<compile_context>
chip_gen: v7x
topology: tpu7x:2x2x1
jax: 0.10.0
libtpu: 0.0.40
codegen_flags: <defaults>
</compile_context>

<pallas_src>
import functools

import jax
import jax.numpy as jnp
from jax.experimental import pallas as pl
from jax.experimental.pallas import tpu as pltpu


_VMEM_LIMIT = 32 * 1024 * 1024   # safe on v5e/v6e (128 MiB) and v7x (64 MiB)


def _cparams(n_axes=1):
    return pltpu.CompilerParams(
        dimension_semantics=("parallel",) * n_axes,
        vmem_limit_bytes=_VMEM_LIMIT)


# -----------------------------------------------------------------------------
# Pallas kernels
# -----------------------------------------------------------------------------
def _mm_affine_act_kernel(x_ref, w_ref, s_ref, b_ref, o_ref, *, act):
    """o = act((x @ w) * scale + bias); conv-as-matmul + folded BN + activation."""
    y = jnp.dot(x_ref[...], w_ref[...], preferred_element_type=jnp.float32)
    y = y * s_ref[...] + b_ref[...]
    if act == "leaky":
        y = jnp.where(y >= 0.0, y, 0.2 * y)
    elif act == "sigmoid":
        y = jax.nn.sigmoid(y)
    elif act == "softmax":                       # fused F.softmax over channels
        m = jnp.max(y, axis=-1, keepdims=True)
        e = jnp.exp(y - m)
        y = e / jnp.sum(e, axis=-1, keepdims=True)
    o_ref[...] = y


def _mu_lv_z_kernel(x_ref, w_ref, b_ref, eps_ref, mulv_ref, z_ref, *, z_dim):
    """Fused layer4 || layer5 + reparameterize.
    mulv = x @ [W4|W5] + [b4|b5];  z = mu + eps * exp(0.01 * log_var)."""
    y = jnp.dot(x_ref[...], w_ref[...], preferred_element_type=jnp.float32)
    y = y + b_ref[...]
    mulv_ref[...] = y
    mu = y[:, :z_dim]
    lv = y[:, z_dim:]
    z_ref[...] = mu + eps_ref[...] * jnp.exp(lv * 0.01)


def _decoder_kernel(z_ref, w11_ref, s11_ref, b11_ref, w12_ref, s12_ref, b12_ref,
                    w23_ref, b23_ref, em_ref):
    """Fused decoder: layer11 -> layer12 -> layer23 -> sigmoid, VMEM-resident."""
    h = jnp.dot(z_ref[...], w11_ref[...], preferred_element_type=jnp.float32)
    h = h * s11_ref[...] + b11_ref[...]
    h = jnp.where(h >= 0.0, h, 0.2 * h)
    h = jnp.dot(h.astype(jnp.bfloat16), w12_ref[...],
                preferred_element_type=jnp.float32)
    h = h * s12_ref[...] + b12_ref[...]
    h = jnp.where(h >= 0.0, h, 0.2 * h)
    h = jnp.dot(h.astype(jnp.bfloat16), w23_ref[...],
                preferred_element_type=jnp.float32)
    em_ref[...] = jax.nn.sigmoid(h + b23_ref[...])


def _chan_att_kernel(x_ref, weca_ref, y_ref, mm_ref):
    """ECA channel attention (one batch element per grid step).
    y = x * sigmoid(mean_HW(x) @ W_eca);  mm = [mean_C(y) | max_C(y)]."""
    x = x_ref[...]                                            # (HW, C)
    m = jnp.mean(x, axis=0, keepdims=True)                    # (1, C) global pool
    att = jax.nn.sigmoid(
        jnp.dot(m, weca_ref[...], preferred_element_type=jnp.float32))
    y = x * att
    y_ref[...] = y
    cm = jnp.mean(y, axis=1, keepdims=True)
    cx = jnp.max(y, axis=1, keepdims=True)
    mm_ref[...] = jnp.concatenate([cm, cx], axis=-1)          # (HW, 2)


def _spatial_apply_res_kernel(cols_ref, w_ref, y_ref, xres_ref, o_ref):
    """o = y * sigmoid(im2col(mean/max map) @ w_sa) + x  (fused residual add)."""
    att = jax.nn.sigmoid(
        jnp.dot(cols_ref[...], w_ref[...], preferred_element_type=jnp.float32))
    o_ref[...] = y_ref[...] * att + xres_ref[...]


def _vecmat_kernel(a_ref, em_ref, o_ref, *, P, C):
    """y_hat[n, c] = sum_p a[n, p] * em[n, p*C + c] on a lane-dense 2D slab."""
    a = a_ref[...]                                            # (TM, P)
    em = em_ref[...]                                          # (TM, P*C)
    acc = a[:, 0:1] * em[:, 0:C]
    for p in range(1, P):
        acc = acc + a[:, p:p + 1] * em[:, p * C:(p + 1) * C]
    o_ref[...] = acc


# -----------------------------------------------------------------------------
# Pallas wrappers (row tiling, padding, bf16 operand casts)
# -----------------------------------------------------------------------------
def _pad_rows(x, rows_p):
    rows = x.shape[0]
    if rows_p == rows:
        return x
    return jnp.pad(x, ((0, rows_p - rows),) + ((0, 0),) * (x.ndim - 1))


def matmul_affine_act(x, w, scale, bias, act="none", tm=128):
    rows, K = x.shape
    N = w.shape[1]
    rows_p = pl.cdiv(rows, tm) * tm
    xb = _pad_rows(x, rows_p).astype(jnp.bfloat16)
    out = pl.pallas_call(
        functools.partial(_mm_affine_act_kernel, act=act),
        out_shape=jax.ShapeDtypeStruct((rows_p, N), jnp.float32),
        grid=(rows_p // tm,),
        in_specs=[
            pl.BlockSpec((tm, K), lambda i: (i, 0)),
            pl.BlockSpec((K, N), lambda i: (0, 0)),
            pl.BlockSpec((1, N), lambda i: (0, 0)),
            pl.BlockSpec((1, N), lambda i: (0, 0)),
        ],
        out_specs=pl.BlockSpec((tm, N), lambda i: (i, 0)),
        compiler_params=_cparams(1),
    )(xb, w, scale, bias)
    return out[:rows]


def mu_logvar_z(cols, w45, b45, eps, z_dim, tm=128):
    rows, K = cols.shape
    rows_p = pl.cdiv(rows, tm) * tm
    xb = _pad_rows(cols, rows_p).astype(jnp.bfloat16)
    eps_p = _pad_rows(eps, rows_p)
    mulv, z = pl.pallas_call(
        functools.partial(_mu_lv_z_kernel, z_dim=z_dim),
        out_shape=(jax.ShapeDtypeStruct((rows_p, 2 * z_dim), jnp.float32),
                   jax.ShapeDtypeStruct((rows_p, z_dim), jnp.float32)),
        grid=(rows_p // tm,),
        in_specs=[
            pl.BlockSpec((tm, K), lambda i: (i, 0)),
            pl.BlockSpec((K, 2 * z_dim), lambda i: (0, 0)),
            pl.BlockSpec((1, 2 * z_dim), lambda i: (0, 0)),
            pl.BlockSpec((tm, z_dim), lambda i: (i, 0)),
        ],
        out_specs=(pl.BlockSpec((tm, 2 * z_dim), lambda i: (i, 0)),
                   pl.BlockSpec((tm, z_dim), lambda i: (i, 0))),
        compiler_params=_cparams(1),
    )(xb, w45, b45, eps_p)
    return mulv[:rows], z[:rows]


def decoder_fused(z2d, p11, p12, p23, tm=128):
    rows, zdim = z2d.shape
    n_out = p23["w"].shape[1]
    rows_p = pl.cdiv(rows, tm) * tm
    zb = _pad_rows(z2d, rows_p).astype(jnp.bfloat16)

    def full(arr):
        return pl.BlockSpec(arr.shape, lambda i: (0, 0))

    em = pl.pallas_call(
        _decoder_kernel,
        out_shape=jax.ShapeDtypeStruct((rows_p, n_out), jnp.float32),
        grid=(rows_p // tm,),
        in_specs=[pl.BlockSpec((tm, zdim), lambda i: (i, 0)),
                  full(p11["w"]), full(p11["s"]), full(p11["b"]),
                  full(p12["w"]), full(p12["s"]), full(p12["b"]),
                  full(p23["w"]), full(p23["b"])],
        out_specs=pl.BlockSpec((tm, n_out), lambda i: (i, 0)),
        compiler_params=_cparams(1),
    )(zb, p11["w"], p11["s"], p11["b"],
      p12["w"], p12["s"], p12["b"], p23["w"], p23["b"])
    return em[:rows]


def vecmat(a2d, em2d, P, C, tm=128):
    rows = a2d.shape[0]
    rows_p = pl.cdiv(rows, tm) * tm
    out = pl.pallas_call(
        functools.partial(_vecmat_kernel, P=P, C=C),
        out_shape=jax.ShapeDtypeStruct((rows_p, C), jnp.float32),
        grid=(rows_p // tm,),
        in_specs=[pl.BlockSpec((tm, P), lambda i: (i, 0)),
                  pl.BlockSpec((tm, P * C), lambda i: (i, 0))],
        out_specs=pl.BlockSpec((tm, C), lambda i: (i, 0)),
        compiler_params=_cparams(1),
    )(_pad_rows(a2d, rows_p), _pad_rows(em2d, rows_p))
    return out[:rows]


# -----------------------------------------------------------------------------
# Conv / ECBAM glue (im2col + kernels above)
# -----------------------------------------------------------------------------
def im2col(x_nhwc, k):
    """(B,H,W,C) -> (B*H*W, k*k*C), 'same' zero padding, stride 1."""
    pad = k // 2
    Bn, H, W, C = x_nhwc.shape
    xp = jnp.pad(x_nhwc, ((0, 0), (pad, pad), (pad, pad), (0, 0)))
    cols = [xp[:, i:i + H, j:j + W, :] for i in range(k) for j in range(k)]
    cols = jnp.concatenate(cols, axis=-1)
    return cols.reshape(Bn * H * W, k * k * C)


def conv_w_to_mat(w):
    """PyTorch conv weight (Cout, Cin, Kh, Kw) -> (Kh*Kw*Cin, Cout)."""
    cout = w.shape[0]
    return jnp.transpose(w, (2, 3, 1, 0)).reshape(-1, cout)


def eca_band_matrix(w3, C):
    """Represent ECA 1D conv (k=3, pad=1, no bias) as a C x C banded matrix."""
    M = jnp.diag(jnp.full((C,), w3[1]))
    M = M + jnp.diag(jnp.full((C - 1,), w3[0]), k=1)
    M = M + jnp.diag(jnp.full((C - 1,), w3[2]), k=-1)
    return M.astype(jnp.float32)


def block_diag2(wa, wb):
    """[[Wa, 0], [0, Wb]] so two layers with different inputs share one matmul."""
    k1, n1 = wa.shape
    k2, n2 = wb.shape
    top = jnp.concatenate([wa, jnp.zeros((k1, n2), wa.dtype)], axis=1)
    bot = jnp.concatenate([jnp.zeros((k2, n1), wb.dtype), wb], axis=1)
    return jnp.concatenate([top, bot], axis=0)


def ecbam(h_nhwc, x_res_rows, eca_mat, w_sa_mat, tm=128):
    """ECA channel attention + 7x7 spatial attention, residual (+x) fused."""
    Bn, H, W, C = h_nhwc.shape
    HW = H * W
    h3 = h_nhwc.reshape(Bn, HW, C)
    y, mm = pl.pallas_call(
        _chan_att_kernel,
        out_shape=(jax.ShapeDtypeStruct((Bn, HW, C), jnp.float32),
                   jax.ShapeDtypeStruct((Bn, HW, 2), jnp.float32)),
        grid=(Bn,),
        in_specs=[pl.BlockSpec((None, HW, C), lambda b: (b, 0, 0)),
                  pl.BlockSpec((C, C), lambda b: (0, 0))],
        out_specs=(pl.BlockSpec((None, HW, C), lambda b: (b, 0, 0)),
                   pl.BlockSpec((None, HW, 2), lambda b: (b, 0, 0))),
        compiler_params=_cparams(1),
    )(h3, eca_mat)

    cols = im2col(mm.reshape(Bn, H, W, 2), 7)                 # (Bn*HW, 98)
    rows = Bn * HW
    rows_p = pl.cdiv(rows, tm) * tm
    ksa = w_sa_mat.shape[0]
    o = pl.pallas_call(
        _spatial_apply_res_kernel,
        out_shape=jax.ShapeDtypeStruct((rows_p, C), jnp.float32),
        grid=(rows_p // tm,),
        in_specs=[pl.BlockSpec((tm, ksa), lambda i: (i, 0)),
                  pl.BlockSpec((ksa, 1), lambda i: (0, 0)),
                  pl.BlockSpec((tm, C), lambda i: (i, 0)),
                  pl.BlockSpec((tm, C), lambda i: (i, 0))],
        out_specs=pl.BlockSpec((tm, C), lambda i: (i, 0)),
        compiler_params=_cparams(1),
    )(_pad_rows(cols, rows_p), w_sa_mat,
      _pad_rows(y.reshape(rows, C), rows_p), _pad_rows(x_res_rows, rows_p))
    return o[:rows].reshape(Bn, H, W, C)


# -----------------------------------------------------------------------------
# Parameters (weight matrices + folded BN precomputed once)
# -----------------------------------------------------------------------------
def init_params(key, P, Channel, z_dim):
    keys = iter(jax.random.split(key, 64))

    def conv(cout, cin, k):
        w = 0.1 * jax.random.normal(next(keys), (cout, cin, k, k), jnp.float32)
        b = 0.1 * jax.random.normal(next(keys), (cout,), jnp.float32)
        return w, b

    def bn(c):
        gamma = 1.0 + 0.1 * jax.random.normal(next(keys), (c,), jnp.float32)
        beta = 0.1 * jax.random.normal(next(keys), (c,), jnp.float32)
        eps = 1e-5
        # eval mode: running_mean = 0, running_var = 1
        return gamma / jnp.sqrt(1.0 + eps), beta

    def conv_bn(cout, cin, k):
        w, b = conv(cout, cin, k)
        s, sh = bn(cout)
        return conv_w_to_mat(w), s, b * s + sh        # (wm, scale, folded bias)

    wm1, ss1, bb1 = conv_bn(Channel, Channel, 3)
    wm2, ss2, bb2 = conv_bn(Channel, Channel, 3)
    wm3, ss3, bb3 = conv_bn(Channel, Channel, 3)
    wm6, ss6, bb6 = conv_bn(Channel, Channel, 3)
    wm7, ss7, bb7 = conv_bn(Channel, Channel, 3)
    wm8, ss8, bb8 = conv_bn(Channel, Channel, 3)
    wm9, ss9, bb9 = conv_bn(Channel, Channel, 3)
    wm10, ss10, bb10 = conv_bn(P, Channel, 3)         # BatchNorm2d(Channel), P==Channel

    w4, b4 = conv(z_dim, Channel, 3)                  # layer4/5: no BN, no act
    w5, b5 = conv(z_dim, Channel, 3)

    wm11, ss11, bb11 = conv_bn(16 * P, z_dim, 1)
    wm12, ss12, bb12 = conv_bn(64 * P, 16 * P, 1)
    w23, b23 = conv(Channel * P, 64 * P, 1)

    eca_w3 = 0.1 * jax.random.normal(next(keys), (3,), jnp.float32)
    w_sa = 0.1 * jax.random.normal(next(keys), (1, 2, 7, 7), jnp.float32)

    def pack(wm, scale, bias):
        return {"w": wm.astype(jnp.bfloat16),
                "s": scale.reshape(1, -1).astype(jnp.float32),
                "b": bias.reshape(1, -1).astype(jnp.float32)}

    return {
        # layer1 || layer6 : shared im2col(x), weights concatenated along N
        "l16": pack(jnp.concatenate([wm1, wm6], axis=1),
                    jnp.concatenate([ss1, ss6]),
                    jnp.concatenate([bb1, bb6])),
        # layer2 || layer7 and layer3 || layer8 : block-diagonal (different inputs)
        "l27": pack(block_diag2(wm2, wm7),
                    jnp.concatenate([ss2, ss7]),
                    jnp.concatenate([bb2, bb7])),
        "l38": pack(block_diag2(wm3, wm8),
                    jnp.concatenate([ss3, ss8]),
                    jnp.concatenate([bb3, bb8])),
        "l9": pack(wm9, ss9, bb9),
        "l10": pack(wm10, ss10, bb10),
        # layer4 || layer5
        "w45": jnp.concatenate([conv_w_to_mat(w4), conv_w_to_mat(w5)],
                               axis=1).astype(jnp.bfloat16),
        "b45": jnp.concatenate([b4, b5]).reshape(1, 2 * z_dim),
        # decoder
        "l11": pack(wm11, ss11, bb11),
        "l12": pack(wm12, ss12, bb12),
        "l23": {"w": conv_w_to_mat(w23).astype(jnp.bfloat16),
                "b": b23.reshape(1, -1)},
        # ECBAM
        "eca_mat": eca_band_matrix(eca_w3, Channel),
        "w_sa_mat": conv_w_to_mat(w_sa).astype(jnp.float32),
    }


# -----------------------------------------------------------------------------
# PGMSU forward
# -----------------------------------------------------------------------------
def pgmsu_forward(params, x_nchw, eps_key, *, P, Channel, z_dim, col, tm=128):
    B, C, H, W = x_nchw.shape
    rows = B * H * W
    x = jnp.transpose(x_nchw, (0, 2, 3, 1)).astype(jnp.float32)    # NHWC
    x_rows = x.reshape(rows, C)

    def split_pair(y2d):
        return (y2d[:, :C].reshape(B, H, W, C),
                y2d[:, C:].reshape(B, H, W, C))

    # ---- layer1 || layer6 (shared im2col of the input) ----
    pr = params["l16"]
    y = matmul_affine_act(im2col(x, 3), pr["w"], pr["s"], pr["b"], "leaky", tm)
    h_m, h_a = split_pair(y)

    # ---- layer2 || layer7 (block-diagonal weights, concatenated im2cols) ----
    pr = params["l27"]
    cols = jnp.concatenate([im2col(h_m, 3), im2col(h_a, 3)], axis=1)
    y = matmul_affine_act(cols, pr["w"], pr["s"], pr["b"], "leaky", tm)
    h_m, h_a = split_pair(y)

    # ---- shared cbam2 on both branches (stacked batch) + fused residual +x ----
    hh = jnp.concatenate([h_m, h_a], axis=0)                       # (2B, H, W, C)
    xres = jnp.concatenate([x_rows, x_rows], axis=0)
    hh = ecbam(hh, xres, params["eca_mat"], params["w_sa_mat"], tm)
    h_m, h_a = hh[:B], hh[B:]

    # ---- layer3 || layer8 ----
    pr = params["l38"]
    cols = jnp.concatenate([im2col(h_m, 3), im2col(h_a, 3)], axis=1)
    y = matmul_affine_act(cols, pr["w"], pr["s"], pr["b"], "leaky", tm)
    h1_m, h_a = split_pair(y)

    # ---- encoder_m tail: layer4 || layer5 + reparameterize (one kernel) ----
    eps = jax.random.normal(eps_key, (rows, z_dim), jnp.float32)
    mulv, z2d = mu_logvar_z(im2col(h1_m, 3), params["w45"], params["b45"],
                            eps, z_dim, tm)
    mu2d, lv2d = mulv[:, :z_dim], mulv[:, z_dim:]

    # ---- encoder_a tail: layer9, then layer10 + BN + softmax (fused) ----
    pr = params["l9"]
    h_a = matmul_affine_act(im2col(h_a, 3), pr["w"], pr["s"], pr["b"], "leaky",
                            tm).reshape(B, H, W, C)
    pr = params["l10"]
    a2d = matmul_affine_act(im2col(h_a, 3), pr["w"], pr["s"], pr["b"],
                            "softmax", tm)                          # (rows, P)

    # ---- decoder: fused layer11 -> layer12 -> layer23 -> sigmoid ----
    em2d = decoder_fused(z2d, params["l11"], params["l12"], params["l23"], tm)

    # ---- output plumbing (PyTorch NCHW .view()/.permute() memory semantics) ----
    em_nchw = jnp.transpose(em2d.reshape(B, H, W, Channel * P), (0, 3, 1, 2))
    em_tensor = em_nchw.reshape(-1, P, Channel)                    # em.view(-1,P,C)
    a_nchw = jnp.transpose(a2d.reshape(B, H, W, P), (0, 3, 1, 2))
    a_tensor = a_nchw.reshape(-1, P)                               # a.view(-1,1,P)
    y_hat = vecmat(a_tensor, em_tensor.reshape(-1, P * Channel), P, Channel, tm)

    mu_nchw = jnp.transpose(mu2d.reshape(B, H, W, z_dim), (0, 3, 1, 2))
    lv_nchw = jnp.transpose(lv2d.reshape(B, H, W, z_dim), (0, 3, 1, 2))
    a_out = jnp.transpose(a_nchw, (2, 3, 0, 1)).reshape(col * col, P)
    return y_hat, mu_nchw, lv_nchw, a_out, em_tensor


# -----------------------------------------------------------------------------
if __name__ == "__main__":
    P, Channel, z_dim, col = 4, 4, 4, 16
    B, H, W = 1, col, col

    key = jax.random.PRNGKey(0)
    pkey, xkey, ekey = jax.random.split(key, 3)
    params = init_params(pkey, P, Channel, z_dim)
    x = jax.random.normal(xkey, (B, Channel, H, W), jnp.float32)

    fwd = jax.jit(functools.partial(
        pgmsu_forward, P=P, Channel=Channel, z_dim=z_dim, col=col))
    outs = jax.block_until_ready(fwd(params, x, ekey))

    y_hat, mu, log_var, a, em_tensor = outs
    assert y_hat.shape == (B * H * W, Channel)
    assert mu.shape == (B, z_dim, H, W)
    assert log_var.shape == (B, z_dim, H, W)
    assert a.shape == (col * col, P)
    assert em_tensor.shape == (B * H * W, P, Channel)
    assert all(bool(jnp.all(jnp.isfinite(o)))
               for o in (y_hat, mu, log_var, a, em_tensor))
    print("KERNEL_OK")
</pallas_src>

<mosaic_0001>
module attributes {stable_mosaic.version = 11 : i64} {
  func.func @_mm_affine_act_kernel(%arg0: i32, %arg1: memref<128x36xbf16, #tpu.memory_space<vmem>>, %arg2: memref<36x8xbf16, #tpu.memory_space<vmem>>, %arg3: memref<1x8xf32, #tpu.memory_space<vmem>>, %arg4: memref<1x8xf32, #tpu.memory_space<vmem>>, %arg5: memref<128x8xf32, #tpu.memory_space<vmem>>) attributes {dimension_semantics = [#tpu.dimension_semantics<parallel>], iteration_bounds = array<i64: 2>, scalar_prefetch = 0 : i64, scratch_operands = 0 : i64, tpu.core_type = #tpu.core_type<tc>, window_params = [{transform_indices = @transform_0, window_bounds = array<i64: 128, 36>}, {pipeline_mode = #tpu.pipeline_mode<synchronous>, transform_indices = @transform_1, window_bounds = array<i64: 36, 8>}, {pipeline_mode = #tpu.pipeline_mode<synchronous>, transform_indices = @transform_2, window_bounds = array<i64: 1, 8>}, {pipeline_mode = #tpu.pipeline_mode<synchronous>, transform_indices = @transform_3, window_bounds = array<i64: 1, 8>}, {transform_indices = @transform_4, window_bounds = array<i64: 128, 8>}]} {
    %c0 = arith.constant 0 : index
    %c0_0 = arith.constant 0 : index
    %0 = vector.load %arg1[%c0, %c0_0] : memref<128x36xbf16, #tpu.memory_space<vmem>>, vector<128x36xbf16>
    %c0_1 = arith.constant 0 : index
    %c0_2 = arith.constant 0 : index
    %1 = vector.load %arg2[%c0_1, %c0_2] : memref<36x8xbf16, #tpu.memory_space<vmem>>, vector<36x8xbf16>
    %cst = arith.constant dense<0.000000e+00> : vector<128x8xf32>
    %2 = tpu.matmul %0, %1, %cst {dimension_numbers = #tpu.dot_dimension_numbers<[1], [0], [0], [1], [0, 0, 1, 1], [], []>} : vector<128x36xbf16>, vector<36x8xbf16>, vector<128x8xf32> -> vector<128x8xf32>
    %c0_3 = arith.constant 0 : index
    %c0_4 = arith.constant 0 : index
    %3 = vector.load %arg3[%c0_3, %c0_4] : memref<1x8xf32, #tpu.memory_space<vmem>>, vector<1x8xf32>
    %4 = vector.broadcast %3 : vector<1x8xf32> to vector<128x8xf32>
    %5 = arith.mulf %2, %4 : vector<128x8xf32>
    %c0_5 = arith.constant 0 : index
    %c0_6 = arith.constant 0 : index
    %6 = vector.load %arg4[%c0_5, %c0_6] : memref<1x8xf32, #tpu.memory_space<vmem>>, vector<1x8xf32>
    %7 = vector.broadcast %6 : vector<1x8xf32> to vector<128x8xf32>
    %8 = arith.addf %5, %7 : vector<128x8xf32>
    %cst_7 = arith.constant 0.000000e+00 : f32
    %9 = vector.broadcast %cst_7 : f32 to vector<128x8xf32>
    %10 = arith.cmpf oge, %8, %9 : vector<128x8xf32>
    %cst_8 = arith.constant 2.000000e-01 : f32
    %11 = vector.broadcast %cst_8 : f32 to vector<128x8xf32>
    %12 = arith.mulf %11, %8 : vector<128x8xf32>
    %13 = arith.select %10, %8, %12 : vector<128x8xi1>, vector<128x8xf32>
    %c0_9 = arith.constant 0 : index
    %c0_10 = arith.constant 0 : index
    %14 = vector.load %arg5[%c0_9, %c0_10] : memref<128x8xf32, #tpu.memory_space<vmem>>, vector<128x8xf32>
    tpu.vector_store %arg5[%c0_9, %c0_10], %13 {strides = array<i32>} : memref<128x8xf32, #tpu.memory_space<vmem>>, vector<128x8xf32>,
    return
  }
  func.func @transform_0(%arg0: i32) -> (i32, i32) {
    %c0_i32 = arith.constant 0 : i32
    %c0_i32_0 = arith.constant 0 : i32
    return %arg0, %c0_i32 : i32, i32
  }
  func.func @transform_1(%arg0: i32) -> (i32, i32) {
    %c0_i32 = arith.constant 0 : i32
    %c0_i32_0 = arith.constant 0 : i32
    %c0_i32_1 = arith.constant 0 : i32
    return %c0_i32, %c0_i32_0 : i32, i32
  }
  func.func @transform_2(%arg0: i32) -> (i32, i32) {
    %c0_i32 = arith.constant 0 : i32
    %c0_i32_0 = arith.constant 0 : i32
    %c0_i32_1 = arith.constant 0 : i32
    return %c0_i32, %c0_i32_0 : i32, i32
  }
  func.func @transform_3(%arg0: i32) -> (i32, i32) {
    %c0_i32 = arith.constant 0 : i32
    %c0_i32_0 = arith.constant 0 : i32
    %c0_i32_1 = arith.constant 0 : i32
    return %c0_i32, %c0_i32_0 : i32, i32
  }
  func.func @transform_4(%arg0: i32) -> (i32, i32) {
    %c0_i32 = arith.constant 0 : i32
    %c0_i32_0 = arith.constant 0 : i32
    return %arg0, %c0_i32 : i32, i32
  }
}

module attributes {stable_mosaic.version = 11 : i64} {
  func.func @_mm_affine_act_kernel(%arg0: i32, %arg1: memref<128x72xbf16, #tpu.memory_space<vmem>>, %arg2: memref<72x8xbf16, #tpu.memory_space<vmem>>, %arg3: memref<1x8xf32, #tpu.memory_space<vmem>>, %arg4: memref<1x8xf32, #tpu.memory_space<vmem>>, %arg5: memref<128x8xf32, #tpu.memory_space<vmem>>) attributes {dimension_semantics = [#tpu.dimension_semantics<parallel>], iteration_bounds = array<i64: 2>, scalar_prefetch = 0 : i64, scratch_operands = 0 : i64, tpu.core_type = #tpu.core_type<tc>, window_params = [{transform_indices = @transform_0, window_bounds = array<i64: 128, 72>}, {pipeline_mode = #tpu.pipeline_mode<synchronous>, transform_indices = @transform_1, window_bounds = array<i64: 72, 8>}, {pipeline_mode = #tpu.pipeline_mode<synchronous>, transform_indices = @transform_2, window_bounds = array<i64: 1, 8>}, {pipeline_mode = #tpu.pipeline_mode<synchronous>, transform_indices = @transform_3, window_bounds = array<i64: 1, 8>}, {transform_indices = @transform_4, window_bounds = array<i64: 128, 8>}]} {
    %c0 = arith.constant 0 : index
    %c0_0 = arith.constant 0 : index
    %0 = vector.load %arg1[%c0, %c0_0] : memref<128x72xbf16, #tpu.memory_space<vmem>>, vector<128x72xbf16>
    %c0_1 = arith.constant 0 : index
    %c0_2 = arith.constant 0 : index
    %1 = vector.load %arg2[%c0_1, %c0_2] : memref<72x8xbf16, #tpu.memory_space<vmem>>, vector<72x8xbf16>
    %cst = arith.constant dense<0.000000e+00> : vector<128x8xf32>
    %2 = tpu.matmul %0, %1, %cst {dimension_numbers = #tpu.dot_dimension_numbers<[1], [0], [0], [1], [0, 0, 1, 1], [], []>} : vector<128x72xbf16>, vector<72x8xbf16>, vector<128x8xf32> -> vector<128x8xf32>
    %c0_3 = arith.constant 0 : index
    %c0_4 = arith.constant 0 : index
    %3 = vector.load %arg3[%c0_3, %c0_4] : memref<1x8xf32, #tpu.memory_space<vmem>>, vector<1x8xf32>
    %4 = vector.broadcast %3 : vector<1x8xf32> to vector<128x8xf32>
    %5 = arith.mulf %2, %4 : vector<128x8xf32>
    %c0_5 = arith.constant 0 : index
    %c0_6 = arith.constant 0 : index
    %6 = vector.load %arg4[%c0_5, %c0_6] : memref<1x8xf32, #tpu.memory_space<vmem>>, vector<1x8xf32>
    %7 = vector.broadcast %6 : vector<1x8xf32> to vector<128x8xf32>
    %8 = arith.addf %5, %7 : vector<128x8xf32>
    %cst_7 = arith.constant 0.000000e+00 : f32
    %9 = vector.broadcast %cst_7 : f32 to vector<128x8xf32>
    %10 = arith.cmpf oge, %8, %9 : vector<128x8xf32>
    %cst_8 = arith.constant 2.000000e-01 : f32
    %11 = vector.broadcast %cst_8 : f32 to vector<128x8xf32>
    %12 = arith.mulf %11, %8 : vector<128x8xf32>
    %13 = arith.select %10, %8, %12 : vector<128x8xi1>, vector<128x8xf32>
    %c0_9 = arith.constant 0 : index
    %c0_10 = arith.constant 0 : index
    %14 = vector.load %arg5[%c0_9, %c0_10] : memref<128x8xf32, #tpu.memory_space<vmem>>, vector<128x8xf32>
    tpu.vector_store %arg5[%c0_9, %c0_10], %13 {strides = array<i32>} : memref<128x8xf32, #tpu.memory_space<vmem>>, vector<128x8xf32>,
    return
  }
  func.func @transform_0(%arg0: i32) -> (i32, i32) {
    %c0_i32 = arith.constant 0 : i32
    %c0_i32_0 = arith.constant 0 : i32
    return %arg0, %c0_i32 : i32, i32
  }
  func.func @transform_1(%arg0: i32) -> (i32, i32) {
    %c0_i32 = arith.constant 0 : i32
    %c0_i32_0 = arith.constant 0 : i32
    %c0_i32_1 = arith.constant 0 : i32
    return %c0_i32, %c0_i32_0 : i32, i32
  }
  func.func @transform_2(%arg0: i32) -> (i32, i32) {
    %c0_i32 = arith.constant 0 : i32
    %c0_i32_0 = arith.constant 0 : i32
    %c0_i32_1 = arith.constant 0 : i32
    return %c0_i32, %c0_i32_0 : i32, i32
  }
  func.func @transform_3(%arg0: i32) -> (i32, i32) {
    %c0_i32 = arith.constant 0 : i32
    %c0_i32_0 = arith.constant 0 : i32
    %c0_i32_1 = arith.constant 0 : i32
    return %c0_i32, %c0_i32_0 : i32, i32
  }
  func.func @transform_4(%arg0: i32) -> (i32, i32) {
    %c0_i32 = arith.constant 0 : i32
    %c0_i32_0 = arith.constant 0 : i32
    return %arg0, %c0_i32 : i32, i32
  }
}

module attributes {stable_mosaic.version = 11 : i64} {
  func.func @_chan_att_kernel(%arg0: i32, %arg1: memref<1x256x4xf32, #tpu.memory_space<vmem>>, %arg2: memref<4x4xf32, #tpu.memory_space<vmem>>, %arg3: memref<1x256x4xf32, #tpu.memory_space<vmem>>, %arg4: memref<1x256x2xf32, #tpu.memory_space<vmem>>) attributes {dimension_semantics = [#tpu.dimension_semantics<parallel>], iteration_bounds = array<i64: 2>, scalar_prefetch = 0 : i64, scratch_operands = 0 : i64, tpu.core_type = #tpu.core_type<tc>, window_params = [{transform_indices = @transform_0, window_bounds = array<i64: 1, 256, 4>}, {pipeline_mode = #tpu.pipeline_mode<synchronous>, transform_indices = @transform_1, window_bounds = array<i64: 4, 4>}, {transform_indices = @transform_2, window_bounds = array<i64: 1, 256, 4>}, {transform_indices = @transform_3, window_bounds = array<i64: 1, 256, 2>}]} {
    %c0 = arith.constant 0 : index
    %c0_0 = arith.constant 0 : index
    %c0_1 = arith.constant 0 : index
    %0 = vector.load %arg1[%c0, %c0_0, %c0_1] : memref<1x256x4xf32, #tpu.memory_space<vmem>>, vector<1x256x4xf32>
    %1 = vector.shape_cast %0 : vector<1x256x4xf32> to vector<256x4xf32>
    %cst = arith.constant dense<0.000000e+00> : vector<4xf32>
    %2 = vector.multi_reduction <add>, %1, %cst [0] : vector<256x4xf32> to vector<4xf32>
    %3 = vector.shape_cast %2 : vector<4xf32> to vector<1x4xf32>
    %cst_2 = arith.constant 2.560000e+02 : f32
    %4 = vector.broadcast %cst_2 : f32 to vector<1x4xf32>
    %5 = arith.divf %3, %4 : vector<1x4xf32>
    %c0_3 = arith.constant 0 : index
    %c0_4 = arith.constant 0 : index
    %6 = vector.load %arg2[%c0_3, %c0_4] : memref<4x4xf32, #tpu.memory_space<vmem>>, vector<4x4xf32>
    %cst_5 = arith.constant dense<0.000000e+00> : vector<1x4xf32>
    %7 = tpu.matmul %5, %6, %cst_5 {dimension_numbers = #tpu.dot_dimension_numbers<[1], [0], [0], [1], [0, 0, 1, 1], [], []>} : vector<1x4xf32>, vector<4x4xf32>, vector<1x4xf32> -> vector<1x4xf32>
    %8 = arith.negf %7 : vector<1x4xf32>
    %9 = math.exp %8 : vector<1x4xf32>
    %cst_6 = arith.constant 1.000000e+00 : f32
    %10 = vector.broadcast %cst_6 : f32 to vector<1x4xf32>
    %11 = arith.addf %10, %9 : vector<1x4xf32>
    %12 = arith.divf %10, %11 : vector<1x4xf32>
    %13 = vector.broadcast %12 : vector<1x4xf32> to vector<256x4xf32>
    %14 = arith.mulf %1, %13 : vector<256x4xf32>
    %c0_7 = arith.constant 0 : index
    %c0_8 = arith.constant 0 : index
    %c0_9 = arith.constant 0 : index
    %15 = vector.load %arg3[%c0_7, %c0_8, %c0_9] : memref<1x256x4xf32, #tpu.memory_space<vmem>>, vector<1x256x4xf32>
    %16 = vector.shape_cast %15 : vector<1x256x4xf32> to vector<256x4xf32>
    %17 = vector.shape_cast %14 : vector<256x4xf32> to vector<1x256x4xf32>
    tpu.vector_store %arg3[%c0_7, %c0_8, %c0_9], %17 {strides = array<i32>} : memref<1x256x4xf32, #tpu.memory_space<vmem>>, vector<1x256x4xf32>,
    %cst_10 = arith.constant dense<0.000000e+00> : vector<256xf32>
    %18 = vector.multi_reduction <add>, %14, %cst_10 [1] : vector<256x4xf32> to vector<256xf32>
    %19 = vector.shape_cast %18 : vector<256xf32> to vector<256x1xf32>
    %cst_11 = arith.constant 4.000000e+00 : f32
    %20 = vector.broadcast %cst_11 : f32 to vector<256x1xf32>
    %21 = arith.divf %19, %20 : vector<256x1xf32>
    %cst_12 = arith.constant dense<0xFF800000> : vector<256xf32>
    %22 = vector.multi_reduction <maximumf>, %14, %cst_12 [1] : vector<256x4xf32> to vector<256xf32>
    %23 = vector.shape_cast %22 : vector<256xf32> to vector<256x1xf32>
    %24 = tpu.concatenate %21, %23 in 1 : vector<256x1xf32>, vector<256x1xf32> -> vector<256x2xf32>
    %c0_13 = arith.constant 0 : index
    %c0_14 = arith.constant 0 : index
    %c0_15 = arith.constant 0 : index
    %25 = vector.load %arg4[%c0_13, %c0_14, %c0_15] : memref<1x256x2xf32, #tpu.memory_space<vmem>>, vector<1x256x2xf32>
    %26 = vector.shape_cast %25 : vector<1x256x2xf32> to vector<256x2xf32>
    %27 = vector.shape_cast %24 : vector<256x2xf32> to vector<1x256x2xf32>
    tpu.vector_store %arg4[%c0_13, %c0_14, %c0_15], %27 {strides = array<i32>} : memref<1x256x2xf32, #tpu.memory_space<vmem>>, vector<1x256x2xf32>,
    return
  }
  func.func @transform_0(%arg0: i32) -> (i32, i32, i32) {
    %c0_i32 = arith.constant 0 : i32
    %c0_i32_0 = arith.constant 0 : i32
    %c0_i32_1 = arith.constant 0 : i32
    return %arg0, %c0_i32, %c0_i32_0 : i32, i32, i32
  }
  func.func @transform_1(%arg0: i32) -> (i32, i32) {
    %c0_i32 = arith.constant 0 : i32
    %c0_i32_0 = arith.constant 0 : i32
    %c0_i32_1 = arith.constant 0 : i32
    return %c0_i32, %c0_i32_0 : i32, i32
  }
  func.func @transform_2(%arg0: i32) -> (i32, i32, i32) {
    %c0_i32 = arith.constant 0 : i32
    %c0_i32_0 = arith.constant 0 : i32
    %c0_i32_1 = arith.constant 0 : i32
    return %arg0, %c0_i32, %c0_i32_0 : i32, i32, i32
  }
  func.func @transform_3(%arg0: i32) -> (i32, i32, i32) {
    %c0_i32 = arith.constant 0 : i32
    %c0_i32_0 = arith.constant 0 : i32
    %c0_i32_1 = arith.constant 0 : i32
    return %arg0, %c0_i32, %c0_i32_0 : i32, i32, i32
  }
}

module attributes {stable_mosaic.version = 11 : i64} {
  func.func @_spatial_apply_res_kernel(%arg0: i32, %arg1: memref<128x98xf32, #tpu.memory_space<vmem>>, %arg2: memref<98x1xf32, #tpu.memory_space<vmem>>, %arg3: memref<128x4xf32, #tpu.memory_space<vmem>>, %arg4: memref<128x4xf32, #tpu.memory_space<vmem>>, %arg5: memref<128x4xf32, #tpu.memory_space<vmem>>) attributes {dimension_semantics = [#tpu.dimension_semantics<parallel>], iteration_bounds = array<i64: 4>, scalar_prefetch = 0 : i64, scratch_operands = 0 : i64, tpu.core_type = #tpu.core_type<tc>, window_params = [{transform_indices = @transform_0, window_bounds = array<i64: 128, 98>}, {pipeline_mode = #tpu.pipeline_mode<synchronous>, transform_indices = @transform_1, window_bounds = array<i64: 98, 1>}, {transform_indices = @transform_2, window_bounds = array<i64: 128, 4>}, {transform_indices = @transform_3, window_bounds = array<i64: 128, 4>}, {transform_indices = @transform_4, window_bounds = array<i64: 128, 4>}]} {
    %c0 = arith.constant 0 : index
    %c0_0 = arith.constant 0 : index
    %0 = vector.load %arg1[%c0, %c0_0] : memref<128x98xf32, #tpu.memory_space<vmem>>, vector<128x98xf32>
    %c0_1 = arith.constant 0 : index
    %c0_2 = arith.constant 0 : index
    %1 = vector.load %arg2[%c0_1, %c0_2] : memref<98x1xf32, #tpu.memory_space<vmem>>, vector<98x1xf32>
    %cst = arith.constant dense<0.000000e+00> : vector<128x1xf32>
    %2 = tpu.matmul %0, %1, %cst {dimension_numbers = #tpu.dot_dimension_numbers<[1], [0], [0], [1], [0, 0, 1, 1], [], []>} : vector<128x98xf32>, vector<98x1xf32>, vector<128x1xf32> -> vector<128x1xf32>
    %3 = arith.negf %2 : vector<128x1xf32>
    %4 = math.exp %3 : vector<128x1xf32>
    %cst_3 = arith.constant 1.000000e+00 : f32
    %5 = vector.broadcast %cst_3 : f32 to vector<128x1xf32>
    %6 = arith.addf %5, %4 : vector<128x1xf32>
    %7 = arith.divf %5, %6 : vector<128x1xf32>
    %c0_4 = arith.constant 0 : index
    %c0_5 = arith.constant 0 : index
    %8 = vector.load %arg3[%c0_4, %c0_5] : memref<128x4xf32, #tpu.memory_space<vmem>>, vector<128x4xf32>
    %9 = vector.broadcast %7 : vector<128x1xf32> to vector<128x4xf32>
    %10 = arith.mulf %8, %9 : vector<128x4xf32>
    %c0_6 = arith.constant 0 : index
    %c0_7 = arith.constant 0 : index
    %11 = vector.load %arg4[%c0_6, %c0_7] : memref<128x4xf32, #tpu.memory_space<vmem>>, vector<128x4xf32>
    %12 = arith.addf %10, %11 : vector<128x4xf32>
    %c0_8 = arith.constant 0 : index
    %c0_9 = arith.constant 0 : index
    %13 = vector.load %arg5[%c0_8, %c0_9] : memref<128x4xf32, #tpu.memory_space<vmem>>, vector<128x4xf32>
    tpu.vector_store %arg5[%c0_8, %c0_9], %12 {strides = array<i32>} : memref<128x4xf32, #tpu.memory_space<vmem>>, vector<128x4xf32>,
    return
  }
  func.func @transform_0(%arg0: i32) -> (i32, i32) {
    %c0_i32 = arith.constant 0 : i32
    %c0_i32_0 = arith.constant 0 : i32
    return %arg0, %c0_i32 : i32, i32
  }
  func.func @transform_1(%arg0: i32) -> (i32, i32) {
    %c0_i32 = arith.constant 0 : i32
    %c0_i32_0 = arith.constant 0 : i32
    %c0_i32_1 = arith.constant 0 : i32
    return %c0_i32, %c0_i32_0 : i32, i32
  }
  func.func @transform_2(%arg0: i32) -> (i32, i32) {
    %c0_i32 = arith.constant 0 : i32
    %c0_i32_0 = arith.constant 0 : i32
    return %arg0, %c0_i32 : i32, i32
  }
  func.func @transform_3(%arg0: i32) -> (i32, i32) {
    %c0_i32 = arith.constant 0 : i32
    %c0_i32_0 = arith.constant 0 : i32
    return %arg0, %c0_i32 : i32, i32
  }
  func.func @transform_4(%arg0: i32) -> (i32, i32) {
    %c0_i32 = arith.constant 0 : i32
    %c0_i32_0 = arith.constant 0 : i32
    return %arg0, %c0_i32 : i32, i32
  }
}

module attributes {stable_mosaic.version = 11 : i64} {
  func.func @_mu_lv_z_kernel(%arg0: i32, %arg1: memref<128x36xbf16, #tpu.memory_space<vmem>>, %arg2: memref<36x8xbf16, #tpu.memory_space<vmem>>, %arg3: memref<1x8xf32, #tpu.memory_space<vmem>>, %arg4: memref<128x4xf32, #tpu.memory_space<vmem>>, %arg5: memref<128x8xf32, #tpu.memory_space<vmem>>, %arg6: memref<128x4xf32, #tpu.memory_space<vmem>>) attributes {dimension_semantics = [#tpu.dimension_semantics<parallel>], iteration_bounds = array<i64: 2>, scalar_prefetch = 0 : i64, scratch_operands = 0 : i64, tpu.core_type = #tpu.core_type<tc>, window_params = [{transform_indices = @transform_0, window_bounds = array<i64: 128, 36>}, {pipeline_mode = #tpu.pipeline_mode<synchronous>, transform_indices = @transform_1, window_bounds = array<i64: 36, 8>}, {pipeline_mode = #tpu.pipeline_mode<synchronous>, transform_indices = @transform_2, window_bounds = array<i64: 1, 8>}, {transform_indices = @transform_3, window_bounds = array<i64: 128, 4>}, {transform_indices = @transform_4, window_bounds = array<i64: 128, 8>}, {transform_indices = @transform_5, window_bounds = array<i64: 128, 4>}]} {
    %c0 = arith.constant 0 : index
    %c0_0 = arith.constant 0 : index
    %0 = vector.load %arg1[%c0, %c0_0] : memref<128x36xbf16, #tpu.memory_space<vmem>>, vector<128x36xbf16>
    %c0_1 = arith.constant 0 : index
    %c0_2 = arith.constant 0 : index
    %1 = vector.load %arg2[%c0_1, %c0_2] : memref<36x8xbf16, #tpu.memory_space<vmem>>, vector<36x8xbf16>
    %cst = arith.constant dense<0.000000e+00> : vector<128x8xf32>
    %2 = tpu.matmul %0, %1, %cst {dimension_numbers = #tpu.dot_dimension_numbers<[1], [0], [0], [1], [0, 0, 1, 1], [], []>} : vector<128x36xbf16>, vector<36x8xbf16>, vector<128x8xf32> -> vector<128x8xf32>
    %c0_3 = arith.constant 0 : index
    %c0_4 = arith.constant 0 : index
    %3 = vector.load %arg3[%c0_3, %c0_4] : memref<1x8xf32, #tpu.memory_space<vmem>>, vector<1x8xf32>
    %4 = vector.broadcast %3 : vector<1x8xf32> to vector<128x8xf32>
    %5 = arith.addf %2, %4 : vector<128x8xf32>
    %c0_5 = arith.constant 0 : index
    %c0_6 = arith.constant 0 : index
    %6 = vector.load %arg5[%c0_5, %c0_6] : memref<128x8xf32, #tpu.memory_space<vmem>>, vector<128x8xf32>
    tpu.vector_store %arg5[%c0_5, %c0_6], %5 {strides = array<i32>} : memref<128x8xf32, #tpu.memory_space<vmem>>, vector<128x8xf32>,
    %7 = vector.extract_strided_slice %5 {offsets = [0, 0], sizes = [128, 4], strides = [1, 1]} : vector<128x8xf32> to vector<128x4xf32>
    %8 = vector.extract_strided_slice %5 {offsets = [0, 4], sizes = [128, 4], strides = [1, 1]} : vector<128x8xf32> to vector<128x4xf32>
    %c0_7 = arith.constant 0 : index
    %c0_8 = arith.constant 0 : index
    %9 = vector.load %arg4[%c0_7, %c0_8] : memref<128x4xf32, #tpu.memory_space<vmem>>, vector<128x4xf32>
    %cst_9 = arith.constant 0.00999999977 : f32
    %10 = vector.broadcast %cst_9 : f32 to vector<128x4xf32>
    %11 = arith.mulf %8, %10 : vector<128x4xf32>
    %12 = math.exp %11 : vector<128x4xf32>
    %13 = arith.mulf %9, %12 : vector<128x4xf32>
    %14 = arith.addf %7, %13 : vector<128x4xf32>
    %c0_10 = arith.constant 0 : index
    %c0_11 = arith.constant 0 : index
    %15 = vector.load %arg6[%c0_10, %c0_11] : memref<128x4xf32, #tpu.memory_space<vmem>>, vector<128x4xf32>
    tpu.vector_store %arg6[%c0_10, %c0_11], %14 {strides = array<i32>} : memref<128x4xf32, #tpu.memory_space<vmem>>, vector<128x4xf32>,
    return
  }
  func.func @transform_0(%arg0: i32) -> (i32, i32) {
    %c0_i32 = arith.constant 0 : i32
    %c0_i32_0 = arith.constant 0 : i32
    return %arg0, %c0_i32 : i32, i32
  }
  func.func @transform_1(%arg0: i32) -> (i32, i32) {
    %c0_i32 = arith.constant 0 : i32
    %c0_i32_0 = arith.constant 0 : i32
    %c0_i32_1 = arith.constant 0 : i32
    return %c0_i32, %c0_i32_0 : i32, i32
  }
  func.func @transform_2(%arg0: i32) -> (i32, i32) {
    %c0_i32 = arith.constant 0 : i32
    %c0_i32_0 = arith.constant 0 : i32
    %c0_i32_1 = arith.constant 0 : i32
    return %c0_i32, %c0_i32_0 : i32, i32
  }
  func.func @transform_3(%arg0: i32) -> (i32, i32) {
    %c0_i32 = arith.constant 0 : i32
    %c0_i32_0 = arith.constant 0 : i32
    return %arg0, %c0_i32 : i32, i32
  }
  func.func @transform_4(%arg0: i32) -> (i32, i32) {
    %c0_i32 = arith.constant 0 : i32
    %c0_i32_0 = arith.constant 0 : i32
    return %arg0, %c0_i32 : i32, i32
  }
  func.func @transform_5(%arg0: i32) -> (i32, i32) {
    %c0_i32 = arith.constant 0 : i32
    %c0_i32_0 = arith.constant 0 : i32
    return %arg0, %c0_i32 : i32, i32
  }
}

module attributes {stable_mosaic.version = 11 : i64} {
  func.func @_decoder_kernel(%arg0: i32, %arg1: memref<128x4xbf16, #tpu.memory_space<vmem>>, %arg2: memref<4x64xbf16, #tpu.memory_space<vmem>>, %arg3: memref<1x64xf32, #tpu.memory_space<vmem>>, %arg4: memref<1x64xf32, #tpu.memory_space<vmem>>, %arg5: memref<64x256xbf16, #tpu.memory_space<vmem>>, %arg6: memref<1x256xf32, #tpu.memory_space<vmem>>, %arg7: memref<1x256xf32, #tpu.memory_space<vmem>>, %arg8: memref<256x16xbf16, #tpu.memory_space<vmem>>, %arg9: memref<1x16xf32, #tpu.memory_space<vmem>>, %arg10: memref<128x16xf32, #tpu.memory_space<vmem>>) attributes {dimension_semantics = [#tpu.dimension_semantics<parallel>], iteration_bounds = array<i64: 2>, scalar_prefetch = 0 : i64, scratch_operands = 0 : i64, tpu.core_type = #tpu.core_type<tc>, window_params = [{transform_indices = @transform_0, window_bounds = array<i64: 128, 4>}, {pipeline_mode = #tpu.pipeline_mode<synchronous>, transform_indices = @transform_1, window_bounds = array<i64: 4, 64>}, {pipeline_mode = #tpu.pipeline_mode<synchronous>, transform_indices = @transform_2, window_bounds = array<i64: 1, 64>}, {pipeline_mode = #tpu.pipeline_mode<synchronous>, transform_indices = @transform_3, window_bounds = array<i64: 1, 64>}, {pipeline_mode = #tpu.pipeline_mode<synchronous>, transform_indices = @transform_4, window_bounds = array<i64: 64, 256>}, {pipeline_mode = #tpu.pipeline_mode<synchronous>, transform_indices = @transform_5, window_bounds = array<i64: 1, 256>}, {pipeline_mode = #tpu.pipeline_mode<synchronous>, transform_indices = @transform_6, window_bounds = array<i64: 1, 256>}, {pipeline_mode = #tpu.pipeline_mode<synchronous>, transform_indices = @transform_7, window_bounds = array<i64: 256, 16>}, {pipeline_mode = #tpu.pipeline_mode<synchronous>, transform_indices = @transform_8, window_bounds = array<i64: 1, 16>}, {transform_indices = @transform_9, window_bounds = array<i64: 128, 16>}]} {
    %c0 = arith.constant 0 : index
    %c0_0 = arith.constant 0 : index
    %0 = vector.load %arg1[%c0, %c0_0] : memref<128x4xbf16, #tpu.memory_space<vmem>>, vector<128x4xbf16>
    %c0_1 = arith.constant 0 : index
    %c0_2 = arith.constant 0 : index
    %1 = vector.load %arg2[%c0_1, %c0_2] : memref<4x64xbf16, #tpu.memory_space<vmem>>, vector<4x64xbf16>
    %cst = arith.constant dense<0.000000e+00> : vector<128x64xf32>
    %2 = tpu.matmul %0, %1, %cst {dimension_numbers = #tpu.dot_dimension_numbers<[1], [0], [0], [1], [0, 0, 1, 1], [], []>} : vector<128x4xbf16>, vector<4x64xbf16>, vector<128x64xf32> -> vector<128x64xf32>
    %c0_3 = arith.constant 0 : index
    %c0_4 = arith.constant 0 : index
    %3 = vector.load %arg3[%c0_3, %c0_4] : memref<1x64xf32, #tpu.memory_space<vmem>>, vector<1x64xf32>
    %4 = vector.broadcast %3 : vector<1x64xf32> to vector<128x64xf32>
    %5 = arith.mulf %2, %4 : vector<128x64xf32>
    %c0_5 = arith.constant 0 : index
    %c0_6 = arith.constant 0 : index
    %6 = vector.load %arg4[%c0_5, %c0_6] : memref<1x64xf32, #tpu.memory_space<vmem>>, vector<1x64xf32>
    %7 = vector.broadcast %6 : vector<1x64xf32> to vector<128x64xf32>
    %8 = arith.addf %5, %7 : vector<128x64xf32>
    %cst_7 = arith.constant 0.000000e+00 : f32
    %9 = vector.broadcast %cst_7 : f32 to vector<128x64xf32>
    %10 = arith.cmpf oge, %8, %9 : vector<128x64xf32>
    %cst_8 = arith.constant 2.000000e-01 : f32
    %11 = vector.broadcast %cst_8 : f32 to vector<128x64xf32>
    %12 = arith.mulf %11, %8 : vector<128x64xf32>
    %13 = arith.select %10, %8, %12 : vector<128x64xi1>, vector<128x64xf32>
    %14 = arith.truncf %13 : vector<128x64xf32> to vector<128x64xbf16>
    %c0_9 = arith.constant 0 : index
    %c0_10 = arith.constant 0 : index
    %15 = vector.load %arg5[%c0_9, %c0_10] : memref<64x256xbf16, #tpu.memory_space<vmem>>, vector<64x256xbf16>
    %cst_11 = arith.constant dense<0.000000e+00> : vector<128x256xf32>
    %16 = tpu.matmul %14, %15, %cst_11 {dimension_numbers = #tpu.dot_dimension_numbers<[1], [0], [0], [1], [0, 0, 1, 1], [], []>} : vector<128x64xbf16>, vector<64x256xbf16>, vector<128x256xf32> -> vector<128x256xf32>
    %c0_12 = arith.constant 0 : index
    %c0_13 = arith.constant 0 : index
    %17 = vector.load %arg6[%c0_12, %c0_13] : memref<1x256xf32, #tpu.memory_space<vmem>>, vector<1x256xf32>
    %18 = vector.broadcast %17 : vector<1x256xf32> to vector<128x256xf32>
    %19 = arith.mulf %16, %18 : vector<128x256xf32>
    %c0_14 = arith.constant 0 : index
    %c0_15 = arith.constant 0 : index
    %20 = vector.load %arg7[%c0_14, %c0_15] : memref<1x256xf32, #tpu.memory_space<vmem>>, vector<1x256xf32>
    %21 = vector.broadcast %20 : vector<1x256xf32> to vector<128x256xf32>
    %22 = arith.addf %19, %21 : vector<128x256xf32>
    %cst_16 = arith.constant 0.000000e+00 : f32
    %23 = vector.broadcast %cst_16 : f32 to vector<128x256xf32>
    %24 = arith.cmpf oge, %22, %23 : vector<128x256xf32>
    %cst_17 = arith.constant 2.000000e-01 : f32
    %25 = vector.broadcast %cst_17 : f32 to vector<128x256xf32>
    %26 = arith.mulf %25, %22 : vector<128x256xf32>
    %27 = arith.select %24, %22, %26 : vector<128x256xi1>, vector<128x256xf32>
    %28 = arith.truncf %27 : vector<128x256xf32> to vector<128x256xbf16>
    %c0_18 = arith.constant 0 : index
    %c0_19 = arith.constant 0 : index
    %29 = vector.load %arg8[%c0_18, %c0_19] : memref<256x16xbf16, #tpu.memory_space<vmem>>, vector<256x16xbf16>
    %cst_20 = arith.constant dense<0.000000e+00> : vector<128x16xf32>
    %30 = tpu.matmul %28, %29, %cst_20 {dimension_numbers = #tpu.dot_dimension_numbers<[1], [0], [0], [1], [0, 0, 1, 1], [], []>} : vector<128x256xbf16>, vector<256x16xbf16>, vector<128x16xf32> -> vector<128x16xf32>
    %c0_21 = arith.constant 0 : index
    %c0_22 = arith.constant 0 : index
    %31 = vector.load %arg9[%c0_21, %c0_22] : memref<1x16xf32, #tpu.memory_space<vmem>>, vector<1x16xf32>
    %32 = vector.broadcast %31 : vector<1x16xf32> to vector<128x16xf32>
    %33 = arith.addf %30, %32 : vector<128x16xf32>
    %34 = arith.negf %33 : vector<128x16xf32>
    %35 = math.exp %34 : vector<128x16xf32>
    %cst_23 = arith.constant 1.000000e+00 : f32
    %36 = vector.broadcast %cst_23 : f32 to vector<128x16xf32>
    %37 = arith.addf %36, %35 : vector<128x16xf32>
    %38 = arith.divf %36, %37 : vector<128x16xf32>
    %c0_24 = arith.constant 0 : index
    %c0_25 = arith.constant 0 : index
    %39 = vector.load %arg10[%c0_24, %c0_25] : memref<128x16xf32, #tpu.memory_space<vmem>>, vector<128x16xf32>
    tpu.vector_store %arg10[%c0_24, %c0_25], %38 {strides = array<i32>} : memref<128x16xf32, #tpu.memory_space<vmem>>, vector<128x16xf32>,
    return
  }
  func.func @transform_0(%arg0: i32) -> (i32, i32) {
    %c0_i32 = arith.constant 0 : i32
    %c0_i32_0 = arith.constant 0 : i32
    return %arg0, %c0_i32 : i32, i32
  }
  func.func @transform_1(%arg0: i32) -> (i32, i32) {
    %c0_i32 = arith.constant 0 : i32
    %c0_i32_0 = arith.constant 0 : i32
    %c0_i32_1 = arith.constant 0 : i32
    return %c0_i32, %c0_i32_0 : i32, i32
  }
  func.func @transform_2(%arg0: i32) -> (i32, i32) {
    %c0_i32 = arith.constant 0 : i32
    %c0_i32_0 = arith.constant 0 : i32
    %c0_i32_1 = arith.constant 0 : i32
    return %c0_i32, %c0_i32_0 : i32, i32
  }
  func.func @transform_3(%arg0: i32) -> (i32, i32) {
    %c0_i32 = arith.constant 0 : i32
    %c0_i32_0 = arith.constant 0 : i32
    %c0_i32_1 = arith.constant 0 : i32
    return %c0_i32, %c0_i32_0 : i32, i32
  }
  func.func @transform_4(%arg0: i32) -> (i32, i32) {
    %c0_i32 = arith.constant 0 : i32
    %c0_i32_0 = arith.constant 0 : i32
    %c0_i32_1 = arith.constant 0 : i32
    return %c0_i32, %c0_i32_0 : i32, i32
  }
  func.func @transform_5(%arg0: i32) -> (i32, i32) {
    %c0_i32 = arith.constant 0 : i32
    %c0_i32_0 = arith.constant 0 : i32
    %c0_i32_1 = arith.constant 0 : i32
    return %c0_i32, %c0_i32_0 : i32, i32
  }
  func.func @transform_6(%arg0: i32) -> (i32, i32) {
    %c0_i32 = arith.constant 0 : i32
    %c0_i32_0 = arith.constant 0 : i32
    %c0_i32_1 = arith.constant 0 : i32
    return %c0_i32, %c0_i32_0 : i32, i32
  }
  func.func @transform_7(%arg0: i32) -> (i32, i32) {
    %c0_i32 = arith.constant 0 : i32
    %c0_i32_0 = arith.constant 0 : i32
    %c0_i32_1 = arith.constant 0 : i32
    return %c0_i32, %c0_i32_0 : i32, i32
  }
  func.func @transform_8(%arg0: i32) -> (i32, i32) {
    %c0_i32 = arith.constant 0 : i32
    %c0_i32_0 = arith.constant 0 : i32
    %c0_i32_1 = arith.constant 0 : i32
    return %c0_i32, %c0_i32_0 : i32, i32
  }
  func.func @transform_9(%arg0: i32) -> (i32, i32) {
    %c0_i32 = arith.constant 0 : i32
    %c0_i32_0 = arith.constant 0 : i32
    return %arg0, %c0_i32 : i32, i32
  }
}

module attributes {stable_mosaic.version = 11 : i64} {
  func.func @_mm_affine_act_kernel(%arg0: i32, %arg1: memref<128x36xbf16, #tpu.memory_space<vmem>>, %arg2: memref<36x4xbf16, #tpu.memory_space<vmem>>, %arg3: memref<1x4xf32, #tpu.memory_space<vmem>>, %arg4: memref<1x4xf32, #tpu.memory_space<vmem>>, %arg5: memref<128x4xf32, #tpu.memory_space<vmem>>) attributes {dimension_semantics = [#tpu.dimension_semantics<parallel>], iteration_bounds = array<i64: 2>, scalar_prefetch = 0 : i64, scratch_operands = 0 : i64, tpu.core_type = #tpu.core_type<tc>, window_params = [{transform_indices = @transform_0, window_bounds = array<i64: 128, 36>}, {pipeline_mode = #tpu.pipeline_mode<synchronous>, transform_indices = @transform_1, window_bounds = array<i64: 36, 4>}, {pipeline_mode = #tpu.pipeline_mode<synchronous>, transform_indices = @transform_2, window_bounds = array<i64: 1, 4>}, {pipeline_mode = #tpu.pipeline_mode<synchronous>, transform_indices = @transform_3, window_bounds = array<i64: 1, 4>}, {transform_indices = @transform_4, window_bounds = array<i64: 128, 4>}]} {
    %c0 = arith.constant 0 : index
    %c0_0 = arith.constant 0 : index
    %0 = vector.load %arg1[%c0, %c0_0] : memref<128x36xbf16, #tpu.memory_space<vmem>>, vector<128x36xbf16>
    %c0_1 = arith.constant 0 : index
    %c0_2 = arith.constant 0 : index
    %1 = vector.load %arg2[%c0_1, %c0_2] : memref<36x4xbf16, #tpu.memory_space<vmem>>, vector<36x4xbf16>
    %cst = arith.constant dense<0.000000e+00> : vector<128x4xf32>
    %2 = tpu.matmul %0, %1, %cst {dimension_numbers = #tpu.dot_dimension_numbers<[1], [0], [0], [1], [0, 0, 1, 1], [], []>} : vector<128x36xbf16>, vector<36x4xbf16>, vector<128x4xf32> -> vector<128x4xf32>
    %c0_3 = arith.constant 0 : index
    %c0_4 = arith.constant 0 : index
    %3 = vector.load %arg3[%c0_3, %c0_4] : memref<1x4xf32, #tpu.memory_space<vmem>>, vector<1x4xf32>
    %4 = vector.broadcast %3 : vector<1x4xf32> to vector<128x4xf32>
    %5 = arith.mulf %2, %4 : vector<128x4xf32>
    %c0_5 = arith.constant 0 : index
    %c0_6 = arith.constant 0 : index
    %6 = vector.load %arg4[%c0_5, %c0_6] : memref<1x4xf32, #tpu.memory_space<vmem>>, vector<1x4xf32>
    %7 = vector.broadcast %6 : vector<1x4xf32> to vector<128x4xf32>
    %8 = arith.addf %5, %7 : vector<128x4xf32>
    %cst_7 = arith.constant dense<0xFF800000> : vector<128xf32>
    %9 = vector.multi_reduction <maximumf>, %8, %cst_7 [1] : vector<128x4xf32> to vector<128xf32>
    %10 = vector.shape_cast %9 : vector<128xf32> to vector<128x1xf32>
    %11 = vector.broadcast %10 : vector<128x1xf32> to vector<128x4xf32>
    %12 = arith.subf %8, %11 : vector<128x4xf32>
    %13 = math.exp %12 : vector<128x4xf32>
    %cst_8 = arith.constant dense<0.000000e+00> : vector<128xf32>
    %14 = vector.multi_reduction <add>, %13, %cst_8 [1] : vector<128x4xf32> to vector<128xf32>
    %15 = vector.shape_cast %14 : vector<128xf32> to vector<128x1xf32>
    %16 = vector.broadcast %15 : vector<128x1xf32> to vector<128x4xf32>
    %17 = arith.divf %13, %16 : vector<128x4xf32>
    %c0_9 = arith.constant 0 : index
    %c0_10 = arith.constant 0 : index
    %18 = vector.load %arg5[%c0_9, %c0_10] : memref<128x4xf32, #tpu.memory_space<vmem>>, vector<128x4xf32>
    tpu.vector_store %arg5[%c0_9, %c0_10], %17 {strides = array<i32>} : memref<128x4xf32, #tpu.memory_space<vmem>>, vector<128x4xf32>,
    return
  }
  func.func @transform_0(%arg0: i32) -> (i32, i32) {
    %c0_i32 = arith.constant 0 : i32
    %c0_i32_0 = arith.constant 0 : i32
    return %arg0, %c0_i32 : i32, i32
  }
  func.func @transform_1(%arg0: i32) -> (i32, i32) {
    %c0_i32 = arith.constant 0 : i32
    %c0_i32_0 = arith.constant 0 : i32
    %c0_i32_1 = arith.constant 0 : i32
    return %c0_i32, %c0_i32_0 : i32, i32
  }
  func.func @transform_2(%arg0: i32) -> (i32, i32) {
    %c0_i32 = arith.constant 0 : i32
    %c0_i32_0 = arith.constant 0 : i32
    %c0_i32_1 = arith.constant 0 : i32
    return %c0_i32, %c0_i32_0 : i32, i32
  }
  func.func @transform_3(%arg0: i32) -> (i32, i32) {
    %c0_i32 = arith.constant 0 : i32
    %c0_i32_0 = arith.constant 0 : i32
    %c0_i32_1 = arith.constant 0 : i32
    return %c0_i32, %c0_i32_0 : i32, i32
  }
  func.func @transform_4(%arg0: i32) -> (i32, i32) {
    %c0_i32 = arith.constant 0 : i32
    %c0_i32_0 = arith.constant 0 : i32
    return %arg0, %c0_i32 : i32, i32
  }
}

module attributes {stable_mosaic.version = 11 : i64} {
  func.func @_mm_affine_act_kernel(%arg0: i32, %arg1: memref<128x36xbf16, #tpu.memory_space<vmem>>, %arg2: memref<36x4xbf16, #tpu.memory_space<vmem>>, %arg3: memref<1x4xf32, #tpu.memory_space<vmem>>, %arg4: memref<1x4xf32, #tpu.memory_space<vmem>>, %arg5: memref<128x4xf32, #tpu.memory_space<vmem>>) attributes {dimension_semantics = [#tpu.dimension_semantics<parallel>], iteration_bounds = array<i64: 2>, scalar_prefetch = 0 : i64, scratch_operands = 0 : i64, tpu.core_type = #tpu.core_type<tc>, window_params = [{transform_indices = @transform_0, window_bounds = array<i64: 128, 36>}, {pipeline_mode = #tpu.pipeline_mode<synchronous>, transform_indices = @transform_1, window_bounds = array<i64: 36, 4>}, {pipeline_mode = #tpu.pipeline_mode<synchronous>, transform_indices = @transform_2, window_bounds = array<i64: 1, 4>}, {pipeline_mode = #tpu.pipeline_mode<synchronous>, transform_indices = @transform_3, window_bounds = array<i64: 1, 4>}, {transform_indices = @transform_4, window_bounds = array<i64: 128, 4>}]} {
    %c0 = arith.constant 0 : index
    %c0_0 = arith.constant 0 : index
    %0 = vector.load %arg1[%c0, %c0_0] : memref<128x36xbf16, #tpu.memory_space<vmem>>, vector<128x36xbf16>
    %c0_1 = arith.constant 0 : index
    %c0_2 = arith.constant 0 : index
    %1 = vector.load %arg2[%c0_1, %c0_2] : memref<36x4xbf16, #tpu.memory_space<vmem>>, vector<36x4xbf16>
    %cst = arith.constant dense<0.000000e+00> : vector<128x4xf32>
    %2 = tpu.matmul %0, %1, %cst {dimension_numbers = #tpu.dot_dimension_numbers<[1], [0], [0], [1], [0, 0, 1, 1], [], []>} : vector<128x36xbf16>, vector<36x4xbf16>, vector<128x4xf32> -> vector<128x4xf32>
    %c0_3 = arith.constant 0 : index
    %c0_4 = arith.constant 0 : index
    %3 = vector.load %arg3[%c0_3, %c0_4] : memref<1x4xf32, #tpu.memory_space<vmem>>, vector<1x4xf32>
    %4 = vector.broadcast %3 : vector<1x4xf32> to vector<128x4xf32>
    %5 = arith.mulf %2, %4 : vector<128x4xf32>
    %c0_5 = arith.constant 0 : index
    %c0_6 = arith.constant 0 : index
    %6 = vector.load %arg4[%c0_5, %c0_6] : memref<1x4xf32, #tpu.memory_space<vmem>>, vector<1x4xf32>
    %7 = vector.broadcast %6 : vector<1x4xf32> to vector<128x4xf32>
    %8 = arith.addf %5, %7 : vector<128x4xf32>
    %cst_7 = arith.constant 0.000000e+00 : f32
    %9 = vector.broadcast %cst_7 : f32 to vector<128x4xf32>
    %10 = arith.cmpf oge, %8, %9 : vector<128x4xf32>
    %cst_8 = arith.constant 2.000000e-01 : f32
    %11 = vector.broadcast %cst_8 : f32 to vector<128x4xf32>
    %12 = arith.mulf %11, %8 : vector<128x4xf32>
    %13 = arith.select %10, %8, %12 : vector<128x4xi1>, vector<128x4xf32>
    %c0_9 = arith.constant 0 : index
    %c0_10 = arith.constant 0 : index
    %14 = vector.load %arg5[%c0_9, %c0_10] : memref<128x4xf32, #tpu.memory_space<vmem>>, vector<128x4xf32>
    tpu.vector_store %arg5[%c0_9, %c0_10], %13 {strides = array<i32>} : memref<128x4xf32, #tpu.memory_space<vmem>>, vector<128x4xf32>,
    return
  }
  func.func @transform_0(%arg0: i32) -> (i32, i32) {
    %c0_i32 = arith.constant 0 : i32
    %c0_i32_0 = arith.constant 0 : i32
    return %arg0, %c0_i32 : i32, i32
  }
  func.func @transform_1(%arg0: i32) -> (i32, i32) {
    %c0_i32 = arith.constant 0 : i32
    %c0_i32_0 = arith.constant 0 : i32
    %c0_i32_1 = arith.constant 0 : i32
    return %c0_i32, %c0_i32_0 : i32, i32
  }
  func.func @transform_2(%arg0: i32) -> (i32, i32) {
    %c0_i32 = arith.constant 0 : i32
    %c0_i32_0 = arith.constant 0 : i32
    %c0_i32_1 = arith.constant 0 : i32
    return %c0_i32, %c0_i32_0 : i32, i32
  }
  func.func @transform_3(%arg0: i32) -> (i32, i32) {
    %c0_i32 = arith.constant 0 : i32
    %c0_i32_0 = arith.constant 0 : i32
    %c0_i32_1 = arith.constant 0 : i32
    return %c0_i32, %c0_i32_0 : i32, i32
  }
  func.func @transform_4(%arg0: i32) -> (i32, i32) {
    %c0_i32 = arith.constant 0 : i32
    %c0_i32_0 = arith.constant 0 : i32
    return %arg0, %c0_i32 : i32, i32
  }
}

module attributes {stable_mosaic.version = 11 : i64} {
  func.func @_vecmat_kernel(%arg0: i32, %arg1: memref<128x4xf32, #tpu.memory_space<vmem>>, %arg2: memref<128x16xf32, #tpu.memory_space<vmem>>, %arg3: memref<128x4xf32, #tpu.memory_space<vmem>>) attributes {dimension_semantics = [#tpu.dimension_semantics<parallel>], iteration_bounds = array<i64: 2>, scalar_prefetch = 0 : i64, scratch_operands = 0 : i64, tpu.core_type = #tpu.core_type<tc>, window_params = [{transform_indices = @transform_0, window_bounds = array<i64: 128, 4>}, {transform_indices = @transform_1, window_bounds = array<i64: 128, 16>}, {transform_indices = @transform_2, window_bounds = array<i64: 128, 4>}]} {
    %c0 = arith.constant 0 : index
    %c0_0 = arith.constant 0 : index
    %0 = vector.load %arg1[%c0, %c0_0] : memref<128x4xf32, #tpu.memory_space<vmem>>, vector<128x4xf32>
    %c0_1 = arith.constant 0 : index
    %c0_2 = arith.constant 0 : index
    %1 = vector.load %arg2[%c0_1, %c0_2] : memref<128x16xf32, #tpu.memory_space<vmem>>, vector<128x16xf32>
    %2 = vector.extract_strided_slice %0 {offsets = [0, 0], sizes = [128, 1], strides = [1, 1]} : vector<128x4xf32> to vector<128x1xf32>
    %3 = vector.extract_strided_slice %1 {offsets = [0, 0], sizes = [128, 4], strides = [1, 1]} : vector<128x16xf32> to vector<128x4xf32>
    %4 = vector.broadcast %2 : vector<128x1xf32> to vector<128x4xf32>
    %5 = arith.mulf %4, %3 : vector<128x4xf32>
    %6 = vector.extract_strided_slice %0 {offsets = [0, 1], sizes = [128, 1], strides = [1, 1]} : vector<128x4xf32> to vector<128x1xf32>
    %7 = vector.extract_strided_slice %1 {offsets = [0, 4], sizes = [128, 4], strides = [1, 1]} : vector<128x16xf32> to vector<128x4xf32>
    %8 = vector.broadcast %6 : vector<128x1xf32> to vector<128x4xf32>
    %9 = arith.mulf %8, %7 : vector<128x4xf32>
    %10 = arith.addf %5, %9 : vector<128x4xf32>
    %11 = vector.extract_strided_slice %0 {offsets = [0, 2], sizes = [128, 1], strides = [1, 1]} : vector<128x4xf32> to vector<128x1xf32>
    %12 = vector.extract_strided_slice %1 {offsets = [0, 8], sizes = [128, 4], strides = [1, 1]} : vector<128x16xf32> to vector<128x4xf32>
    %13 = vector.broadcast %11 : vector<128x1xf32> to vector<128x4xf32>
    %14 = arith.mulf %13, %12 : vector<128x4xf32>
    %15 = arith.addf %10, %14 : vector<128x4xf32>
    %16 = vector.extract_strided_slice %0 {offsets = [0, 3], sizes = [128, 1], strides = [1, 1]} : vector<128x4xf32> to vector<128x1xf32>
    %17 = vector.extract_strided_slice %1 {offsets = [0, 12], sizes = [128, 4], strides = [1, 1]} : vector<128x16xf32> to vector<128x4xf32>
    %18 = vector.broadcast %16 : vector<128x1xf32> to vector<128x4xf32>
    %19 = arith.mulf %18, %17 : vector<128x4xf32>
    %20 = arith.addf %15, %19 : vector<128x4xf32>
    %c0_3 = arith.constant 0 : index
    %c0_4 = arith.constant 0 : index
    %21 = vector.load %arg3[%c0_3, %c0_4] : memref<128x4xf32, #tpu.memory_space<vmem>>, vector<128x4xf32>
    tpu.vector_store %arg3[%c0_3, %c0_4], %20 {strides = array<i32>} : memref<128x4xf32, #tpu.memory_space<vmem>>, vector<128x4xf32>,
    return
  }
  func.func @transform_0(%arg0: i32) -> (i32, i32) {
    %c0_i32 = arith.constant 0 : i32
    %c0_i32_0 = arith.constant 0 : i32
    return %arg0, %c0_i32 : i32, i32
  }
  func.func @transform_1(%arg0: i32) -> (i32, i32) {
    %c0_i32 = arith.constant 0 : i32
    %c0_i32_0 = arith.constant 0 : i32
    return %arg0, %c0_i32 : i32, i32
  }
  func.func @transform_2(%arg0: i32) -> (i32, i32) {
    %c0_i32 = arith.constant 0 : i32
    %c0_i32_0 = arith.constant 0 : i32
    return %arg0, %c0_i32 : i32, i32
  }
}

</mosaic_0001>

<llo_original>
// kernel: pgmsu_forward.10
$region0: #{pgmsu_forward.10}
  #allocation0 [shape = 'u32[]', space=smem, size = 0x4, offset = 0x4, fixed_abs, tag = 'smem constant byte address 0x4 - core index']
  #allocation1 [shape = 'u32[144,128]{1,0:T(1,128)}', space=vmem, size = 0x12000, scoped, tag = 'internal scratch']
  %s0 = inlined_call_operand.vmem [shape: bf16[256,36], index: 0, kind: input, shape index: {}]
  %s1 = inlined_call_operand.vmem [shape: bf16[36,8], index: 1, kind: input, shape index: {}]
  %s2 = inlined_call_operand.vmem [shape: f32[1,8], index: 2, kind: input, shape index: {}]
  %s3 = inlined_call_operand.vmem [shape: f32[1,8], index: 3, kind: input, shape index: {}]
  %s4 = inlined_call_operand.vmem [shape: f32[256,8], index: 4, kind: output, shape index: {}]
  %s5 = sld [smem:[#allocation0]]
  $region49: #{pgmsu_forward.10} parent=0
    _
  %s7 = ssub.s32 1, %s5
  %s8 = scalar_select 0, %s7, %s5
  loop: start=0, step=1, limit=4
  $region2: #{pgmsu_forward.10} parent=0 // loop_pre_header
    _
  $region3: #{pgmsu_forward.10} parent=0 // loop_header
    %s10 = sphi 0, %s14
    %p11 = scmp.ge.s32.totalorder %s10, 4
    %s20 = sphi 0, %s22
    %s23 = sphi 0, %s20
    %s24 = sphi 0, %s23
    %s40 = sphi 0, %s24
    %s44 = sphi 0, %s44
    %s46 = sphi 0, %s44
    %s47 = sphi 0, %s46
    %s61 = sphi 0, %s47
    %s65 = sphi 0, %s65
    %s67 = sphi 0, %s65
    %s68 = sphi 0, %s67
    %s82 = sphi 0, %s68
    %s86 = sphi 0, %s86
    %s88 = sphi 0, %s86
    %s89 = sphi 0, %s88
    %s103 = sphi 0, %s89
    %s109 = sphi 0, %s111
    %s112 = sphi 0, %s109
    %s113 = sphi 0, %s112
    %s129 = sphi 0, %s113
  $region4: #{pgmsu_forward.10} parent=0 // loop_header_branch
    %13 = sbr.rel (%p11) target = $region8
  $region5: #{pgmsu_forward.10} parent=0 // loop_body
    %s15 = ssub.s32 %s10, 1
    %s16 = ssub.s32 %s10, 2
    %s17 = sadd.s32 %s10, 1
    %s18 = ssub.s32 %s10, %s17
    %p19 = scmp.eq.s32.totalorder %s18, 0
    %s21 = sadd.s32 %s20, 1
    %s22 = scalar_select %p19, %s20, %s21
    %p25 = pneg %p19
    %p26 = scmp.eq.s32.totalorder %s10, 1
    %p27 = por %p25, %p26
    %p28 = scmp.ne.s32.totalorder %s20, %s23
    %p29 = scmp.eq.s32.totalorder %s10, 0
    %p30 = por %p28, %p29
    %p31 = scmp.ne.s32.totalorder %s20, %s23
    %p32 = scmp.eq.s32.totalorder %s15, 1
    %p33 = por %p31, %p32
    %p34 = scmp.ne.s32.totalorder %s23, %s24
    %p35 = scmp.eq.s32.totalorder %s15, 0
    %p36 = por %p34, %p35
    %p37 = scmp.ne.s32.totalorder %s23, %s24
    %p38 = scmp.eq.s32.totalorder %s16, 1
    %p39 = por %p37, %p38
    %p41 = scmp.ne.s32.totalorder %s24, %s40
    %p42 = scmp.eq.s32.totalorder %s16, 0
    %p43 = por %p41, %p42
    %s45 = sadd.s32 %s44, 1
    %p48 = scmp.eq.s32.totalorder %s10, 1
    %p49 = scmp.ne.s32.totalorder %s44, %s46
    %p50 = scmp.eq.s32.totalorder %s10, 0
    %p51 = por %p49, %p50
    %p52 = scmp.ne.s32.totalorder %s44, %s46
    %p53 = scmp.eq.s32.totalorder %s15, 1
    %p54 = por %p52, %p53
    %p55 = scmp.ne.s32.totalorder %s46, %s47
    %p56 = scmp.eq.s32.totalorder %s15, 0
    %p57 = por %p55, %p56
    %p58 = scmp.ne.s32.totalorder %s46, %s47
    %p59 = scmp.eq.s32.totalorder %s16, 1
    %p60 = por %p58, %p59
    %p62 = scmp.ne.s32.totalorder %s47, %s61
    %p63 = scmp.eq.s32.totalorder %s16, 0
    %p64 = por %p62, %p63
    %s66 = sadd.s32 %s65, 1
    %p69 = scmp.eq.s32.totalorder %s10, 1
    %p70 = scmp.ne.s32.totalorder %s65, %s67
    %p71 = scmp.eq.s32.totalorder %s10, 0
    %p72 = por %p70, %p71
    %p73 = scmp.ne.s32.totalorder %s65, %s67
    %p74 = scmp.eq.s32.totalorder %s15, 1
    %p75 = por %p73, %p74
    %p76 = scmp.ne.s32.totalorder %s67, %s68
    %p77 = scmp.eq.s32.totalorder %s15, 0
    %p78 = por %p76, %p77
    %p79 = scmp.ne.s32.totalorder %s67, %s68
    %p80 = scmp.eq.s32.totalorder %s16, 1
    %p81 = por %p79, %p80
    %p83 = scmp.ne.s32.totalorder %s68, %s82
    %p84 = scmp.eq.s32.totalorder %s16, 0
    %p85 = por %p83, %p84
    %s87 = sadd.s32 %s86, 1
    %p90 = scmp.eq.s32.totalorder %s10, 1
    %p91 = scmp.ne.s32.totalorder %s86, %s88
    %p92 = scmp.eq.s32.totalorder %s10, 0
    %p93 = por %p91, %p92
    %p94 = scmp.ne.s32.totalorder %s86, %s88
    %p95 = scmp.eq.s32.totalorder %s15, 1
    %p96 = por %p94, %p95
    %p97 = scmp.ne.s32.totalorder %s88, %s89
    %p98 = scmp.eq.s32.totalorder %s15, 0
    %p99 = por %p97, %p98
    %p100 = scmp.ne.s32.totalorder %s88, %s89
    %p101 = scmp.eq.s32.totalorder %s16, 1
    %p102 = por %p100, %p101
    %p104 = scmp.ne.s32.totalorder %s89, %s103
    %p105 = scmp.eq.s32.totalorder %s16, 0
    %p106 = por %p104, %p105
    %s107 = ssub.s32 %s10, %s17
    %p108 = scmp.eq.s32.totalorder %s107, 0
    %s110 = sadd.s32 %s109, 1
    %s111 = scalar_select %p108, %s109, %s110
    %p114 = pneg %p108
    %p115 = scmp.eq.s32.totalorder %s10, 1
    %p116 = por %p114, %p115
    %p117 = scmp.ne.s32.totalorder %s109, %s112
    %p118 = scmp.eq.s32.totalorder %s10, 0
    %p119 = por %p117, %p118
    %p120 = scmp.ne.s32.totalorder %s109, %s112
    %p121 = scmp.eq.s32.totalorder %s15, 1
    %p122 = por %p120, %p121
    %p123 = scmp.ne.s32.totalorder %s112, %s113
    %p124 = scmp.eq.s32.totalorder %s15, 0
    %p125 = por %p123, %p124
    %p126 = scmp.ne.s32.totalorder %s112, %s113
    %p127 = scmp.eq.s32.totalorder %s16, 1
    %p128 = por %p126, %p127
    %p130 = scmp.ne.s32.totalorder %s113, %s129
    %p131 = scmp.eq.s32.totalorder %s16, 0
    %p132 = por %p130, %p131
    %p133 = scmp.le.s32.totalorder 1, %s10
    %p134 = scmp.lt.s32.totalorder %s10, 3
    %p135 = pnand %p133, %p134
    %p136 = pneg %p135
    // Predicated region
    $region9: #{pgmsu_forward.10} parent=5 // pred_check
      _
    $region10: #{pgmsu_forward.10} parent=5 // pred_check_branch
      %138 = sbr.rel (%p135) target = $region12
    $region11: #{pgmsu_forward.10} parent=5 // pred_region
      %s139 = ssub.s32 %s10, 1
      // Predicated region
      $region13: #{pgmsu_forward.10} parent=11 // pred_check
        %p140 = pneg %p57
      $region14: #{pgmsu_forward.10} parent=11 // pred_check_branch
        %142 = sbr.rel (%p140) target = $region16
      $region15: #{pgmsu_forward.10} parent=11 // pred_region
        _
      $region16: #{pgmsu_forward.10} parent=11 // pred_fallthru
        _
      // Predicated region
      $region17: #{pgmsu_forward.10} parent=11 // pred_check
        %p143 = pneg %p78
      $region18: #{pgmsu_forward.10} parent=11 // pred_check_branch
        %145 = sbr.rel (%p143) target = $region20
      $region19: #{pgmsu_forward.10} parent=11 // pred_region
        _
      $region20: #{pgmsu_forward.10} parent=11 // pred_fallthru
        _
      // Predicated region
      $region21: #{pgmsu_forward.10} parent=11 // pred_check
        %p146 = pneg %p99
      $region22: #{pgmsu_forward.10} parent=11 // pred_check_branch
        %148 = sbr.rel (%p146) target = $region24
      $region23: #{pgmsu_forward.10} parent=11 // pred_region
        _
      $region24: #{pgmsu_forward.10} parent=11 // pred_fallthru
        _
    $region12: #{pgmsu_forward.10} parent=5 // pred_fallthru
      _
    %p149 = scmp.lt.s32.totalorder %s10, 2
    // Predicated region
    $region25: #{pgmsu_forward.10} parent=5 // pred_check
      %p150 = pneg %p149
    $region26: #{pgmsu_forward.10} parent=5 // pred_check_branch
      %152 = sbr.rel (%p150) target = $region28
    $region27: #{pgmsu_forward.10} parent=5 // pred_region
      // Predicated region
      $region29: #{pgmsu_forward.10} parent=27 // pred_check
        %p153 = pneg %p30
      $region30: #{pgmsu_forward.10} parent=27 // pred_check_branch
        %155 = sbr.rel (%p153) target = $region32
      $region31: #{pgmsu_forward.10} parent=27 // pred_region
        %s156 = smul.u32 16, %s10
        %p157 = scmp.lt.s32.totalorder %s156, 31
        %s158 = scalar_select %p157, %s156, 31
        %s159 = smul.addr %s158, 4
        %s160 = scalar_lea.vmem %s0, %s159
        %s161 = smul.u32 16, %s10
      $region32: #{pgmsu_forward.10} parent=27 // pred_fallthru
        _
    $region28: #{pgmsu_forward.10} parent=5 // pred_fallthru
      _
    %p162 = scmp.le.s32.totalorder 1, %s10
    %p163 = scmp.lt.s32.totalorder %s10, 3
    %p164 = pnand %p162, %p163
    %p165 = pneg %p164
    // Predicated region
    $region33: #{pgmsu_forward.10} parent=5 // pred_check
      _
    $region34: #{pgmsu_forward.10} parent=5 // pred_check_branch
      %167 = sbr.rel (%p164) target = $region36
    $region35: #{pgmsu_forward.10} parent=5 // pred_region
      %s168 = ssub.s32 %s10, 1
      %s169 = smul.u32 16, %s15
      %p170 = scmp.lt.s32.totalorder %s169, 31
      %s171 = scalar_select %p170, %s169, 31
      %s172 = smul.addr %s171, 4
      %s173 = scalar_lea.vmem %s0, %s172
      %p174 = pneg %p36
      %p175 = pneg %p33
      %p176 = pneg %p57
      %p177 = pneg %p54
      %p178 = pneg %p78
      %p179 = pneg %p75
      %p180 = pneg %p99
      %p181 = pneg %p96
      %p182 = pneg %p125
      %p183 = pneg %p122
      %s184 = smul.u32 16, %s15
      %p185 = scmp.lt.s32.totalorder %s184, 31
      %s186 = scalar_select %p185, %s184, 31
      %s187 = smul.addr %s186, 8
      %s188 = scalar_lea.vmem %s4, %s187
      %s189 = smul.u32 16, %s15
      %p190 = scmp.lt.s32.totalorder %s189, 31
      %s191 = scalar_select %p190, %s189, 31
      %s192 = smul.addr %s191, 4
      %s193 = scalar_lea.vmem %s0, %s192
      %s194 = smul.u32 16, %s15
      %s195 = smul.u32 16, %s15
      %p196 = scmp.lt.s32.totalorder %s195, 31
      %s197 = scalar_select %p196, %s195, 31
      %s198 = smul.addr %s197, 8
      %s199 = scalar_lea.vmem %s4, %s198
      %s200 = smul.u32 16, %s15
      %v202 = vld [vmem:[%s193] sm:$0xf]
      %v203 = vld [vmem:[%s193 + $0x4] sm:$0xf]
      %v204 = vld [vmem:[%s193 + $0x8] sm:$0xf]
      %v205 = vld [vmem:[%s193 + $0xc] sm:$0xf]
      %v206 = vld [vmem:[%s193 + $0x10] sm:$0xf]
      %v207 = vld [vmem:[%s193 + $0x14] sm:$0xf]
      %v208 = vld [vmem:[%s193 + $0x18] sm:$0xf]
      %v209 = vld [vmem:[%s193 + $0x1c] sm:$0xf]
      %v210 = vld [vmem:[%s193 + $0x20] sm:$0xf]
      %v211 = vld [vmem:[%s193 + $0x24] sm:$0xf]
      %v212 = vld [vmem:[%s193 + $0x28] sm:$0xf]
      %v213 = vld [vmem:[%s193 + $0x2c] sm:$0xf]
      %v214 = vld [vmem:[%s193 + $0x30] sm:$0xf]
      %v215 = vld [vmem:[%s193 + $0x34] sm:$0xf]
      %v216 = vld [vmem:[%s193 + $0x38] sm:$0xf]
      %v217 = vld [vmem:[%s193 + $0x3c] sm:$0xf]
      %v218 = vld [vmem:[%s1] sm:$0xf]
      %v219 = vld [vmem:[%s1 + $0x4] sm:$0xf]
      %v220 = vld [vmem:[%s1 + $0x8] sm:$0xf]
      %v221 = vld [vmem:[%s1 + $0xc] sm:$0xf]
      %v222 = vld [vmem:[%s1 + $0x10] sm:$0x3]
      %v239 = vunpack.c.l.b16 %v202
      %v240 = vunpack.c.l.b16 %v203
      %v241 = vunpack.c.l.b16 %v204
      %v242 = vunpack.c.l.b16 %v205
      %v243 = vunpack.c.l.b16 %v206
      %v244 = vunpack.c.l.b16 %v207
      %v245 = vunpack.c.l.b16 %v208
      %v246 = vunpack.c.l.b16 %v209
      %v247 = vunpack.c.l.b16 %v210
      %v248 = vunpack.c.l.b16 %v211
      %v249 = vunpack.c.l.b16 %v212
      %v250 = vunpack.c.l.b16 %v213
      %v251 = vunpack.c.l.b16 %v214
      %v252 = vunpack.c.l.b16 %v215
      %v253 = vunpack.c.l.b16 %v216
      %v254 = vunpack.c.l.b16 %v217
      %v255 = vpack.c.b16 %v240, %v239
      %v256 = vpack.c.b16 %v242, %v241
      %v257 = vpack.c.b16 %v244, %v243
      %v258 = vpack.c.b16 %v246, %v245
      %v259 = vpack.c.b16 %v248, %v247
      %v260 = vpack.c.b16 %v250, %v249
      %v261 = vpack.c.b16 %v252, %v251
      %v262 = vpack.c.b16 %v254, %v253
      %v268 = vunpack.c.l.b16 %v218
      %v269 = vunpack.c.l.b16 %v219
      %v270 = vunpack.c.l.b16 %v220
      %v271 = vunpack.c.l.b16 %v221
      %v272 = vunpack.c.l.b16 %v222
      %v273 = vpack.c.b16 %v269, %v268
      %v274 = vpack.c.b16 %v271, %v270
      %v275 = vpack.c.b16 %v272, %v272
      %vm278 = vcmask 293888
      %v280 = vsel %vm278, %v255, 0
      %v283 = vsel %vm278, %v256, 0
      %v286 = vsel %vm278, %v257, 0
      %v289 = vsel %vm278, %v258, 0
      %v292 = vsel %vm278, %v259, 0
      %v295 = vsel %vm278, %v260, 0
      %v298 = vsel %vm278, %v261, 0
      %v301 = vsel %vm278, %v262, 0
      %vm303 = vcmask 1041408
      %v305 = vsel %vm303, %v275, 0
      %307 = vmatprep.subr.bf16.mxu0 0
      %308 = vmatpush1.bf16.msra.mxu0 %v273
      %309 = vmatprep.subr.bf16.mxu0 0
      %310 = vmatpush1.bf16.msra.mxu0 %v274
      %311 = vmatprep.subr.bf16.mxu0 0
      %312 = vmatpush1.bf16.msra.mxu0 %v305
      %313 = vmatprep.subr.bf16.mxu0 0
      %314 = vmatpush1.bf16.msra.mxu0 0
      %315 = vmatprep.subr.bf16.mxu0 0
      %316 = vmatpush1.bf16.msra.mxu0 0
      %317 = vmatprep.subr.bf16.mxu0 0
      %318 = vmatpush1.bf16.msra.mxu0 0
      %319 = vmatprep.subr.bf16.mxu0 0
      %320 = vmatpush1.bf16.msra.mxu0 0
      %321 = vmatprep.subr.bf16.mxu0 0
      %322 = vmatpush1.bf16.msra.mxu0 0
      %323 = vmatprep.subr.bf16.mxu0 0
      %324 = vmatpush1.bf16.msra.mxu0 0
      %325 = vmatprep.subr.bf16.mxu0 0
      %326 = vmatpush1.bf16.msra.mxu0 0
      %327 = vmatprep.subr.bf16.mxu0 0
      %328 = vmatpush1.bf16.msra.mxu0 0
      %329 = vmatprep.subr.bf16.mxu0 0
      %330 = vmatpush1.bf16.msra.mxu0 0
      %331 = vmatprep.subr.bf16.mxu0 0
      %332 = vmatpush1.bf16.msra.mxu0 0
      %333 = vmatprep.subr.bf16.mxu0 0
      %334 = vmatpush1.bf16.msra.mxu0 0
      %335 = vmatprep.subr.bf16.mxu0 0
      %336 = vmatpush1.bf16.msra.mxu0 0
      %337 = vmatprep.subr.bf16.mxu0 0
      %338 = vmatpush1.bf16.msra.mxu0 0
      %339 = vmatprep.mubr.bf16.mxu0 0
      %340 = vmatmul.mubr.bf16.gmra.mrb[0].mxu0 %v280
      %v341 = vpop.f32.mrb[0].mxu0
      %v342 = vadd.f32 0.0, %v341
      %v343 = vpop.f32.mrb[0].mxu0
      %v344 = vpop.f32.mrb[0].mxu0
      %v345 = vadd.f32 0.0, %v344
      %v346 = vpop.f32.mrb[0].mxu0
      %347 = vmatprep.mubr.bf16.mxu0 0
      %348 = vmatmul.mubr.bf16.gmra.mrb[0].mxu0 %v283
      %v349 = vpop.f32.mrb[0].mxu0
      %v350 = vadd.f32 0.0, %v349
      %v351 = vpop.f32.mrb[0].mxu0
      %v352 = vpop.f32.mrb[0].mxu0
      %v353 = vadd.f32 0.0, %v352
      %v354 = vpop.f32.mrb[0].mxu0
      %355 = vmatprep.mubr.bf16.mxu0 0
      %356 = vmatmul.mubr.bf16.gmra.mrb[0].mxu0 %v286
      %v357 = vpop.f32.mrb[0].mxu0
      %v358 = vadd.f32 0.0, %v357
      %v359 = vpop.f32.mrb[0].mxu0
      %v360 = vpop.f32.mrb[0].mxu0
      %v361 = vadd.f32 0.0, %v360
      %v362 = vpop.f32.mrb[0].mxu0
      %363 = vmatprep.mubr.bf16.mxu0 0
      %364 = vmatmul.mubr.bf16.gmra.mrb[0].mxu0 %v289
      %v365 = vpop.f32.mrb[0].mxu0
      %v366 = vadd.f32 0.0, %v365
      %v367 = vpop.f32.mrb[0].mxu0
      %v368 = vpop.f32.mrb[0].mxu0
      %v369 = vadd.f32 0.0, %v368
      %v370 = vpop.f32.mrb[0].mxu0
      %371 = vmatprep.mubr.bf16.mxu0 0
      %372 = vmatmul.mubr.bf16.gmra.mrb[0].mxu0 %v292
      %v373 = vpop.f32.mrb[0].mxu0
      %v374 = vadd.f32 0.0, %v373
      %v375 = vpop.f32.mrb[0].mxu0
      %v376 = vpop.f32.mrb[0].mxu0
      %v377 = vadd.f32 0.0, %v376
      %v378 = vpop.f32.mrb[0].mxu0
      %379 = vmatprep.mubr.bf16.mxu0 0
      %380 = vmatmul.mubr.bf16.gmra.mrb[0].mxu0 %v295
      %v381 = vpop.f32.mrb[0].mxu0
      %v382 = vadd.f32 0.0, %v381
      %v383 = vpop.f32.mrb[0].mxu0
      %v384 = vpop.f32.mrb[0].mxu0
      %v385 = vadd.f32 0.0, %v384
      %v386 = vpop.f32.mrb[0].mxu0
      %387 = vmatprep.mubr.bf16.mxu0 0
      %388 = vmatmul.mubr.bf16.gmra.mrb[0].mxu0 %v298
      %v389 = vpop.f32.mrb[0].mxu0
      %v390 = vadd.f32 0.0, %v389
      %v391 = vpop.f32.mrb[0].mxu0
      %v392 = vpop.f32.mrb[0].mxu0
      %v393 = vadd.f32 0.0, %v392
      %v394 = vpop.f32.mrb[0].mxu0
      %395 = vmatprep.mubr.bf16.mxu0 0
      %396 = vmatmul.mubr.bf16.gmra.mrb[0].mxu0 %v301
      %v397 = vpop.f32.mrb[0].mxu0
      %v398 = vadd.f32 0.0, %v397
      %v399 = vpop.f32.mrb[0].mxu0
      %v400 = vpop.f32.mrb[0].mxu0
      %v401 = vadd.f32 0.0, %v400
      %v402 = vpop.f32.mrb[0].mxu0
      %403 = vdwg.mxu0
      %v404 = vld [vmem:[%s2] sm:$0x1]
      %v406 = vlaneseq
      %v407 = vshrl.u32 %v406, 7
      %v408 = vsub.s32 0, %v407
      %v409 = vrot.slane %v404, %v408
      %v411 = vmul.f32 %v342, %v409
      %v412 = vmul.f32 %v345, %v409
      %v413 = vmul.f32 %v350, %v409
      %v414 = vmul.f32 %v353, %v409
      %v415 = vmul.f32 %v358, %v409
      %v416 = vmul.f32 %v361, %v409
      %v417 = vmul.f32 %v366, %v409
      %v418 = vmul.f32 %v369, %v409
      %v419 = vmul.f32 %v374, %v409
      %v420 = vmul.f32 %v377, %v409
      %v421 = vmul.f32 %v382, %v409
      %v422 = vmul.f32 %v385, %v409
      %v423 = vmul.f32 %v390, %v409
      %v424 = vmul.f32 %v393, %v409
      %v425 = vmul.f32 %v398, %v409
      %v426 = vmul.f32 %v401, %v409
      %v427 = vld [vmem:[%s3] sm:$0x1]
      %v429 = vlaneseq
      %v430 = vshrl.u32 %v429, 7
      %v431 = vsub.s32 0, %v430
      %v432 = vrot.slane %v427, %v431
      %v434 = vadd.f32 %v411, %v432
      %v435 = vadd.f32 %v412, %v432
      %v436 = vadd.f32 %v413, %v432
      %v437 = vadd.f32 %v414, %v432
      %v438 = vadd.f32 %v415, %v432
      %v439 = vadd.f32 %v416, %v432
      %v440 = vadd.f32 %v417, %v432
      %v441 = vadd.f32 %v418, %v432
      %v442 = vadd.f32 %v419, %v432
      %v443 = vadd.f32 %v420, %v432
      %v444 = vadd.f32 %v421, %v432
      %v445 = vadd.f32 %v422, %v432
      %v446 = vadd.f32 %v423, %v432
      %v447 = vadd.f32 %v424, %v432
      %v448 = vadd.f32 %v425, %v432
      %v449 = vadd.f32 %v426, %v432
      %vm450 = vcmp.ge.f32.partialorder %v434, 0.0
      %vm451 = vcmp.ge.f32.partialorder %v435, 0.0
      %vm452 = vcmp.ge.f32.partialorder %v436, 0.0
      %vm453 = vcmp.ge.f32.partialorder %v437, 0.0
      %vm454 = vcmp.ge.f32.partialorder %v438, 0.0
      %vm455 = vcmp.ge.f32.partialorder %v439, 0.0
      %vm456 = vcmp.ge.f32.partialorder %v440, 0.0
      %vm457 = vcmp.ge.f32.partialorder %v441, 0.0
      %vm458 = vcmp.ge.f32.partialorder %v442, 0.0
      %vm459 = vcmp.ge.f32.partialorder %v443, 0.0
      %vm460 = vcmp.ge.f32.partialorder %v444, 0.0
      %vm461 = vcmp.ge.f32.partialorder %v445, 0.0
      %vm462 = vcmp.ge.f32.partialorder %v446, 0.0
      %vm463 = vcmp.ge.f32.partialorder %v447, 0.0
      %vm464 = vcmp.ge.f32.partialorder %v448, 0.0
      %vm465 = vcmp.ge.f32.partialorder %v449, 0.0
      %v466 = vmul.f32 %v434, 0.2
      %v467 = vmul.f32 %v435, 0.2
      %v468 = vmul.f32 %v436, 0.2
      %v469 = vmul.f32 %v437, 0.2
      %v470 = vmul.f32 %v438, 0.2
      %v471 = vmul.f32 %v439, 0.2
      %v472 = vmul.f32 %v440, 0.2
      %v473 = vmul.f32 %v441, 0.2
      %v474 = vmul.f32 %v442, 0.2
      %v475 = vmul.f32 %v443, 0.2
      %v476 = vmul.f32 %v444, 0.2
      %v477 = vmul.f32 %v445, 0.2
      %v478 = vmul.f32 %v446, 0.2
      %v479 = vmul.f32 %v447, 0.2
      %v480 = vmul.f32 %v448, 0.2
      %v481 = vmul.f32 %v449, 0.2
      %v482 = vsel %vm450, %v434, %v466
      %v483 = vsel %vm451, %v435, %v467
      %v484 = vsel %vm452, %v436, %v468
      %v485 = vsel %vm453, %v437, %v469
      %v486 = vsel %vm454, %v438, %v470
      %v487 = vsel %vm455, %v439, %v471
      %v488 = vsel %vm456, %v440, %v472
      %v489 = vsel %vm457, %v441, %v473
      %v490 = vsel %vm458, %v442, %v474
      %v491 = vsel %vm459, %v443, %v475
      %v492 = vsel %vm460, %v444, %v476
      %v493 = vsel %vm461, %v445, %v477
      %v494 = vsel %vm462, %v446, %v478
      %v495 = vsel %vm463, %v447, %v479
      %v496 = vsel %vm464, %v448, %v480
      %v497 = vsel %vm465, %v449, %v481
      %vm498 = vcmask 64512
      %499 = vst.msk [vmem:[%s199] sm:$0xff] %vm498, %v482
      %500 = vst.msk [vmem:[%s199 + $0x8] sm:$0xff] %vm498, %v483
      %501 = vst.msk [vmem:[%s199 + $0x10] sm:$0xff] %vm498, %v484
      %502 = vst.msk [vmem:[%s199 + $0x18] sm:$0xff] %vm498, %v485
      %503 = vst.msk [vmem:[%s199 + $0x20] sm:$0xff] %vm498, %v486
      %504 = vst.msk [vmem:[%s199 + $0x28] sm:$0xff] %vm498, %v487
      %505 = vst.msk [vmem:[%s199 + $0x30] sm:$0xff] %vm498, %v488
      %506 = vst.msk [vmem:[%s199 + $0x38] sm:$0xff] %vm498, %v489
      %507 = vst.msk [vmem:[%s199 + $0x40] sm:$0xff] %vm498, %v490
      %508 = vst.msk [vmem:[%s199 + $0x48] sm:$0xff] %vm498, %v491
      %509 = vst.msk [vmem:[%s199 + $0x50] sm:$0xff] %vm498, %v492
      %510 = vst.msk [vmem:[%s199 + $0x58] sm:$0xff] %vm498, %v493
      %511 = vst.msk [vmem:[%s199 + $0x60] sm:$0xff] %vm498, %v494
      %512 = vst.msk [vmem:[%s199 + $0x68] sm:$0xff] %vm498, %v495
      %513 = vst.msk [vmem:[%s199 + $0x70] sm:$0xff] %vm498, %v496
      %514 = vst.msk [vmem:[%s199 + $0x78] sm:$0xff] %vm498, %v497
      %s515 = smul.u32 16, %s15
      %p516 = scmp.lt.s32.totalorder %s515, 31
      %s517 = scalar_select %p516, %s515, 31
      %s518 = smul.addr %s517, 8
      %s519 = scalar_lea.vmem %s4, %s518
      // Predicated region
      $region37: #{pgmsu_forward.10} parent=35 // pred_check
        %p520 = pneg %p122
      $region38: #{pgmsu_forward.10} parent=35 // pred_check_branch
        %522 = sbr.rel (%p520) target = $region40
      $region39: #{pgmsu_forward.10} parent=35 // pred_region
        %s523 = smul.u32 16, %s15
      $region40: #{pgmsu_forward.10} parent=35 // pred_fallthru
        _
    $region36: #{pgmsu_forward.10} parent=5 // pred_fallthru
      _
    %p524 = scmp.le.s32.totalorder 2, %s10
    // Predicated region
    $region41: #{pgmsu_forward.10} parent=5 // pred_check
      %p525 = pneg %p524
    $region42: #{pgmsu_forward.10} parent=5 // pred_check_branch
      %527 = sbr.rel (%p525) target = $region44
    $region43: #{pgmsu_forward.10} parent=5 // pred_region
      %s528 = ssub.s32 %s10, 2
      // Predicated region
      $region45: #{pgmsu_forward.10} parent=43 // pred_check
        %p529 = pneg %p128
      $region46: #{pgmsu_forward.10} parent=43 // pred_check_branch
        %531 = sbr.rel (%p529) target = $region48
      $region47: #{pgmsu_forward.10} parent=43 // pred_region
        %s532 = smul.u32 16, %s16
        %p533 = scmp.lt.s32.totalorder %s532, 31
        %s534 = scalar_select %p533, %s532, 31
        %s535 = smul.addr %s534, 8
        %s536 = scalar_lea.vmem %s4, %s535
      $region48: #{pgmsu_forward.10} parent=43 // pred_fallthru
        _
    $region44: #{pgmsu_forward.10} parent=5 // pred_fallthru
      _
  $region6: #{pgmsu_forward.10} parent=0 // loop_footer
    %s14 = sadd.s32 1, %s10
  $region7: #{pgmsu_forward.10} parent=0 // loop_footer_branch
    %9 = sbr.rel target = $region3
  $region8: #{pgmsu_forward.10} parent=0 // loop_exit
    _

// kernel: pgmsu_forward.11
$region0: #{pgmsu_forward.11}
  #allocation0 [shape = 'u32[]', space=smem, size = 0x4, offset = 0x4, fixed_abs, tag = 'smem constant byte address 0x4 - core index']
  #allocation1 [shape = 'u32[144,128]{1,0:T(1,128)}', space=vmem, size = 0x12000, scoped, tag = 'internal scratch']
  %s0 = inlined_call_operand.vmem [shape: bf16[256,72], index: 0, kind: input, shape index: {}]
  %s1 = inlined_call_operand.vmem [shape: bf16[72,8], index: 1, kind: input, shape index: {}]
  %s2 = inlined_call_operand.vmem [shape: f32[1,8], index: 2, kind: input, shape index: {}]
  %s3 = inlined_call_operand.vmem [shape: f32[1,8], index: 3, kind: input, shape index: {}]
  %s4 = inlined_call_operand.vmem [shape: f32[256,8], index: 4, kind: output, shape index: {}]
  %s5 = sld [smem:[#allocation0]]
  $region49: #{pgmsu_forward.11} parent=0
    _
  %s7 = ssub.s32 1, %s5
  %s8 = scalar_select 0, %s7, %s5
  loop: start=0, step=1, limit=4
  $region2: #{pgmsu_forward.11} parent=0 // loop_pre_header
    _
  $region3: #{pgmsu_forward.11} parent=0 // loop_header
    %s10 = sphi 0, %s14
    %p11 = scmp.ge.s32.totalorder %s10, 4
    %s20 = sphi 0, %s22
    %s23 = sphi 0, %s20
    %s24 = sphi 0, %s23
    %s40 = sphi 0, %s24
    %s44 = sphi 0, %s44
    %s46 = sphi 0, %s44
    %s47 = sphi 0, %s46
    %s61 = sphi 0, %s47
    %s65 = sphi 0, %s65
    %s67 = sphi 0, %s65
    %s68 = sphi 0, %s67
    %s82 = sphi 0, %s68
    %s86 = sphi 0, %s86
    %s88 = sphi 0, %s86
    %s89 = sphi 0, %s88
    %s103 = sphi 0, %s89
    %s109 = sphi 0, %s111
    %s112 = sphi 0, %s109
    %s113 = sphi 0, %s112
    %s129 = sphi 0, %s113
  $region4: #{pgmsu_forward.11} parent=0 // loop_header_branch
    %13 = sbr.rel (%p11) target = $region8
  $region5: #{pgmsu_forward.11} parent=0 // loop_body
    %s15 = ssub.s32 %s10, 1
    %s16 = ssub.s32 %s10, 2
    %s17 = sadd.s32 %s10, 1
    %s18 = ssub.s32 %s10, %s17
    %p19 = scmp.eq.s32.totalorder %s18, 0
    %s21 = sadd.s32 %s20, 1
    %s22 = scalar_select %p19, %s20, %s21
    %p25 = pneg %p19
    %p26 = scmp.eq.s32.totalorder %s10, 1
    %p27 = por %p25, %p26
    %p28 = scmp.ne.s32.totalorder %s20, %s23
    %p29 = scmp.eq.s32.totalorder %s10, 0
    %p30 = por %p28, %p29
    %p31 = scmp.ne.s32.totalorder %s20, %s23
    %p32 = scmp.eq.s32.totalorder %s15, 1
    %p33 = por %p31, %p32
    %p34 = scmp.ne.s32.totalorder %s23, %s24
    %p35 = scmp.eq.s32.totalorder %s15, 0
    %p36 = por %p34, %p35
    %p37 = scmp.ne.s32.totalorder %s23, %s24
    %p38 = scmp.eq.s32.totalorder %s16, 1
    %p39 = por %p37, %p38
    %p41 = scmp.ne.s32.totalorder %s24, %s40
    %p42 = scmp.eq.s32.totalorder %s16, 0
    %p43 = por %p41, %p42
    %s45 = sadd.s32 %s44, 1
    %p48 = scmp.eq.s32.totalorder %s10, 1
    %p49 = scmp.ne.s32.totalorder %s44, %s46
    %p50 = scmp.eq.s32.totalorder %s10, 0
    %p51 = por %p49, %p50
    %p52 = scmp.ne.s32.totalorder %s44, %s46
    %p53 = scmp.eq.s32.totalorder %s15, 1
    %p54 = por %p52, %p53
    %p55 = scmp.ne.s32.totalorder %s46, %s47
    %p56 = scmp.eq.s32.totalorder %s15, 0
    %p57 = por %p55, %p56
    %p58 = scmp.ne.s32.totalorder %s46, %s47
    %p59 = scmp.eq.s32.totalorder %s16, 1
    %p60 = por %p58, %p59
    %p62 = scmp.ne.s32.totalorder %s47, %s61
    %p63 = scmp.eq.s32.totalorder %s16, 0
    %p64 = por %p62, %p63
    %s66 = sadd.s32 %s65, 1
    %p69 = scmp.eq.s32.totalorder %s10, 1
    %p70 = scmp.ne.s32.totalorder %s65, %s67
    %p71 = scmp.eq.s32.totalorder %s10, 0
    %p72 = por %p70, %p71
    %p73 = scmp.ne.s32.totalorder %s65, %s67
    %p74 = scmp.eq.s32.totalorder %s15, 1
    %p75 = por %p73, %p74
    %p76 = scmp.ne.s32.totalorder %s67, %s68
    %p77 = scmp.eq.s32.totalorder %s15, 0
    %p78 = por %p76, %p77
    %p79 = scmp.ne.s32.totalorder %s67, %s68
    %p80 = scmp.eq.s32.totalorder %s16, 1
    %p81 = por %p79, %p80
    %p83 = scmp.ne.s32.totalorder %s68, %s82
    %p84 = scmp.eq.s32.totalorder %s16, 0
    %p85 = por %p83, %p84
    %s87 = sadd.s32 %s86, 1
    %p90 = scmp.eq.s32.totalorder %s10, 1
    %p91 = scmp.ne.s32.totalorder %s86, %s88
    %p92 = scmp.eq.s32.totalorder %s10, 0
    %p93 = por %p91, %p92
    %p94 = scmp.ne.s32.totalorder %s86, %s88
    %p95 = scmp.eq.s32.totalorder %s15, 1
    %p96 = por %p94, %p95
    %p97 = scmp.ne.s32.totalorder %s88, %s89
    %p98 = scmp.eq.s32.totalorder %s15, 0
    %p99 = por %p97, %p98
    %p100 = scmp.ne.s32.totalorder %s88, %s89
    %p101 = scmp.eq.s32.totalorder %s16, 1
    %p102 = por %p100, %p101
    %p104 = scmp.ne.s32.totalorder %s89, %s103
    %p105 = scmp.eq.s32.totalorder %s16, 0
    %p106 = por %p104, %p105
    %s107 = ssub.s32 %s10, %s17
    %p108 = scmp.eq.s32.totalorder %s107, 0
    %s110 = sadd.s32 %s109, 1
    %s111 = scalar_select %p108, %s109, %s110
    %p114 = pneg %p108
    %p115 = scmp.eq.s32.totalorder %s10, 1
    %p116 = por %p114, %p115
    %p117 = scmp.ne.s32.totalorder %s109, %s112
    %p118 = scmp.eq.s32.totalorder %s10, 0
    %p119 = por %p117, %p118
    %p120 = scmp.ne.s32.totalorder %s109, %s112
    %p121 = scmp.eq.s32.totalorder %s15, 1
    %p122 = por %p120, %p121
    %p123 = scmp.ne.s32.totalorder %s112, %s113
    %p124 = scmp.eq.s32.totalorder %s15, 0
    %p125 = por %p123, %p124
    %p126 = scmp.ne.s32.totalorder %s112, %s113
    %p127 = scmp.eq.s32.totalorder %s16, 1
    %p128 = por %p126, %p127
    %p130 = scmp.ne.s32.totalorder %s113, %s129
    %p131 = scmp.eq.s32.totalorder %s16, 0
    %p132 = por %p130, %p131
    %p133 = scmp.le.s32.totalorder 1, %s10
    %p134 = scmp.lt.s32.totalorder %s10, 3
    %p135 = pnand %p133, %p134
    %p136 = pneg %p135
    // Predicated region
    $region9: #{pgmsu_forward.11} parent=5 // pred_check
      _
    $region10: #{pgmsu_forward.11} parent=5 // pred_check_branch
      %138 = sbr.rel (%p135) target = $region12
    $region11: #{pgmsu_forward.11} parent=5 // pred_region
      %s139 = ssub.s32 %s10, 1
      // Predicated region
      $region13: #{pgmsu_forward.11} parent=11 // pred_check
        %p140 = pneg %p57
      $region14: #{pgmsu_forward.11} parent=11 // pred_check_branch
        %142 = sbr.rel (%p140) target = $region16
      $region15: #{pgmsu_forward.11} parent=11 // pred_region
        _
      $region16: #{pgmsu_forward.11} parent=11 // pred_fallthru
        _
      // Predicated region
      $region17: #{pgmsu_forward.11} parent=11 // pred_check
        %p143 = pneg %p78
      $region18: #{pgmsu_forward.11} parent=11 // pred_check_branch
        %145 = sbr.rel (%p143) target = $region20
      $region19: #{pgmsu_forward.11} parent=11 // pred_region
        _
      $region20: #{pgmsu_forward.11} parent=11 // pred_fallthru
        _
      // Predicated region
      $region21: #{pgmsu_forward.11} parent=11 // pred_check
        %p146 = pneg %p99
      $region22: #{pgmsu_forward.11} parent=11 // pred_check_branch
        %148 = sbr.rel (%p146) target = $region24
      $region23: #{pgmsu_forward.11} parent=11 // pred_region
        _
      $region24: #{pgmsu_forward.11} parent=11 // pred_fallthru
        _
    $region12: #{pgmsu_forward.11} parent=5 // pred_fallthru
      _
    %p149 = scmp.lt.s32.totalorder %s10, 2
    // Predicated region
    $region25: #{pgmsu_forward.11} parent=5 // pred_check
      %p150 = pneg %p149
    $region26: #{pgmsu_forward.11} parent=5 // pred_check_branch
      %152 = sbr.rel (%p150) target = $region28
    $region27: #{pgmsu_forward.11} parent=5 // pred_region
      // Predicated region
      $region29: #{pgmsu_forward.11} parent=27 // pred_check
        %p153 = pneg %p30
      $region30: #{pgmsu_forward.11} parent=27 // pred_check_branch
        %155 = sbr.rel (%p153) target = $region32
      $region31: #{pgmsu_forward.11} parent=27 // pred_region
        %s156 = smul.u32 16, %s10
        %p157 = scmp.lt.s32.totalorder %s156, 31
        %s158 = scalar_select %p157, %s156, 31
        %s159 = smul.addr %s158, 4
        %s160 = scalar_lea.vmem %s0, %s159
        %s161 = smul.u32 16, %s10
      $region32: #{pgmsu_forward.11} parent=27 // pred_fallthru
        _
    $region28: #{pgmsu_forward.11} parent=5 // pred_fallthru
      _
    %p162 = scmp.le.s32.totalorder 1, %s10
    %p163 = scmp.lt.s32.totalorder %s10, 3
    %p164 = pnand %p162, %p163
    %p165 = pneg %p164
    // Predicated region
    $region33: #{pgmsu_forward.11} parent=5 // pred_check
      _
    $region34: #{pgmsu_forward.11} parent=5 // pred_check_branch
      %167 = sbr.rel (%p164) target = $region36
    $region35: #{pgmsu_forward.11} parent=5 // pred_region
      %s168 = ssub.s32 %s10, 1
      %s169 = smul.u32 16, %s15
      %p170 = scmp.lt.s32.totalorder %s169, 31
      %s171 = scalar_select %p170, %s169, 31
      %s172 = smul.addr %s171, 4
      %s173 = scalar_lea.vmem %s0, %s172
      %p174 = pneg %p36
      %p175 = pneg %p33
      %p176 = pneg %p57
      %p177 = pneg %p54
      %p178 = pneg %p78
      %p179 = pneg %p75
      %p180 = pneg %p99
      %p181 = pneg %p96
      %p182 = pneg %p125
      %p183 = pneg %p122
      %s184 = smul.u32 16, %s15
      %p185 = scmp.lt.s32.totalorder %s184, 31
      %s186 = scalar_select %p185, %s184, 31
      %s187 = smul.addr %s186, 8
      %s188 = scalar_lea.vmem %s4, %s187
      %s189 = smul.u32 16, %s15
      %p190 = scmp.lt.s32.totalorder %s189, 31
      %s191 = scalar_select %p190, %s189, 31
      %s192 = smul.addr %s191, 4
      %s193 = scalar_lea.vmem %s0, %s192
      %s194 = smul.u32 16, %s15
      %s195 = smul.u32 16, %s15
      %p196 = scmp.lt.s32.totalorder %s195, 31
      %s197 = scalar_select %p196, %s195, 31
      %s198 = smul.addr %s197, 8
      %s199 = scalar_lea.vmem %s4, %s198
      %s200 = smul.u32 16, %s15
      %v202 = vld [vmem:[%s193] sm:$0xf]
      %v203 = vld [vmem:[%s193 + $0x4] sm:$0xf]
      %v204 = vld [vmem:[%s193 + $0x8] sm:$0xf]
      %v205 = vld [vmem:[%s193 + $0xc] sm:$0xf]
      %v206 = vld [vmem:[%s193 + $0x10] sm:$0xf]
      %v207 = vld [vmem:[%s193 + $0x14] sm:$0xf]
      %v208 = vld [vmem:[%s193 + $0x18] sm:$0xf]
      %v209 = vld [vmem:[%s193 + $0x1c] sm:$0xf]
      %v210 = vld [vmem:[%s193 + $0x20] sm:$0xf]
      %v211 = vld [vmem:[%s193 + $0x24] sm:$0xf]
      %v212 = vld [vmem:[%s193 + $0x28] sm:$0xf]
      %v213 = vld [vmem:[%s193 + $0x2c] sm:$0xf]
      %v214 = vld [vmem:[%s193 + $0x30] sm:$0xf]
      %v215 = vld [vmem:[%s193 + $0x34] sm:$0xf]
      %v216 = vld [vmem:[%s193 + $0x38] sm:$0xf]
      %v217 = vld [vmem:[%s193 + $0x3c] sm:$0xf]
      %v218 = vld [vmem:[%s1] sm:$0xf]
      %v219 = vld [vmem:[%s1 + $0x4] sm:$0xf]
      %v220 = vld [vmem:[%s1 + $0x8] sm:$0xf]
      %v221 = vld [vmem:[%s1 + $0xc] sm:$0xf]
      %v222 = vld [vmem:[%s1 + $0x10] sm:$0xf]
      %v223 = vld [vmem:[%s1 + $0x14] sm:$0xf]
      %v224 = vld [vmem:[%s1 + $0x18] sm:$0xf]
      %v225 = vld [vmem:[%s1 + $0x1c] sm:$0xf]
      %v226 = vld [vmem:[%s1 + $0x20] sm:$0xf]
      %v243 = vunpack.c.l.b16 %v202
      %v244 = vunpack.c.l.b16 %v203
      %v245 = vunpack.c.l.b16 %v204
      %v246 = vunpack.c.l.b16 %v205
      %v247 = vunpack.c.l.b16 %v206
      %v248 = vunpack.c.l.b16 %v207
      %v249 = vunpack.c.l.b16 %v208
      %v250 = vunpack.c.l.b16 %v209
      %v251 = vunpack.c.l.b16 %v210
      %v252 = vunpack.c.l.b16 %v211
      %v253 = vunpack.c.l.b16 %v212
      %v254 = vunpack.c.l.b16 %v213
      %v255 = vunpack.c.l.b16 %v214
      %v256 = vunpack.c.l.b16 %v215
      %v257 = vunpack.c.l.b16 %v216
      %v258 = vunpack.c.l.b16 %v217
      %v259 = vpack.c.b16 %v244, %v243
      %v260 = vpack.c.b16 %v246, %v245
      %v261 = vpack.c.b16 %v248, %v247
      %v262 = vpack.c.b16 %v250, %v249
      %v263 = vpack.c.b16 %v252, %v251
      %v264 = vpack.c.b16 %v254, %v253
      %v265 = vpack.c.b16 %v256, %v255
      %v266 = vpack.c.b16 %v258, %v257
      %v276 = vunpack.c.l.b16 %v218
      %v277 = vunpack.c.l.b16 %v219
      %v278 = vunpack.c.l.b16 %v220
      %v279 = vunpack.c.l.b16 %v221
      %v280 = vunpack.c.l.b16 %v222
      %v281 = vunpack.c.l.b16 %v223
      %v282 = vunpack.c.l.b16 %v224
      %v283 = vunpack.c.l.b16 %v225
      %v284 = vunpack.c.l.b16 %v226
      %v285 = vpack.c.b16 %v277, %v276
      %v286 = vpack.c.b16 %v279, %v278
      %v287 = vpack.c.b16 %v281, %v280
      %v288 = vpack.c.b16 %v283, %v282
      %v289 = vpack.c.b16 %v284, %v284
      %vm294 = vcmask 588800
      %v296 = vsel %vm294, %v259, 0
      %v299 = vsel %vm294, %v260, 0
      %v302 = vsel %vm294, %v261, 0
      %v305 = vsel %vm294, %v262, 0
      %v308 = vsel %vm294, %v263, 0
      %v311 = vsel %vm294, %v264, 0
      %v314 = vsel %vm294, %v265, 0
      %v317 = vsel %vm294, %v266, 0
      %vm319 = vcmask 1043456
      %v321 = vsel %vm319, %v289, 0
      %323 = vmatprep.subr.bf16.mxu0 0
      %324 = vmatpush1.bf16.msra.mxu0 %v285
      %325 = vmatprep.subr.bf16.mxu0 0
      %326 = vmatpush1.bf16.msra.mxu0 %v286
      %327 = vmatprep.subr.bf16.mxu0 0
      %328 = vmatpush1.bf16.msra.mxu0 %v287
      %329 = vmatprep.subr.bf16.mxu0 0
      %330 = vmatpush1.bf16.msra.mxu0 %v288
      %331 = vmatprep.subr.bf16.mxu0 0
      %332 = vmatpush1.bf16.msra.mxu0 %v321
      %333 = vmatprep.subr.bf16.mxu0 0
      %334 = vmatpush1.bf16.msra.mxu0 0
      %335 = vmatprep.subr.bf16.mxu0 0
      %336 = vmatpush1.bf16.msra.mxu0 0
      %337 = vmatprep.subr.bf16.mxu0 0
      %338 = vmatpush1.bf16.msra.mxu0 0
      %339 = vmatprep.subr.bf16.mxu0 0
      %340 = vmatpush1.bf16.msra.mxu0 0
      %341 = vmatprep.subr.bf16.mxu0 0
      %342 = vmatpush1.bf16.msra.mxu0 0
      %343 = vmatprep.subr.bf16.mxu0 0
      %344 = vmatpush1.bf16.msra.mxu0 0
      %345 = vmatprep.subr.bf16.mxu0 0
      %346 = vmatpush1.bf16.msra.mxu0 0
      %347 = vmatprep.subr.bf16.mxu0 0
      %348 = vmatpush1.bf16.msra.mxu0 0
      %349 = vmatprep.subr.bf16.mxu0 0
      %350 = vmatpush1.bf16.msra.mxu0 0
      %351 = vmatprep.subr.bf16.mxu0 0
      %352 = vmatpush1.bf16.msra.mxu0 0
      %353 = vmatprep.subr.bf16.mxu0 0
      %354 = vmatpush1.bf16.msra.mxu0 0
      %355 = vmatprep.mubr.bf16.mxu0 0
      %356 = vmatmul.mubr.bf16.gmra.mrb[0].mxu0 %v296
      %v357 = vpop.f32.mrb[0].mxu0
      %v358 = vadd.f32 0.0, %v357
      %v359 = vpop.f32.mrb[0].mxu0
      %v360 = vpop.f32.mrb[0].mxu0
      %v361 = vadd.f32 0.0, %v360
      %v362 = vpop.f32.mrb[0].mxu0
      %363 = vmatprep.mubr.bf16.mxu0 0
      %364 = vmatmul.mubr.bf16.gmra.mrb[0].mxu0 %v299
      %v365 = vpop.f32.mrb[0].mxu0
      %v366 = vadd.f32 0.0, %v365
      %v367 = vpop.f32.mrb[0].mxu0
      %v368 = vpop.f32.mrb[0].mxu0
      %v369 = vadd.f32 0.0, %v368
      %v370 = vpop.f32.mrb[0].mxu0
      %371 = vmatprep.mubr.bf16.mxu0 0
      %372 = vmatmul.mubr.bf16.gmra.mrb[0].mxu0 %v302
      %v373 = vpop.f32.mrb[0].mxu0
      %v374 = vadd.f32 0.0, %v373
      %v375 = vpop.f32.mrb[0].mxu0
      %v376 = vpop.f32.mrb[0].mxu0
      %v377 = vadd.f32 0.0, %v376
      %v378 = vpop.f32.mrb[0].mxu0
      %379 = vmatprep.mubr.bf16.mxu0 0
      %380 = vmatmul.mubr.bf16.gmra.mrb[0].mxu0 %v305
      %v381 = vpop.f32.mrb[0].mxu0
      %v382 = vadd.f32 0.0, %v381
      %v383 = vpop.f32.mrb[0].mxu0
      %v384 = vpop.f32.mrb[0].mxu0
      %v385 = vadd.f32 0.0, %v384
      %v386 = vpop.f32.mrb[0].mxu0
      %387 = vmatprep.mubr.bf16.mxu0 0
      %388 = vmatmul.mubr.bf16.gmra.mrb[0].mxu0 %v308
      %v389 = vpop.f32.mrb[0].mxu0
      %v390 = vadd.f32 0.0, %v389
      %v391 = vpop.f32.mrb[0].mxu0
      %v392 = vpop.f32.mrb[0].mxu0
      %v393 = vadd.f32 0.0, %v392
      %v394 = vpop.f32.mrb[0].mxu0
      %395 = vmatprep.mubr.bf16.mxu0 0
      %396 = vmatmul.mubr.bf16.gmra.mrb[0].mxu0 %v311
      %v397 = vpop.f32.mrb[0].mxu0
      %v398 = vadd.f32 0.0, %v397
      %v399 = vpop.f32.mrb[0].mxu0
      %v400 = vpop.f32.mrb[0].mxu0
      %v401 = vadd.f32 0.0, %v400
      %v402 = vpop.f32.mrb[0].mxu0
      %403 = vmatprep.mubr.bf16.mxu0 0
      %404 = vmatmul.mubr.bf16.gmra.mrb[0].mxu0 %v314
      %v405 = vpop.f32.mrb[0].mxu0
      %v406 = vadd.f32 0.0, %v405
      %v407 = vpop.f32.mrb[0].mxu0
      %v408 = vpop.f32.mrb[0].mxu0
      %v409 = vadd.f32 0.0, %v408
      %v410 = vpop.f32.mrb[0].mxu0
      %411 = vmatprep.mubr.bf16.mxu0 0
      %412 = vmatmul.mubr.bf16.gmra.mrb[0].mxu0 %v317
      %v413 = vpop.f32.mrb[0].mxu0
      %v414 = vadd.f32 0.0, %v413
      %v415 = vpop.f32.mrb[0].mxu0
      %v416 = vpop.f32.mrb[0].mxu0
      %v417 = vadd.f32 0.0, %v416
      %v418 = vpop.f32.mrb[0].mxu0
      %419 = vdwg.mxu0
      %v420 = vld [vmem:[%s2] sm:$0x1]
      %v422 = vlaneseq
      %v423 = vshrl.u32 %v422, 7
      %v424 = vsub.s32 0, %v423
      %v425 = vrot.slane %v420, %v424
      %v427 = vmul.f32 %v358, %v425
      %v428 = vmul.f32 %v361, %v425
      %v429 = vmul.f32 %v366, %v425
      %v430 = vmul.f32 %v369, %v425
      %v431 = vmul.f32 %v374, %v425
      %v432 = vmul.f32 %v377, %v425
      %v433 = vmul.f32 %v382, %v425
      %v434 = vmul.f32 %v385, %v425
      %v435 = vmul.f32 %v390, %v425
      %v436 = vmul.f32 %v393, %v425
      %v437 = vmul.f32 %v398, %v425
      %v438 = vmul.f32 %v401, %v425
      %v439 = vmul.f32 %v406, %v425
      %v440 = vmul.f32 %v409, %v425
      %v441 = vmul.f32 %v414, %v425
      %v442 = vmul.f32 %v417, %v425
      %v443 = vld [vmem:[%s3] sm:$0x1]
      %v445 = vlaneseq
      %v446 = vshrl.u32 %v445, 7
      %v447 = vsub.s32 0, %v446
      %v448 = vrot.slane %v443, %v447
      %v450 = vadd.f32 %v427, %v448
      %v451 = vadd.f32 %v428, %v448
      %v452 = vadd.f32 %v429, %v448
      %v453 = vadd.f32 %v430, %v448
      %v454 = vadd.f32 %v431, %v448
      %v455 = vadd.f32 %v432, %v448
      %v456 = vadd.f32 %v433, %v448
      %v457 = vadd.f32 %v434, %v448
      %v458 = vadd.f32 %v435, %v448
      %v459 = vadd.f32 %v436, %v448
      %v460 = vadd.f32 %v437, %v448
      %v461 = vadd.f32 %v438, %v448
      %v462 = vadd.f32 %v439, %v448
      %v463 = vadd.f32 %v440, %v448
      %v464 = vadd.f32 %v441, %v448
      %v465 = vadd.f32 %v442, %v448
      %vm466 = vcmp.ge.f32.partialorder %v450, 0.0
      %vm467 = vcmp.ge.f32.partialorder %v451, 0.0
      %vm468 = vcmp.ge.f32.partialorder %v452, 0.0
      %vm469 = vcmp.ge.f32.partialorder %v453, 0.0
      %vm470 = vcmp.ge.f32.partialorder %v454, 0.0
      %vm471 = vcmp.ge.f32.partialorder %v455, 0.0
      %vm472 = vcmp.ge.f32.partialorder %v456, 0.0
      %vm473 = vcmp.ge.f32.partialorder %v457, 0.0
      %vm474 = vcmp.ge.f32.partialorder %v458, 0.0
      %vm475 = vcmp.ge.f32.partialorder %v459, 0.0
      %vm476 = vcmp.ge.f32.partialorder %v460, 0.0
      %vm477 = vcmp.ge.f32.partialorder %v461, 0.0
      %vm478 = vcmp.ge.f32.partialorder %v462, 0.0
      %vm479 = vcmp.ge.f32.partialorder %v463, 0.0
      %vm480 = vcmp.ge.f32.partialorder %v464, 0.0
      %vm481 = vcmp.ge.f32.partialorder %v465, 0.0
      %v482 = vmul.f32 %v450, 0.2
      %v483 = vmul.f32 %v451, 0.2
      %v484 = vmul.f32 %v452, 0.2
      %v485 = vmul.f32 %v453, 0.2
      %v486 = vmul.f32 %v454, 0.2
      %v487 = vmul.f32 %v455, 0.2
      %v488 = vmul.f32 %v456, 0.2
      %v489 = vmul.f32 %v457, 0.2
      %v490 = vmul.f32 %v458, 0.2
      %v491 = vmul.f32 %v459, 0.2
      %v492 = vmul.f32 %v460, 0.2
      %v493 = vmul.f32 %v461, 0.2
      %v494 = vmul.f32 %v462, 0.2
      %v495 = vmul.f32 %v463, 0.2
      %v496 = vmul.f32 %v464, 0.2
      %v497 = vmul.f32 %v465, 0.2
      %v498 = vsel %vm466, %v450, %v482
      %v499 = vsel %vm467, %v451, %v483
      %v500 = vsel %vm468, %v452, %v484
      %v501 = vsel %vm469, %v453, %v485
      %v502 = vsel %vm470, %v454, %v486
      %v503 = vsel %vm471, %v455, %v487
      %v504 = vsel %vm472, %v456, %v488
      %v505 = vsel %vm473, %v457, %v489
      %v506 = vsel %vm474, %v458, %v490
      %v507 = vsel %vm475, %v459, %v491
      %v508 = vsel %vm476, %v460, %v492
      %v509 = vsel %vm477, %v461, %v493
      %v510 = vsel %vm478, %v462, %v494
      %v511 = vsel %vm479, %v463, %v495
      %v512 = vsel %vm480, %v464, %v496
      %v513 = vsel %vm481, %v465, %v497
      %vm514 = vcmask 64512
      %515 = vst.msk [vmem:[%s199] sm:$0xff] %vm514, %v498
      %516 = vst.msk [vmem:[%s199 + $0x8] sm:$0xff] %vm514, %v499
      %517 = vst.msk [vmem:[%s199 + $0x10] sm:$0xff] %vm514, %v500
      %518 = vst.msk [vmem:[%s199 + $0x18] sm:$0xff] %vm514, %v501
      %519 = vst.msk [vmem:[%s199 + $0x20] sm:$0xff] %vm514, %v502
      %520 = vst.msk [vmem:[%s199 + $0x28] sm:$0xff] %vm514, %v503
      %521 = vst.msk [vmem:[%s199 + $0x30] sm:$0xff] %vm514, %v504
      %522 = vst.msk [vmem:[%s199 + $0x38] sm:$0xff] %vm514, %v505
      %523 = vst.msk [vmem:[%s199 + $0x40] sm:$0xff] %vm514, %v506
      %524 = vst.msk [vmem:[%s199 + $0x48] sm:$0xff] %vm514, %v507
      %525 = vst.msk [vmem:[%s199 + $0x50] sm:$0xff] %vm514, %v508
      %526 = vst.msk [vmem:[%s199 + $0x58] sm:$0xff] %vm514, %v509
      %527 = vst.msk [vmem:[%s199 + $0x60] sm:$0xff] %vm514, %v510
      %528 = vst.msk [vmem:[%s199 + $0x68] sm:$0xff] %vm514, %v511
      %529 = vst.msk [vmem:[%s199 + $0x70] sm:$0xff] %vm514, %v512
      %530 = vst.msk [vmem:[%s199 + $0x78] sm:$0xff] %vm514, %v513
      %s531 = smul.u32 16, %s15
      %p532 = scmp.lt.s32.totalorder %s531, 31
      %s533 = scalar_select %p532, %s531, 31
      %s534 = smul.addr %s533, 8
      %s535 = scalar_lea.vmem %s4, %s534
      // Predicated region
      $region37: #{pgmsu_forward.11} parent=35 // pred_check
        %p536 = pneg %p122
      $region38: #{pgmsu_forward.11} parent=35 // pred_check_branch
        %538 = sbr.rel (%p536) target = $region40
      $region39: #{pgmsu_forward.11} parent=35 // pred_region
        %s539 = smul.u32 16, %s15
      $region40: #{pgmsu_forward.11} parent=35 // pred_fallthru
        _
    $region36: #{pgmsu_forward.11} parent=5 // pred_fallthru
      _
    %p540 = scmp.le.s32.totalorder 2, %s10
    // Predicated region
    $region41: #{pgmsu_forward.11} parent=5 // pred_check
      %p541 = pneg %p540
    $region42: #{pgmsu_forward.11} parent=5 // pred_check_branch
      %543 = sbr.rel (%p541) target = $region44
    $region43: #{pgmsu_forward.11} parent=5 // pred_region
      %s544 = ssub.s32 %s10, 2
      // Predicated region
      $region45: #{pgmsu_forward.11} parent=43 // pred_check
        %p545 = pneg %p128
      $region46: #{pgmsu_forward.11} parent=43 // pred_check_branch
        %547 = sbr.rel (%p545) target = $region48
      $region47: #{pgmsu_forward.11} parent=43 // pred_region
        %s548 = smul.u32 16, %s16
        %p549 = scmp.lt.s32.totalorder %s548, 31
        %s550 = scalar_select %p549, %s548, 31
        %s551 = smul.addr %s550, 8
        %s552 = scalar_lea.vmem %s4, %s551
      $region48: #{pgmsu_forward.11} parent=43 // pred_fallthru
        _
    $region44: #{pgmsu_forward.11} parent=5 // pred_fallthru
      _
  $region6: #{pgmsu_forward.11} parent=0 // loop_footer
    %s14 = sadd.s32 1, %s10
  $region7: #{pgmsu_forward.11} parent=0 // loop_footer_branch
    %9 = sbr.rel target = $region3
  $region8: #{pgmsu_forward.11} parent=0 // loop_exit
    _

// kernel: pgmsu_forward.12
$region0: #{pgmsu_forward.12}
  #allocation0 [shape = 'u32[]', space=smem, size = 0x4, offset = 0x4, fixed_abs, tag = 'smem constant byte address 0x4 - core index']
  #allocation1 [shape = 'u32[144,128]{1,0:T(1,128)}', space=vmem, size = 0x12000, scoped, tag = 'internal scratch']
  %s0 = inlined_call_operand.vmem [shape: f32[2,256,4], index: 0, kind: input, shape index: {}]
  %s1 = inlined_call_operand.vmem [shape: f32[4,4], index: 1, kind: input, shape index: {}]
  %s2 = inlined_call_operand.vmem [shape: f32[2,256,4], index: 2, kind: output, shape index: {0}]
  %s3 = inlined_call_operand.vmem [shape: f32[2,256,2], index: 3, kind: output, shape index: {1}]
  %4 = xla_tuple %s2, %s3
  %s5 = sld [smem:[#allocation0]]
  $region49: #{pgmsu_forward.12} parent=0
    _
  %s7 = ssub.s32 1, %s5
  %s8 = scalar_select 0, %s7, %s5
  loop: start=0, step=1, limit=4
  $region2: #{pgmsu_forward.12} parent=0 // loop_pre_header
    _
  $region3: #{pgmsu_forward.12} parent=0 // loop_header
    %s10 = sphi 0, %s14
    %p11 = scmp.ge.s32.totalorder %s10, 4
    %s20 = sphi 0, %s22
    %s23 = sphi 0, %s20
    %s24 = sphi 0, %s23
    %s40 = sphi 0, %s24
    %s44 = sphi 0, %s44
    %s46 = sphi 0, %s44
    %s47 = sphi 0, %s46
    %s61 = sphi 0, %s47
    %s67 = sphi 0, %s69
    %s70 = sphi 0, %s67
    %s71 = sphi 0, %s70
    %s87 = sphi 0, %s71
    %s93 = sphi 0, %s95
    %s96 = sphi 0, %s93
    %s97 = sphi 0, %s96
    %s113 = sphi 0, %s97
  $region4: #{pgmsu_forward.12} parent=0 // loop_header_branch
    %13 = sbr.rel (%p11) target = $region8
  $region5: #{pgmsu_forward.12} parent=0 // loop_body
    %s15 = ssub.s32 %s10, 1
    %s16 = ssub.s32 %s10, 2
    %s17 = sadd.s32 %s10, 1
    %s18 = ssub.s32 %s10, %s17
    %p19 = scmp.eq.s32.totalorder %s18, 0
    %s21 = sadd.s32 %s20, 1
    %s22 = scalar_select %p19, %s20, %s21
    %p25 = pneg %p19
    %p26 = scmp.eq.s32.totalorder %s10, 1
    %p27 = por %p25, %p26
    %p28 = scmp.ne.s32.totalorder %s20, %s23
    %p29 = scmp.eq.s32.totalorder %s10, 0
    %p30 = por %p28, %p29
    %p31 = scmp.ne.s32.totalorder %s20, %s23
    %p32 = scmp.eq.s32.totalorder %s15, 1
    %p33 = por %p31, %p32
    %p34 = scmp.ne.s32.totalorder %s23, %s24
    %p35 = scmp.eq.s32.totalorder %s15, 0
    %p36 = por %p34, %p35
    %p37 = scmp.ne.s32.totalorder %s23, %s24
    %p38 = scmp.eq.s32.totalorder %s16, 1
    %p39 = por %p37, %p38
    %p41 = scmp.ne.s32.totalorder %s24, %s40
    %p42 = scmp.eq.s32.totalorder %s16, 0
    %p43 = por %p41, %p42
    %s45 = sadd.s32 %s44, 1
    %p48 = scmp.eq.s32.totalorder %s10, 1
    %p49 = scmp.ne.s32.totalorder %s44, %s46
    %p50 = scmp.eq.s32.totalorder %s10, 0
    %p51 = por %p49, %p50
    %p52 = scmp.ne.s32.totalorder %s44, %s46
    %p53 = scmp.eq.s32.totalorder %s15, 1
    %p54 = por %p52, %p53
    %p55 = scmp.ne.s32.totalorder %s46, %s47
    %p56 = scmp.eq.s32.totalorder %s15, 0
    %p57 = por %p55, %p56
    %p58 = scmp.ne.s32.totalorder %s46, %s47
    %p59 = scmp.eq.s32.totalorder %s16, 1
    %p60 = por %p58, %p59
    %p62 = scmp.ne.s32.totalorder %s47, %s61
    %p63 = scmp.eq.s32.totalorder %s16, 0
    %p64 = por %p62, %p63
    %s65 = ssub.s32 %s10, %s17
    %p66 = scmp.eq.s32.totalorder %s65, 0
    %s68 = sadd.s32 %s67, 1
    %s69 = scalar_select %p66, %s67, %s68
    %p72 = pneg %p66
    %p73 = scmp.eq.s32.totalorder %s10, 1
    %p74 = por %p72, %p73
    %p75 = scmp.ne.s32.totalorder %s67, %s70
    %p76 = scmp.eq.s32.totalorder %s10, 0
    %p77 = por %p75, %p76
    %p78 = scmp.ne.s32.totalorder %s67, %s70
    %p79 = scmp.eq.s32.totalorder %s15, 1
    %p80 = por %p78, %p79
    %p81 = scmp.ne.s32.totalorder %s70, %s71
    %p82 = scmp.eq.s32.totalorder %s15, 0
    %p83 = por %p81, %p82
    %p84 = scmp.ne.s32.totalorder %s70, %s71
    %p85 = scmp.eq.s32.totalorder %s16, 1
    %p86 = por %p84, %p85
    %p88 = scmp.ne.s32.totalorder %s71, %s87
    %p89 = scmp.eq.s32.totalorder %s16, 0
    %p90 = por %p88, %p89
    %s91 = ssub.s32 %s10, %s17
    %p92 = scmp.eq.s32.totalorder %s91, 0
    %s94 = sadd.s32 %s93, 1
    %s95 = scalar_select %p92, %s93, %s94
    %p98 = pneg %p92
    %p99 = scmp.eq.s32.totalorder %s10, 1
    %p100 = por %p98, %p99
    %p101 = scmp.ne.s32.totalorder %s93, %s96
    %p102 = scmp.eq.s32.totalorder %s10, 0
    %p103 = por %p101, %p102
    %p104 = scmp.ne.s32.totalorder %s93, %s96
    %p105 = scmp.eq.s32.totalorder %s15, 1
    %p106 = por %p104, %p105
    %p107 = scmp.ne.s32.totalorder %s96, %s97
    %p108 = scmp.eq.s32.totalorder %s15, 0
    %p109 = por %p107, %p108
    %p110 = scmp.ne.s32.totalorder %s96, %s97
    %p111 = scmp.eq.s32.totalorder %s16, 1
    %p112 = por %p110, %p111
    %p114 = scmp.ne.s32.totalorder %s97, %s113
    %p115 = scmp.eq.s32.totalorder %s16, 0
    %p116 = por %p114, %p115
    %p117 = scmp.le.s32.totalorder 1, %s10
    %p118 = scmp.lt.s32.totalorder %s10, 3
    %p119 = pnand %p117, %p118
    %p120 = pneg %p119
    // Predicated region
    $region9: #{pgmsu_forward.12} parent=5 // pred_check
      _
    $region10: #{pgmsu_forward.12} parent=5 // pred_check_branch
      %122 = sbr.rel (%p119) target = $region12
    $region11: #{pgmsu_forward.12} parent=5 // pred_region
      %s123 = ssub.s32 %s10, 1
      // Predicated region
      $region13: #{pgmsu_forward.12} parent=11 // pred_check
        %p124 = pneg %p57
      $region14: #{pgmsu_forward.12} parent=11 // pred_check_branch
        %126 = sbr.rel (%p124) target = $region16
      $region15: #{pgmsu_forward.12} parent=11 // pred_region
        _
      $region16: #{pgmsu_forward.12} parent=11 // pred_fallthru
        _
    $region12: #{pgmsu_forward.12} parent=5 // pred_fallthru
      _
    %p127 = scmp.lt.s32.totalorder %s10, 2
    // Predicated region
    $region17: #{pgmsu_forward.12} parent=5 // pred_check
      %p128 = pneg %p127
    $region18: #{pgmsu_forward.12} parent=5 // pred_check_branch
      %130 = sbr.rel (%p128) target = $region20
    $region19: #{pgmsu_forward.12} parent=5 // pred_region
      // Predicated region
      $region21: #{pgmsu_forward.12} parent=19 // pred_check
        %p131 = pneg %p30
      $region22: #{pgmsu_forward.12} parent=19 // pred_check_branch
        %133 = sbr.rel (%p131) target = $region24
      $region23: #{pgmsu_forward.12} parent=19 // pred_region
        %p134 = scmp.lt.s32.totalorder %s10, 1
        %s135 = scalar_select %p134, %s10, 1
        %s136 = smul.addr %s135, 32
        %s137 = smul.addr %s136, 8
        %s138 = scalar_lea.vmem %s0, %s137
      $region24: #{pgmsu_forward.12} parent=19 // pred_fallthru
        _
    $region20: #{pgmsu_forward.12} parent=5 // pred_fallthru
      _
    %p139 = scmp.le.s32.totalorder 1, %s10
    %p140 = scmp.lt.s32.totalorder %s10, 3
    %p141 = pnand %p139, %p140
    %p142 = pneg %p141
    // Predicated region
    $region25: #{pgmsu_forward.12} parent=5 // pred_check
      _
    $region26: #{pgmsu_forward.12} parent=5 // pred_check_branch
      %144 = sbr.rel (%p141) target = $region28
    $region27: #{pgmsu_forward.12} parent=5 // pred_region
      %s145 = ssub.s32 %s10, 1
      %p146 = scmp.lt.s32.totalorder %s15, 1
      %s147 = scalar_select %p146, %s15, 1
      %s148 = smul.addr %s147, 32
      %s149 = smul.addr %s148, 8
      %s150 = scalar_lea.vmem %s0, %s149
      %p151 = pneg %p36
      %p152 = pneg %p33
      %p153 = pneg %p57
      %p154 = pneg %p54
      %p155 = pneg %p83
      %p156 = pneg %p80
      %p157 = scmp.lt.s32.totalorder %s15, 1
      %s158 = scalar_select %p157, %s15, 1
      %s159 = smul.addr %s158, 32
      %s160 = smul.addr %s159, 8
      %s161 = scalar_lea.vmem %s2, %s160
      %p162 = pneg %p109
      %p163 = pneg %p106
      %p164 = scmp.lt.s32.totalorder %s15, 1
      %s165 = scalar_select %p164, %s15, 1
      %s166 = smul.addr %s165, 32
      %s167 = smul.addr %s166, 8
      %s168 = scalar_lea.vmem %s3, %s167
      %p169 = scmp.lt.s32.totalorder %s15, 1
      %s170 = scalar_select %p169, %s15, 1
      %s171 = smul.addr %s170, 32
      %s172 = smul.addr %s171, 8
      %s173 = scalar_lea.vmem %s0, %s172
      %p174 = scmp.lt.s32.totalorder %s15, 1
      %s175 = scalar_select %p174, %s15, 1
      %s176 = smul.addr %s175, 32
      %s177 = smul.addr %s176, 8
      %s178 = scalar_lea.vmem %s2, %s177
      %p179 = scmp.lt.s32.totalorder %s15, 1
      %s180 = scalar_select %p179, %s15, 1
      %s181 = smul.addr %s180, 32
      %s182 = smul.addr %s181, 8
      %s183 = scalar_lea.vmem %s3, %s182
      %v184 = vld [vmem:[%s173] sm:$0xff]
      %v185 = vld [vmem:[%s173 + $0x8] sm:$0xff]
      %v186 = vld [vmem:[%s173 + $0x10] sm:$0xff]
      %v187 = vld [vmem:[%s173 + $0x18] sm:$0xff]
      %v188 = vld [vmem:[%s173 + $0x20] sm:$0xff]
      %v189 = vld [vmem:[%s173 + $0x28] sm:$0xff]
      %v190 = vld [vmem:[%s173 + $0x30] sm:$0xff]
      %v191 = vld [vmem:[%s173 + $0x38] sm:$0xff]
      %v192 = vld [vmem:[%s173 + $0x40] sm:$0xff]
      %v193 = vld [vmem:[%s173 + $0x48] sm:$0xff]
      %v194 = vld [vmem:[%s173 + $0x50] sm:$0xff]
      %v195 = vld [vmem:[%s173 + $0x58] sm:$0xff]
      %v196 = vld [vmem:[%s173 + $0x60] sm:$0xff]
      %v197 = vld [vmem:[%s173 + $0x68] sm:$0xff]
      %v198 = vld [vmem:[%s173 + $0x70] sm:$0xff]
      %v199 = vld [vmem:[%s173 + $0x78] sm:$0xff]
      %v200 = vld [vmem:[%s173 + $0x80] sm:$0xff]
      %v201 = vld [vmem:[%s173 + $0x88] sm:$0xff]
      %v202 = vld [vmem:[%s173 + $0x90] sm:$0xff]
      %v203 = vld [vmem:[%s173 + $0x98] sm:$0xff]
      %v204 = vld [vmem:[%s173 + $0xa0] sm:$0xff]
      %v205 = vld [vmem:[%s173 + $0xa8] sm:$0xff]
      %v206 = vld [vmem:[%s173 + $0xb0] sm:$0xff]
      %v207 = vld [vmem:[%s173 + $0xb8] sm:$0xff]
      %v208 = vld [vmem:[%s173 + $0xc0] sm:$0xff]
      %v209 = vld [vmem:[%s173 + $0xc8] sm:$0xff]
      %v210 = vld [vmem:[%s173 + $0xd0] sm:$0xff]
      %v211 = vld [vmem:[%s173 + $0xd8] sm:$0xff]
      %v212 = vld [vmem:[%s173 + $0xe0] sm:$0xff]
      %v213 = vld [vmem:[%s173 + $0xe8] sm:$0xff]
      %v214 = vld [vmem:[%s173 + $0xf0] sm:$0xff]
      %v215 = vld [vmem:[%s173 + $0xf8] sm:$0xff]
      %vm216 = vcmask 31744
      %v217 = vsel %vm216, %v184, 0.0
      %v218 = vsel %vm216, %v185, 0.0
      %v219 = vadd.f32 %v217, %v218
      %v220 = vsel %vm216, %v186, 0.0
      %v221 = vadd.f32 %v219, %v220
      %v222 = vsel %vm216, %v187, 0.0
      %v223 = vadd.f32 %v221, %v222
      %v224 = vsel %vm216, %v188, 0.0
      %v225 = vadd.f32 %v223, %v224
      %v226 = vsel %vm216, %v189, 0.0
      %v227 = vadd.f32 %v225, %v226
      %v228 = vsel %vm216, %v190, 0.0
      %v229 = vadd.f32 %v227, %v228
      %v230 = vsel %vm216, %v191, 0.0
      %v231 = vadd.f32 %v229, %v230
      %v232 = vsel %vm216, %v192, 0.0
      %v233 = vadd.f32 %v231, %v232
      %v234 = vsel %vm216, %v193, 0.0
      %v235 = vadd.f32 %v233, %v234
      %v236 = vsel %vm216, %v194, 0.0
      %v237 = vadd.f32 %v235, %v236
      %v238 = vsel %vm216, %v195, 0.0
      %v239 = vadd.f32 %v237, %v238
      %v240 = vsel %vm216, %v196, 0.0
      %v241 = vadd.f32 %v239, %v240
      %v242 = vsel %vm216, %v197, 0.0
      %v243 = vadd.f32 %v241, %v242
      %v244 = vsel %vm216, %v198, 0.0
      %v245 = vadd.f32 %v243, %v244
      %v246 = vsel %vm216, %v199, 0.0
      %v247 = vadd.f32 %v245, %v246
      %v248 = vsel %vm216, %v200, 0.0
      %v249 = vadd.f32 %v247, %v248
      %v250 = vsel %vm216, %v201, 0.0
      %v251 = vadd.f32 %v249, %v250
      %v252 = vsel %vm216, %v202, 0.0
      %v253 = vadd.f32 %v251, %v252
      %v254 = vsel %vm216, %v203, 0.0
      %v255 = vadd.f32 %v253, %v254
      %v256 = vsel %vm216, %v204, 0.0
      %v257 = vadd.f32 %v255, %v256
      %v258 = vsel %vm216, %v205, 0.0
      %v259 = vadd.f32 %v257, %v258
      %v260 = vsel %vm216, %v206, 0.0
      %v261 = vadd.f32 %v259, %v260
      %v262 = vsel %vm216, %v207, 0.0
      %v263 = vadd.f32 %v261, %v262
      %v264 = vsel %vm216, %v208, 0.0
      %v265 = vadd.f32 %v263, %v264
      %v266 = vsel %vm216, %v209, 0.0
      %v267 = vadd.f32 %v265, %v266
      %v268 = vsel %vm216, %v210, 0.0
      %v269 = vadd.f32 %v267, %v268
      %v270 = vsel %vm216, %v211, 0.0
      %v271 = vadd.f32 %v269, %v270
      %v272 = vsel %vm216, %v212, 0.0
      %v273 = vadd.f32 %v271, %v272
      %v274 = vsel %vm216, %v213, 0.0
      %v275 = vadd.f32 %v273, %v274
      %v276 = vsel %vm216, %v214, 0.0
      %v277 = vadd.f32 %v275, %v276
      %v278 = vsel %vm216, %v215, 0.0
      %v279 = vadd.f32 %v277, %v278
      %v280 = vrot.slane %v279, 4
      %v281 = vadd.f32 %v279, %v280
      %v282 = vrot.slane %v281, 2
      %v283 = vadd.f32 %v281, %v282
      %v284 = vrot.slane %v283, 1
      %v285 = vadd.f32 %v283, %v284
      %v286 = vrcp.pop 256.0
      %v287 = vmul.f32 %v285, %v286
      %v288 = vld [vmem:[%s1] sm:$0xf]
      %v290 = vsel %vm216, %v287, 0
      %vm292 = vcmask 1043456
      %v294 = vsel %vm292, %v288, 0
      %296 = vmatprep.subr.mxu0 0.0
      %297 = vmatpush1.msra.mxu0 %v294
      %298 = vmatprep.subr.mxu0 0.0
      %299 = vmatpush1.msra.mxu0 0.0
      %300 = vmatprep.subr.mxu0 0.0
      %301 = vmatpush1.msra.mxu0 0.0
      %302 = vmatprep.subr.mxu0 0.0
      %303 = vmatpush1.msra.mxu0 0.0
      %304 = vmatprep.subr.mxu0 0.0
      %305 = vmatpush1.msra.mxu0 0.0
      %306 = vmatprep.subr.mxu0 0.0
      %307 = vmatpush1.msra.mxu0 0.0
      %308 = vmatprep.subr.mxu0 0.0
      %309 = vmatpush1.msra.mxu0 0.0
      %310 = vmatprep.subr.mxu0 0.0
      %311 = vmatpush1.msra.mxu0 0.0
      %312 = vmatprep.subr.mxu0 0.0
      %313 = vmatpush1.msra.mxu0 0.0
      %314 = vmatprep.subr.mxu0 0.0
      %315 = vmatpush1.msra.mxu0 0.0
      %316 = vmatprep.subr.mxu0 0.0
      %317 = vmatpush1.msra.mxu0 0.0
      %318 = vmatprep.subr.mxu0 0.0
      %319 = vmatpush1.msra.mxu0 0.0
      %320 = vmatprep.subr.mxu0 0.0
      %321 = vmatpush1.msra.mxu0 0.0
      %322 = vmatprep.subr.mxu0 0.0
      %323 = vmatpush1.msra.mxu0 0.0
      %324 = vmatprep.subr.mxu0 0.0
      %325 = vmatpush1.msra.mxu0 0.0
      %326 = vmatprep.subr.mxu0 0.0
      %327 = vmatpush1.msra.mxu0 0.0
      %328 = vmatprep.subr.mxu0 0.0
      %329 = vmatpush1.msra.mxu0 0.0
      %330 = vmatprep.subr.mxu0 0.0
      %331 = vmatpush1.msra.mxu0 0.0
      %332 = vmatprep.subr.mxu0 0.0
      %333 = vmatpush1.msra.mxu0 0.0
      %334 = vmatprep.subr.mxu0 0.0
      %335 = vmatpush1.msra.mxu0 0.0
      %336 = vmatprep.subr.mxu0 0.0
      %337 = vmatpush1.msra.mxu0 0.0
      %338 = vmatprep.subr.mxu0 0.0
      %339 = vmatpush1.msra.mxu0 0.0
      %340 = vmatprep.subr.mxu0 0.0
      %341 = vmatpush1.msra.mxu0 0.0
      %342 = vmatprep.subr.mxu0 0.0
      %343 = vmatpush1.msra.mxu0 0.0
      %344 = vmatprep.subr.mxu0 0.0
      %345 = vmatpush1.msra.mxu0 0.0
      %346 = vmatprep.subr.mxu0 0.0
      %347 = vmatpush1.msra.mxu0 0.0
      %348 = vmatprep.subr.mxu0 0.0
      %349 = vmatpush1.msra.mxu0 0.0
      %350 = vmatprep.subr.mxu0 0.0
      %351 = vmatpush1.msra.mxu0 0.0
      %352 = vmatprep.subr.mxu0 0.0
      %353 = vmatpush1.msra.mxu0 0.0
      %354 = vmatprep.subr.mxu0 0.0
      %355 = vmatpush1.msra.mxu0 0.0
      %356 = vmatprep.subr.mxu0 0.0
      %357 = vmatpush1.msra.mxu0 0.0
      %358 = vmatprep.subr.mxu0 0.0
      %359 = vmatpush1.msra.mxu0 0.0
      %360 = vmatprep.mubr.f32.mxu0 0.0
      %361 = vmatmul.mubr.f32.gmra.mrb[0].mxu0 %v290
      %v362 = vpop.f32.mrb[0].mxu0
      %v363 = vadd.f32 0.0, %v362
      %v364 = vpop.f32.mrb[0].mxu0
      %365 = vdwg.mxu0
      %v366 = vxor.u32 %v363, 2147483648
      %v367 = vmul.f32 %v366, 1.442695
      %v368 = vpow.pop %v367
      %v369 = vadd.f32 %v368, 1.0
      %v370 = vrcp.pop %v369
      %v371 = vmul.f32 1.0, %v370
      %v372 = vlaneseq
      %v373 = vshrl.u32 %v372, 7
      %v374 = vsub.s32 0, %v373
      %v375 = vrot.slane %v371, %v374
      %v376 = vmul.f32 %v184, %v375
      %v377 = vmul.f32 %v185, %v375
      %v378 = vmul.f32 %v186, %v375
      %v379 = vmul.f32 %v187, %v375
      %v380 = vmul.f32 %v188, %v375
      %v381 = vmul.f32 %v189, %v375
      %v382 = vmul.f32 %v190, %v375
      %v383 = vmul.f32 %v191, %v375
      %v384 = vmul.f32 %v192, %v375
      %v385 = vmul.f32 %v193, %v375
      %v386 = vmul.f32 %v194, %v375
      %v387 = vmul.f32 %v195, %v375
      %v388 = vmul.f32 %v196, %v375
      %v389 = vmul.f32 %v197, %v375
      %v390 = vmul.f32 %v198, %v375
      %v391 = vmul.f32 %v199, %v375
      %v392 = vmul.f32 %v200, %v375
      %v393 = vmul.f32 %v201, %v375
      %v394 = vmul.f32 %v202, %v375
      %v395 = vmul.f32 %v203, %v375
      %v396 = vmul.f32 %v204, %v375
      %v397 = vmul.f32 %v205, %v375
      %v398 = vmul.f32 %v206, %v375
      %v399 = vmul.f32 %v207, %v375
      %v400 = vmul.f32 %v208, %v375
      %v401 = vmul.f32 %v209, %v375
      %v402 = vmul.f32 %v210, %v375
      %v403 = vmul.f32 %v211, %v375
      %v404 = vmul.f32 %v212, %v375
      %v405 = vmul.f32 %v213, %v375
      %v406 = vmul.f32 %v214, %v375
      %v407 = vmul.f32 %v215, %v375
      %408 = vst.msk [vmem:[%s178] sm:$0xff] %vm216, %v376
      %409 = vst.msk [vmem:[%s178 + $0x8] sm:$0xff] %vm216, %v377
      %410 = vst.msk [vmem:[%s178 + $0x10] sm:$0xff] %vm216, %v378
      %411 = vst.msk [vmem:[%s178 + $0x18] sm:$0xff] %vm216, %v379
      %412 = vst.msk [vmem:[%s178 + $0x20] sm:$0xff] %vm216, %v380
      %413 = vst.msk [vmem:[%s178 + $0x28] sm:$0xff] %vm216, %v381
      %414 = vst.msk [vmem:[%s178 + $0x30] sm:$0xff] %vm216, %v382
      %415 = vst.msk [vmem:[%s178 + $0x38] sm:$0xff] %vm216, %v383
      %416 = vst.msk [vmem:[%s178 + $0x40] sm:$0xff] %vm216, %v384
      %417 = vst.msk [vmem:[%s178 + $0x48] sm:$0xff] %vm216, %v385
      %418 = vst.msk [vmem:[%s178 + $0x50] sm:$0xff] %vm216, %v386
      %419 = vst.msk [vmem:[%s178 + $0x58] sm:$0xff] %vm216, %v387
      %420 = vst.msk [vmem:[%s178 + $0x60] sm:$0xff] %vm216, %v388
      %421 = vst.msk [vmem:[%s178 + $0x68] sm:$0xff] %vm216, %v389
      %422 = vst.msk [vmem:[%s178 + $0x70] sm:$0xff] %vm216, %v390
      %423 = vst.msk [vmem:[%s178 + $0x78] sm:$0xff] %vm216, %v391
      %424 = vst.msk [vmem:[%s178 + $0x80] sm:$0xff] %vm216, %v392
      %425 = vst.msk [vmem:[%s178 + $0x88] sm:$0xff] %vm216, %v393
      %426 = vst.msk [vmem:[%s178 + $0x90] sm:$0xff] %vm216, %v394
      %427 = vst.msk [vmem:[%s178 + $0x98] sm:$0xff] %vm216, %v395
      %428 = vst.msk [vmem:[%s178 + $0xa0] sm:$0xff] %vm216, %v396
      %429 = vst.msk [vmem:[%s178 + $0xa8] sm:$0xff] %vm216, %v397
      %430 = vst.msk [vmem:[%s178 + $0xb0] sm:$0xff] %vm216, %v398
      %431 = vst.msk [vmem:[%s178 + $0xb8] sm:$0xff] %vm216, %v399
      %432 = vst.msk [vmem:[%s178 + $0xc0] sm:$0xff] %vm216, %v400
      %433 = vst.msk [vmem:[%s178 + $0xc8] sm:$0xff] %vm216, %v401
      %434 = vst.msk [vmem:[%s178 + $0xd0] sm:$0xff] %vm216, %v402
      %435 = vst.msk [vmem:[%s178 + $0xd8] sm:$0xff] %vm216, %v403
      %436 = vst.msk [vmem:[%s178 + $0xe0] sm:$0xff] %vm216, %v404
      %437 = vst.msk [vmem:[%s178 + $0xe8] sm:$0xff] %vm216, %v405
      %438 = vst.msk [vmem:[%s178 + $0xf0] sm:$0xff] %vm216, %v406
      %439 = vst.msk [vmem:[%s178 + $0xf8] sm:$0xff] %vm216, %v407
      %v440 = vsel %vm216, %v376, 0.0
      %441 = vadd.xlane.f32.xlu0 %v440
      %v442 = vpop.xlane.xlu0 %441
      %v443 = vsel %vm216, %v377, 0.0
      %444 = vadd.xlane.f32.xlu0 %v443
      %v445 = vpop.xlane.xlu0 %444
      %v446 = vsel %vm216, %v378, 0.0
      %447 = vadd.xlane.f32.xlu0 %v446
      %v448 = vpop.xlane.xlu0 %447
      %v449 = vsel %vm216, %v379, 0.0
      %450 = vadd.xlane.f32.xlu0 %v449
      %v451 = vpop.xlane.xlu0 %450
      %v452 = vsel %vm216, %v380, 0.0
      %453 = vadd.xlane.f32.xlu0 %v452
      %v454 = vpop.xlane.xlu0 %453
      %v455 = vsel %vm216, %v381, 0.0
      %456 = vadd.xlane.f32.xlu0 %v455
      %v457 = vpop.xlane.xlu0 %456
      %v458 = vsel %vm216, %v382, 0.0
      %459 = vadd.xlane.f32.xlu0 %v458
      %v460 = vpop.xlane.xlu0 %459
      %v461 = vsel %vm216, %v383, 0.0
      %462 = vadd.xlane.f32.xlu0 %v461
      %v463 = vpop.xlane.xlu0 %462
      %v464 = vsel %vm216, %v384, 0.0
      %465 = vadd.xlane.f32.xlu0 %v464
      %v466 = vpop.xlane.xlu0 %465
      %v467 = vsel %vm216, %v385, 0.0
      %468 = vadd.xlane.f32.xlu0 %v467
      %v469 = vpop.xlane.xlu0 %468
      %v470 = vsel %vm216, %v386, 0.0
      %471 = vadd.xlane.f32.xlu0 %v470
      %v472 = vpop.xlane.xlu0 %471
      %v473 = vsel %vm216, %v387, 0.0
      %474 = vadd.xlane.f32.xlu0 %v473
      %v475 = vpop.xlane.xlu0 %474
      %v476 = vsel %vm216, %v388, 0.0
      %477 = vadd.xlane.f32.xlu0 %v476
      %v478 = vpop.xlane.xlu0 %477
      %v479 = vsel %vm216, %v389, 0.0
      %480 = vadd.xlane.f32.xlu0 %v479
      %v481 = vpop.xlane.xlu0 %480
      %v482 = vsel %vm216, %v390, 0.0
      %483 = vadd.xlane.f32.xlu0 %v482
      %v484 = vpop.xlane.xlu0 %483
      %v485 = vsel %vm216, %v391, 0.0
      %486 = vadd.xlane.f32.xlu0 %v485
      %v487 = vpop.xlane.xlu0 %486
      %v488 = vsel %vm216, %v392, 0.0
      %489 = vadd.xlane.f32.xlu0 %v488
      %v490 = vpop.xlane.xlu0 %489
      %v491 = vsel %vm216, %v393, 0.0
      %492 = vadd.xlane.f32.xlu0 %v491
      %v493 = vpop.xlane.xlu0 %492
      %v494 = vsel %vm216, %v394, 0.0
      %495 = vadd.xlane.f32.xlu0 %v494
      %v496 = vpop.xlane.xlu0 %495
      %v497 = vsel %vm216, %v395, 0.0
      %498 = vadd.xlane.f32.xlu0 %v497
      %v499 = vpop.xlane.xlu0 %498
      %v500 = vsel %vm216, %v396, 0.0
      %501 = vadd.xlane.f32.xlu0 %v500
      %v502 = vpop.xlane.xlu0 %501
      %v503 = vsel %vm216, %v397, 0.0
      %504 = vadd.xlane.f32.xlu0 %v503
      %v505 = vpop.xlane.xlu0 %504
      %v506 = vsel %vm216, %v398, 0.0
      %507 = vadd.xlane.f32.xlu0 %v506
      %v508 = vpop.xlane.xlu0 %507
      %v509 = vsel %vm216, %v399, 0.0
      %510 = vadd.xlane.f32.xlu0 %v509
      %v511 = vpop.xlane.xlu0 %510
      %v512 = vsel %vm216, %v400, 0.0
      %513 = vadd.xlane.f32.xlu0 %v512
      %v514 = vpop.xlane.xlu0 %513
      %v515 = vsel %vm216, %v401, 0.0
      %516 = vadd.xlane.f32.xlu0 %v515
      %v517 = vpop.xlane.xlu0 %516
      %v518 = vsel %vm216, %v402, 0.0
      %519 = vadd.xlane.f32.xlu0 %v518
      %v520 = vpop.xlane.xlu0 %519
      %v521 = vsel %vm216, %v403, 0.0
      %522 = vadd.xlane.f32.xlu0 %v521
      %v523 = vpop.xlane.xlu0 %522
      %v524 = vsel %vm216, %v404, 0.0
      %525 = vadd.xlane.f32.xlu0 %v524
      %v526 = vpop.xlane.xlu0 %525
      %v527 = vsel %vm216, %v405, 0.0
      %528 = vadd.xlane.f32.xlu0 %v527
      %v529 = vpop.xlane.xlu0 %528
      %v530 = vsel %vm216, %v406, 0.0
      %531 = vadd.xlane.f32.xlu0 %v530
      %v532 = vpop.xlane.xlu0 %531
      %v533 = vsel %vm216, %v407, 0.0
      %534 = vadd.xlane.f32.xlu0 %v533
      %v535 = vpop.xlane.xlu0 %534
      %v536 = vrcp.pop 4.0
      %v537 = vmul.f32 %v442, %v536
      %v538 = vmul.f32 %v445, %v536
      %v539 = vmul.f32 %v448, %v536
      %v540 = vmul.f32 %v451, %v536
      %v541 = vmul.f32 %v454, %v536
      %v542 = vmul.f32 %v457, %v536
      %v543 = vmul.f32 %v460, %v536
      %v544 = vmul.f32 %v463, %v536
      %v545 = vmul.f32 %v466, %v536
      %v546 = vmul.f32 %v469, %v536
      %v547 = vmul.f32 %v472, %v536
      %v548 = vmul.f32 %v475, %v536
      %v549 = vmul.f32 %v478, %v536
      %v550 = vmul.f32 %v481, %v536
      %v551 = vmul.f32 %v484, %v536
      %v552 = vmul.f32 %v487, %v536
      %v553 = vmul.f32 %v490, %v536
      %v554 = vmul.f32 %v493, %v536
      %v555 = vmul.f32 %v496, %v536
      %v556 = vmul.f32 %v499, %v536
      %v557 = vmul.f32 %v502, %v536
      %v558 = vmul.f32 %v505, %v536
      %v559 = vmul.f32 %v508, %v536
      %v560 = vmul.f32 %v511, %v536
      %v561 = vmul.f32 %v514, %v536
      %v562 = vmul.f32 %v517, %v536
      %v563 = vmul.f32 %v520, %v536
      %v564 = vmul.f32 %v523, %v536
      %v565 = vmul.f32 %v526, %v536
      %v566 = vmul.f32 %v529, %v536
      %v567 = vmul.f32 %v532, %v536
      %v568 = vmul.f32 %v535, %v536
      %v569 = vsel %vm216, %v376, -inf
      %570 = vmax.xlane.f32.xlu0 %v569
      %v571 = vpop.xlane.xlu0 %570
      %v572 = vsel %vm216, %v377, -inf
      %573 = vmax.xlane.f32.xlu0 %v572
      %v574 = vpop.xlane.xlu0 %573
      %v575 = vsel %vm216, %v378, -inf
      %576 = vmax.xlane.f32.xlu0 %v575
      %v577 = vpop.xlane.xlu0 %576
      %v578 = vsel %vm216, %v379, -inf
      %579 = vmax.xlane.f32.xlu0 %v578
      %v580 = vpop.xlane.xlu0 %579
      %v581 = vsel %vm216, %v380, -inf
      %582 = vmax.xlane.f32.xlu0 %v581
      %v583 = vpop.xlane.xlu0 %582
      %v584 = vsel %vm216, %v381, -inf
      %585 = vmax.xlane.f32.xlu0 %v584
      %v586 = vpop.xlane.xlu0 %585
      %v587 = vsel %vm216, %v382, -inf
      %588 = vmax.xlane.f32.xlu0 %v587
      %v589 = vpop.xlane.xlu0 %588
      %v590 = vsel %vm216, %v383, -inf
      %591 = vmax.xlane.f32.xlu0 %v590
      %v592 = vpop.xlane.xlu0 %591
      %v593 = vsel %vm216, %v384, -inf
      %594 = vmax.xlane.f32.xlu0 %v593
      %v595 = vpop.xlane.xlu0 %594
      %v596 = vsel %vm216, %v385, -inf
      %597 = vmax.xlane.f32.xlu0 %v596
      %v598 = vpop.xlane.xlu0 %597
      %v599 = vsel %vm216, %v386, -inf
      %600 = vmax.xlane.f32.xlu0 %v599
      %v601 = vpop.xlane.xlu0 %600
      %v602 = vsel %vm216, %v387, -inf
      %603 = vmax.xlane.f32.xlu0 %v602
      %v604 = vpop.xlane.xlu0 %603
      %v605 = vsel %vm216, %v388, -inf
      %606 = vmax.xlane.f32.xlu0 %v605
      %v607 = vpop.xlane.xlu0 %606
      %v608 = vsel %vm216, %v389, -inf
      %609 = vmax.xlane.f32.xlu0 %v608
      %v610 = vpop.xlane.xlu0 %609
      %v611 = vsel %vm216, %v390, -inf
      %612 = vmax.xlane.f32.xlu0 %v611
      %v613 = vpop.xlane.xlu0 %612
      %v614 = vsel %vm216, %v391, -inf
      %615 = vmax.xlane.f32.xlu0 %v614
      %v616 = vpop.xlane.xlu0 %615
      %v617 = vsel %vm216, %v392, -inf
      %618 = vmax.xlane.f32.xlu0 %v617
      %v619 = vpop.xlane.xlu0 %618
      %v620 = vsel %vm216, %v393, -inf
      %621 = vmax.xlane.f32.xlu0 %v620
      %v622 = vpop.xlane.xlu0 %621
      %v623 = vsel %vm216, %v394, -inf
      %624 = vmax.xlane.f32.xlu0 %v623
      %v625 = vpop.xlane.xlu0 %624
      %v626 = vsel %vm216, %v395, -inf
      %627 = vmax.xlane.f32.xlu0 %v626
      %v628 = vpop.xlane.xlu0 %627
      %v629 = vsel %vm216, %v396, -inf
      %630 = vmax.xlane.f32.xlu0 %v629
      %v631 = vpop.xlane.xlu0 %630
      %v632 = vsel %vm216, %v397, -inf
      %633 = vmax.xlane.f32.xlu0 %v632
      %v634 = vpop.xlane.xlu0 %633
      %v635 = vsel %vm216, %v398, -inf
      %636 = vmax.xlane.f32.xlu0 %v635
      %v637 = vpop.xlane.xlu0 %636
      %v638 = vsel %vm216, %v399, -inf
      %639 = vmax.xlane.f32.xlu0 %v638
      %v640 = vpop.xlane.xlu0 %639
      %v641 = vsel %vm216, %v400, -inf
      %642 = vmax.xlane.f32.xlu0 %v641
      %v643 = vpop.xlane.xlu0 %642
      %v644 = vsel %vm216, %v401, -inf
      %645 = vmax.xlane.f32.xlu0 %v644
      %v646 = vpop.xlane.xlu0 %645
      %v647 = vsel %vm216, %v402, -inf
      %648 = vmax.xlane.f32.xlu0 %v647
      %v649 = vpop.xlane.xlu0 %648
      %v650 = vsel %vm216, %v403, -inf
      %651 = vmax.xlane.f32.xlu0 %v650
      %v652 = vpop.xlane.xlu0 %651
      %v653 = vsel %vm216, %v404, -inf
      %654 = vmax.xlane.f32.xlu0 %v653
      %v655 = vpop.xlane.xlu0 %654
      %v656 = vsel %vm216, %v405, -inf
      %657 = vmax.xlane.f32.xlu0 %v656
      %v658 = vpop.xlane.xlu0 %657
      %v659 = vsel %vm216, %v406, -inf
      %660 = vmax.xlane.f32.xlu0 %v659
      %v661 = vpop.xlane.xlu0 %660
      %v662 = vsel %vm216, %v407, -inf
      %663 = vmax.xlane.f32.xlu0 %v662
      %v664 = vpop.xlane.xlu0 %663
      %vm665 = vcmask 7168
      %v666 = vsel %vm665, %v537, %v571
      %v667 = vsel %vm665, %v538, %v574
      %v668 = vsel %vm665, %v539, %v577
      %v669 = vsel %vm665, %v540, %v580
      %v670 = vsel %vm665, %v541, %v583
      %v671 = vsel %vm665, %v542, %v586
      %v672 = vsel %vm665, %v543, %v589
      %v673 = vsel %vm665, %v544, %v592
      %v674 = vsel %vm665, %v545, %v595
      %v675 = vsel %vm665, %v546, %v598
      %v676 = vsel %vm665, %v547, %v601
      %v677 = vsel %vm665, %v548, %v604
      %v678 = vsel %vm665, %v549, %v607
      %v679 = vsel %vm665, %v550, %v610
      %v680 = vsel %vm665, %v551, %v613
      %v681 = vsel %vm665, %v552, %v616
      %v682 = vsel %vm665, %v553, %v619
      %v683 = vsel %vm665, %v554, %v622
      %v684 = vsel %vm665, %v555, %v625
      %v685 = vsel %vm665, %v556, %v628
      %v686 = vsel %vm665, %v557, %v631
      %v687 = vsel %vm665, %v558, %v634
      %v688 = vsel %vm665, %v559, %v637
      %v689 = vsel %vm665, %v560, %v640
      %v690 = vsel %vm665, %v561, %v643
      %v691 = vsel %vm665, %v562, %v646
      %v692 = vsel %vm665, %v563, %v649
      %v693 = vsel %vm665, %v564, %v652
      %v694 = vsel %vm665, %v565, %v655
      %v695 = vsel %vm665, %v566, %v658
      %v696 = vsel %vm665, %v567, %v661
      %v697 = vsel %vm665, %v568, %v664
      %vm698 = vcmask 15360
      %699 = vst.msk [vmem:[%s183] sm:$0xff] %vm698, %v666
      %700 = vst.msk [vmem:[%s183 + $0x8] sm:$0xff] %vm698, %v667
      %701 = vst.msk [vmem:[%s183 + $0x10] sm:$0xff] %vm698, %v668
      %702 = vst.msk [vmem:[%s183 + $0x18] sm:$0xff] %vm698, %v669
      %703 = vst.msk [vmem:[%s183 + $0x20] sm:$0xff] %vm698, %v670
      %704 = vst.msk [vmem:[%s183 + $0x28] sm:$0xff] %vm698, %v671
      %705 = vst.msk [vmem:[%s183 + $0x30] sm:$0xff] %vm698, %v672
      %706 = vst.msk [vmem:[%s183 + $0x38] sm:$0xff] %vm698, %v673
      %707 = vst.msk [vmem:[%s183 + $0x40] sm:$0xff] %vm698, %v674
      %708 = vst.msk [vmem:[%s183 + $0x48] sm:$0xff] %vm698, %v675
      %709 = vst.msk [vmem:[%s183 + $0x50] sm:$0xff] %vm698, %v676
      %710 = vst.msk [vmem:[%s183 + $0x58] sm:$0xff] %vm698, %v677
      %711 = vst.msk [vmem:[%s183 + $0x60] sm:$0xff] %vm698, %v678
      %712 = vst.msk [vmem:[%s183 + $0x68] sm:$0xff] %vm698, %v679
      %713 = vst.msk [vmem:[%s183 + $0x70] sm:$0xff] %vm698, %v680
      %714 = vst.msk [vmem:[%s183 + $0x78] sm:$0xff] %vm698, %v681
      %715 = vst.msk [vmem:[%s183 + $0x80] sm:$0xff] %vm698, %v682
      %716 = vst.msk [vmem:[%s183 + $0x88] sm:$0xff] %vm698, %v683
      %717 = vst.msk [vmem:[%s183 + $0x90] sm:$0xff] %vm698, %v684
      %718 = vst.msk [vmem:[%s183 + $0x98] sm:$0xff] %vm698, %v685
      %719 = vst.msk [vmem:[%s183 + $0xa0] sm:$0xff] %vm698, %v686
      %720 = vst.msk [vmem:[%s183 + $0xa8] sm:$0xff] %vm698, %v687
      %721 = vst.msk [vmem:[%s183 + $0xb0] sm:$0xff] %vm698, %v688
      %722 = vst.msk [vmem:[%s183 + $0xb8] sm:$0xff] %vm698, %v689
      %723 = vst.msk [vmem:[%s183 + $0xc0] sm:$0xff] %vm698, %v690
      %724 = vst.msk [vmem:[%s183 + $0xc8] sm:$0xff] %vm698, %v691
      %725 = vst.msk [vmem:[%s183 + $0xd0] sm:$0xff] %vm698, %v692
      %726 = vst.msk [vmem:[%s183 + $0xd8] sm:$0xff] %vm698, %v693
      %727 = vst.msk [vmem:[%s183 + $0xe0] sm:$0xff] %vm698, %v694
      %728 = vst.msk [vmem:[%s183 + $0xe8] sm:$0xff] %vm698, %v695
      %729 = vst.msk [vmem:[%s183 + $0xf0] sm:$0xff] %vm698, %v696
      %730 = vst.msk [vmem:[%s183 + $0xf8] sm:$0xff] %vm698, %v697
      %p731 = scmp.lt.s32.totalorder %s15, 1
      %s732 = scalar_select %p731, %s15, 1
      %s733 = smul.addr %s732, 32
      %s734 = smul.addr %s733, 8
      %s735 = scalar_lea.vmem %s2, %s734
      %p736 = scmp.lt.s32.totalorder %s15, 1
      %s737 = scalar_select %p736, %s15, 1
      %s738 = smul.addr %s737, 32
      %s739 = smul.addr %s738, 8
      %s740 = scalar_lea.vmem %s3, %s739
      // Predicated region
      $region29: #{pgmsu_forward.12} parent=27 // pred_check
        %p741 = pneg %p80
      $region30: #{pgmsu_forward.12} parent=27 // pred_check_branch
        %743 = sbr.rel (%p741) target = $region32
      $region31: #{pgmsu_forward.12} parent=27 // pred_region
        _
      $region32: #{pgmsu_forward.12} parent=27 // pred_fallthru
        _
      // Predicated region
      $region33: #{pgmsu_forward.12} parent=27 // pred_check
        %p744 = pneg %p106
      $region34: #{pgmsu_forward.12} parent=27 // pred_check_branch
        %746 = sbr.rel (%p744) target = $region36
      $region35: #{pgmsu_forward.12} parent=27 // pred_region
        _
      $region36: #{pgmsu_forward.12} parent=27 // pred_fallthru
        _
    $region28: #{pgmsu_forward.12} parent=5 // pred_fallthru
      _
    %p747 = scmp.le.s32.totalorder 2, %s10
    // Predicated region
    $region37: #{pgmsu_forward.12} parent=5 // pred_check
      %p748 = pneg %p747
    $region38: #{pgmsu_forward.12} parent=5 // pred_check_branch
      %750 = sbr.rel (%p748) target = $region40
    $region39: #{pgmsu_forward.12} parent=5 // pred_region
      %s751 = ssub.s32 %s10, 2
      // Predicated region
      $region41: #{pgmsu_forward.12} parent=39 // pred_check
        %p752 = pneg %p86
      $region42: #{pgmsu_forward.12} parent=39 // pred_check_branch
        %754 = sbr.rel (%p752) target = $region44
      $region43: #{pgmsu_forward.12} parent=39 // pred_region
        %p755 = scmp.lt.s32.totalorder %s16, 1
        %s756 = scalar_select %p755, %s16, 1
        %s757 = smul.addr %s756, 32
        %s758 = smul.addr %s757, 8
        %s759 = scalar_lea.vmem %s2, %s758
      $region44: #{pgmsu_forward.12} parent=39 // pred_fallthru
        _
      // Predicated region
      $region45: #{pgmsu_forward.12} parent=39 // pred_check
        %p760 = pneg %p112
      $region46: #{pgmsu_forward.12} parent=39 // pred_check_branch
        %762 = sbr.rel (%p760) target = $region48
      $region47: #{pgmsu_forward.12} parent=39 // pred_region
        %p763 = scmp.lt.s32.totalorder %s16, 1
        %s764 = scalar_select %p763, %s16, 1
        %s765 = smul.addr %s764, 32
        %s766 = smul.addr %s765, 8
        %s767 = scalar_lea.vmem %s3, %s766
      $region48: #{pgmsu_forward.12} parent=39 // pred_fallthru
        _
    $region40: #{pgmsu_forward.12} parent=5 // pred_fallthru
      _
  $region6: #{pgmsu_forward.12} parent=0 // loop_footer
    %s14 = sadd.s32 1, %s10
  $region7: #{pgmsu_forward.12} parent=0 // loop_footer_branch
    %9 = sbr.rel target = $region3
  $region8: #{pgmsu_forward.12} parent=0 // loop_exit
    _

// kernel: pgmsu_forward.13
$region0: #{pgmsu_forward.13}
  #allocation0 [shape = 'u32[]', space=smem, size = 0x4, offset = 0x4, fixed_abs, tag = 'smem constant byte address 0x4 - core index']
  #allocation1 [shape = 'u32[144,128]{1,0:T(1,128)}', space=vmem, size = 0x12000, scoped, tag = 'internal scratch']
  %s0 = inlined_call_operand.vmem [shape: f32[512,98], index: 0, kind: input, shape index: {}]
  %s1 = inlined_call_operand.vmem [shape: f32[98,1], index: 1, kind: input, shape index: {}]
  %s2 = inlined_call_operand.vmem [shape: f32[512,4], index: 2, kind: input, shape index: {}]
  %s3 = inlined_call_operand.vmem [shape: f32[512,4], index: 3, kind: input, shape index: {}]
  %s4 = inlined_call_operand.vmem [shape: f32[512,4], index: 4, kind: output, shape index: {}]
  %s5 = sld [smem:[#allocation0]]
  $region49: #{pgmsu_forward.13} parent=0
    _
  %s7 = ssub.s32 1, %s5
  %s8 = scalar_select 0, %s7, %s5
  loop: start=0, step=1, limit=6
  $region2: #{pgmsu_forward.13} parent=0 // loop_pre_header
    _
  $region3: #{pgmsu_forward.13} parent=0 // loop_header
    %s10 = sphi 0, %s14
    %p11 = scmp.ge.s32.totalorder %s10, 6
    %s20 = sphi 0, %s22
    %s23 = sphi 0, %s20
    %s24 = sphi 0, %s23
    %s40 = sphi 0, %s24
    %s44 = sphi 0, %s44
    %s46 = sphi 0, %s44
    %s47 = sphi 0, %s46
    %s61 = sphi 0, %s47
    %s67 = sphi 0, %s69
    %s70 = sphi 0, %s67
    %s71 = sphi 0, %s70
    %s87 = sphi 0, %s71
    %s93 = sphi 0, %s95
    %s96 = sphi 0, %s93
    %s97 = sphi 0, %s96
    %s113 = sphi 0, %s97
    %s119 = sphi 0, %s121
    %s122 = sphi 0, %s119
    %s123 = sphi 0, %s122
    %s139 = sphi 0, %s123
  $region4: #{pgmsu_forward.13} parent=0 // loop_header_branch
    %13 = sbr.rel (%p11) target = $region8
  $region5: #{pgmsu_forward.13} parent=0 // loop_body
    %s15 = ssub.s32 %s10, 1
    %s16 = ssub.s32 %s10, 2
    %s17 = sadd.s32 %s10, 1
    %s18 = ssub.s32 %s10, %s17
    %p19 = scmp.eq.s32.totalorder %s18, 0
    %s21 = sadd.s32 %s20, 1
    %s22 = scalar_select %p19, %s20, %s21
    %p25 = pneg %p19
    %p26 = scmp.eq.s32.totalorder %s10, 3
    %p27 = por %p25, %p26
    %p28 = scmp.ne.s32.totalorder %s20, %s23
    %p29 = scmp.eq.s32.totalorder %s10, 0
    %p30 = por %p28, %p29
    %p31 = scmp.ne.s32.totalorder %s20, %s23
    %p32 = scmp.eq.s32.totalorder %s15, 3
    %p33 = por %p31, %p32
    %p34 = scmp.ne.s32.totalorder %s23, %s24
    %p35 = scmp.eq.s32.totalorder %s15, 0
    %p36 = por %p34, %p35
    %p37 = scmp.ne.s32.totalorder %s23, %s24
    %p38 = scmp.eq.s32.totalorder %s16, 3
    %p39 = por %p37, %p38
    %p41 = scmp.ne.s32.totalorder %s24, %s40
    %p42 = scmp.eq.s32.totalorder %s16, 0
    %p43 = por %p41, %p42
    %s45 = sadd.s32 %s44, 1
    %p48 = scmp.eq.s32.totalorder %s10, 3
    %p49 = scmp.ne.s32.totalorder %s44, %s46
    %p50 = scmp.eq.s32.totalorder %s10, 0
    %p51 = por %p49, %p50
    %p52 = scmp.ne.s32.totalorder %s44, %s46
    %p53 = scmp.eq.s32.totalorder %s15, 3
    %p54 = por %p52, %p53
    %p55 = scmp.ne.s32.totalorder %s46, %s47
    %p56 = scmp.eq.s32.totalorder %s15, 0
    %p57 = por %p55, %p56
    %p58 = scmp.ne.s32.totalorder %s46, %s47
    %p59 = scmp.eq.s32.totalorder %s16, 3
    %p60 = por %p58, %p59
    %p62 = scmp.ne.s32.totalorder %s47, %s61
    %p63 = scmp.eq.s32.totalorder %s16, 0
    %p64 = por %p62, %p63
    %s65 = ssub.s32 %s10, %s17
    %p66 = scmp.eq.s32.totalorder %s65, 0
    %s68 = sadd.s32 %s67, 1
    %s69 = scalar_select %p66, %s67, %s68
    %p72 = pneg %p66
    %p73 = scmp.eq.s32.totalorder %s10, 3
    %p74 = por %p72, %p73
    %p75 = scmp.ne.s32.totalorder %s67, %s70
    %p76 = scmp.eq.s32.totalorder %s10, 0
    %p77 = por %p75, %p76
    %p78 = scmp.ne.s32.totalorder %s67, %s70
    %p79 = scmp.eq.s32.totalorder %s15, 3
    %p80 = por %p78, %p79
    %p81 = scmp.ne.s32.totalorder %s70, %s71
    %p82 = scmp.eq.s32.totalorder %s15, 0
    %p83 = por %p81, %p82
    %p84 = scmp.ne.s32.totalorder %s70, %s71
    %p85 = scmp.eq.s32.totalorder %s16, 3
    %p86 = por %p84, %p85
    %p88 = scmp.ne.s32.totalorder %s71, %s87
    %p89 = scmp.eq.s32.totalorder %s16, 0
    %p90 = por %p88, %p89
    %s91 = ssub.s32 %s10, %s17
    %p92 = scmp.eq.s32.totalorder %s91, 0
    %s94 = sadd.s32 %s93, 1
    %s95 = scalar_select %p92, %s93, %s94
    %p98 = pneg %p92
    %p99 = scmp.eq.s32.totalorder %s10, 3
    %p100 = por %p98, %p99
    %p101 = scmp.ne.s32.totalorder %s93, %s96
    %p102 = scmp.eq.s32.totalorder %s10, 0
    %p103 = por %p101, %p102
    %p104 = scmp.ne.s32.totalorder %s93, %s96
    %p105 = scmp.eq.s32.totalorder %s15, 3
    %p106 = por %p104, %p105
    %p107 = scmp.ne.s32.totalorder %s96, %s97
    %p108 = scmp.eq.s32.totalorder %s15, 0
    %p109 = por %p107, %p108
    %p110 = scmp.ne.s32.totalorder %s96, %s97
    %p111 = scmp.eq.s32.totalorder %s16, 3
    %p112 = por %p110, %p111
    %p114 = scmp.ne.s32.totalorder %s97, %s113
    %p115 = scmp.eq.s32.totalorder %s16, 0
    %p116 = por %p114, %p115
    %s117 = ssub.s32 %s10, %s17
    %p118 = scmp.eq.s32.totalorder %s117, 0
    %s120 = sadd.s32 %s119, 1
    %s121 = scalar_select %p118, %s119, %s120
    %p124 = pneg %p118
    %p125 = scmp.eq.s32.totalorder %s10, 3
    %p126 = por %p124, %p125
    %p127 = scmp.ne.s32.totalorder %s119, %s122
    %p128 = scmp.eq.s32.totalorder %s10, 0
    %p129 = por %p127, %p128
    %p130 = scmp.ne.s32.totalorder %s119, %s122
    %p131 = scmp.eq.s32.totalorder %s15, 3
    %p132 = por %p130, %p131
    %p133 = scmp.ne.s32.totalorder %s122, %s123
    %p134 = scmp.eq.s32.totalorder %s15, 0
    %p135 = por %p133, %p134
    %p136 = scmp.ne.s32.totalorder %s122, %s123
    %p137 = scmp.eq.s32.totalorder %s16, 3
    %p138 = por %p136, %p137
    %p140 = scmp.ne.s32.totalorder %s123, %s139
    %p141 = scmp.eq.s32.totalorder %s16, 0
    %p142 = por %p140, %p141
    %p143 = scmp.le.s32.totalorder 1, %s10
    %p144 = scmp.lt.s32.totalorder %s10, 5
    %p145 = pnand %p143, %p144
    %p146 = pneg %p145
    // Predicated region
    $region9: #{pgmsu_forward.13} parent=5 // pred_check
      _
    $region10: #{pgmsu_forward.13} parent=5 // pred_check_branch
      %148 = sbr.rel (%p145) target = $region12
    $region11: #{pgmsu_forward.13} parent=5 // pred_region
      %s149 = ssub.s32 %s10, 1
      // Predicated region
      $region13: #{pgmsu_forward.13} parent=11 // pred_check
        %p150 = pneg %p57
      $region14: #{pgmsu_forward.13} parent=11 // pred_check_branch
        %152 = sbr.rel (%p150) target = $region16
      $region15: #{pgmsu_forward.13} parent=11 // pred_region
        _
      $region16: #{pgmsu_forward.13} parent=11 // pred_fallthru
        _
    $region12: #{pgmsu_forward.13} parent=5 // pred_fallthru
      _
    %p153 = scmp.lt.s32.totalorder %s10, 4
    // Predicated region
    $region17: #{pgmsu_forward.13} parent=5 // pred_check
      %p154 = pneg %p153
    $region18: #{pgmsu_forward.13} parent=5 // pred_check_branch
      %156 = sbr.rel (%p154) target = $region20
    $region19: #{pgmsu_forward.13} parent=5 // pred_region
      // Predicated region
      $region21: #{pgmsu_forward.13} parent=19 // pred_check
        %p157 = pneg %p30
      $region22: #{pgmsu_forward.13} parent=19 // pred_check_branch
        %159 = sbr.rel (%p157) target = $region24
      $region23: #{pgmsu_forward.13} parent=19 // pred_region
        %s160 = smul.u32 16, %s10
        %p161 = scmp.lt.s32.totalorder %s160, 63
        %s162 = scalar_select %p161, %s160, 63
        %s163 = smul.addr %s162, 8
        %s164 = scalar_lea.vmem %s0, %s163
        %s165 = smul.u32 16, %s10
      $region24: #{pgmsu_forward.13} parent=19 // pred_fallthru
        _
      // Predicated region
      $region25: #{pgmsu_forward.13} parent=19 // pred_check
        %p166 = pneg %p77
      $region26: #{pgmsu_forward.13} parent=19 // pred_check_branch
        %168 = sbr.rel (%p166) target = $region28
      $region27: #{pgmsu_forward.13} parent=19 // pred_region
        %s169 = smul.u32 16, %s10
        %p170 = scmp.lt.s32.totalorder %s169, 63
        %s171 = scalar_select %p170, %s169, 63
        %s172 = smul.addr %s171, 8
        %s173 = scalar_lea.vmem %s2, %s172
        %s174 = smul.u32 16, %s10
      $region28: #{pgmsu_forward.13} parent=19 // pred_fallthru
        _
      // Predicated region
      $region29: #{pgmsu_forward.13} parent=19 // pred_check
        %p175 = pneg %p103
      $region30: #{pgmsu_forward.13} parent=19 // pred_check_branch
        %177 = sbr.rel (%p175) target = $region32
      $region31: #{pgmsu_forward.13} parent=19 // pred_region
        %s178 = smul.u32 16, %s10
        %p179 = scmp.lt.s32.totalorder %s178, 63
        %s180 = scalar_select %p179, %s178, 63
        %s181 = smul.addr %s180, 8
        %s182 = scalar_lea.vmem %s3, %s181
        %s183 = smul.u32 16, %s10
      $region32: #{pgmsu_forward.13} parent=19 // pred_fallthru
        _
    $region20: #{pgmsu_forward.13} parent=5 // pred_fallthru
      _
    %p184 = scmp.le.s32.totalorder 1, %s10
    %p185 = scmp.lt.s32.totalorder %s10, 5
    %p186 = pnand %p184, %p185
    %p187 = pneg %p186
    // Predicated region
    $region33: #{pgmsu_forward.13} parent=5 // pred_check
      _
    $region34: #{pgmsu_forward.13} parent=5 // pred_check_branch
      %189 = sbr.rel (%p186) target = $region36
    $region35: #{pgmsu_forward.13} parent=5 // pred_region
      %s190 = ssub.s32 %s10, 1
      %s191 = smul.u32 16, %s15
      %p192 = scmp.lt.s32.totalorder %s191, 63
      %s193 = scalar_select %p192, %s191, 63
      %s194 = smul.addr %s193, 8
      %s195 = scalar_lea.vmem %s0, %s194
      %p196 = pneg %p36
      %p197 = pneg %p33
      %p198 = pneg %p57
      %p199 = pneg %p54
      %s200 = smul.u32 16, %s15
      %p201 = scmp.lt.s32.totalorder %s200, 63
      %s202 = scalar_select %p201, %s200, 63
      %s203 = smul.addr %s202, 8
      %s204 = scalar_lea.vmem %s2, %s203
      %p205 = pneg %p83
      %p206 = pneg %p80
      %s207 = smul.u32 16, %s15
      %p208 = scmp.lt.s32.totalorder %s207, 63
      %s209 = scalar_select %p208, %s207, 63
      %s210 = smul.addr %s209, 8
      %s211 = scalar_lea.vmem %s3, %s210
      %p212 = pneg %p109
      %p213 = pneg %p106
      %p214 = pneg %p135
      %p215 = pneg %p132
      %s216 = smul.u32 16, %s15
      %p217 = scmp.lt.s32.totalorder %s216, 63
      %s218 = scalar_select %p217, %s216, 63
      %s219 = smul.addr %s218, 8
      %s220 = scalar_lea.vmem %s4, %s219
      %s221 = smul.u32 16, %s15
      %p222 = scmp.lt.s32.totalorder %s221, 63
      %s223 = scalar_select %p222, %s221, 63
      %s224 = smul.addr %s223, 8
      %s225 = scalar_lea.vmem %s0, %s224
      %s226 = smul.u32 16, %s15
      %s227 = smul.u32 16, %s15
      %p228 = scmp.lt.s32.totalorder %s227, 63
      %s229 = scalar_select %p228, %s227, 63
      %s230 = smul.addr %s229, 8
      %s231 = scalar_lea.vmem %s2, %s230
      %s232 = smul.u32 16, %s15
      %s233 = smul.u32 16, %s15
      %p234 = scmp.lt.s32.totalorder %s233, 63
      %s235 = scalar_select %p234, %s233, 63
      %s236 = smul.addr %s235, 8
      %s237 = scalar_lea.vmem %s3, %s236
      %s238 = smul.u32 16, %s15
      %s239 = smul.u32 16, %s15
      %p240 = scmp.lt.s32.totalorder %s239, 63
      %s241 = scalar_select %p240, %s239, 63
      %s242 = smul.addr %s241, 8
      %s243 = scalar_lea.vmem %s4, %s242
      %s244 = smul.u32 16, %s15
      %v245 = vld [vmem:[%s225] sm:$0xff]
      %v246 = vld [vmem:[%s225 + $0x8] sm:$0xff]
      %v247 = vld [vmem:[%s225 + $0x10] sm:$0xff]
      %v248 = vld [vmem:[%s225 + $0x18] sm:$0xff]
      %v249 = vld [vmem:[%s225 + $0x20] sm:$0xff]
      %v250 = vld [vmem:[%s225 + $0x28] sm:$0xff]
      %v251 = vld [vmem:[%s225 + $0x30] sm:$0xff]
      %v252 = vld [vmem:[%s225 + $0x38] sm:$0xff]
      %v253 = vld [vmem:[%s225 + $0x40] sm:$0xff]
      %v254 = vld [vmem:[%s225 + $0x48] sm:$0xff]
      %v255 = vld [vmem:[%s225 + $0x50] sm:$0xff]
      %v256 = vld [vmem:[%s225 + $0x58] sm:$0xff]
      %v257 = vld [vmem:[%s225 + $0x60] sm:$0xff]
      %v258 = vld [vmem:[%s225 + $0x68] sm:$0xff]
      %v259 = vld [vmem:[%s225 + $0x70] sm:$0xff]
      %v260 = vld [vmem:[%s225 + $0x78] sm:$0xff]
      %v261 = vld [vmem:[%s1] sm:$0xff]
      %v262 = vld [vmem:[%s1 + $0x8] sm:$0xff]
      %v263 = vld [vmem:[%s1 + $0x10] sm:$0xff]
      %v264 = vld [vmem:[%s1 + $0x18] sm:$0xff]
      %v265 = vld [vmem:[%s1 + $0x20] sm:$0xff]
      %v266 = vld [vmem:[%s1 + $0x28] sm:$0xff]
      %v267 = vld [vmem:[%s1 + $0x30] sm:$0xff]
      %v268 = vld [vmem:[%s1 + $0x38] sm:$0xff]
      %v269 = vld [vmem:[%s1 + $0x40] sm:$0xff]
      %v270 = vld [vmem:[%s1 + $0x48] sm:$0xff]
      %v271 = vld [vmem:[%s1 + $0x50] sm:$0xff]
      %v272 = vld [vmem:[%s1 + $0x58] sm:$0xff]
      %v273 = vld [vmem:[%s1 + $0x60] sm:$0x3]
      %vm274 = vcmask 801792
      %v276 = vsel %vm274, %v245, 0
      %v279 = vsel %vm274, %v246, 0
      %v282 = vsel %vm274, %v247, 0
      %v285 = vsel %vm274, %v248, 0
      %v288 = vsel %vm274, %v249, 0
      %v291 = vsel %vm274, %v250, 0
      %v294 = vsel %vm274, %v251, 0
      %v297 = vsel %vm274, %v252, 0
      %v300 = vsel %vm274, %v253, 0
      %v303 = vsel %vm274, %v254, 0
      %v306 = vsel %vm274, %v255, 0
      %v309 = vsel %vm274, %v256, 0
      %v312 = vsel %vm274, %v257, 0
      %v315 = vsel %vm274, %v258, 0
      %v318 = vsel %vm274, %v259, 0
      %v321 = vsel %vm274, %v260, 0
      %vm323 = vcmask 1041408
      %v325 = vsel %vm323, %v273, 0
      %327 = vmatprep.subr.mxu0 0.0
      %328 = vmatpush1.msra.mxu0 %v261
      %329 = vmatprep.subr.mxu0 0.0
      %330 = vmatpush1.msra.mxu0 %v262
      %331 = vmatprep.subr.mxu0 0.0
      %332 = vmatpush1.msra.mxu0 %v263
      %333 = vmatprep.subr.mxu0 0.0
      %334 = vmatpush1.msra.mxu0 %v264
      %335 = vmatprep.subr.mxu0 0.0
      %336 = vmatpush1.msra.mxu0 %v265
      %337 = vmatprep.subr.mxu0 0.0
      %338 = vmatpush1.msra.mxu0 %v266
      %339 = vmatprep.subr.mxu0 0.0
      %340 = vmatpush1.msra.mxu0 %v267
      %341 = vmatprep.subr.mxu0 0.0
      %342 = vmatpush1.msra.mxu0 %v268
      %343 = vmatprep.subr.mxu0 0.0
      %344 = vmatpush1.msra.mxu0 %v269
      %345 = vmatprep.subr.mxu0 0.0
      %346 = vmatpush1.msra.mxu0 %v270
      %347 = vmatprep.subr.mxu0 0.0
      %348 = vmatpush1.msra.mxu0 %v271
      %349 = vmatprep.subr.mxu0 0.0
      %350 = vmatpush1.msra.mxu0 %v272
      %351 = vmatprep.subr.mxu0 0.0
      %352 = vmatpush1.msra.mxu0 %v325
      %353 = vmatprep.subr.mxu0 0.0
      %354 = vmatpush1.msra.mxu0 0.0
      %355 = vmatprep.subr.mxu0 0.0
      %356 = vmatpush1.msra.mxu0 0.0
      %357 = vmatprep.subr.mxu0 0.0
      %358 = vmatpush1.msra.mxu0 0.0
      %359 = vmatprep.subr.mxu0 0.0
      %360 = vmatpush1.msra.mxu0 0.0
      %361 = vmatprep.subr.mxu0 0.0
      %362 = vmatpush1.msra.mxu0 0.0
      %363 = vmatprep.subr.mxu0 0.0
      %364 = vmatpush1.msra.mxu0 0.0
      %365 = vmatprep.subr.mxu0 0.0
      %366 = vmatpush1.msra.mxu0 0.0
      %367 = vmatprep.subr.mxu0 0.0
      %368 = vmatpush1.msra.mxu0 0.0
      %369 = vmatprep.subr.mxu0 0.0
      %370 = vmatpush1.msra.mxu0 0.0
      %371 = vmatprep.subr.mxu0 0.0
      %372 = vmatpush1.msra.mxu0 0.0
      %373 = vmatprep.subr.mxu0 0.0
      %374 = vmatpush1.msra.mxu0 0.0
      %375 = vmatprep.subr.mxu0 0.0
      %376 = vmatpush1.msra.mxu0 0.0
      %377 = vmatprep.subr.mxu0 0.0
      %378 = vmatpush1.msra.mxu0 0.0
      %379 = vmatprep.subr.mxu0 0.0
      %380 = vmatpush1.msra.mxu0 0.0
      %381 = vmatprep.subr.mxu0 0.0
      %382 = vmatpush1.msra.mxu0 0.0
      %383 = vmatprep.subr.mxu0 0.0
      %384 = vmatpush1.msra.mxu0 0.0
      %385 = vmatprep.subr.mxu0 0.0
      %386 = vmatpush1.msra.mxu0 0.0
      %387 = vmatprep.subr.mxu0 0.0
      %388 = vmatpush1.msra.mxu0 0.0
      %389 = vmatprep.subr.mxu0 0.0
      %390 = vmatpush1.msra.mxu0 0.0
      %391 = vmatprep.mubr.f32.mxu0 0.0
      %392 = vmatmul.mubr.f32.gmra.mrb[0].mxu0 %v276
      %v393 = vpop.f32.mrb[0].mxu0
      %v394 = vadd.f32 0.0, %v393
      %v395 = vpop.f32.mrb[0].mxu0
      %396 = vmatprep.mubr.f32.mxu0 0.0
      %397 = vmatmul.mubr.f32.gmra.mrb[0].mxu0 %v279
      %v398 = vpop.f32.mrb[0].mxu0
      %v399 = vadd.f32 0.0, %v398
      %v400 = vpop.f32.mrb[0].mxu0
      %401 = vmatprep.mubr.f32.mxu0 0.0
      %402 = vmatmul.mubr.f32.gmra.mrb[0].mxu0 %v282
      %v403 = vpop.f32.mrb[0].mxu0
      %v404 = vadd.f32 0.0, %v403
      %v405 = vpop.f32.mrb[0].mxu0
      %406 = vmatprep.mubr.f32.mxu0 0.0
      %407 = vmatmul.mubr.f32.gmra.mrb[0].mxu0 %v285
      %v408 = vpop.f32.mrb[0].mxu0
      %v409 = vadd.f32 0.0, %v408
      %v410 = vpop.f32.mrb[0].mxu0
      %411 = vmatprep.mubr.f32.mxu0 0.0
      %412 = vmatmul.mubr.f32.gmra.mrb[0].mxu0 %v288
      %v413 = vpop.f32.mrb[0].mxu0
      %v414 = vadd.f32 0.0, %v413
      %v415 = vpop.f32.mrb[0].mxu0
      %416 = vmatprep.mubr.f32.mxu0 0.0
      %417 = vmatmul.mubr.f32.gmra.mrb[0].mxu0 %v291
      %v418 = vpop.f32.mrb[0].mxu0
      %v419 = vadd.f32 0.0, %v418
      %v420 = vpop.f32.mrb[0].mxu0
      %421 = vmatprep.mubr.f32.mxu0 0.0
      %422 = vmatmul.mubr.f32.gmra.mrb[0].mxu0 %v294
      %v423 = vpop.f32.mrb[0].mxu0
      %v424 = vadd.f32 0.0, %v423
      %v425 = vpop.f32.mrb[0].mxu0
      %426 = vmatprep.mubr.f32.mxu0 0.0
      %427 = vmatmul.mubr.f32.gmra.mrb[0].mxu0 %v297
      %v428 = vpop.f32.mrb[0].mxu0
      %v429 = vadd.f32 0.0, %v428
      %v430 = vpop.f32.mrb[0].mxu0
      %431 = vmatprep.mubr.f32.mxu0 0.0
      %432 = vmatmul.mubr.f32.gmra.mrb[0].mxu0 %v300
      %v433 = vpop.f32.mrb[0].mxu0
      %v434 = vadd.f32 0.0, %v433
      %v435 = vpop.f32.mrb[0].mxu0
      %436 = vmatprep.mubr.f32.mxu0 0.0
      %437 = vmatmul.mubr.f32.gmra.mrb[0].mxu0 %v303
      %v438 = vpop.f32.mrb[0].mxu0
      %v439 = vadd.f32 0.0, %v438
      %v440 = vpop.f32.mrb[0].mxu0
      %441 = vmatprep.mubr.f32.mxu0 0.0
      %442 = vmatmul.mubr.f32.gmra.mrb[0].mxu0 %v306
      %v443 = vpop.f32.mrb[0].mxu0
      %v444 = vadd.f32 0.0, %v443
      %v445 = vpop.f32.mrb[0].mxu0
      %446 = vmatprep.mubr.f32.mxu0 0.0
      %447 = vmatmul.mubr.f32.gmra.mrb[0].mxu0 %v309
      %v448 = vpop.f32.mrb[0].mxu0
      %v449 = vadd.f32 0.0, %v448
      %v450 = vpop.f32.mrb[0].mxu0
      %451 = vmatprep.mubr.f32.mxu0 0.0
      %452 = vmatmul.mubr.f32.gmra.mrb[0].mxu0 %v312
      %v453 = vpop.f32.mrb[0].mxu0
      %v454 = vadd.f32 0.0, %v453
      %v455 = vpop.f32.mrb[0].mxu0
      %456 = vmatprep.mubr.f32.mxu0 0.0
      %457 = vmatmul.mubr.f32.gmra.mrb[0].mxu0 %v315
      %v458 = vpop.f32.mrb[0].mxu0
      %v459 = vadd.f32 0.0, %v458
      %v460 = vpop.f32.mrb[0].mxu0
      %461 = vmatprep.mubr.f32.mxu0 0.0
      %462 = vmatmul.mubr.f32.gmra.mrb[0].mxu0 %v318
      %v463 = vpop.f32.mrb[0].mxu0
      %v464 = vadd.f32 0.0, %v463
      %v465 = vpop.f32.mrb[0].mxu0
      %466 = vmatprep.mubr.f32.mxu0 0.0
      %467 = vmatmul.mubr.f32.gmra.mrb[0].mxu0 %v321
      %v468 = vpop.f32.mrb[0].mxu0
      %v469 = vadd.f32 0.0, %v468
      %v470 = vpop.f32.mrb[0].mxu0
      %471 = vdwg.mxu0
      %v472 = vxor.u32 %v394, 2147483648
      %v473 = vxor.u32 %v399, 2147483648
      %v474 = vxor.u32 %v404, 2147483648
      %v475 = vxor.u32 %v409, 2147483648
      %v476 = vxor.u32 %v414, 2147483648
      %v477 = vxor.u32 %v419, 2147483648
      %v478 = vxor.u32 %v424, 2147483648
      %v479 = vxor.u32 %v429, 2147483648
      %v480 = vxor.u32 %v434, 2147483648
      %v481 = vxor.u32 %v439, 2147483648
      %v482 = vxor.u32 %v444, 2147483648
      %v483 = vxor.u32 %v449, 2147483648
      %v484 = vxor.u32 %v454, 2147483648
      %v485 = vxor.u32 %v459, 2147483648
      %v486 = vxor.u32 %v464, 2147483648
      %v487 = vxor.u32 %v469, 2147483648
      %v488 = vmul.f32 %v472, 1.442695
      %v489 = vpow.pop %v488
      %v490 = vmul.f32 %v473, 1.442695
      %v491 = vpow.pop %v490
      %v492 = vmul.f32 %v474, 1.442695
      %v493 = vpow.pop %v492
      %v494 = vmul.f32 %v475, 1.442695
      %v495 = vpow.pop %v494
      %v496 = vmul.f32 %v476, 1.442695
      %v497 = vpow.pop %v496
      %v498 = vmul.f32 %v477, 1.442695
      %v499 = vpow.pop %v498
      %v500 = vmul.f32 %v478, 1.442695
      %v501 = vpow.pop %v500
      %v502 = vmul.f32 %v479, 1.442695
      %v503 = vpow.pop %v502
      %v504 = vmul.f32 %v480, 1.442695
      %v505 = vpow.pop %v504
      %v506 = vmul.f32 %v481, 1.442695
      %v507 = vpow.pop %v506
      %v508 = vmul.f32 %v482, 1.442695
      %v509 = vpow.pop %v508
      %v510 = vmul.f32 %v483, 1.442695
      %v511 = vpow.pop %v510
      %v512 = vmul.f32 %v484, 1.442695
      %v513 = vpow.pop %v512
      %v514 = vmul.f32 %v485, 1.442695
      %v515 = vpow.pop %v514
      %v516 = vmul.f32 %v486, 1.442695
      %v517 = vpow.pop %v516
      %v518 = vmul.f32 %v487, 1.442695
      %v519 = vpow.pop %v518
      %v520 = vadd.f32 %v489, 1.0
      %v521 = vadd.f32 %v491, 1.0
      %v522 = vadd.f32 %v493, 1.0
      %v523 = vadd.f32 %v495, 1.0
      %v524 = vadd.f32 %v497, 1.0
      %v525 = vadd.f32 %v499, 1.0
      %v526 = vadd.f32 %v501, 1.0
      %v527 = vadd.f32 %v503, 1.0
      %v528 = vadd.f32 %v505, 1.0
      %v529 = vadd.f32 %v507, 1.0
      %v530 = vadd.f32 %v509, 1.0
      %v531 = vadd.f32 %v511, 1.0
      %v532 = vadd.f32 %v513, 1.0
      %v533 = vadd.f32 %v515, 1.0
      %v534 = vadd.f32 %v517, 1.0
      %v535 = vadd.f32 %v519, 1.0
      %v536 = vrcp.pop %v520
      %v537 = vmul.f32 1.0, %v536
      %v538 = vrcp.pop %v521
      %v539 = vmul.f32 1.0, %v538
      %v540 = vrcp.pop %v522
      %v541 = vmul.f32 1.0, %v540
      %v542 = vrcp.pop %v523
      %v543 = vmul.f32 1.0, %v542
      %v544 = vrcp.pop %v524
      %v545 = vmul.f32 1.0, %v544
      %v546 = vrcp.pop %v525
      %v547 = vmul.f32 1.0, %v546
      %v548 = vrcp.pop %v526
      %v549 = vmul.f32 1.0, %v548
      %v550 = vrcp.pop %v527
      %v551 = vmul.f32 1.0, %v550
      %v552 = vrcp.pop %v528
      %v553 = vmul.f32 1.0, %v552
      %v554 = vrcp.pop %v529
      %v555 = vmul.f32 1.0, %v554
      %v556 = vrcp.pop %v530
      %v557 = vmul.f32 1.0, %v556
      %v558 = vrcp.pop %v531
      %v559 = vmul.f32 1.0, %v558
      %v560 = vrcp.pop %v532
      %v561 = vmul.f32 1.0, %v560
      %v562 = vrcp.pop %v533
      %v563 = vmul.f32 1.0, %v562
      %v564 = vrcp.pop %v534
      %v565 = vmul.f32 1.0, %v564
      %v566 = vrcp.pop %v535
      %v567 = vmul.f32 1.0, %v566
      %v568 = vld [vmem:[%s231] sm:$0xff]
      %v569 = vld [vmem:[%s231 + $0x8] sm:$0xff]
      %v570 = vld [vmem:[%s231 + $0x10] sm:$0xff]
      %v571 = vld [vmem:[%s231 + $0x18] sm:$0xff]
      %v572 = vld [vmem:[%s231 + $0x20] sm:$0xff]
      %v573 = vld [vmem:[%s231 + $0x28] sm:$0xff]
      %v574 = vld [vmem:[%s231 + $0x30] sm:$0xff]
      %v575 = vld [vmem:[%s231 + $0x38] sm:$0xff]
      %v576 = vld [vmem:[%s231 + $0x40] sm:$0xff]
      %v577 = vld [vmem:[%s231 + $0x48] sm:$0xff]
      %v578 = vld [vmem:[%s231 + $0x50] sm:$0xff]
      %v579 = vld [vmem:[%s231 + $0x58] sm:$0xff]
      %v580 = vld [vmem:[%s231 + $0x60] sm:$0xff]
      %v581 = vld [vmem:[%s231 + $0x68] sm:$0xff]
      %v582 = vld [vmem:[%s231 + $0x70] sm:$0xff]
      %v583 = vld [vmem:[%s231 + $0x78] sm:$0xff]
      %585 = vset.pattern.permute.xlu0 0
      %586 = vperm.xlu0 %585, %v537
      %v587 = vpop.permute.xlu0 %586
      %590 = vset.pattern.permute.xlu0 0
      %591 = vperm.xlu0 %590, %v539
      %v592 = vpop.permute.xlu0 %591
      %595 = vset.pattern.permute.xlu0 0
      %596 = vperm.xlu0 %595, %v541
      %v597 = vpop.permute.xlu0 %596
      %600 = vset.pattern.permute.xlu0 0
      %601 = vperm.xlu0 %600, %v543
      %v602 = vpop.permute.xlu0 %601
      %605 = vset.pattern.permute.xlu0 0
      %606 = vperm.xlu0 %605, %v545
      %v607 = vpop.permute.xlu0 %606
      %610 = vset.pattern.permute.xlu0 0
      %611 = vperm.xlu0 %610, %v547
      %v612 = vpop.permute.xlu0 %611
      %615 = vset.pattern.permute.xlu0 0
      %616 = vperm.xlu0 %615, %v549
      %v617 = vpop.permute.xlu0 %616
      %620 = vset.pattern.permute.xlu0 0
      %621 = vperm.xlu0 %620, %v551
      %v622 = vpop.permute.xlu0 %621
      %625 = vset.pattern.permute.xlu0 0
      %626 = vperm.xlu0 %625, %v553
      %v627 = vpop.permute.xlu0 %626
      %630 = vset.pattern.permute.xlu0 0
      %631 = vperm.xlu0 %630, %v555
      %v632 = vpop.permute.xlu0 %631
      %635 = vset.pattern.permute.xlu0 0
      %636 = vperm.xlu0 %635, %v557
      %v637 = vpop.permute.xlu0 %636
      %640 = vset.pattern.permute.xlu0 0
      %641 = vperm.xlu0 %640, %v559
      %v642 = vpop.permute.xlu0 %641
      %645 = vset.pattern.permute.xlu0 0
      %646 = vperm.xlu0 %645, %v561
      %v647 = vpop.permute.xlu0 %646
      %650 = vset.pattern.permute.xlu0 0
      %651 = vperm.xlu0 %650, %v563
      %v652 = vpop.permute.xlu0 %651
      %655 = vset.pattern.permute.xlu0 0
      %656 = vperm.xlu0 %655, %v565
      %v657 = vpop.permute.xlu0 %656
      %660 = vset.pattern.permute.xlu0 0
      %661 = vperm.xlu0 %660, %v567
      %v662 = vpop.permute.xlu0 %661
      %v664 = vmul.f32 %v568, %v587
      %v665 = vmul.f32 %v569, %v592
      %v666 = vmul.f32 %v570, %v597
      %v667 = vmul.f32 %v571, %v602
      %v668 = vmul.f32 %v572, %v607
      %v669 = vmul.f32 %v573, %v612
      %v670 = vmul.f32 %v574, %v617
      %v671 = vmul.f32 %v575, %v622
      %v672 = vmul.f32 %v576, %v627
      %v673 = vmul.f32 %v577, %v632
      %v674 = vmul.f32 %v578, %v637
      %v675 = vmul.f32 %v579, %v642
      %v676 = vmul.f32 %v580, %v647
      %v677 = vmul.f32 %v581, %v652
      %v678 = vmul.f32 %v582, %v657
      %v679 = vmul.f32 %v583, %v662
      %v680 = vld [vmem:[%s237] sm:$0xff]
      %v681 = vld [vmem:[%s237 + $0x8] sm:$0xff]
      %v682 = vld [vmem:[%s237 + $0x10] sm:$0xff]
      %v683 = vld [vmem:[%s237 + $0x18] sm:$0xff]
      %v684 = vld [vmem:[%s237 + $0x20] sm:$0xff]
      %v685 = vld [vmem:[%s237 + $0x28] sm:$0xff]
      %v686 = vld [vmem:[%s237 + $0x30] sm:$0xff]
      %v687 = vld [vmem:[%s237 + $0x38] sm:$0xff]
      %v688 = vld [vmem:[%s237 + $0x40] sm:$0xff]
      %v689 = vld [vmem:[%s237 + $0x48] sm:$0xff]
      %v690 = vld [vmem:[%s237 + $0x50] sm:$0xff]
      %v691 = vld [vmem:[%s237 + $0x58] sm:$0xff]
      %v692 = vld [vmem:[%s237 + $0x60] sm:$0xff]
      %v693 = vld [vmem:[%s237 + $0x68] sm:$0xff]
      %v694 = vld [vmem:[%s237 + $0x70] sm:$0xff]
      %v695 = vld [vmem:[%s237 + $0x78] sm:$0xff]
      %v696 = vadd.f32 %v664, %v680
      %v697 = vadd.f32 %v665, %v681
      %v698 = vadd.f32 %v666, %v682
      %v699 = vadd.f32 %v667, %v683
      %v700 = vadd.f32 %v668, %v684
      %v701 = vadd.f32 %v669, %v685
      %v702 = vadd.f32 %v670, %v686
      %v703 = vadd.f32 %v671, %v687
      %v704 = vadd.f32 %v672, %v688
      %v705 = vadd.f32 %v673, %v689
      %v706 = vadd.f32 %v674, %v690
      %v707 = vadd.f32 %v675, %v691
      %v708 = vadd.f32 %v676, %v692
      %v709 = vadd.f32 %v677, %v693
      %v710 = vadd.f32 %v678, %v694
      %v711 = vadd.f32 %v679, %v695
      %vm712 = vcmask 31744
      %713 = vst.msk [vmem:[%s243] sm:$0xff] %vm712, %v696
      %714 = vst.msk [vmem:[%s243 + $0x8] sm:$0xff] %vm712, %v697
      %715 = vst.msk [vmem:[%s243 + $0x10] sm:$0xff] %vm712, %v698
      %716 = vst.msk [vmem:[%s243 + $0x18] sm:$0xff] %vm712, %v699
      %717 = vst.msk [vmem:[%s243 + $0x20] sm:$0xff] %vm712, %v700
      %718 = vst.msk [vmem:[%s243 + $0x28] sm:$0xff] %vm712, %v701
      %719 = vst.msk [vmem:[%s243 + $0x30] sm:$0xff] %vm712, %v702
      %720 = vst.msk [vmem:[%s243 + $0x38] sm:$0xff] %vm712, %v703
      %721 = vst.msk [vmem:[%s243 + $0x40] sm:$0xff] %vm712, %v704
      %722 = vst.msk [vmem:[%s243 + $0x48] sm:$0xff] %vm712, %v705
      %723 = vst.msk [vmem:[%s243 + $0x50] sm:$0xff] %vm712, %v706
      %724 = vst.msk [vmem:[%s243 + $0x58] sm:$0xff] %vm712, %v707
      %725 = vst.msk [vmem:[%s243 + $0x60] sm:$0xff] %vm712, %v708
      %726 = vst.msk [vmem:[%s243 + $0x68] sm:$0xff] %vm712, %v709
      %727 = vst.msk [vmem:[%s243 + $0x70] sm:$0xff] %vm712, %v710
      %728 = vst.msk [vmem:[%s243 + $0x78] sm:$0xff] %vm712, %v711
      %s729 = smul.u32 16, %s15
      %p730 = scmp.lt.s32.totalorder %s729, 63
      %s731 = scalar_select %p730, %s729, 63
      %s732 = smul.addr %s731, 8
      %s733 = scalar_lea.vmem %s4, %s732
      // Predicated region
      $region37: #{pgmsu_forward.13} parent=35 // pred_check
        %p734 = pneg %p132
      $region38: #{pgmsu_forward.13} parent=35 // pred_check_branch
        %736 = sbr.rel (%p734) target = $region40
      $region39: #{pgmsu_forward.13} parent=35 // pred_region
        %s737 = smul.u32 16, %s15
      $region40: #{pgmsu_forward.13} parent=35 // pred_fallthru
        _
    $region36: #{pgmsu_forward.13} parent=5 // pred_fallthru
      _
    %p738 = scmp.le.s32.totalorder 2, %s10
    // Predicated region
    $region41: #{pgmsu_forward.13} parent=5 // pred_check
      %p739 = pneg %p738
    $region42: #{pgmsu_forward.13} parent=5 // pred_check_branch
      %741 = sbr.rel (%p739) target = $region44
    $region43: #{pgmsu_forward.13} parent=5 // pred_region
      %s742 = ssub.s32 %s10, 2
      // Predicated region
      $region45: #{pgmsu_forward.13} parent=43 // pred_check
        %p743 = pneg %p138
      $region46: #{pgmsu_forward.13} parent=43 // pred_check_branch
        %745 = sbr.rel (%p743) target = $region48
      $region47: #{pgmsu_forward.13} parent=43 // pred_region
        %s746 = smul.u32 16, %s16
        %p747 = scmp.lt.s32.totalorder %s746, 63
        %s748 = scalar_select %p747, %s746, 63
        %s749 = smul.addr %s748, 8
        %s750 = scalar_lea.vmem %s4, %s749
      $region48: #{pgmsu_forward.13} parent=43 // pred_fallthru
        _
    $region44: #{pgmsu_forward.13} parent=5 // pred_fallthru
      _
  $region6: #{pgmsu_forward.13} parent=0 // loop_footer
    %s14 = sadd.s32 1, %s10
  $region7: #{pgmsu_forward.13} parent=0 // loop_footer_branch
    %9 = sbr.rel target = $region3
  $region8: #{pgmsu_forward.13} parent=0 // loop_exit
    _

// kernel: pgmsu_forward.17
$region0: #{pgmsu_forward.17}
  #allocation0 [shape = 'u32[]', space=smem, size = 0x4, offset = 0x4, fixed_abs, tag = 'smem constant byte address 0x4 - core index']
  #allocation1 [shape = 'u32[144,128]{1,0:T(1,128)}', space=vmem, size = 0x12000, scoped, tag = 'internal scratch']
  %s0 = inlined_call_operand.vmem [shape: bf16[256,36], index: 0, kind: input, shape index: {}]
  %s1 = inlined_call_operand.vmem [shape: bf16[36,8], index: 1, kind: input, shape index: {}]
  %s2 = inlined_call_operand.vmem [shape: f32[1,8], index: 2, kind: input, shape index: {}]
  %s3 = inlined_call_operand.vmem [shape: f32[256,4], index: 3, kind: input, shape index: {}]
  %s4 = inlined_call_operand.vmem [shape: f32[256,8], index: 4, kind: output, shape index: {0}]
  %s5 = inlined_call_operand.vmem [shape: f32[256,4], index: 5, kind: output, shape index: {1}]
  %6 = xla_tuple %s4, %s5
  %s7 = sld [smem:[#allocation0]]
  $region57: #{pgmsu_forward.17} parent=0
    _
  %s9 = ssub.s32 1, %s7
  %s10 = scalar_select 0, %s9, %s7
  loop: start=0, step=1, limit=4
  $region2: #{pgmsu_forward.17} parent=0 // loop_pre_header
    _
  $region3: #{pgmsu_forward.17} parent=0 // loop_header
    %s12 = sphi 0, %s16
    %p13 = scmp.ge.s32.totalorder %s12, 4
    %s22 = sphi 0, %s24
    %s25 = sphi 0, %s22
    %s26 = sphi 0, %s25
    %s42 = sphi 0, %s26
    %s46 = sphi 0, %s46
    %s48 = sphi 0, %s46
    %s49 = sphi 0, %s48
    %s63 = sphi 0, %s49
    %s67 = sphi 0, %s67
    %s69 = sphi 0, %s67
    %s70 = sphi 0, %s69
    %s84 = sphi 0, %s70
    %s90 = sphi 0, %s92
    %s93 = sphi 0, %s90
    %s94 = sphi 0, %s93
    %s110 = sphi 0, %s94
    %s116 = sphi 0, %s118
    %s119 = sphi 0, %s116
    %s120 = sphi 0, %s119
    %s136 = sphi 0, %s120
    %s142 = sphi 0, %s144
    %s145 = sphi 0, %s142
    %s146 = sphi 0, %s145
    %s162 = sphi 0, %s146
  $region4: #{pgmsu_forward.17} parent=0 // loop_header_branch
    %15 = sbr.rel (%p13) target = $region8
  $region5: #{pgmsu_forward.17} parent=0 // loop_body
    %s17 = ssub.s32 %s12, 1
    %s18 = ssub.s32 %s12, 2
    %s19 = sadd.s32 %s12, 1
    %s20 = ssub.s32 %s12, %s19
    %p21 = scmp.eq.s32.totalorder %s20, 0
    %s23 = sadd.s32 %s22, 1
    %s24 = scalar_select %p21, %s22, %s23
    %p27 = pneg %p21
    %p28 = scmp.eq.s32.totalorder %s12, 1
    %p29 = por %p27, %p28
    %p30 = scmp.ne.s32.totalorder %s22, %s25
    %p31 = scmp.eq.s32.totalorder %s12, 0
    %p32 = por %p30, %p31
    %p33 = scmp.ne.s32.totalorder %s22, %s25
    %p34 = scmp.eq.s32.totalorder %s17, 1
    %p35 = por %p33, %p34
    %p36 = scmp.ne.s32.totalorder %s25, %s26
    %p37 = scmp.eq.s32.totalorder %s17, 0
    %p38 = por %p36, %p37
    %p39 = scmp.ne.s32.totalorder %s25, %s26
    %p40 = scmp.eq.s32.totalorder %s18, 1
    %p41 = por %p39, %p40
    %p43 = scmp.ne.s32.totalorder %s26, %s42
    %p44 = scmp.eq.s32.totalorder %s18, 0
    %p45 = por %p43, %p44
    %s47 = sadd.s32 %s46, 1
    %p50 = scmp.eq.s32.totalorder %s12, 1
    %p51 = scmp.ne.s32.totalorder %s46, %s48
    %p52 = scmp.eq.s32.totalorder %s12, 0
    %p53 = por %p51, %p52
    %p54 = scmp.ne.s32.totalorder %s46, %s48
    %p55 = scmp.eq.s32.totalorder %s17, 1
    %p56 = por %p54, %p55
    %p57 = scmp.ne.s32.totalorder %s48, %s49
    %p58 = scmp.eq.s32.totalorder %s17, 0
    %p59 = por %p57, %p58
    %p60 = scmp.ne.s32.totalorder %s48, %s49
    %p61 = scmp.eq.s32.totalorder %s18, 1
    %p62 = por %p60, %p61
    %p64 = scmp.ne.s32.totalorder %s49, %s63
    %p65 = scmp.eq.s32.totalorder %s18, 0
    %p66 = por %p64, %p65
    %s68 = sadd.s32 %s67, 1
    %p71 = scmp.eq.s32.totalorder %s12, 1
    %p72 = scmp.ne.s32.totalorder %s67, %s69
    %p73 = scmp.eq.s32.totalorder %s12, 0
    %p74 = por %p72, %p73
    %p75 = scmp.ne.s32.totalorder %s67, %s69
    %p76 = scmp.eq.s32.totalorder %s17, 1
    %p77 = por %p75, %p76
    %p78 = scmp.ne.s32.totalorder %s69, %s70
    %p79 = scmp.eq.s32.totalorder %s17, 0
    %p80 = por %p78, %p79
    %p81 = scmp.ne.s32.totalorder %s69, %s70
    %p82 = scmp.eq.s32.totalorder %s18, 1
    %p83 = por %p81, %p82
    %p85 = scmp.ne.s32.totalorder %s70, %s84
    %p86 = scmp.eq.s32.totalorder %s18, 0
    %p87 = por %p85, %p86
    %s88 = ssub.s32 %s12, %s19
    %p89 = scmp.eq.s32.totalorder %s88, 0
    %s91 = sadd.s32 %s90, 1
    %s92 = scalar_select %p89, %s90, %s91
    %p95 = pneg %p89
    %p96 = scmp.eq.s32.totalorder %s12, 1
    %p97 = por %p95, %p96
    %p98 = scmp.ne.s32.totalorder %s90, %s93
    %p99 = scmp.eq.s32.totalorder %s12, 0
    %p100 = por %p98, %p99
    %p101 = scmp.ne.s32.totalorder %s90, %s93
    %p102 = scmp.eq.s32.totalorder %s17, 1
    %p103 = por %p101, %p102
    %p104 = scmp.ne.s32.totalorder %s93, %s94
    %p105 = scmp.eq.s32.totalorder %s17, 0
    %p106 = por %p104, %p105
    %p107 = scmp.ne.s32.totalorder %s93, %s94
    %p108 = scmp.eq.s32.totalorder %s18, 1
    %p109 = por %p107, %p108
    %p111 = scmp.ne.s32.totalorder %s94, %s110
    %p112 = scmp.eq.s32.totalorder %s18, 0
    %p113 = por %p111, %p112
    %s114 = ssub.s32 %s12, %s19
    %p115 = scmp.eq.s32.totalorder %s114, 0
    %s117 = sadd.s32 %s116, 1
    %s118 = scalar_select %p115, %s116, %s117
    %p121 = pneg %p115
    %p122 = scmp.eq.s32.totalorder %s12, 1
    %p123 = por %p121, %p122
    %p124 = scmp.ne.s32.totalorder %s116, %s119
    %p125 = scmp.eq.s32.totalorder %s12, 0
    %p126 = por %p124, %p125
    %p127 = scmp.ne.s32.totalorder %s116, %s119
    %p128 = scmp.eq.s32.totalorder %s17, 1
    %p129 = por %p127, %p128
    %p130 = scmp.ne.s32.totalorder %s119, %s120
    %p131 = scmp.eq.s32.totalorder %s17, 0
    %p132 = por %p130, %p131
    %p133 = scmp.ne.s32.totalorder %s119, %s120
    %p134 = scmp.eq.s32.totalorder %s18, 1
    %p135 = por %p133, %p134
    %p137 = scmp.ne.s32.totalorder %s120, %s136
    %p138 = scmp.eq.s32.totalorder %s18, 0
    %p139 = por %p137, %p138
    %s140 = ssub.s32 %s12, %s19
    %p141 = scmp.eq.s32.totalorder %s140, 0
    %s143 = sadd.s32 %s142, 1
    %s144 = scalar_select %p141, %s142, %s143
    %p147 = pneg %p141
    %p148 = scmp.eq.s32.totalorder %s12, 1
    %p149 = por %p147, %p148
    %p150 = scmp.ne.s32.totalorder %s142, %s145
    %p151 = scmp.eq.s32.totalorder %s12, 0
    %p152 = por %p150, %p151
    %p153 = scmp.ne.s32.totalorder %s142, %s145
    %p154 = scmp.eq.s32.totalorder %s17, 1
    %p155 = por %p153, %p154
    %p156 = scmp.ne.s32.totalorder %s145, %s146
    %p157 = scmp.eq.s32.totalorder %s17, 0
    %p158 = por %p156, %p157
    %p159 = scmp.ne.s32.totalorder %s145, %s146
    %p160 = scmp.eq.s32.totalorder %s18, 1
    %p161 = por %p159, %p160
    %p163 = scmp.ne.s32.totalorder %s146, %s162
    %p164 = scmp.eq.s32.totalorder %s18, 0
    %p165 = por %p163, %p164
    %p166 = scmp.le.s32.totalorder 1, %s12
    %p167 = scmp.lt.s32.totalorder %s12, 3
    %p168 = pnand %p166, %p167
    %p169 = pneg %p168
    // Predicated region
    $region9: #{pgmsu_forward.17} parent=5 // pred_check
      _
    $region10: #{pgmsu_forward.17} parent=5 // pred_check_branch
      %171 = sbr.rel (%p168) target = $region12
    $region11: #{pgmsu_forward.17} parent=5 // pred_region
      %s172 = ssub.s32 %s12, 1
      // Predicated region
      $region13: #{pgmsu_forward.17} parent=11 // pred_check
        %p173 = pneg %p59
      $region14: #{pgmsu_forward.17} parent=11 // pred_check_branch
        %175 = sbr.rel (%p173) target = $region16
      $region15: #{pgmsu_forward.17} parent=11 // pred_region
        _
      $region16: #{pgmsu_forward.17} parent=11 // pred_fallthru
        _
      // Predicated region
      $region17: #{pgmsu_forward.17} parent=11 // pred_check
        %p176 = pneg %p80
      $region18: #{pgmsu_forward.17} parent=11 // pred_check_branch
        %178 = sbr.rel (%p176) target = $region20
      $region19: #{pgmsu_forward.17} parent=11 // pred_region
        _
      $region20: #{pgmsu_forward.17} parent=11 // pred_fallthru
        _
    $region12: #{pgmsu_forward.17} parent=5 // pred_fallthru
      _
    %p179 = scmp.lt.s32.totalorder %s12, 2
    // Predicated region
    $region21: #{pgmsu_forward.17} parent=5 // pred_check
      %p180 = pneg %p179
    $region22: #{pgmsu_forward.17} parent=5 // pred_check_branch
      %182 = sbr.rel (%p180) target = $region24
    $region23: #{pgmsu_forward.17} parent=5 // pred_region
      // Predicated region
      $region25: #{pgmsu_forward.17} parent=23 // pred_check
        %p183 = pneg %p32
      $region26: #{pgmsu_forward.17} parent=23 // pred_check_branch
        %185 = sbr.rel (%p183) target = $region28
      $region27: #{pgmsu_forward.17} parent=23 // pred_region
        %s186 = smul.u32 16, %s12
        %p187 = scmp.lt.s32.totalorder %s186, 31
        %s188 = scalar_select %p187, %s186, 31
        %s189 = smul.addr %s188, 4
        %s190 = scalar_lea.vmem %s0, %s189
        %s191 = smul.u32 16, %s12
      $region28: #{pgmsu_forward.17} parent=23 // pred_fallthru
        _
      // Predicated region
      $region29: #{pgmsu_forward.17} parent=23 // pred_check
        %p192 = pneg %p100
      $region30: #{pgmsu_forward.17} parent=23 // pred_check_branch
        %194 = sbr.rel (%p192) target = $region32
      $region31: #{pgmsu_forward.17} parent=23 // pred_region
        %s195 = smul.u32 16, %s12
        %p196 = scmp.lt.s32.totalorder %s195, 31
        %s197 = scalar_select %p196, %s195, 31
        %s198 = smul.addr %s197, 8
        %s199 = scalar_lea.vmem %s3, %s198
        %s200 = smul.u32 16, %s12
      $region32: #{pgmsu_forward.17} parent=23 // pred_fallthru
        _
    $region24: #{pgmsu_forward.17} parent=5 // pred_fallthru
      _
    %p201 = scmp.le.s32.totalorder 1, %s12
    %p202 = scmp.lt.s32.totalorder %s12, 3
    %p203 = pnand %p201, %p202
    %p204 = pneg %p203
    // Predicated region
    $region33: #{pgmsu_forward.17} parent=5 // pred_check
      _
    $region34: #{pgmsu_forward.17} parent=5 // pred_check_branch
      %206 = sbr.rel (%p203) target = $region36
    $region35: #{pgmsu_forward.17} parent=5 // pred_region
      %s207 = ssub.s32 %s12, 1
      %s208 = smul.u32 16, %s17
      %p209 = scmp.lt.s32.totalorder %s208, 31
      %s210 = scalar_select %p209, %s208, 31
      %s211 = smul.addr %s210, 4
      %s212 = scalar_lea.vmem %s0, %s211
      %p213 = pneg %p38
      %p214 = pneg %p35
      %p215 = pneg %p59
      %p216 = pneg %p56
      %p217 = pneg %p80
      %p218 = pneg %p77
      %s219 = smul.u32 16, %s17
      %p220 = scmp.lt.s32.totalorder %s219, 31
      %s221 = scalar_select %p220, %s219, 31
      %s222 = smul.addr %s221, 8
      %s223 = scalar_lea.vmem %s3, %s222
      %p224 = pneg %p106
      %p225 = pneg %p103
      %p226 = pneg %p132
      %p227 = pneg %p129
      %s228 = smul.u32 16, %s17
      %p229 = scmp.lt.s32.totalorder %s228, 31
      %s230 = scalar_select %p229, %s228, 31
      %s231 = smul.addr %s230, 8
      %s232 = scalar_lea.vmem %s4, %s231
      %p233 = pneg %p158
      %p234 = pneg %p155
      %s235 = smul.u32 16, %s17
      %p236 = scmp.lt.s32.totalorder %s235, 31
      %s237 = scalar_select %p236, %s235, 31
      %s238 = smul.addr %s237, 8
      %s239 = scalar_lea.vmem %s5, %s238
      %s240 = smul.u32 16, %s17
      %p241 = scmp.lt.s32.totalorder %s240, 31
      %s242 = scalar_select %p241, %s240, 31
      %s243 = smul.addr %s242, 4
      %s244 = scalar_lea.vmem %s0, %s243
      %s245 = smul.u32 16, %s17
      %s246 = smul.u32 16, %s17
      %p247 = scmp.lt.s32.totalorder %s246, 31
      %s248 = scalar_select %p247, %s246, 31
      %s249 = smul.addr %s248, 8
      %s250 = scalar_lea.vmem %s3, %s249
      %s251 = smul.u32 16, %s17
      %s252 = smul.u32 16, %s17
      %p253 = scmp.lt.s32.totalorder %s252, 31
      %s254 = scalar_select %p253, %s252, 31
      %s255 = smul.addr %s254, 8
      %s256 = scalar_lea.vmem %s4, %s255
      %s257 = smul.u32 16, %s17
      %s258 = smul.u32 16, %s17
      %p259 = scmp.lt.s32.totalorder %s258, 31
      %s260 = scalar_select %p259, %s258, 31
      %s261 = smul.addr %s260, 8
      %s262 = scalar_lea.vmem %s5, %s261
      %s263 = smul.u32 16, %s17
      %v265 = vld [vmem:[%s244] sm:$0xf]
      %v266 = vld [vmem:[%s244 + $0x4] sm:$0xf]
      %v267 = vld [vmem:[%s244 + $0x8] sm:$0xf]
      %v268 = vld [vmem:[%s244 + $0xc] sm:$0xf]
      %v269 = vld [vmem:[%s244 + $0x10] sm:$0xf]
      %v270 = vld [vmem:[%s244 + $0x14] sm:$0xf]
      %v271 = vld [vmem:[%s244 + $0x18] sm:$0xf]
      %v272 = vld [vmem:[%s244 + $0x1c] sm:$0xf]
      %v273 = vld [vmem:[%s244 + $0x20] sm:$0xf]
      %v274 = vld [vmem:[%s244 + $0x24] sm:$0xf]
      %v275 = vld [vmem:[%s244 + $0x28] sm:$0xf]
      %v276 = vld [vmem:[%s244 + $0x2c] sm:$0xf]
      %v277 = vld [vmem:[%s244 + $0x30] sm:$0xf]
      %v278 = vld [vmem:[%s244 + $0x34] sm:$0xf]
      %v279 = vld [vmem:[%s244 + $0x38] sm:$0xf]
      %v280 = vld [vmem:[%s244 + $0x3c] sm:$0xf]
      %v281 = vld [vmem:[%s1] sm:$0xf]
      %v282 = vld [vmem:[%s1 + $0x4] sm:$0xf]
      %v283 = vld [vmem:[%s1 + $0x8] sm:$0xf]
      %v284 = vld [vmem:[%s1 + $0xc] sm:$0xf]
      %v285 = vld [vmem:[%s1 + $0x10] sm:$0x3]
      %v286 = vld [vmem:[%s2] sm:$0x1]
      %v288 = vlaneseq
      %v289 = vshrl.u32 %v288, 7
      %v290 = vsub.s32 0, %v289
      %v291 = vrot.slane %v286, %v290
      %v309 = vunpack.c.l.b16 %v265
      %v310 = vunpack.c.l.b16 %v266
      %v311 = vunpack.c.l.b16 %v267
      %v312 = vunpack.c.l.b16 %v268
      %v313 = vunpack.c.l.b16 %v269
      %v314 = vunpack.c.l.b16 %v270
      %v315 = vunpack.c.l.b16 %v271
      %v316 = vunpack.c.l.b16 %v272
      %v317 = vunpack.c.l.b16 %v273
      %v318 = vunpack.c.l.b16 %v274
      %v319 = vunpack.c.l.b16 %v275
      %v320 = vunpack.c.l.b16 %v276
      %v321 = vunpack.c.l.b16 %v277
      %v322 = vunpack.c.l.b16 %v278
      %v323 = vunpack.c.l.b16 %v279
      %v324 = vunpack.c.l.b16 %v280
      %v325 = vpack.c.b16 %v310, %v309
      %v326 = vpack.c.b16 %v312, %v311
      %v327 = vpack.c.b16 %v314, %v313
      %v328 = vpack.c.b16 %v316, %v315
      %v329 = vpack.c.b16 %v318, %v317
      %v330 = vpack.c.b16 %v320, %v319
      %v331 = vpack.c.b16 %v322, %v321
      %v332 = vpack.c.b16 %v324, %v323
      %v338 = vunpack.c.l.b16 %v281
      %v339 = vunpack.c.l.b16 %v282
      %v340 = vunpack.c.l.b16 %v283
      %v341 = vunpack.c.l.b16 %v284
      %v342 = vunpack.c.l.b16 %v285
      %v343 = vpack.c.b16 %v339, %v338
      %v344 = vpack.c.b16 %v341, %v340
      %v345 = vpack.c.b16 %v342, %v342
      %vm348 = vcmask 293888
      %v350 = vsel %vm348, %v325, 0
      %v353 = vsel %vm348, %v326, 0
      %v356 = vsel %vm348, %v327, 0
      %v359 = vsel %vm348, %v328, 0
      %v362 = vsel %vm348, %v329, 0
      %v365 = vsel %vm348, %v330, 0
      %v368 = vsel %vm348, %v331, 0
      %v371 = vsel %vm348, %v332, 0
      %vm373 = vcmask 1041408
      %v375 = vsel %vm373, %v345, 0
      %377 = vmatprep.subr.bf16.mxu0 0
      %378 = vmatpush1.bf16.msra.mxu0 %v343
      %379 = vmatprep.subr.bf16.mxu0 0
      %380 = vmatpush1.bf16.msra.mxu0 %v344
      %381 = vmatprep.subr.bf16.mxu0 0
      %382 = vmatpush1.bf16.msra.mxu0 %v375
      %383 = vmatprep.subr.bf16.mxu0 0
      %384 = vmatpush1.bf16.msra.mxu0 0
      %385 = vmatprep.subr.bf16.mxu0 0
      %386 = vmatpush1.bf16.msra.mxu0 0
      %387 = vmatprep.subr.bf16.mxu0 0
      %388 = vmatpush1.bf16.msra.mxu0 0
      %389 = vmatprep.subr.bf16.mxu0 0
      %390 = vmatpush1.bf16.msra.mxu0 0
      %391 = vmatprep.subr.bf16.mxu0 0
      %392 = vmatpush1.bf16.msra.mxu0 0
      %393 = vmatprep.subr.bf16.mxu0 0
      %394 = vmatpush1.bf16.msra.mxu0 0
      %395 = vmatprep.subr.bf16.mxu0 0
      %396 = vmatpush1.bf16.msra.mxu0 0
      %397 = vmatprep.subr.bf16.mxu0 0
      %398 = vmatpush1.bf16.msra.mxu0 0
      %399 = vmatprep.subr.bf16.mxu0 0
      %400 = vmatpush1.bf16.msra.mxu0 0
      %401 = vmatprep.subr.bf16.mxu0 0
      %402 = vmatpush1.bf16.msra.mxu0 0
      %403 = vmatprep.subr.bf16.mxu0 0
      %404 = vmatpush1.bf16.msra.mxu0 0
      %405 = vmatprep.subr.bf16.mxu0 0
      %406 = vmatpush1.bf16.msra.mxu0 0
      %407 = vmatprep.subr.bf16.mxu0 0
      %408 = vmatpush1.bf16.msra.mxu0 0
      %409 = vmatprep.mubr.bf16.mxu0 0
      %410 = vmatmul.mubr.bf16.gmra.mrb[0].mxu0 %v350
      %v411 = vpop.f32.mrb[0].mxu0
      %v412 = vadd.f32 %v291, %v411
      %v413 = vpop.f32.mrb[0].mxu0
      %v414 = vpop.f32.mrb[0].mxu0
      %v415 = vadd.f32 %v291, %v414
      %v416 = vpop.f32.mrb[0].mxu0
      %417 = vmatprep.mubr.bf16.mxu0 0
      %418 = vmatmul.mubr.bf16.gmra.mrb[0].mxu0 %v353
      %v419 = vpop.f32.mrb[0].mxu0
      %v420 = vadd.f32 %v291, %v419
      %v421 = vpop.f32.mrb[0].mxu0
      %v422 = vpop.f32.mrb[0].mxu0
      %v423 = vadd.f32 %v291, %v422
      %v424 = vpop.f32.mrb[0].mxu0
      %425 = vmatprep.mubr.bf16.mxu0 0
      %426 = vmatmul.mubr.bf16.gmra.mrb[0].mxu0 %v356
      %v427 = vpop.f32.mrb[0].mxu0
      %v428 = vadd.f32 %v291, %v427
      %v429 = vpop.f32.mrb[0].mxu0
      %v430 = vpop.f32.mrb[0].mxu0
      %v431 = vadd.f32 %v291, %v430
      %v432 = vpop.f32.mrb[0].mxu0
      %433 = vmatprep.mubr.bf16.mxu0 0
      %434 = vmatmul.mubr.bf16.gmra.mrb[0].mxu0 %v359
      %v435 = vpop.f32.mrb[0].mxu0
      %v436 = vadd.f32 %v291, %v435
      %v437 = vpop.f32.mrb[0].mxu0
      %v438 = vpop.f32.mrb[0].mxu0
      %v439 = vadd.f32 %v291, %v438
      %v440 = vpop.f32.mrb[0].mxu0
      %441 = vmatprep.mubr.bf16.mxu0 0
      %442 = vmatmul.mubr.bf16.gmra.mrb[0].mxu0 %v362
      %v443 = vpop.f32.mrb[0].mxu0
      %v444 = vadd.f32 %v291, %v443
      %v445 = vpop.f32.mrb[0].mxu0
      %v446 = vpop.f32.mrb[0].mxu0
      %v447 = vadd.f32 %v291, %v446
      %v448 = vpop.f32.mrb[0].mxu0
      %449 = vmatprep.mubr.bf16.mxu0 0
      %450 = vmatmul.mubr.bf16.gmra.mrb[0].mxu0 %v365
      %v451 = vpop.f32.mrb[0].mxu0
      %v452 = vadd.f32 %v291, %v451
      %v453 = vpop.f32.mrb[0].mxu0
      %v454 = vpop.f32.mrb[0].mxu0
      %v455 = vadd.f32 %v291, %v454
      %v456 = vpop.f32.mrb[0].mxu0
      %457 = vmatprep.mubr.bf16.mxu0 0
      %458 = vmatmul.mubr.bf16.gmra.mrb[0].mxu0 %v368
      %v459 = vpop.f32.mrb[0].mxu0
      %v460 = vadd.f32 %v291, %v459
      %v461 = vpop.f32.mrb[0].mxu0
      %v462 = vpop.f32.mrb[0].mxu0
      %v463 = vadd.f32 %v291, %v462
      %v464 = vpop.f32.mrb[0].mxu0
      %465 = vmatprep.mubr.bf16.mxu0 0
      %466 = vmatmul.mubr.bf16.gmra.mrb[0].mxu0 %v371
      %v467 = vpop.f32.mrb[0].mxu0
      %v468 = vadd.f32 %v291, %v467
      %v469 = vpop.f32.mrb[0].mxu0
      %v470 = vpop.f32.mrb[0].mxu0
      %v471 = vadd.f32 %v291, %v470
      %v472 = vpop.f32.mrb[0].mxu0
      %473 = vdwg.mxu0
      %vm474 = vcmask 64512
      %475 = vst.msk [vmem:[%s256] sm:$0xff] %vm474, %v412
      %476 = vst.msk [vmem:[%s256 + $0x8] sm:$0xff] %vm474, %v415
      %477 = vst.msk [vmem:[%s256 + $0x10] sm:$0xff] %vm474, %v420
      %478 = vst.msk [vmem:[%s256 + $0x18] sm:$0xff] %vm474, %v423
      %479 = vst.msk [vmem:[%s256 + $0x20] sm:$0xff] %vm474, %v428
      %480 = vst.msk [vmem:[%s256 + $0x28] sm:$0xff] %vm474, %v431
      %481 = vst.msk [vmem:[%s256 + $0x30] sm:$0xff] %vm474, %v436
      %482 = vst.msk [vmem:[%s256 + $0x38] sm:$0xff] %vm474, %v439
      %483 = vst.msk [vmem:[%s256 + $0x40] sm:$0xff] %vm474, %v444
      %484 = vst.msk [vmem:[%s256 + $0x48] sm:$0xff] %vm474, %v447
      %485 = vst.msk [vmem:[%s256 + $0x50] sm:$0xff] %vm474, %v452
      %486 = vst.msk [vmem:[%s256 + $0x58] sm:$0xff] %vm474, %v455
      %487 = vst.msk [vmem:[%s256 + $0x60] sm:$0xff] %vm474, %v460
      %488 = vst.msk [vmem:[%s256 + $0x68] sm:$0xff] %vm474, %v463
      %489 = vst.msk [vmem:[%s256 + $0x70] sm:$0xff] %vm474, %v468
      %490 = vst.msk [vmem:[%s256 + $0x78] sm:$0xff] %vm474, %v471
      %v491 = vld [vmem:[%s250] sm:$0xff]
      %v492 = vld [vmem:[%s250 + $0x8] sm:$0xff]
      %v493 = vld [vmem:[%s250 + $0x10] sm:$0xff]
      %v494 = vld [vmem:[%s250 + $0x18] sm:$0xff]
      %v495 = vld [vmem:[%s250 + $0x20] sm:$0xff]
      %v496 = vld [vmem:[%s250 + $0x28] sm:$0xff]
      %v497 = vld [vmem:[%s250 + $0x30] sm:$0xff]
      %v498 = vld [vmem:[%s250 + $0x38] sm:$0xff]
      %v499 = vld [vmem:[%s250 + $0x40] sm:$0xff]
      %v500 = vld [vmem:[%s250 + $0x48] sm:$0xff]
      %v501 = vld [vmem:[%s250 + $0x50] sm:$0xff]
      %v502 = vld [vmem:[%s250 + $0x58] sm:$0xff]
      %v503 = vld [vmem:[%s250 + $0x60] sm:$0xff]
      %v504 = vld [vmem:[%s250 + $0x68] sm:$0xff]
      %v505 = vld [vmem:[%s250 + $0x70] sm:$0xff]
      %v506 = vld [vmem:[%s250 + $0x78] sm:$0xff]
      %v507 = vmul.f32 %v412, 0.01
      %v508 = vmul.f32 %v415, 0.01
      %v509 = vmul.f32 %v420, 0.01
      %v510 = vmul.f32 %v423, 0.01
      %v511 = vmul.f32 %v428, 0.01
      %v512 = vmul.f32 %v431, 0.01
      %v513 = vmul.f32 %v436, 0.01
      %v514 = vmul.f32 %v439, 0.01
      %v515 = vmul.f32 %v444, 0.01
      %v516 = vmul.f32 %v447, 0.01
      %v517 = vmul.f32 %v452, 0.01
      %v518 = vmul.f32 %v455, 0.01
      %v519 = vmul.f32 %v460, 0.01
      %v520 = vmul.f32 %v463, 0.01
      %v521 = vmul.f32 %v468, 0.01
      %v522 = vmul.f32 %v471, 0.01
      %v523 = vmul.f32 %v507, 1.442695
      %v524 = vpow.pop %v523
      %v525 = vmul.f32 %v508, 1.442695
      %v526 = vpow.pop %v525
      %v527 = vmul.f32 %v509, 1.442695
      %v528 = vpow.pop %v527
      %v529 = vmul.f32 %v510, 1.442695
      %v530 = vpow.pop %v529
      %v531 = vmul.f32 %v511, 1.442695
      %v532 = vpow.pop %v531
      %v533 = vmul.f32 %v512, 1.442695
      %v534 = vpow.pop %v533
      %v535 = vmul.f32 %v513, 1.442695
      %v536 = vpow.pop %v535
      %v537 = vmul.f32 %v514, 1.442695
      %v538 = vpow.pop %v537
      %v539 = vmul.f32 %v515, 1.442695
      %v540 = vpow.pop %v539
      %v541 = vmul.f32 %v516, 1.442695
      %v542 = vpow.pop %v541
      %v543 = vmul.f32 %v517, 1.442695
      %v544 = vpow.pop %v543
      %v545 = vmul.f32 %v518, 1.442695
      %v546 = vpow.pop %v545
      %v547 = vmul.f32 %v519, 1.442695
      %v548 = vpow.pop %v547
      %v549 = vmul.f32 %v520, 1.442695
      %v550 = vpow.pop %v549
      %v551 = vmul.f32 %v521, 1.442695
      %v552 = vpow.pop %v551
      %v553 = vmul.f32 %v522, 1.442695
      %v554 = vpow.pop %v553
      %571 = vrot.lane.b32.xlu0 %v524, 124
      %v572 = vpop.permute.xlu0 %571
      %573 = vrot.lane.b32.xlu0 %v526, 124
      %v574 = vpop.permute.xlu0 %573
      %575 = vrot.lane.b32.xlu0 %v528, 124
      %v576 = vpop.permute.xlu0 %575
      %577 = vrot.lane.b32.xlu0 %v530, 124
      %v578 = vpop.permute.xlu0 %577
      %579 = vrot.lane.b32.xlu0 %v532, 124
      %v580 = vpop.permute.xlu0 %579
      %581 = vrot.lane.b32.xlu0 %v534, 124
      %v582 = vpop.permute.xlu0 %581
      %583 = vrot.lane.b32.xlu0 %v536, 124
      %v584 = vpop.permute.xlu0 %583
      %585 = vrot.lane.b32.xlu0 %v538, 124
      %v586 = vpop.permute.xlu0 %585
      %587 = vrot.lane.b32.xlu0 %v540, 124
      %v588 = vpop.permute.xlu0 %587
      %589 = vrot.lane.b32.xlu0 %v542, 124
      %v590 = vpop.permute.xlu0 %589
      %591 = vrot.lane.b32.xlu0 %v544, 124
      %v592 = vpop.permute.xlu0 %591
      %593 = vrot.lane.b32.xlu0 %v546, 124
      %v594 = vpop.permute.xlu0 %593
      %595 = vrot.lane.b32.xlu0 %v548, 124
      %v596 = vpop.permute.xlu0 %595
      %597 = vrot.lane.b32.xlu0 %v550, 124
      %v598 = vpop.permute.xlu0 %597
      %599 = vrot.lane.b32.xlu0 %v552, 124
      %v600 = vpop.permute.xlu0 %599
      %601 = vrot.lane.b32.xlu0 %v554, 124
      %v602 = vpop.permute.xlu0 %601
      %v619 = vmul.f32 %v491, %v572
      %v620 = vmul.f32 %v492, %v574
      %v621 = vmul.f32 %v493, %v576
      %v622 = vmul.f32 %v494, %v578
      %v623 = vmul.f32 %v495, %v580
      %v624 = vmul.f32 %v496, %v582
      %v625 = vmul.f32 %v497, %v584
      %v626 = vmul.f32 %v498, %v586
      %v627 = vmul.f32 %v499, %v588
      %v628 = vmul.f32 %v500, %v590
      %v629 = vmul.f32 %v501, %v592
      %v630 = vmul.f32 %v502, %v594
      %v631 = vmul.f32 %v503, %v596
      %v632 = vmul.f32 %v504, %v598
      %v633 = vmul.f32 %v505, %v600
      %v634 = vmul.f32 %v506, %v602
      %v635 = vadd.f32 %v412, %v619
      %v636 = vadd.f32 %v415, %v620
      %v637 = vadd.f32 %v420, %v621
      %v638 = vadd.f32 %v423, %v622
      %v639 = vadd.f32 %v428, %v623
      %v640 = vadd.f32 %v431, %v624
      %v641 = vadd.f32 %v436, %v625
      %v642 = vadd.f32 %v439, %v626
      %v643 = vadd.f32 %v444, %v627
      %v644 = vadd.f32 %v447, %v628
      %v645 = vadd.f32 %v452, %v629
      %v646 = vadd.f32 %v455, %v630
      %v647 = vadd.f32 %v460, %v631
      %v648 = vadd.f32 %v463, %v632
      %v649 = vadd.f32 %v468, %v633
      %v650 = vadd.f32 %v471, %v634
      %vm651 = vcmask 31744
      %652 = vst.msk [vmem:[%s262] sm:$0xff] %vm651, %v635
      %653 = vst.msk [vmem:[%s262 + $0x8] sm:$0xff] %vm651, %v636
      %654 = vst.msk [vmem:[%s262 + $0x10] sm:$0xff] %vm651, %v637
      %655 = vst.msk [vmem:[%s262 + $0x18] sm:$0xff] %vm651, %v638
      %656 = vst.msk [vmem:[%s262 + $0x20] sm:$0xff] %vm651, %v639
      %657 = vst.msk [vmem:[%s262 + $0x28] sm:$0xff] %vm651, %v640
      %658 = vst.msk [vmem:[%s262 + $0x30] sm:$0xff] %vm651, %v641
      %659 = vst.msk [vmem:[%s262 + $0x38] sm:$0xff] %vm651, %v642
      %660 = vst.msk [vmem:[%s262 + $0x40] sm:$0xff] %vm651, %v643
      %661 = vst.msk [vmem:[%s262 + $0x48] sm:$0xff] %vm651, %v644
      %662 = vst.msk [vmem:[%s262 + $0x50] sm:$0xff] %vm651, %v645
      %663 = vst.msk [vmem:[%s262 + $0x58] sm:$0xff] %vm651, %v646
      %664 = vst.msk [vmem:[%s262 + $0x60] sm:$0xff] %vm651, %v647
      %665 = vst.msk [vmem:[%s262 + $0x68] sm:$0xff] %vm651, %v648
      %666 = vst.msk [vmem:[%s262 + $0x70] sm:$0xff] %vm651, %v649
      %667 = vst.msk [vmem:[%s262 + $0x78] sm:$0xff] %vm651, %v650
      %s668 = smul.u32 16, %s17
      %p669 = scmp.lt.s32.totalorder %s668, 31
      %s670 = scalar_select %p669, %s668, 31
      %s671 = smul.addr %s670, 8
      %s672 = scalar_lea.vmem %s4, %s671
      %s673 = smul.u32 16, %s17
      %p674 = scmp.lt.s32.totalorder %s673, 31
      %s675 = scalar_select %p674, %s673, 31
      %s676 = smul.addr %s675, 8
      %s677 = scalar_lea.vmem %s5, %s676
      // Predicated region
      $region37: #{pgmsu_forward.17} parent=35 // pred_check
        %p678 = pneg %p129
      $region38: #{pgmsu_forward.17} parent=35 // pred_check_branch
        %680 = sbr.rel (%p678) target = $region40
      $region39: #{pgmsu_forward.17} parent=35 // pred_region
        %s681 = smul.u32 16, %s17
      $region40: #{pgmsu_forward.17} parent=35 // pred_fallthru
        _
      // Predicated region
      $region41: #{pgmsu_forward.17} parent=35 // pred_check
        %p682 = pneg %p155
      $region42: #{pgmsu_forward.17} parent=35 // pred_check_branch
        %684 = sbr.rel (%p682) target = $region44
      $region43: #{pgmsu_forward.17} parent=35 // pred_region
        %s685 = smul.u32 16, %s17
      $region44: #{pgmsu_forward.17} parent=35 // pred_fallthru
        _
    $region36: #{pgmsu_forward.17} parent=5 // pred_fallthru
      _
    %p686 = scmp.le.s32.totalorder 2, %s12
    // Predicated region
    $region45: #{pgmsu_forward.17} parent=5 // pred_check
      %p687 = pneg %p686
    $region46: #{pgmsu_forward.17} parent=5 // pred_check_branch
      %689 = sbr.rel (%p687) target = $region48
    $region47: #{pgmsu_forward.17} parent=5 // pred_region
      %s690 = ssub.s32 %s12, 2
      // Predicated region
      $region49: #{pgmsu_forward.17} parent=47 // pred_check
        %p691 = pneg %p135
      $region50: #{pgmsu_forward.17} parent=47 // pred_check_branch
        %693 = sbr.rel (%p691) target = $region52
      $region51: #{pgmsu_forward.17} parent=47 // pred_region
        %s694 = smul.u32 16, %s18
        %p695 = scmp.lt.s32.totalorder %s694, 31
        %s696 = scalar_select %p695, %s694, 31
        %s697 = smul.addr %s696, 8
        %s698 = scalar_lea.vmem %s4, %s697
      $region52: #{pgmsu_forward.17} parent=47 // pred_fallthru
        _
      // Predicated region
      $region53: #{pgmsu_forward.17} parent=47 // pred_check
        %p699 = pneg %p161
      $region54: #{pgmsu_forward.17} parent=47 // pred_check_branch
        %701 = sbr.rel (%p699) target = $region56
      $region55: #{pgmsu_forward.17} parent=47 // pred_region
        %s702 = smul.u32 16, %s18
        %p703 = scmp.lt.s32.totalorder %s702, 31
        %s704 = scalar_select %p703, %s702, 31
        %s705 = smul.addr %s704, 8
        %s706 = scalar_lea.vmem %s5, %s705
      $region56: #{pgmsu_forward.17} parent=47 // pred_fallthru
        _
    $region48: #{pgmsu_forward.17} parent=5 // pred_fallthru
      _
  $region6: #{pgmsu_forward.17} parent=0 // loop_footer
    %s16 = sadd.s32 1, %s12
  $region7: #{pgmsu_forward.17} parent=0 // loop_footer_branch
    %11 = sbr.rel target = $region3
  $region8: #{pgmsu_forward.17} parent=0 // loop_exit
    _

// kernel: pgmsu_forward.18
$region0: #{pgmsu_forward.18}
  #allocation0 [shape = 'u32[]', space=smem, size = 0x4, offset = 0x4, fixed_abs, tag = 'smem constant byte address 0x4 - core index']
  #allocation1 [shape = 'u32[144,128]{1,0:T(1,128)}', space=vmem, size = 0x12000, scoped, tag = 'internal scratch']
  %s0 = inlined_call_operand.vmem [shape: bf16[256,4], index: 0, kind: input, shape index: {}]
  %s1 = inlined_call_operand.vmem [shape: bf16[4,64], index: 1, kind: input, shape index: {}]
  %s2 = inlined_call_operand.vmem [shape: f32[1,64], index: 2, kind: input, shape index: {}]
  %s3 = inlined_call_operand.vmem [shape: f32[1,64], index: 3, kind: input, shape index: {}]
  %s4 = inlined_call_operand.vmem [shape: bf16[64,256], index: 4, kind: input, shape index: {}]
  %s5 = inlined_call_operand.vmem [shape: f32[1,256], index: 5, kind: input, shape index: {}]
  %s6 = inlined_call_operand.vmem [shape: f32[1,256], index: 6, kind: input, shape index: {}]
  %s7 = inlined_call_operand.vmem [shape: bf16[256,16], index: 7, kind: input, shape index: {}]
  %s8 = inlined_call_operand.vmem [shape: f32[1,16], index: 8, kind: input, shape index: {}]
  %s9 = inlined_call_operand.vmem [shape: f32[256,16], index: 9, kind: output, shape index: {}]
  %s10 = sld [smem:[#allocation0]]
  $region69: #{pgmsu_forward.18} parent=0
    _
  %s12 = ssub.s32 1, %s10
  %s13 = scalar_select 0, %s12, %s10
  loop: start=0, step=1, limit=4
  $region2: #{pgmsu_forward.18} parent=0 // loop_pre_header
    _
  $region3: #{pgmsu_forward.18} parent=0 // loop_header
    %s15 = sphi 0, %s19
    %p16 = scmp.ge.s32.totalorder %s15, 4
    %s25 = sphi 0, %s27
    %s28 = sphi 0, %s25
    %s29 = sphi 0, %s28
    %s45 = sphi 0, %s29
    %s49 = sphi 0, %s49
    %s51 = sphi 0, %s49
    %s52 = sphi 0, %s51
    %s66 = sphi 0, %s52
    %s70 = sphi 0, %s70
    %s72 = sphi 0, %s70
    %s73 = sphi 0, %s72
    %s87 = sphi 0, %s73
    %s91 = sphi 0, %s91
    %s93 = sphi 0, %s91
    %s94 = sphi 0, %s93
    %s108 = sphi 0, %s94
    %s112 = sphi 0, %s112
    %s114 = sphi 0, %s112
    %s115 = sphi 0, %s114
    %s129 = sphi 0, %s115
    %s133 = sphi 0, %s133
    %s135 = sphi 0, %s133
    %s136 = sphi 0, %s135
    %s150 = sphi 0, %s136
    %s154 = sphi 0, %s154
    %s156 = sphi 0, %s154
    %s157 = sphi 0, %s156
    %s171 = sphi 0, %s157
    %s175 = sphi 0, %s175
    %s177 = sphi 0, %s175
    %s178 = sphi 0, %s177
    %s192 = sphi 0, %s178
    %s196 = sphi 0, %s196
    %s198 = sphi 0, %s196
    %s199 = sphi 0, %s198
    %s213 = sphi 0, %s199
    %s219 = sphi 0, %s221
    %s222 = sphi 0, %s219
    %s223 = sphi 0, %s222
    %s239 = sphi 0, %s223
  $region4: #{pgmsu_forward.18} parent=0 // loop_header_branch
    %18 = sbr.rel (%p16) target = $region8
  $region5: #{pgmsu_forward.18} parent=0 // loop_body
    %s20 = ssub.s32 %s15, 1
    %s21 = ssub.s32 %s15, 2
    %s22 = sadd.s32 %s15, 1
    %s23 = ssub.s32 %s15, %s22
    %p24 = scmp.eq.s32.totalorder %s23, 0
    %s26 = sadd.s32 %s25, 1
    %s27 = scalar_select %p24, %s25, %s26
    %p30 = pneg %p24
    %p31 = scmp.eq.s32.totalorder %s15, 1
    %p32 = por %p30, %p31
    %p33 = scmp.ne.s32.totalorder %s25, %s28
    %p34 = scmp.eq.s32.totalorder %s15, 0
    %p35 = por %p33, %p34
    %p36 = scmp.ne.s32.totalorder %s25, %s28
    %p37 = scmp.eq.s32.totalorder %s20, 1
    %p38 = por %p36, %p37
    %p39 = scmp.ne.s32.totalorder %s28, %s29
    %p40 = scmp.eq.s32.totalorder %s20, 0
    %p41 = por %p39, %p40
    %p42 = scmp.ne.s32.totalorder %s28, %s29
    %p43 = scmp.eq.s32.totalorder %s21, 1
    %p44 = por %p42, %p43
    %p46 = scmp.ne.s32.totalorder %s29, %s45
    %p47 = scmp.eq.s32.totalorder %s21, 0
    %p48 = por %p46, %p47
    %s50 = sadd.s32 %s49, 1
    %p53 = scmp.eq.s32.totalorder %s15, 1
    %p54 = scmp.ne.s32.totalorder %s49, %s51
    %p55 = scmp.eq.s32.totalorder %s15, 0
    %p56 = por %p54, %p55
    %p57 = scmp.ne.s32.totalorder %s49, %s51
    %p58 = scmp.eq.s32.totalorder %s20, 1
    %p59 = por %p57, %p58
    %p60 = scmp.ne.s32.totalorder %s51, %s52
    %p61 = scmp.eq.s32.totalorder %s20, 0
    %p62 = por %p60, %p61
    %p63 = scmp.ne.s32.totalorder %s51, %s52
    %p64 = scmp.eq.s32.totalorder %s21, 1
    %p65 = por %p63, %p64
    %p67 = scmp.ne.s32.totalorder %s52, %s66
    %p68 = scmp.eq.s32.totalorder %s21, 0
    %p69 = por %p67, %p68
    %s71 = sadd.s32 %s70, 1
    %p74 = scmp.eq.s32.totalorder %s15, 1
    %p75 = scmp.ne.s32.totalorder %s70, %s72
    %p76 = scmp.eq.s32.totalorder %s15, 0
    %p77 = por %p75, %p76
    %p78 = scmp.ne.s32.totalorder %s70, %s72
    %p79 = scmp.eq.s32.totalorder %s20, 1
    %p80 = por %p78, %p79
    %p81 = scmp.ne.s32.totalorder %s72, %s73
    %p82 = scmp.eq.s32.totalorder %s20, 0
    %p83 = por %p81, %p82
    %p84 = scmp.ne.s32.totalorder %s72, %s73
    %p85 = scmp.eq.s32.totalorder %s21, 1
    %p86 = por %p84, %p85
    %p88 = scmp.ne.s32.totalorder %s73, %s87
    %p89 = scmp.eq.s32.totalorder %s21, 0
    %p90 = por %p88, %p89
    %s92 = sadd.s32 %s91, 1
    %p95 = scmp.eq.s32.totalorder %s15, 1
    %p96 = scmp.ne.s32.totalorder %s91, %s93
    %p97 = scmp.eq.s32.totalorder %s15, 0
    %p98 = por %p96, %p97
    %p99 = scmp.ne.s32.totalorder %s91, %s93
    %p100 = scmp.eq.s32.totalorder %s20, 1
    %p101 = por %p99, %p100
    %p102 = scmp.ne.s32.totalorder %s93, %s94
    %p103 = scmp.eq.s32.totalorder %s20, 0
    %p104 = por %p102, %p103
    %p105 = scmp.ne.s32.totalorder %s93, %s94
    %p106 = scmp.eq.s32.totalorder %s21, 1
    %p107 = por %p105, %p106
    %p109 = scmp.ne.s32.totalorder %s94, %s108
    %p110 = scmp.eq.s32.totalorder %s21, 0
    %p111 = por %p109, %p110
    %s113 = sadd.s32 %s112, 1
    %p116 = scmp.eq.s32.totalorder %s15, 1
    %p117 = scmp.ne.s32.totalorder %s112, %s114
    %p118 = scmp.eq.s32.totalorder %s15, 0
    %p119 = por %p117, %p118
    %p120 = scmp.ne.s32.totalorder %s112, %s114
    %p121 = scmp.eq.s32.totalorder %s20, 1
    %p122 = por %p120, %p121
    %p123 = scmp.ne.s32.totalorder %s114, %s115
    %p124 = scmp.eq.s32.totalorder %s20, 0
    %p125 = por %p123, %p124
    %p126 = scmp.ne.s32.totalorder %s114, %s115
    %p127 = scmp.eq.s32.totalorder %s21, 1
    %p128 = por %p126, %p127
    %p130 = scmp.ne.s32.totalorder %s115, %s129
    %p131 = scmp.eq.s32.totalorder %s21, 0
    %p132 = por %p130, %p131
    %s134 = sadd.s32 %s133, 1
    %p137 = scmp.eq.s32.totalorder %s15, 1
    %p138 = scmp.ne.s32.totalorder %s133, %s135
    %p139 = scmp.eq.s32.totalorder %s15, 0
    %p140 = por %p138, %p139
    %p141 = scmp.ne.s32.totalorder %s133, %s135
    %p142 = scmp.eq.s32.totalorder %s20, 1
    %p143 = por %p141, %p142
    %p144 = scmp.ne.s32.totalorder %s135, %s136
    %p145 = scmp.eq.s32.totalorder %s20, 0
    %p146 = por %p144, %p145
    %p147 = scmp.ne.s32.totalorder %s135, %s136
    %p148 = scmp.eq.s32.totalorder %s21, 1
    %p149 = por %p147, %p148
    %p151 = scmp.ne.s32.totalorder %s136, %s150
    %p152 = scmp.eq.s32.totalorder %s21, 0
    %p153 = por %p151, %p152
    %s155 = sadd.s32 %s154, 1
    %p158 = scmp.eq.s32.totalorder %s15, 1
    %p159 = scmp.ne.s32.totalorder %s154, %s156
    %p160 = scmp.eq.s32.totalorder %s15, 0
    %p161 = por %p159, %p160
    %p162 = scmp.ne.s32.totalorder %s154, %s156
    %p163 = scmp.eq.s32.totalorder %s20, 1
    %p164 = por %p162, %p163
    %p165 = scmp.ne.s32.totalorder %s156, %s157
    %p166 = scmp.eq.s32.totalorder %s20, 0
    %p167 = por %p165, %p166
    %p168 = scmp.ne.s32.totalorder %s156, %s157
    %p169 = scmp.eq.s32.totalorder %s21, 1
    %p170 = por %p168, %p169
    %p172 = scmp.ne.s32.totalorder %s157, %s171
    %p173 = scmp.eq.s32.totalorder %s21, 0
    %p174 = por %p172, %p173
    %s176 = sadd.s32 %s175, 1
    %p179 = scmp.eq.s32.totalorder %s15, 1
    %p180 = scmp.ne.s32.totalorder %s175, %s177
    %p181 = scmp.eq.s32.totalorder %s15, 0
    %p182 = por %p180, %p181
    %p183 = scmp.ne.s32.totalorder %s175, %s177
    %p184 = scmp.eq.s32.totalorder %s20, 1
    %p185 = por %p183, %p184
    %p186 = scmp.ne.s32.totalorder %s177, %s178
    %p187 = scmp.eq.s32.totalorder %s20, 0
    %p188 = por %p186, %p187
    %p189 = scmp.ne.s32.totalorder %s177, %s178
    %p190 = scmp.eq.s32.totalorder %s21, 1
    %p191 = por %p189, %p190
    %p193 = scmp.ne.s32.totalorder %s178, %s192
    %p194 = scmp.eq.s32.totalorder %s21, 0
    %p195 = por %p193, %p194
    %s197 = sadd.s32 %s196, 1
    %p200 = scmp.eq.s32.totalorder %s15, 1
    %p201 = scmp.ne.s32.totalorder %s196, %s198
    %p202 = scmp.eq.s32.totalorder %s15, 0
    %p203 = por %p201, %p202
    %p204 = scmp.ne.s32.totalorder %s196, %s198
    %p205 = scmp.eq.s32.totalorder %s20, 1
    %p206 = por %p204, %p205
    %p207 = scmp.ne.s32.totalorder %s198, %s199
    %p208 = scmp.eq.s32.totalorder %s20, 0
    %p209 = por %p207, %p208
    %p210 = scmp.ne.s32.totalorder %s198, %s199
    %p211 = scmp.eq.s32.totalorder %s21, 1
    %p212 = por %p210, %p211
    %p214 = scmp.ne.s32.totalorder %s199, %s213
    %p215 = scmp.eq.s32.totalorder %s21, 0
    %p216 = por %p214, %p215
    %s217 = ssub.s32 %s15, %s22
    %p218 = scmp.eq.s32.totalorder %s217, 0
    %s220 = sadd.s32 %s219, 1
    %s221 = scalar_select %p218, %s219, %s220
    %p224 = pneg %p218
    %p225 = scmp.eq.s32.totalorder %s15, 1
    %p226 = por %p224, %p225
    %p227 = scmp.ne.s32.totalorder %s219, %s222
    %p228 = scmp.eq.s32.totalorder %s15, 0
    %p229 = por %p227, %p228
    %p230 = scmp.ne.s32.totalorder %s219, %s222
    %p231 = scmp.eq.s32.totalorder %s20, 1
    %p232 = por %p230, %p231
    %p233 = scmp.ne.s32.totalorder %s222, %s223
    %p234 = scmp.eq.s32.totalorder %s20, 0
    %p235 = por %p233, %p234
    %p236 = scmp.ne.s32.totalorder %s222, %s223
    %p237 = scmp.eq.s32.totalorder %s21, 1
    %p238 = por %p236, %p237
    %p240 = scmp.ne.s32.totalorder %s223, %s239
    %p241 = scmp.eq.s32.totalorder %s21, 0
    %p242 = por %p240, %p241
    %p243 = scmp.le.s32.totalorder 1, %s15
    %p244 = scmp.lt.s32.totalorder %s15, 3
    %p245 = pnand %p243, %p244
    %p246 = pneg %p245
    // Predicated region
    $region9: #{pgmsu_forward.18} parent=5 // pred_check
      _
    $region10: #{pgmsu_forward.18} parent=5 // pred_check_branch
      %248 = sbr.rel (%p245) target = $region12
    $region11: #{pgmsu_forward.18} parent=5 // pred_region
      %s249 = ssub.s32 %s15, 1
      // Predicated region
      $region13: #{pgmsu_forward.18} parent=11 // pred_check
        %p250 = pneg %p62
      $region14: #{pgmsu_forward.18} parent=11 // pred_check_branch
        %252 = sbr.rel (%p250) target = $region16
      $region15: #{pgmsu_forward.18} parent=11 // pred_region
        _
      $region16: #{pgmsu_forward.18} parent=11 // pred_fallthru
        _
      // Predicated region
      $region17: #{pgmsu_forward.18} parent=11 // pred_check
        %p253 = pneg %p83
      $region18: #{pgmsu_forward.18} parent=11 // pred_check_branch
        %255 = sbr.rel (%p253) target = $region20
      $region19: #{pgmsu_forward.18} parent=11 // pred_region
        _
      $region20: #{pgmsu_forward.18} parent=11 // pred_fallthru
        _
      // Predicated region
      $region21: #{pgmsu_forward.18} parent=11 // pred_check
        %p256 = pneg %p104
      $region22: #{pgmsu_forward.18} parent=11 // pred_check_branch
        %258 = sbr.rel (%p256) target = $region24
      $region23: #{pgmsu_forward.18} parent=11 // pred_region
        _
      $region24: #{pgmsu_forward.18} parent=11 // pred_fallthru
        _
      // Predicated region
      $region25: #{pgmsu_forward.18} parent=11 // pred_check
        %p259 = pneg %p125
      $region26: #{pgmsu_forward.18} parent=11 // pred_check_branch
        %261 = sbr.rel (%p259) target = $region28
      $region27: #{pgmsu_forward.18} parent=11 // pred_region
        _
      $region28: #{pgmsu_forward.18} parent=11 // pred_fallthru
        _
      // Predicated region
      $region29: #{pgmsu_forward.18} parent=11 // pred_check
        %p262 = pneg %p146
      $region30: #{pgmsu_forward.18} parent=11 // pred_check_branch
        %264 = sbr.rel (%p262) target = $region32
      $region31: #{pgmsu_forward.18} parent=11 // pred_region
        _
      $region32: #{pgmsu_forward.18} parent=11 // pred_fallthru
        _
      // Predicated region
      $region33: #{pgmsu_forward.18} parent=11 // pred_check
        %p265 = pneg %p167
      $region34: #{pgmsu_forward.18} parent=11 // pred_check_branch
        %267 = sbr.rel (%p265) target = $region36
      $region35: #{pgmsu_forward.18} parent=11 // pred_region
        _
      $region36: #{pgmsu_forward.18} parent=11 // pred_fallthru
        _
      // Predicated region
      $region37: #{pgmsu_forward.18} parent=11 // pred_check
        %p268 = pneg %p188
      $region38: #{pgmsu_forward.18} parent=11 // pred_check_branch
        %270 = sbr.rel (%p268) target = $region40
      $region39: #{pgmsu_forward.18} parent=11 // pred_region
        _
      $region40: #{pgmsu_forward.18} parent=11 // pred_fallthru
        _
      // Predicated region
      $region41: #{pgmsu_forward.18} parent=11 // pred_check
        %p271 = pneg %p209
      $region42: #{pgmsu_forward.18} parent=11 // pred_check_branch
        %273 = sbr.rel (%p271) target = $region44
      $region43: #{pgmsu_forward.18} parent=11 // pred_region
        _
      $region44: #{pgmsu_forward.18} parent=11 // pred_fallthru
        _
    $region12: #{pgmsu_forward.18} parent=5 // pred_fallthru
      _
    %p274 = scmp.lt.s32.totalorder %s15, 2
    // Predicated region
    $region45: #{pgmsu_forward.18} parent=5 // pred_check
      %p275 = pneg %p274
    $region46: #{pgmsu_forward.18} parent=5 // pred_check_branch
      %277 = sbr.rel (%p275) target = $region48
    $region47: #{pgmsu_forward.18} parent=5 // pred_region
      // Predicated region
      $region49: #{pgmsu_forward.18} parent=47 // pred_check
        %p278 = pneg %p35
      $region50: #{pgmsu_forward.18} parent=47 // pred_check_branch
        %280 = sbr.rel (%p278) target = $region52
      $region51: #{pgmsu_forward.18} parent=47 // pred_region
        %s281 = smul.u32 16, %s15
        %p282 = scmp.lt.s32.totalorder %s281, 31
        %s283 = scalar_select %p282, %s281, 31
        %s284 = smul.addr %s283, 4
        %s285 = scalar_lea.vmem %s0, %s284
        %s286 = smul.u32 16, %s15
      $region52: #{pgmsu_forward.18} parent=47 // pred_fallthru
        _
    $region48: #{pgmsu_forward.18} parent=5 // pred_fallthru
      _
    %p287 = scmp.le.s32.totalorder 1, %s15
    %p288 = scmp.lt.s32.totalorder %s15, 3
    %p289 = pnand %p287, %p288
    %p290 = pneg %p289
    // Predicated region
    $region53: #{pgmsu_forward.18} parent=5 // pred_check
      _
    $region54: #{pgmsu_forward.18} parent=5 // pred_check_branch
      %292 = sbr.rel (%p289) target = $region56
    $region55: #{pgmsu_forward.18} parent=5 // pred_region
      %s293 = ssub.s32 %s15, 1
      %s294 = smul.u32 16, %s20
      %p295 = scmp.lt.s32.totalorder %s294, 31
      %s296 = scalar_select %p295, %s294, 31
      %s297 = smul.addr %s296, 4
      %s298 = scalar_lea.vmem %s0, %s297
      %p299 = pneg %p41
      %p300 = pneg %p38
      %p301 = pneg %p62
      %p302 = pneg %p59
      %p303 = pneg %p83
      %p304 = pneg %p80
      %p305 = pneg %p104
      %p306 = pneg %p101
      %p307 = pneg %p125
      %p308 = pneg %p122
      %p309 = pneg %p146
      %p310 = pneg %p143
      %p311 = pneg %p167
      %p312 = pneg %p164
      %p313 = pneg %p188
      %p314 = pneg %p185
      %p315 = pneg %p209
      %p316 = pneg %p206
      %p317 = pneg %p235
      %p318 = pneg %p232
      %s319 = smul.u32 16, %s20
      %p320 = scmp.lt.s32.totalorder %s319, 31
      %s321 = scalar_select %p320, %s319, 31
      %s322 = smul.addr %s321, 8
      %s323 = scalar_lea.vmem %s9, %s322
      %s324 = smul.u32 16, %s20
      %p325 = scmp.lt.s32.totalorder %s324, 31
      %s326 = scalar_select %p325, %s324, 31
      %s327 = smul.addr %s326, 4
      %s328 = scalar_lea.vmem %s0, %s327
      %s329 = smul.u32 16, %s20
      %s330 = smul.u32 16, %s20
      %p331 = scmp.lt.s32.totalorder %s330, 31
      %s332 = scalar_select %p331, %s330, 31
      %s333 = smul.addr %s332, 8
      %s334 = scalar_lea.vmem %s9, %s333
      %s335 = smul.u32 16, %s20
      %v337 = vld [vmem:[%s328] sm:$0xf]
      %v338 = vld [vmem:[%s328 + $0x4] sm:$0xf]
      %v339 = vld [vmem:[%s328 + $0x8] sm:$0xf]
      %v340 = vld [vmem:[%s328 + $0xc] sm:$0xf]
      %v341 = vld [vmem:[%s328 + $0x10] sm:$0xf]
      %v342 = vld [vmem:[%s328 + $0x14] sm:$0xf]
      %v343 = vld [vmem:[%s328 + $0x18] sm:$0xf]
      %v344 = vld [vmem:[%s328 + $0x1c] sm:$0xf]
      %v345 = vld [vmem:[%s328 + $0x20] sm:$0xf]
      %v346 = vld [vmem:[%s328 + $0x24] sm:$0xf]
      %v347 = vld [vmem:[%s328 + $0x28] sm:$0xf]
      %v348 = vld [vmem:[%s328 + $0x2c] sm:$0xf]
      %v349 = vld [vmem:[%s328 + $0x30] sm:$0xf]
      %v350 = vld [vmem:[%s328 + $0x34] sm:$0xf]
      %v351 = vld [vmem:[%s328 + $0x38] sm:$0xf]
      %v352 = vld [vmem:[%s328 + $0x3c] sm:$0xf]
      %v353 = vld [vmem:[%s1] sm:$0x3]
      %v370 = vunpack.c.l.b16 %v337
      %v371 = vunpack.c.l.b16 %v338
      %v372 = vunpack.c.l.b16 %v339
      %v373 = vunpack.c.l.b16 %v340
      %v374 = vunpack.c.l.b16 %v341
      %v375 = vunpack.c.l.b16 %v342
      %v376 = vunpack.c.l.b16 %v343
      %v377 = vunpack.c.l.b16 %v344
      %v378 = vunpack.c.l.b16 %v345
      %v379 = vunpack.c.l.b16 %v346
      %v380 = vunpack.c.l.b16 %v347
      %v381 = vunpack.c.l.b16 %v348
      %v382 = vunpack.c.l.b16 %v349
      %v383 = vunpack.c.l.b16 %v350
      %v384 = vunpack.c.l.b16 %v351
      %v385 = vunpack.c.l.b16 %v352
      %v386 = vpack.c.b16 %v371, %v370
      %v387 = vpack.c.b16 %v373, %v372
      %v388 = vpack.c.b16 %v375, %v374
      %v389 = vpack.c.b16 %v377, %v376
      %v390 = vpack.c.b16 %v379, %v378
      %v391 = vpack.c.b16 %v381, %v380
      %v392 = vpack.c.b16 %v383, %v382
      %v393 = vpack.c.b16 %v385, %v384
      %vm394 = vcmask 31744
      %v396 = vsel %vm394, %v386, 0
      %v399 = vsel %vm394, %v387, 0
      %v402 = vsel %vm394, %v388, 0
      %v405 = vsel %vm394, %v389, 0
      %v408 = vsel %vm394, %v390, 0
      %v411 = vsel %vm394, %v391, 0
      %v414 = vsel %vm394, %v392, 0
      %v417 = vsel %vm394, %v393, 0
      %vm419 = vcmask 1041408
      %v421 = vsel %vm419, %v353, 0
      %423 = vmatprep.subr.bf16.mxu0 0
      %424 = vmatpush1.bf16.msra.mxu0 %v421
      %425 = vmatprep.subr.bf16.mxu0 0
      %426 = vmatpush1.bf16.msra.mxu0 0
      %427 = vmatprep.subr.bf16.mxu0 0
      %428 = vmatpush1.bf16.msra.mxu0 0
      %429 = vmatprep.subr.bf16.mxu0 0
      %430 = vmatpush1.bf16.msra.mxu0 0
      %431 = vmatprep.subr.bf16.mxu0 0
      %432 = vmatpush1.bf16.msra.mxu0 0
      %433 = vmatprep.subr.bf16.mxu0 0
      %434 = vmatpush1.bf16.msra.mxu0 0
      %435 = vmatprep.subr.bf16.mxu0 0
      %436 = vmatpush1.bf16.msra.mxu0 0
      %437 = vmatprep.subr.bf16.mxu0 0
      %438 = vmatpush1.bf16.msra.mxu0 0
      %439 = vmatprep.subr.bf16.mxu0 0
      %440 = vmatpush1.bf16.msra.mxu0 0
      %441 = vmatprep.subr.bf16.mxu0 0
      %442 = vmatpush1.bf16.msra.mxu0 0
      %443 = vmatprep.subr.bf16.mxu0 0
      %444 = vmatpush1.bf16.msra.mxu0 0
      %445 = vmatprep.subr.bf16.mxu0 0
      %446 = vmatpush1.bf16.msra.mxu0 0
      %447 = vmatprep.subr.bf16.mxu0 0
      %448 = vmatpush1.bf16.msra.mxu0 0
      %449 = vmatprep.subr.bf16.mxu0 0
      %450 = vmatpush1.bf16.msra.mxu0 0
      %451 = vmatprep.subr.bf16.mxu0 0
      %452 = vmatpush1.bf16.msra.mxu0 0
      %453 = vmatprep.subr.bf16.mxu0 0
      %454 = vmatpush1.bf16.msra.mxu0 0
      %455 = vmatprep.mubr.bf16.mxu0 0
      %456 = vmatmul.mubr.bf16.gmra.mrb[0].mxu0 %v396
      %v457 = vpop.f32.mrb[0].mxu0
      %v458 = vadd.f32 0.0, %v457
      %v459 = vpop.f32.mrb[0].mxu0
      %v460 = vpop.f32.mrb[0].mxu0
      %v461 = vadd.f32 0.0, %v460
      %v462 = vpop.f32.mrb[0].mxu0
      %463 = vmatprep.mubr.bf16.mxu0 0
      %464 = vmatmul.mubr.bf16.gmra.mrb[0].mxu0 %v399
      %v465 = vpop.f32.mrb[0].mxu0
      %v466 = vadd.f32 0.0, %v465
      %v467 = vpop.f32.mrb[0].mxu0
      %v468 = vpop.f32.mrb[0].mxu0
      %v469 = vadd.f32 0.0, %v468
      %v470 = vpop.f32.mrb[0].mxu0
      %471 = vmatprep.mubr.bf16.mxu0 0
      %472 = vmatmul.mubr.bf16.gmra.mrb[0].mxu0 %v402
      %v473 = vpop.f32.mrb[0].mxu0
      %v474 = vadd.f32 0.0, %v473
      %v475 = vpop.f32.mrb[0].mxu0
      %v476 = vpop.f32.mrb[0].mxu0
      %v477 = vadd.f32 0.0, %v476
      %v478 = vpop.f32.mrb[0].mxu0
      %479 = vmatprep.mubr.bf16.mxu0 0
      %480 = vmatmul.mubr.bf16.gmra.mrb[0].mxu0 %v405
      %v481 = vpop.f32.mrb[0].mxu0
      %v482 = vadd.f32 0.0, %v481
      %v483 = vpop.f32.mrb[0].mxu0
      %v484 = vpop.f32.mrb[0].mxu0
      %v485 = vadd.f32 0.0, %v484
      %v486 = vpop.f32.mrb[0].mxu0
      %487 = vmatprep.mubr.bf16.mxu0 0
      %488 = vmatmul.mubr.bf16.gmra.mrb[0].mxu0 %v408
      %v489 = vpop.f32.mrb[0].mxu0
      %v490 = vadd.f32 0.0, %v489
      %v491 = vpop.f32.mrb[0].mxu0
      %v492 = vpop.f32.mrb[0].mxu0
      %v493 = vadd.f32 0.0, %v492
      %v494 = vpop.f32.mrb[0].mxu0
      %495 = vmatprep.mubr.bf16.mxu0 0
      %496 = vmatmul.mubr.bf16.gmra.mrb[0].mxu0 %v411
      %v497 = vpop.f32.mrb[0].mxu0
      %v498 = vadd.f32 0.0, %v497
      %v499 = vpop.f32.mrb[0].mxu0
      %v500 = vpop.f32.mrb[0].mxu0
      %v501 = vadd.f32 0.0, %v500
      %v502 = vpop.f32.mrb[0].mxu0
      %503 = vmatprep.mubr.bf16.mxu0 0
      %504 = vmatmul.mubr.bf16.gmra.mrb[0].mxu0 %v414
      %v505 = vpop.f32.mrb[0].mxu0
      %v506 = vadd.f32 0.0, %v505
      %v507 = vpop.f32.mrb[0].mxu0
      %v508 = vpop.f32.mrb[0].mxu0
      %v509 = vadd.f32 0.0, %v508
      %v510 = vpop.f32.mrb[0].mxu0
      %511 = vmatprep.mubr.bf16.mxu0 0
      %512 = vmatmul.mubr.bf16.gmra.mrb[0].mxu0 %v417
      %v513 = vpop.f32.mrb[0].mxu0
      %v514 = vadd.f32 0.0, %v513
      %v515 = vpop.f32.mrb[0].mxu0
      %v516 = vpop.f32.mrb[0].mxu0
      %v517 = vadd.f32 0.0, %v516
      %v518 = vpop.f32.mrb[0].mxu0
      %519 = vdwg.mxu0
      %v520 = vld [vmem:[%s2] sm:$0x1]
      %v522 = vlaneseq
      %v523 = vshrl.u32 %v522, 7
      %v524 = vsub.s32 0, %v523
      %v525 = vrot.slane %v520, %v524
      %v527 = vmul.f32 %v458, %v525
      %v528 = vmul.f32 %v461, %v525
      %v529 = vmul.f32 %v466, %v525
      %v530 = vmul.f32 %v469, %v525
      %v531 = vmul.f32 %v474, %v525
      %v532 = vmul.f32 %v477, %v525
      %v533 = vmul.f32 %v482, %v525
      %v534 = vmul.f32 %v485, %v525
      %v535 = vmul.f32 %v490, %v525
      %v536 = vmul.f32 %v493, %v525
      %v537 = vmul.f32 %v498, %v525
      %v538 = vmul.f32 %v501, %v525
      %v539 = vmul.f32 %v506, %v525
      %v540 = vmul.f32 %v509, %v525
      %v541 = vmul.f32 %v514, %v525
      %v542 = vmul.f32 %v517, %v525
      %v543 = vld [vmem:[%s3] sm:$0x1]
      %v545 = vlaneseq
      %v546 = vshrl.u32 %v545, 7
      %v547 = vsub.s32 0, %v546
      %v548 = vrot.slane %v543, %v547
      %v550 = vadd.f32 %v527, %v548
      %v551 = vadd.f32 %v528, %v548
      %v552 = vadd.f32 %v529, %v548
      %v553 = vadd.f32 %v530, %v548
      %v554 = vadd.f32 %v531, %v548
      %v555 = vadd.f32 %v532, %v548
      %v556 = vadd.f32 %v533, %v548
      %v557 = vadd.f32 %v534, %v548
      %v558 = vadd.f32 %v535, %v548
      %v559 = vadd.f32 %v536, %v548
      %v560 = vadd.f32 %v537, %v548
      %v561 = vadd.f32 %v538, %v548
      %v562 = vadd.f32 %v539, %v548
      %v563 = vadd.f32 %v540, %v548
      %v564 = vadd.f32 %v541, %v548
      %v565 = vadd.f32 %v542, %v548
      %vm566 = vcmp.ge.f32.partialorder %v550, 0.0
      %vm567 = vcmp.ge.f32.partialorder %v551, 0.0
      %vm568 = vcmp.ge.f32.partialorder %v552, 0.0
      %vm569 = vcmp.ge.f32.partialorder %v553, 0.0
      %vm570 = vcmp.ge.f32.partialorder %v554, 0.0
      %vm571 = vcmp.ge.f32.partialorder %v555, 0.0
      %vm572 = vcmp.ge.f32.partialorder %v556, 0.0
      %vm573 = vcmp.ge.f32.partialorder %v557, 0.0
      %vm574 = vcmp.ge.f32.partialorder %v558, 0.0
      %vm575 = vcmp.ge.f32.partialorder %v559, 0.0
      %vm576 = vcmp.ge.f32.partialorder %v560, 0.0
      %vm577 = vcmp.ge.f32.partialorder %v561, 0.0
      %vm578 = vcmp.ge.f32.partialorder %v562, 0.0
      %vm579 = vcmp.ge.f32.partialorder %v563, 0.0
      %vm580 = vcmp.ge.f32.partialorder %v564, 0.0
      %vm581 = vcmp.ge.f32.partialorder %v565, 0.0
      %v582 = vmul.f32 %v550, 0.2
      %v583 = vmul.f32 %v551, 0.2
      %v584 = vmul.f32 %v552, 0.2
      %v585 = vmul.f32 %v553, 0.2
      %v586 = vmul.f32 %v554, 0.2
      %v587 = vmul.f32 %v555, 0.2
      %v588 = vmul.f32 %v556, 0.2
      %v589 = vmul.f32 %v557, 0.2
      %v590 = vmul.f32 %v558, 0.2
      %v591 = vmul.f32 %v559, 0.2
      %v592 = vmul.f32 %v560, 0.2
      %v593 = vmul.f32 %v561, 0.2
      %v594 = vmul.f32 %v562, 0.2
      %v595 = vmul.f32 %v563, 0.2
      %v596 = vmul.f32 %v564, 0.2
      %v597 = vmul.f32 %v565, 0.2
      %v598 = vsel %vm566, %v550, %v582
      %v599 = vsel %vm567, %v551, %v583
      %v600 = vsel %vm568, %v552, %v584
      %v601 = vsel %vm569, %v553, %v585
      %v602 = vsel %vm570, %v554, %v586
      %v603 = vsel %vm571, %v555, %v587
      %v604 = vsel %vm572, %v556, %v588
      %v605 = vsel %vm573, %v557, %v589
      %v606 = vsel %vm574, %v558, %v590
      %v607 = vsel %vm575, %v559, %v591
      %v608 = vsel %vm576, %v560, %v592
      %v609 = vsel %vm577, %v561, %v593
      %v610 = vsel %vm578, %v562, %v594
      %v611 = vsel %vm579, %v563, %v595
      %v612 = vsel %vm580, %v564, %v596
      %v613 = vsel %vm581, %v565, %v597
      %v614 = vpack.c.bf16 %v599, %v598
      %v615 = vpack.c.bf16 %v601, %v600
      %v616 = vpack.c.bf16 %v603, %v602
      %v617 = vpack.c.bf16 %v605, %v604
      %v618 = vpack.c.bf16 %v607, %v606
      %v619 = vpack.c.bf16 %v609, %v608
      %v620 = vpack.c.bf16 %v611, %v610
      %v621 = vpack.c.bf16 %v613, %v612
      %v622 = vld [vmem:[%s4] sm:$0xff]
      %v623 = vld [vmem:[%s4 + $0x8] sm:$0xff]
      %v624 = vld [vmem:[%s4 + $0x10] sm:$0xff]
      %v625 = vld [vmem:[%s4 + $0x18] sm:$0xff]
      %v626 = vld [vmem:[%s4 + $0x20] sm:$0xff]
      %v627 = vld [vmem:[%s4 + $0x28] sm:$0xff]
      %v628 = vld [vmem:[%s4 + $0x30] sm:$0xff]
      %v629 = vld [vmem:[%s4 + $0x38] sm:$0xff]
      %v638 = vunpack.c.l.b16 %v622
      %v639 = vunpack.c.h.b16 %v622
      %v640 = vunpack.c.l.b16 %v623
      %v641 = vunpack.c.h.b16 %v623
      %v642 = vunpack.c.l.b16 %v624
      %v643 = vunpack.c.h.b16 %v624
      %v644 = vunpack.c.l.b16 %v625
      %v645 = vunpack.c.h.b16 %v625
      %v646 = vunpack.c.l.b16 %v626
      %v647 = vunpack.c.h.b16 %v626
      %v648 = vunpack.c.l.b16 %v627
      %v649 = vunpack.c.h.b16 %v627
      %v650 = vunpack.c.l.b16 %v628
      %v651 = vunpack.c.h.b16 %v628
      %v652 = vunpack.c.l.b16 %v629
      %v653 = vunpack.c.h.b16 %v629
      %v654 = vpack.c.b16 %v640, %v638
      %v655 = vpack.c.b16 %v641, %v639
      %v656 = vpack.c.b16 %v644, %v642
      %v657 = vpack.c.b16 %v645, %v643
      %v658 = vpack.c.b16 %v648, %v646
      %v659 = vpack.c.b16 %v649, %v647
      %v660 = vpack.c.b16 %v652, %v650
      %v661 = vpack.c.b16 %v653, %v651
      %vm670 = vcmask 523264
      %v672 = vsel %vm670, %v614, 0
      %v675 = vsel %vm670, %v615, 0
      %v678 = vsel %vm670, %v616, 0
      %v681 = vsel %vm670, %v617, 0
      %v684 = vsel %vm670, %v618, 0
      %v687 = vsel %vm670, %v619, 0
      %v690 = vsel %vm670, %v620, 0
      %v693 = vsel %vm670, %v621, 0
      %695 = vmatprep.subr.bf16.mxu0 %v655
      %696 = vmatpush1.bf16.msra.mxu0 %v654
      %697 = vmatprep.subr.bf16.mxu0 %v657
      %698 = vmatpush1.bf16.msra.mxu0 %v656
      %699 = vmatprep.subr.bf16.mxu0 %v659
      %700 = vmatpush1.bf16.msra.mxu0 %v658
      %701 = vmatprep.subr.bf16.mxu0 %v661
      %702 = vmatpush1.bf16.msra.mxu0 %v660
      %703 = vmatprep.subr.bf16.mxu0 0
      %704 = vmatpush1.bf16.msra.mxu0 0
      %705 = vmatprep.subr.bf16.mxu0 0
      %706 = vmatpush1.bf16.msra.mxu0 0
      %707 = vmatprep.subr.bf16.mxu0 0
      %708 = vmatpush1.bf16.msra.mxu0 0
      %709 = vmatprep.subr.bf16.mxu0 0
      %710 = vmatpush1.bf16.msra.mxu0 0
      %711 = vmatprep.subr.bf16.mxu0 0
      %712 = vmatpush1.bf16.msra.mxu0 0
      %713 = vmatprep.subr.bf16.mxu0 0
      %714 = vmatpush1.bf16.msra.mxu0 0
      %715 = vmatprep.subr.bf16.mxu0 0
      %716 = vmatpush1.bf16.msra.mxu0 0
      %717 = vmatprep.subr.bf16.mxu0 0
      %718 = vmatpush1.bf16.msra.mxu0 0
      %719 = vmatprep.subr.bf16.mxu0 0
      %720 = vmatpush1.bf16.msra.mxu0 0
      %721 = vmatprep.subr.bf16.mxu0 0
      %722 = vmatpush1.bf16.msra.mxu0 0
      %723 = vmatprep.subr.bf16.mxu0 0
      %724 = vmatpush1.bf16.msra.mxu0 0
      %725 = vmatprep.subr.bf16.mxu0 0
      %726 = vmatpush1.bf16.msra.mxu0 0
      %727 = vmatprep.mubr.bf16.mxu0 0
      %728 = vmatmul.mubr.bf16.gmra.mrb[0].mxu0 %v672
      %v729 = vpop.f32.mrb[0].mxu0
      %v730 = vadd.f32 0.0, %v729
      %v731 = vpop.f32.mrb[0].mxu0
      %v732 = vadd.f32 0.0, %v731
      %v733 = vpop.f32.mrb[0].mxu0
      %v734 = vadd.f32 0.0, %v733
      %v735 = vpop.f32.mrb[0].mxu0
      %v736 = vadd.f32 0.0, %v735
      %737 = vmatprep.mubr.bf16.mxu0 0
      %738 = vmatmul.mubr.bf16.gmra.mrb[0].mxu0 %v675
      %v739 = vpop.f32.mrb[0].mxu0
      %v740 = vadd.f32 0.0, %v739
      %v741 = vpop.f32.mrb[0].mxu0
      %v742 = vadd.f32 0.0, %v741
      %v743 = vpop.f32.mrb[0].mxu0
      %v744 = vadd.f32 0.0, %v743
      %v745 = vpop.f32.mrb[0].mxu0
      %v746 = vadd.f32 0.0, %v745
      %747 = vmatprep.mubr.bf16.mxu0 0
      %748 = vmatmul.mubr.bf16.gmra.mrb[0].mxu0 %v678
      %v749 = vpop.f32.mrb[0].mxu0
      %v750 = vadd.f32 0.0, %v749
      %v751 = vpop.f32.mrb[0].mxu0
      %v752 = vadd.f32 0.0, %v751
      %v753 = vpop.f32.mrb[0].mxu0
      %v754 = vadd.f32 0.0, %v753
      %v755 = vpop.f32.mrb[0].mxu0
      %v756 = vadd.f32 0.0, %v755
      %757 = vmatprep.mubr.bf16.mxu0 0
      %758 = vmatmul.mubr.bf16.gmra.mrb[0].mxu0 %v681
      %v759 = vpop.f32.mrb[0].mxu0
      %v760 = vadd.f32 0.0, %v759
      %v761 = vpop.f32.mrb[0].mxu0
      %v762 = vadd.f32 0.0, %v761
      %v763 = vpop.f32.mrb[0].mxu0
      %v764 = vadd.f32 0.0, %v763
      %v765 = vpop.f32.mrb[0].mxu0
      %v766 = vadd.f32 0.0, %v765
      %767 = vmatprep.mubr.bf16.mxu0 0
      %768 = vmatmul.mubr.bf16.gmra.mrb[0].mxu0 %v684
      %v769 = vpop.f32.mrb[0].mxu0
      %v770 = vadd.f32 0.0, %v769
      %v771 = vpop.f32.mrb[0].mxu0
      %v772 = vadd.f32 0.0, %v771
      %v773 = vpop.f32.mrb[0].mxu0
      %v774 = vadd.f32 0.0, %v773
      %v775 = vpop.f32.mrb[0].mxu0
      %v776 = vadd.f32 0.0, %v775
      %777 = vmatprep.mubr.bf16.mxu0 0
      %778 = vmatmul.mubr.bf16.gmra.mrb[0].mxu0 %v687
      %v779 = vpop.f32.mrb[0].mxu0
      %v780 = vadd.f32 0.0, %v779
      %v781 = vpop.f32.mrb[0].mxu0
      %v782 = vadd.f32 0.0, %v781
      %v783 = vpop.f32.mrb[0].mxu0
      %v784 = vadd.f32 0.0, %v783
      %v785 = vpop.f32.mrb[0].mxu0
      %v786 = vadd.f32 0.0, %v785
      %787 = vmatprep.mubr.bf16.mxu0 0
      %788 = vmatmul.mubr.bf16.gmra.mrb[0].mxu0 %v690
      %v789 = vpop.f32.mrb[0].mxu0
      %v790 = vadd.f32 0.0, %v789
      %v791 = vpop.f32.mrb[0].mxu0
      %v792 = vadd.f32 0.0, %v791
      %v793 = vpop.f32.mrb[0].mxu0
      %v794 = vadd.f32 0.0, %v793
      %v795 = vpop.f32.mrb[0].mxu0
      %v796 = vadd.f32 0.0, %v795
      %797 = vmatprep.mubr.bf16.mxu0 0
      %798 = vmatmul.mubr.bf16.gmra.mrb[0].mxu0 %v693
      %v799 = vpop.f32.mrb[0].mxu0
      %v800 = vadd.f32 0.0, %v799
      %v801 = vpop.f32.mrb[0].mxu0
      %v802 = vadd.f32 0.0, %v801
      %v803 = vpop.f32.mrb[0].mxu0
      %v804 = vadd.f32 0.0, %v803
      %v805 = vpop.f32.mrb[0].mxu0
      %v806 = vadd.f32 0.0, %v805
      %807 = vdwg.mxu0
      %v808 = vld [vmem:[%s5] sm:$0x3]
      %v810 = vlaneseq
      %v811 = vshrl.u32 %v810, 7
      %v812 = vsub.s32 0, %v811
      %v813 = vrot.slane %v808, %v812
      %v814 = vlaneseq
      %v815 = vshrl.u32 %v814, 7
      %v816 = vsub.s32 1, %v815
      %v817 = vrot.slane %v808, %v816
      %v820 = vmul.f32 %v730, %v813
      %v821 = vmul.f32 %v732, %v817
      %v822 = vmul.f32 %v734, %v813
      %v823 = vmul.f32 %v736, %v817
      %v824 = vmul.f32 %v740, %v813
      %v825 = vmul.f32 %v742, %v817
      %v826 = vmul.f32 %v744, %v813
      %v827 = vmul.f32 %v746, %v817
      %v828 = vmul.f32 %v750, %v813
      %v829 = vmul.f32 %v752, %v817
      %v830 = vmul.f32 %v754, %v813
      %v831 = vmul.f32 %v756, %v817
      %v832 = vmul.f32 %v760, %v813
      %v833 = vmul.f32 %v762, %v817
      %v834 = vmul.f32 %v764, %v813
      %v835 = vmul.f32 %v766, %v817
      %v836 = vmul.f32 %v770, %v813
      %v837 = vmul.f32 %v772, %v817
      %v838 = vmul.f32 %v774, %v813
      %v839 = vmul.f32 %v776, %v817
      %v840 = vmul.f32 %v780, %v813
      %v841 = vmul.f32 %v782, %v817
      %v842 = vmul.f32 %v784, %v813
      %v843 = vmul.f32 %v786, %v817
      %v844 = vmul.f32 %v790, %v813
      %v845 = vmul.f32 %v792, %v817
      %v846 = vmul.f32 %v794, %v813
      %v847 = vmul.f32 %v796, %v817
      %v848 = vmul.f32 %v800, %v813
      %v849 = vmul.f32 %v802, %v817
      %v850 = vmul.f32 %v804, %v813
      %v851 = vmul.f32 %v806, %v817
      %v852 = vld [vmem:[%s6] sm:$0x3]
      %v854 = vlaneseq
      %v855 = vshrl.u32 %v854, 7
      %v856 = vsub.s32 0, %v855
      %v857 = vrot.slane %v852, %v856
      %v858 = vlaneseq
      %v859 = vshrl.u32 %v858, 7
      %v860 = vsub.s32 1, %v859
      %v861 = vrot.slane %v852, %v860
      %v864 = vadd.f32 %v820, %v857
      %v865 = vadd.f32 %v821, %v861
      %v866 = vadd.f32 %v822, %v857
      %v867 = vadd.f32 %v823, %v861
      %v868 = vadd.f32 %v824, %v857
      %v869 = vadd.f32 %v825, %v861
      %v870 = vadd.f32 %v826, %v857
      %v871 = vadd.f32 %v827, %v861
      %v872 = vadd.f32 %v828, %v857
      %v873 = vadd.f32 %v829, %v861
      %v874 = vadd.f32 %v830, %v857
      %v875 = vadd.f32 %v831, %v861
      %v876 = vadd.f32 %v832, %v857
      %v877 = vadd.f32 %v833, %v861
      %v878 = vadd.f32 %v834, %v857
      %v879 = vadd.f32 %v835, %v861
      %v880 = vadd.f32 %v836, %v857
      %v881 = vadd.f32 %v837, %v861
      %v882 = vadd.f32 %v838, %v857
      %v883 = vadd.f32 %v839, %v861
      %v884 = vadd.f32 %v840, %v857
      %v885 = vadd.f32 %v841, %v861
      %v886 = vadd.f32 %v842, %v857
      %v887 = vadd.f32 %v843, %v861
      %v888 = vadd.f32 %v844, %v857
      %v889 = vadd.f32 %v845, %v861
      %v890 = vadd.f32 %v846, %v857
      %v891 = vadd.f32 %v847, %v861
      %v892 = vadd.f32 %v848, %v857
      %v893 = vadd.f32 %v849, %v861
      %v894 = vadd.f32 %v850, %v857
      %v895 = vadd.f32 %v851, %v861
      %vm896 = vcmp.ge.f32.partialorder %v864, 0.0
      %vm897 = vcmp.ge.f32.partialorder %v865, 0.0
      %vm898 = vcmp.ge.f32.partialorder %v866, 0.0
      %vm899 = vcmp.ge.f32.partialorder %v867, 0.0
      %vm900 = vcmp.ge.f32.partialorder %v868, 0.0
      %vm901 = vcmp.ge.f32.partialorder %v869, 0.0
      %vm902 = vcmp.ge.f32.partialorder %v870, 0.0
      %vm903 = vcmp.ge.f32.partialorder %v871, 0.0
      %vm904 = vcmp.ge.f32.partialorder %v872, 0.0
      %vm905 = vcmp.ge.f32.partialorder %v873, 0.0
      %vm906 = vcmp.ge.f32.partialorder %v874, 0.0
      %vm907 = vcmp.ge.f32.partialorder %v875, 0.0
      %vm908 = vcmp.ge.f32.partialorder %v876, 0.0
      %vm909 = vcmp.ge.f32.partialorder %v877, 0.0
      %vm910 = vcmp.ge.f32.partialorder %v878, 0.0
      %vm911 = vcmp.ge.f32.partialorder %v879, 0.0
      %vm912 = vcmp.ge.f32.partialorder %v880, 0.0
      %vm913 = vcmp.ge.f32.partialorder %v881, 0.0
      %vm914 = vcmp.ge.f32.partialorder %v882, 0.0
      %vm915 = vcmp.ge.f32.partialorder %v883, 0.0
      %vm916 = vcmp.ge.f32.partialorder %v884, 0.0
      %vm917 = vcmp.ge.f32.partialorder %v885, 0.0
      %vm918 = vcmp.ge.f32.partialorder %v886, 0.0
      %vm919 = vcmp.ge.f32.partialorder %v887, 0.0
      %vm920 = vcmp.ge.f32.partialorder %v888, 0.0
      %vm921 = vcmp.ge.f32.partialorder %v889, 0.0
      %vm922 = vcmp.ge.f32.partialorder %v890, 0.0
      %vm923 = vcmp.ge.f32.partialorder %v891, 0.0
      %vm924 = vcmp.ge.f32.partialorder %v892, 0.0
      %vm925 = vcmp.ge.f32.partialorder %v893, 0.0
      %vm926 = vcmp.ge.f32.partialorder %v894, 0.0
      %vm927 = vcmp.ge.f32.partialorder %v895, 0.0
      %v928 = vmul.f32 %v864, 0.2
      %v929 = vmul.f32 %v865, 0.2
      %v930 = vmul.f32 %v866, 0.2
      %v931 = vmul.f32 %v867, 0.2
      %v932 = vmul.f32 %v868, 0.2
      %v933 = vmul.f32 %v869, 0.2
      %v934 = vmul.f32 %v870, 0.2
      %v935 = vmul.f32 %v871, 0.2
      %v936 = vmul.f32 %v872, 0.2
      %v937 = vmul.f32 %v873, 0.2
      %v938 = vmul.f32 %v874, 0.2
      %v939 = vmul.f32 %v875, 0.2
      %v940 = vmul.f32 %v876, 0.2
      %v941 = vmul.f32 %v877, 0.2
      %v942 = vmul.f32 %v878, 0.2
      %v943 = vmul.f32 %v879, 0.2
      %v944 = vmul.f32 %v880, 0.2
      %v945 = vmul.f32 %v881, 0.2
      %v946 = vmul.f32 %v882, 0.2
      %v947 = vmul.f32 %v883, 0.2
      %v948 = vmul.f32 %v884, 0.2
      %v949 = vmul.f32 %v885, 0.2
      %v950 = vmul.f32 %v886, 0.2
      %v951 = vmul.f32 %v887, 0.2
      %v952 = vmul.f32 %v888, 0.2
      %v953 = vmul.f32 %v889, 0.2
      %v954 = vmul.f32 %v890, 0.2
      %v955 = vmul.f32 %v891, 0.2
      %v956 = vmul.f32 %v892, 0.2
      %v957 = vmul.f32 %v893, 0.2
      %v958 = vmul.f32 %v894, 0.2
      %v959 = vmul.f32 %v895, 0.2
      %v960 = vsel %vm896, %v864, %v928
      %v961 = vsel %vm897, %v865, %v929
      %v962 = vsel %vm898, %v866, %v930
      %v963 = vsel %vm899, %v867, %v931
      %v964 = vsel %vm900, %v868, %v932
      %v965 = vsel %vm901, %v869, %v933
      %v966 = vsel %vm902, %v870, %v934
      %v967 = vsel %vm903, %v871, %v935
      %v968 = vsel %vm904, %v872, %v936
      %v969 = vsel %vm905, %v873, %v937
      %v970 = vsel %vm906, %v874, %v938
      %v971 = vsel %vm907, %v875, %v939
      %v972 = vsel %vm908, %v876, %v940
      %v973 = vsel %vm909, %v877, %v941
      %v974 = vsel %vm910, %v878, %v942
      %v975 = vsel %vm911, %v879, %v943
      %v976 = vsel %vm912, %v880, %v944
      %v977 = vsel %vm913, %v881, %v945
      %v978 = vsel %vm914, %v882, %v946
      %v979 = vsel %vm915, %v883, %v947
      %v980 = vsel %vm916, %v884, %v948
      %v981 = vsel %vm917, %v885, %v949
      %v982 = vsel %vm918, %v886, %v950
      %v983 = vsel %vm919, %v887, %v951
      %v984 = vsel %vm920, %v888, %v952
      %v985 = vsel %vm921, %v889, %v953
      %v986 = vsel %vm922, %v890, %v954
      %v987 = vsel %vm923, %v891, %v955
      %v988 = vsel %vm924, %v892, %v956
      %v989 = vsel %vm925, %v893, %v957
      %v990 = vsel %vm926, %v894, %v958
      %v991 = vsel %vm927, %v895, %v959
      %v992 = vpack.c.bf16 %v962, %v960
      %v993 = vpack.c.bf16 %v963, %v961
      %v994 = vpack.c.bf16 %v966, %v964
      %v995 = vpack.c.bf16 %v967, %v965
      %v996 = vpack.c.bf16 %v970, %v968
      %v997 = vpack.c.bf16 %v971, %v969
      %v998 = vpack.c.bf16 %v974, %v972
      %v999 = vpack.c.bf16 %v975, %v973
      %v1000 = vpack.c.bf16 %v978, %v976
      %v1001 = vpack.c.bf16 %v979, %v977
      %v1002 = vpack.c.bf16 %v982, %v980
      %v1003 = vpack.c.bf16 %v983, %v981
      %v1004 = vpack.c.bf16 %v986, %v984
      %v1005 = vpack.c.bf16 %v987, %v985
      %v1006 = vpack.c.bf16 %v990, %v988
      %v1007 = vpack.c.bf16 %v991, %v989
      %v1008 = vld [vmem:[%s7] sm:$0xf]
      %v1009 = vld [vmem:[%s7 + $0x4] sm:$0xf]
      %v1010 = vld [vmem:[%s7 + $0x8] sm:$0xf]
      %v1011 = vld [vmem:[%s7 + $0xc] sm:$0xf]
      %v1012 = vld [vmem:[%s7 + $0x10] sm:$0xf]
      %v1013 = vld [vmem:[%s7 + $0x14] sm:$0xf]
      %v1014 = vld [vmem:[%s7 + $0x18] sm:$0xf]
      %v1015 = vld [vmem:[%s7 + $0x1c] sm:$0xf]
      %v1016 = vld [vmem:[%s7 + $0x20] sm:$0xf]
      %v1017 = vld [vmem:[%s7 + $0x24] sm:$0xf]
      %v1018 = vld [vmem:[%s7 + $0x28] sm:$0xf]
      %v1019 = vld [vmem:[%s7 + $0x2c] sm:$0xf]
      %v1020 = vld [vmem:[%s7 + $0x30] sm:$0xf]
      %v1021 = vld [vmem:[%s7 + $0x34] sm:$0xf]
      %v1022 = vld [vmem:[%s7 + $0x38] sm:$0xf]
      %v1023 = vld [vmem:[%s7 + $0x3c] sm:$0xf]
      %v1024 = vld [vmem:[%s7 + $0x40] sm:$0xf]
      %v1025 = vld [vmem:[%s7 + $0x44] sm:$0xf]
      %v1026 = vld [vmem:[%s7 + $0x48] sm:$0xf]
      %v1027 = vld [vmem:[%s7 + $0x4c] sm:$0xf]
      %v1028 = vld [vmem:[%s7 + $0x50] sm:$0xf]
      %v1029 = vld [vmem:[%s7 + $0x54] sm:$0xf]
      %v1030 = vld [vmem:[%s7 + $0x58] sm:$0xf]
      %v1031 = vld [vmem:[%s7 + $0x5c] sm:$0xf]
      %v1032 = vld [vmem:[%s7 + $0x60] sm:$0xf]
      %v1033 = vld [vmem:[%s7 + $0x64] sm:$0xf]
      %v1034 = vld [vmem:[%s7 + $0x68] sm:$0xf]
      %v1035 = vld [vmem:[%s7 + $0x6c] sm:$0xf]
      %v1036 = vld [vmem:[%s7 + $0x70] sm:$0xf]
      %v1037 = vld [vmem:[%s7 + $0x74] sm:$0xf]
      %v1038 = vld [vmem:[%s7 + $0x78] sm:$0xf]
      %v1039 = vld [vmem:[%s7 + $0x7c] sm:$0xf]
      %v1040 = vld [vmem:[%s8] sm:$0x1]
      %v1042 = vlaneseq
      %v1043 = vshrl.u32 %v1042, 7
      %v1044 = vsub.s32 0, %v1043
      %v1045 = vrot.slane %v1040, %v1044
      %v1079 = vunpack.c.l.b16 %v1008
      %v1080 = vunpack.c.l.b16 %v1009
      %v1081 = vunpack.c.l.b16 %v1010
      %v1082 = vunpack.c.l.b16 %v1011
      %v1083 = vunpack.c.l.b16 %v1012
      %v1084 = vunpack.c.l.b16 %v1013
      %v1085 = vunpack.c.l.b16 %v1014
      %v1086 = vunpack.c.l.b16 %v1015
      %v1087 = vunpack.c.l.b16 %v1016
      %v1088 = vunpack.c.l.b16 %v1017
      %v1089 = vunpack.c.l.b16 %v1018
      %v1090 = vunpack.c.l.b16 %v1019
      %v1091 = vunpack.c.l.b16 %v1020
      %v1092 = vunpack.c.l.b16 %v1021
      %v1093 = vunpack.c.l.b16 %v1022
      %v1094 = vunpack.c.l.b16 %v1023
      %v1095 = vunpack.c.l.b16 %v1024
      %v1096 = vunpack.c.l.b16 %v1025
      %v1097 = vunpack.c.l.b16 %v1026
      %v1098 = vunpack.c.l.b16 %v1027
      %v1099 = vunpack.c.l.b16 %v1028
      %v1100 = vunpack.c.l.b16 %v1029
      %v1101 = vunpack.c.l.b16 %v1030
      %v1102 = vunpack.c.l.b16 %v1031
      %v1103 = vunpack.c.l.b16 %v1032
      %v1104 = vunpack.c.l.b16 %v1033
      %v1105 = vunpack.c.l.b16 %v1034
      %v1106 = vunpack.c.l.b16 %v1035
      %v1107 = vunpack.c.l.b16 %v1036
      %v1108 = vunpack.c.l.b16 %v1037
      %v1109 = vunpack.c.l.b16 %v1038
      %v1110 = vunpack.c.l.b16 %v1039
      %v1111 = vpack.c.b16 %v1080, %v1079
      %v1112 = vpack.c.b16 %v1082, %v1081
      %v1113 = vpack.c.b16 %v1084, %v1083
      %v1114 = vpack.c.b16 %v1086, %v1085
      %v1115 = vpack.c.b16 %v1088, %v1087
      %v1116 = vpack.c.b16 %v1090, %v1089
      %v1117 = vpack.c.b16 %v1092, %v1091
      %v1118 = vpack.c.b16 %v1094, %v1093
      %v1119 = vpack.c.b16 %v1096, %v1095
      %v1120 = vpack.c.b16 %v1098, %v1097
      %v1121 = vpack.c.b16 %v1100, %v1099
      %v1122 = vpack.c.b16 %v1102, %v1101
      %v1123 = vpack.c.b16 %v1104, %v1103
      %v1124 = vpack.c.b16 %v1106, %v1105
      %v1125 = vpack.c.b16 %v1108, %v1107
      %v1126 = vpack.c.b16 %v1110, %v1109
      %1143 = vmatprep.subr.bf16.mxu0 0
      %1144 = vmatpush1.bf16.msra.mxu0 %v1111
      %1145 = vmatprep.subr.bf16.mxu0 0
      %1146 = vmatpush1.bf16.msra.mxu0 %v1112
      %1147 = vmatprep.subr.bf16.mxu0 0
      %1148 = vmatpush1.bf16.msra.mxu0 %v1113
      %1149 = vmatprep.subr.bf16.mxu0 0
      %1150 = vmatpush1.bf16.msra.mxu0 %v1114
      %1151 = vmatprep.subr.bf16.mxu0 0
      %1152 = vmatpush1.bf16.msra.mxu0 %v1115
      %1153 = vmatprep.subr.bf16.mxu0 0
      %1154 = vmatpush1.bf16.msra.mxu0 %v1116
      %1155 = vmatprep.subr.bf16.mxu0 0
      %1156 = vmatpush1.bf16.msra.mxu0 %v1117
      %1157 = vmatprep.subr.bf16.mxu0 0
      %1158 = vmatpush1.bf16.msra.mxu0 %v1118
      %1159 = vmatprep.subr.bf16.mxu0 0
      %1160 = vmatpush1.bf16.msra.mxu0 %v1119
      %1161 = vmatprep.subr.bf16.mxu0 0
      %1162 = vmatpush1.bf16.msra.mxu0 %v1120
      %1163 = vmatprep.subr.bf16.mxu0 0
      %1164 = vmatpush1.bf16.msra.mxu0 %v1121
      %1165 = vmatprep.subr.bf16.mxu0 0
      %1166 = vmatpush1.bf16.msra.mxu0 %v1122
      %1167 = vmatprep.subr.bf16.mxu0 0
      %1168 = vmatpush1.bf16.msra.mxu0 %v1123
      %1169 = vmatprep.subr.bf16.mxu0 0
      %1170 = vmatpush1.bf16.msra.mxu0 %v1124
      %1171 = vmatprep.subr.bf16.mxu0 0
      %1172 = vmatpush1.bf16.msra.mxu0 %v1125
      %1173 = vmatprep.subr.bf16.mxu0 0
      %1174 = vmatpush1.bf16.msra.mxu0 %v1126
      %1175 = vmatprep.mubr.bf16.mxu0 %v993
      %1176 = vmatmul.mubr.bf16.gmra.mrb[0].mxu0 %v992
      %v1177 = vpop.f32.mrb[0].mxu0
      %v1178 = vadd.f32 %v1045, %v1177
      %v1179 = vpop.f32.mrb[0].mxu0
      %v1180 = vpop.f32.mrb[0].mxu0
      %v1181 = vadd.f32 %v1045, %v1180
      %v1182 = vpop.f32.mrb[0].mxu0
      %1183 = vmatprep.mubr.bf16.mxu0 %v995
      %1184 = vmatmul.mubr.bf16.gmra.mrb[0].mxu0 %v994
      %v1185 = vpop.f32.mrb[0].mxu0
      %v1186 = vadd.f32 %v1045, %v1185
      %v1187 = vpop.f32.mrb[0].mxu0
      %v1188 = vpop.f32.mrb[0].mxu0
      %v1189 = vadd.f32 %v1045, %v1188
      %v1190 = vpop.f32.mrb[0].mxu0
      %1191 = vmatprep.mubr.bf16.mxu0 %v997
      %1192 = vmatmul.mubr.bf16.gmra.mrb[0].mxu0 %v996
      %v1193 = vpop.f32.mrb[0].mxu0
      %v1194 = vadd.f32 %v1045, %v1193
      %v1195 = vpop.f32.mrb[0].mxu0
      %v1196 = vpop.f32.mrb[0].mxu0
      %v1197 = vadd.f32 %v1045, %v1196
      %v1198 = vpop.f32.mrb[0].mxu0
      %1199 = vmatprep.mubr.bf16.mxu0 %v999
      %1200 = vmatmul.mubr.bf16.gmra.mrb[0].mxu0 %v998
      %v1201 = vpop.f32.mrb[0].mxu0
      %v1202 = vadd.f32 %v1045, %v1201
      %v1203 = vpop.f32.mrb[0].mxu0
      %v1204 = vpop.f32.mrb[0].mxu0
      %v1205 = vadd.f32 %v1045, %v1204
      %v1206 = vpop.f32.mrb[0].mxu0
      %1207 = vmatprep.mubr.bf16.mxu0 %v1001
      %1208 = vmatmul.mubr.bf16.gmra.mrb[0].mxu0 %v1000
      %v1209 = vpop.f32.mrb[0].mxu0
      %v1210 = vadd.f32 %v1045, %v1209
      %v1211 = vpop.f32.mrb[0].mxu0
      %v1212 = vpop.f32.mrb[0].mxu0
      %v1213 = vadd.f32 %v1045, %v1212
      %v1214 = vpop.f32.mrb[0].mxu0
      %1215 = vmatprep.mubr.bf16.mxu0 %v1003
      %1216 = vmatmul.mubr.bf16.gmra.mrb[0].mxu0 %v1002
      %v1217 = vpop.f32.mrb[0].mxu0
      %v1218 = vadd.f32 %v1045, %v1217
      %v1219 = vpop.f32.mrb[0].mxu0
      %v1220 = vpop.f32.mrb[0].mxu0
      %v1221 = vadd.f32 %v1045, %v1220
      %v1222 = vpop.f32.mrb[0].mxu0
      %1223 = vmatprep.mubr.bf16.mxu0 %v1005
      %1224 = vmatmul.mubr.bf16.gmra.mrb[0].mxu0 %v1004
      %v1225 = vpop.f32.mrb[0].mxu0
      %v1226 = vadd.f32 %v1045, %v1225
      %v1227 = vpop.f32.mrb[0].mxu0
      %v1228 = vpop.f32.mrb[0].mxu0
      %v1229 = vadd.f32 %v1045, %v1228
      %v1230 = vpop.f32.mrb[0].mxu0
      %1231 = vmatprep.mubr.bf16.mxu0 %v1007
      %1232 = vmatmul.mubr.bf16.gmra.mrb[0].mxu0 %v1006
      %v1233 = vpop.f32.mrb[0].mxu0
      %v1234 = vadd.f32 %v1045, %v1233
      %v1235 = vpop.f32.mrb[0].mxu0
      %v1236 = vpop.f32.mrb[0].mxu0
      %v1237 = vadd.f32 %v1045, %v1236
      %v1238 = vpop.f32.mrb[0].mxu0
      %1239 = vdwg.mxu0
      %v1240 = vxor.u32 %v1178, 2147483648
      %v1241 = vxor.u32 %v1181, 2147483648
      %v1242 = vxor.u32 %v1186, 2147483648
      %v1243 = vxor.u32 %v1189, 2147483648
      %v1244 = vxor.u32 %v1194, 2147483648
      %v1245 = vxor.u32 %v1197, 2147483648
      %v1246 = vxor.u32 %v1202, 2147483648
      %v1247 = vxor.u32 %v1205, 2147483648
      %v1248 = vxor.u32 %v1210, 2147483648
      %v1249 = vxor.u32 %v1213, 2147483648
      %v1250 = vxor.u32 %v1218, 2147483648
      %v1251 = vxor.u32 %v1221, 2147483648
      %v1252 = vxor.u32 %v1226, 2147483648
      %v1253 = vxor.u32 %v1229, 2147483648
      %v1254 = vxor.u32 %v1234, 2147483648
      %v1255 = vxor.u32 %v1237, 2147483648
      %v1256 = vmul.f32 %v1240, 1.442695
      %v1257 = vpow.pop %v1256
      %v1258 = vmul.f32 %v1241, 1.442695
      %v1259 = vpow.pop %v1258
      %v1260 = vmul.f32 %v1242, 1.442695
      %v1261 = vpow.pop %v1260
      %v1262 = vmul.f32 %v1243, 1.442695
      %v1263 = vpow.pop %v1262
      %v1264 = vmul.f32 %v1244, 1.442695
      %v1265 = vpow.pop %v1264
      %v1266 = vmul.f32 %v1245, 1.442695
      %v1267 = vpow.pop %v1266
      %v1268 = vmul.f32 %v1246, 1.442695
      %v1269 = vpow.pop %v1268
      %v1270 = vmul.f32 %v1247, 1.442695
      %v1271 = vpow.pop %v1270
      %v1272 = vmul.f32 %v1248, 1.442695
      %v1273 = vpow.pop %v1272
      %v1274 = vmul.f32 %v1249, 1.442695
      %v1275 = vpow.pop %v1274
      %v1276 = vmul.f32 %v1250, 1.442695
      %v1277 = vpow.pop %v1276
      %v1278 = vmul.f32 %v1251, 1.442695
      %v1279 = vpow.pop %v1278
      %v1280 = vmul.f32 %v1252, 1.442695
      %v1281 = vpow.pop %v1280
      %v1282 = vmul.f32 %v1253, 1.442695
      %v1283 = vpow.pop %v1282
      %v1284 = vmul.f32 %v1254, 1.442695
      %v1285 = vpow.pop %v1284
      %v1286 = vmul.f32 %v1255, 1.442695
      %v1287 = vpow.pop %v1286
      %v1288 = vadd.f32 %v1257, 1.0
      %v1289 = vadd.f32 %v1259, 1.0
      %v1290 = vadd.f32 %v1261, 1.0
      %v1291 = vadd.f32 %v1263, 1.0
      %v1292 = vadd.f32 %v1265, 1.0
      %v1293 = vadd.f32 %v1267, 1.0
      %v1294 = vadd.f32 %v1269, 1.0
      %v1295 = vadd.f32 %v1271, 1.0
      %v1296 = vadd.f32 %v1273, 1.0
      %v1297 = vadd.f32 %v1275, 1.0
      %v1298 = vadd.f32 %v1277, 1.0
      %v1299 = vadd.f32 %v1279, 1.0
      %v1300 = vadd.f32 %v1281, 1.0
      %v1301 = vadd.f32 %v1283, 1.0
      %v1302 = vadd.f32 %v1285, 1.0
      %v1303 = vadd.f32 %v1287, 1.0
      %v1304 = vrcp.pop %v1288
      %v1305 = vmul.f32 1.0, %v1304
      %v1306 = vrcp.pop %v1289
      %v1307 = vmul.f32 1.0, %v1306
      %v1308 = vrcp.pop %v1290
      %v1309 = vmul.f32 1.0, %v1308
      %v1310 = vrcp.pop %v1291
      %v1311 = vmul.f32 1.0, %v1310
      %v1312 = vrcp.pop %v1292
      %v1313 = vmul.f32 1.0, %v1312
      %v1314 = vrcp.pop %v1293
      %v1315 = vmul.f32 1.0, %v1314
      %v1316 = vrcp.pop %v1294
      %v1317 = vmul.f32 1.0, %v1316
      %v1318 = vrcp.pop %v1295
      %v1319 = vmul.f32 1.0, %v1318
      %v1320 = vrcp.pop %v1296
      %v1321 = vmul.f32 1.0, %v1320
      %v1322 = vrcp.pop %v1297
      %v1323 = vmul.f32 1.0, %v1322
      %v1324 = vrcp.pop %v1298
      %v1325 = vmul.f32 1.0, %v1324
      %v1326 = vrcp.pop %v1299
      %v1327 = vmul.f32 1.0, %v1326
      %v1328 = vrcp.pop %v1300
      %v1329 = vmul.f32 1.0, %v1328
      %v1330 = vrcp.pop %v1301
      %v1331 = vmul.f32 1.0, %v1330
      %v1332 = vrcp.pop %v1302
      %v1333 = vmul.f32 1.0, %v1332
      %v1334 = vrcp.pop %v1303
      %v1335 = vmul.f32 1.0, %v1334
      %vm1336 = vcmask 130048
      %1337 = vst.msk [vmem:[%s334] sm:$0xff] %vm1336, %v1305
      %1338 = vst.msk [vmem:[%s334 + $0x8] sm:$0xff] %vm1336, %v1307
      %1339 = vst.msk [vmem:[%s334 + $0x10] sm:$0xff] %vm1336, %v1309
      %1340 = vst.msk [vmem:[%s334 + $0x18] sm:$0xff] %vm1336, %v1311
      %1341 = vst.msk [vmem:[%s334 + $0x20] sm:$0xff] %vm1336, %v1313
      %1342 = vst.msk [vmem:[%s334 + $0x28] sm:$0xff] %vm1336, %v1315
      %1343 = vst.msk [vmem:[%s334 + $0x30] sm:$0xff] %vm1336, %v1317
      %1344 = vst.msk [vmem:[%s334 + $0x38] sm:$0xff] %vm1336, %v1319
      %1345 = vst.msk [vmem:[%s334 + $0x40] sm:$0xff] %vm1336, %v1321
      %1346 = vst.msk [vmem:[%s334 + $0x48] sm:$0xff] %vm1336, %v1323
      %1347 = vst.msk [vmem:[%s334 + $0x50] sm:$0xff] %vm1336, %v1325
      %1348 = vst.msk [vmem:[%s334 + $0x58] sm:$0xff] %vm1336, %v1327
      %1349 = vst.msk [vmem:[%s334 + $0x60] sm:$0xff] %vm1336, %v1329
      %1350 = vst.msk [vmem:[%s334 + $0x68] sm:$0xff] %vm1336, %v1331
      %1351 = vst.msk [vmem:[%s334 + $0x70] sm:$0xff] %vm1336, %v1333
      %1352 = vst.msk [vmem:[%s334 + $0x78] sm:$0xff] %vm1336, %v1335
      %s1353 = smul.u32 16, %s20
      %p1354 = scmp.lt.s32.totalorder %s1353, 31
      %s1355 = scalar_select %p1354, %s1353, 31
      %s1356 = smul.addr %s1355, 8
      %s1357 = scalar_lea.vmem %s9, %s1356
      // Predicated region
      $region57: #{pgmsu_forward.18} parent=55 // pred_check
        %p1358 = pneg %p232
      $region58: #{pgmsu_forward.18} parent=55 // pred_check_branch
        %1360 = sbr.rel (%p1358) target = $region60
      $region59: #{pgmsu_forward.18} parent=55 // pred_region
        %s1361 = smul.u32 16, %s20
      $region60: #{pgmsu_forward.18} parent=55 // pred_fallthru
        _
    $region56: #{pgmsu_forward.18} parent=5 // pred_fallthru
      _
    %p1362 = scmp.le.s32.totalorder 2, %s15
    // Predicated region
    $region61: #{pgmsu_forward.18} parent=5 // pred_check
      %p1363 = pneg %p1362
    $region62: #{pgmsu_forward.18} parent=5 // pred_check_branch
      %1365 = sbr.rel (%p1363) target = $region64
    $region63: #{pgmsu_forward.18} parent=5 // pred_region
      %s1366 = ssub.s32 %s15, 2
      // Predicated region
      $region65: #{pgmsu_forward.18} parent=63 // pred_check
        %p1367 = pneg %p238
      $region66: #{pgmsu_forward.18} parent=63 // pred_check_branch
        %1369 = sbr.rel (%p1367) target = $region68
      $region67: #{pgmsu_forward.18} parent=63 // pred_region
        %s1370 = smul.u32 16, %s21
        %p1371 = scmp.lt.s32.totalorder %s1370, 31
        %s1372 = scalar_select %p1371, %s1370, 31
        %s1373 = smul.addr %s1372, 8
        %s1374 = scalar_lea.vmem %s9, %s1373
      $region68: #{pgmsu_forward.18} parent=63 // pred_fallthru
        _
    $region64: #{pgmsu_forward.18} parent=5 // pred_fallthru
      _
  $region6: #{pgmsu_forward.18} parent=0 // loop_footer
    %s19 = sadd.s32 1, %s15
  $region7: #{pgmsu_forward.18} parent=0 // loop_footer_branch
    %14 = sbr.rel target = $region3
  $region8: #{pgmsu_forward.18} parent=0 // loop_exit
    _

// kernel: pgmsu_forward.15
$region0: #{pgmsu_forward.15}
  #allocation0 [shape = 'u32[]', space=smem, size = 0x4, offset = 0x4, fixed_abs, tag = 'smem constant byte address 0x4 - core index']
  #allocation1 [shape = 'u32[144,128]{1,0:T(1,128)}', space=vmem, size = 0x12000, scoped, tag = 'internal scratch']
  %s0 = inlined_call_operand.vmem [shape: bf16[256,36], index: 0, kind: input, shape index: {}]
  %s1 = inlined_call_operand.vmem [shape: bf16[36,4], index: 1, kind: input, shape index: {}]
  %s2 = inlined_call_operand.vmem [shape: f32[1,4], index: 2, kind: input, shape index: {}]
  %s3 = inlined_call_operand.vmem [shape: f32[1,4], index: 3, kind: input, shape index: {}]
  %s4 = inlined_call_operand.vmem [shape: f32[256,4], index: 4, kind: output, shape index: {}]
  %s5 = sld [smem:[#allocation0]]
  $region49: #{pgmsu_forward.15} parent=0
    _
  %s7 = ssub.s32 1, %s5
  %s8 = scalar_select 0, %s7, %s5
  loop: start=0, step=1, limit=4
  $region2: #{pgmsu_forward.15} parent=0 // loop_pre_header
    _
  $region3: #{pgmsu_forward.15} parent=0 // loop_header
    %s10 = sphi 0, %s14
    %p11 = scmp.ge.s32.totalorder %s10, 4
    %s20 = sphi 0, %s22
    %s23 = sphi 0, %s20
    %s24 = sphi 0, %s23
    %s40 = sphi 0, %s24
    %s44 = sphi 0, %s44
    %s46 = sphi 0, %s44
    %s47 = sphi 0, %s46
    %s61 = sphi 0, %s47
    %s65 = sphi 0, %s65
    %s67 = sphi 0, %s65
    %s68 = sphi 0, %s67
    %s82 = sphi 0, %s68
    %s86 = sphi 0, %s86
    %s88 = sphi 0, %s86
    %s89 = sphi 0, %s88
    %s103 = sphi 0, %s89
    %s109 = sphi 0, %s111
    %s112 = sphi 0, %s109
    %s113 = sphi 0, %s112
    %s129 = sphi 0, %s113
  $region4: #{pgmsu_forward.15} parent=0 // loop_header_branch
    %13 = sbr.rel (%p11) target = $region8
  $region5: #{pgmsu_forward.15} parent=0 // loop_body
    %s15 = ssub.s32 %s10, 1
    %s16 = ssub.s32 %s10, 2
    %s17 = sadd.s32 %s10, 1
    %s18 = ssub.s32 %s10, %s17
    %p19 = scmp.eq.s32.totalorder %s18, 0
    %s21 = sadd.s32 %s20, 1
    %s22 = scalar_select %p19, %s20, %s21
    %p25 = pneg %p19
    %p26 = scmp.eq.s32.totalorder %s10, 1
    %p27 = por %p25, %p26
    %p28 = scmp.ne.s32.totalorder %s20, %s23
    %p29 = scmp.eq.s32.totalorder %s10, 0
    %p30 = por %p28, %p29
    %p31 = scmp.ne.s32.totalorder %s20, %s23
    %p32 = scmp.eq.s32.totalorder %s15, 1
    %p33 = por %p31, %p32
    %p34 = scmp.ne.s32.totalorder %s23, %s24
    %p35 = scmp.eq.s32.totalorder %s15, 0
    %p36 = por %p34, %p35
    %p37 = scmp.ne.s32.totalorder %s23, %s24
    %p38 = scmp.eq.s32.totalorder %s16, 1
    %p39 = por %p37, %p38
    %p41 = scmp.ne.s32.totalorder %s24, %s40
    %p42 = scmp.eq.s32.totalorder %s16, 0
    %p43 = por %p41, %p42
    %s45 = sadd.s32 %s44, 1
    %p48 = scmp.eq.s32.totalorder %s10, 1
    %p49 = scmp.ne.s32.totalorder %s44, %s46
    %p50 = scmp.eq.s32.totalorder %s10, 0
    %p51 = por %p49, %p50
    %p52 = scmp.ne.s32.totalorder %s44, %s46
    %p53 = scmp.eq.s32.totalorder %s15, 1
    %p54 = por %p52, %p53
    %p55 = scmp.ne.s32.totalorder %s46, %s47
    %p56 = scmp.eq.s32.totalorder %s15, 0
    %p57 = por %p55, %p56
    %p58 = scmp.ne.s32.totalorder %s46, %s47
    %p59 = scmp.eq.s32.totalorder %s16, 1
    %p60 = por %p58, %p59
    %p62 = scmp.ne.s32.totalorder %s47, %s61
    %p63 = scmp.eq.s32.totalorder %s16, 0
    %p64 = por %p62, %p63
    %s66 = sadd.s32 %s65, 1
    %p69 = scmp.eq.s32.totalorder %s10, 1
    %p70 = scmp.ne.s32.totalorder %s65, %s67
    %p71 = scmp.eq.s32.totalorder %s10, 0
    %p72 = por %p70, %p71
    %p73 = scmp.ne.s32.totalorder %s65, %s67
    %p74 = scmp.eq.s32.totalorder %s15, 1
    %p75 = por %p73, %p74
    %p76 = scmp.ne.s32.totalorder %s67, %s68
    %p77 = scmp.eq.s32.totalorder %s15, 0
    %p78 = por %p76, %p77
    %p79 = scmp.ne.s32.totalorder %s67, %s68
    %p80 = scmp.eq.s32.totalorder %s16, 1
    %p81 = por %p79, %p80
    %p83 = scmp.ne.s32.totalorder %s68, %s82
    %p84 = scmp.eq.s32.totalorder %s16, 0
    %p85 = por %p83, %p84
    %s87 = sadd.s32 %s86, 1
    %p90 = scmp.eq.s32.totalorder %s10, 1
    %p91 = scmp.ne.s32.totalorder %s86, %s88
    %p92 = scmp.eq.s32.totalorder %s10, 0
    %p93 = por %p91, %p92
    %p94 = scmp.ne.s32.totalorder %s86, %s88
    %p95 = scmp.eq.s32.totalorder %s15, 1
    %p96 = por %p94, %p95
    %p97 = scmp.ne.s32.totalorder %s88, %s89
    %p98 = scmp.eq.s32.totalorder %s15, 0
    %p99 = por %p97, %p98
    %p100 = scmp.ne.s32.totalorder %s88, %s89
    %p101 = scmp.eq.s32.totalorder %s16, 1
    %p102 = por %p100, %p101
    %p104 = scmp.ne.s32.totalorder %s89, %s103
    %p105 = scmp.eq.s32.totalorder %s16, 0
    %p106 = por %p104, %p105
    %s107 = ssub.s32 %s10, %s17
    %p108 = scmp.eq.s32.totalorder %s107, 0
    %s110 = sadd.s32 %s109, 1
    %s111 = scalar_select %p108, %s109, %s110
    %p114 = pneg %p108
    %p115 = scmp.eq.s32.totalorder %s10, 1
    %p116 = por %p114, %p115
    %p117 = scmp.ne.s32.totalorder %s109, %s112
    %p118 = scmp.eq.s32.totalorder %s10, 0
    %p119 = por %p117, %p118
    %p120 = scmp.ne.s32.totalorder %s109, %s112
    %p121 = scmp.eq.s32.totalorder %s15, 1
    %p122 = por %p120, %p121
    %p123 = scmp.ne.s32.totalorder %s112, %s113
    %p124 = scmp.eq.s32.totalorder %s15, 0
    %p125 = por %p123, %p124
    %p126 = scmp.ne.s32.totalorder %s112, %s113
    %p127 = scmp.eq.s32.totalorder %s16, 1
    %p128 = por %p126, %p127
    %p130 = scmp.ne.s32.totalorder %s113, %s129
    %p131 = scmp.eq.s32.totalorder %s16, 0
    %p132 = por %p130, %p131
    %p133 = scmp.le.s32.totalorder 1, %s10
    %p134 = scmp.lt.s32.totalorder %s10, 3
    %p135 = pnand %p133, %p134
    %p136 = pneg %p135
    // Predicated region
    $region9: #{pgmsu_forward.15} parent=5 // pred_check
      _
    $region10: #{pgmsu_forward.15} parent=5 // pred_check_branch
      %138 = sbr.rel (%p135) target = $region12
    $region11: #{pgmsu_forward.15} parent=5 // pred_region
      %s139 = ssub.s32 %s10, 1
      // Predicated region
      $region13: #{pgmsu_forward.15} parent=11 // pred_check
        %p140 = pneg %p57
      $region14: #{pgmsu_forward.15} parent=11 // pred_check_branch
        %142 = sbr.rel (%p140) target = $region16
      $region15: #{pgmsu_forward.15} parent=11 // pred_region
        _
      $region16: #{pgmsu_forward.15} parent=11 // pred_fallthru
        _
      // Predicated region
      $region17: #{pgmsu_forward.15} parent=11 // pred_check
        %p143 = pneg %p78
      $region18: #{pgmsu_forward.15} parent=11 // pred_check_branch
        %145 = sbr.rel (%p143) target = $region20
      $region19: #{pgmsu_forward.15} parent=11 // pred_region
        _
      $region20: #{pgmsu_forward.15} parent=11 // pred_fallthru
        _
      // Predicated region
      $region21: #{pgmsu_forward.15} parent=11 // pred_check
        %p146 = pneg %p99
      $region22: #{pgmsu_forward.15} parent=11 // pred_check_branch
        %148 = sbr.rel (%p146) target = $region24
      $region23: #{pgmsu_forward.15} parent=11 // pred_region
        _
      $region24: #{pgmsu_forward.15} parent=11 // pred_fallthru
        _
    $region12: #{pgmsu_forward.15} parent=5 // pred_fallthru
      _
    %p149 = scmp.lt.s32.totalorder %s10, 2
    // Predicated region
    $region25: #{pgmsu_forward.15} parent=5 // pred_check
      %p150 = pneg %p149
    $region26: #{pgmsu_forward.15} parent=5 // pred_check_branch
      %152 = sbr.rel (%p150) target = $region28
    $region27: #{pgmsu_forward.15} parent=5 // pred_region
      // Predicated region
      $region29: #{pgmsu_forward.15} parent=27 // pred_check
        %p153 = pneg %p30
      $region30: #{pgmsu_forward.15} parent=27 // pred_check_branch
        %155 = sbr.rel (%p153) target = $region32
      $region31: #{pgmsu_forward.15} parent=27 // pred_region
        %s156 = smul.u32 16, %s10
        %p157 = scmp.lt.s32.totalorder %s156, 31
        %s158 = scalar_select %p157, %s156, 31
        %s159 = smul.addr %s158, 4
        %s160 = scalar_lea.vmem %s0, %s159
        %s161 = smul.u32 16, %s10
      $region32: #{pgmsu_forward.15} parent=27 // pred_fallthru
        _
    $region28: #{pgmsu_forward.15} parent=5 // pred_fallthru
      _
    %p162 = scmp.le.s32.totalorder 1, %s10
    %p163 = scmp.lt.s32.totalorder %s10, 3
    %p164 = pnand %p162, %p163
    %p165 = pneg %p164
    // Predicated region
    $region33: #{pgmsu_forward.15} parent=5 // pred_check
      _
    $region34: #{pgmsu_forward.15} parent=5 // pred_check_branch
      %167 = sbr.rel (%p164) target = $region36
    $region35: #{pgmsu_forward.15} parent=5 // pred_region
      %s168 = ssub.s32 %s10, 1
      %s169 = smul.u32 16, %s15
      %p170 = scmp.lt.s32.totalorder %s169, 31
      %s171 = scalar_select %p170, %s169, 31
      %s172 = smul.addr %s171, 4
      %s173 = scalar_lea.vmem %s0, %s172
      %p174 = pneg %p36
      %p175 = pneg %p33
      %p176 = pneg %p57
      %p177 = pneg %p54
      %p178 = pneg %p78
      %p179 = pneg %p75
      %p180 = pneg %p99
      %p181 = pneg %p96
      %p182 = pneg %p125
      %p183 = pneg %p122
      %s184 = smul.u32 16, %s15
      %p185 = scmp.lt.s32.totalorder %s184, 31
      %s186 = scalar_select %p185, %s184, 31
      %s187 = smul.addr %s186, 8
      %s188 = scalar_lea.vmem %s4, %s187
      %s189 = smul.u32 16, %s15
      %p190 = scmp.lt.s32.totalorder %s189, 31
      %s191 = scalar_select %p190, %s189, 31
      %s192 = smul.addr %s191, 4
      %s193 = scalar_lea.vmem %s0, %s192
      %s194 = smul.u32 16, %s15
      %s195 = smul.u32 16, %s15
      %p196 = scmp.lt.s32.totalorder %s195, 31
      %s197 = scalar_select %p196, %s195, 31
      %s198 = smul.addr %s197, 8
      %s199 = scalar_lea.vmem %s4, %s198
      %s200 = smul.u32 16, %s15
      %v202 = vld [vmem:[%s193] sm:$0xf]
      %v203 = vld [vmem:[%s193 + $0x4] sm:$0xf]
      %v204 = vld [vmem:[%s193 + $0x8] sm:$0xf]
      %v205 = vld [vmem:[%s193 + $0xc] sm:$0xf]
      %v206 = vld [vmem:[%s193 + $0x10] sm:$0xf]
      %v207 = vld [vmem:[%s193 + $0x14] sm:$0xf]
      %v208 = vld [vmem:[%s193 + $0x18] sm:$0xf]
      %v209 = vld [vmem:[%s193 + $0x1c] sm:$0xf]
      %v210 = vld [vmem:[%s193 + $0x20] sm:$0xf]
      %v211 = vld [vmem:[%s193 + $0x24] sm:$0xf]
      %v212 = vld [vmem:[%s193 + $0x28] sm:$0xf]
      %v213 = vld [vmem:[%s193 + $0x2c] sm:$0xf]
      %v214 = vld [vmem:[%s193 + $0x30] sm:$0xf]
      %v215 = vld [vmem:[%s193 + $0x34] sm:$0xf]
      %v216 = vld [vmem:[%s193 + $0x38] sm:$0xf]
      %v217 = vld [vmem:[%s193 + $0x3c] sm:$0xf]
      %v218 = vld [vmem:[%s1] sm:$0xf]
      %v219 = vld [vmem:[%s1 + $0x4] sm:$0xf]
      %v220 = vld [vmem:[%s1 + $0x8] sm:$0xf]
      %v221 = vld [vmem:[%s1 + $0xc] sm:$0xf]
      %v222 = vld [vmem:[%s1 + $0x10] sm:$0x3]
      %v239 = vunpack.c.l.b16 %v202
      %v240 = vunpack.c.l.b16 %v203
      %v241 = vunpack.c.l.b16 %v204
      %v242 = vunpack.c.l.b16 %v205
      %v243 = vunpack.c.l.b16 %v206
      %v244 = vunpack.c.l.b16 %v207
      %v245 = vunpack.c.l.b16 %v208
      %v246 = vunpack.c.l.b16 %v209
      %v247 = vunpack.c.l.b16 %v210
      %v248 = vunpack.c.l.b16 %v211
      %v249 = vunpack.c.l.b16 %v212
      %v250 = vunpack.c.l.b16 %v213
      %v251 = vunpack.c.l.b16 %v214
      %v252 = vunpack.c.l.b16 %v215
      %v253 = vunpack.c.l.b16 %v216
      %v254 = vunpack.c.l.b16 %v217
      %v255 = vpack.c.b16 %v240, %v239
      %v256 = vpack.c.b16 %v242, %v241
      %v257 = vpack.c.b16 %v244, %v243
      %v258 = vpack.c.b16 %v246, %v245
      %v259 = vpack.c.b16 %v248, %v247
      %v260 = vpack.c.b16 %v250, %v249
      %v261 = vpack.c.b16 %v252, %v251
      %v262 = vpack.c.b16 %v254, %v253
      %v268 = vunpack.c.l.b16 %v218
      %v269 = vunpack.c.l.b16 %v219
      %v270 = vunpack.c.l.b16 %v220
      %v271 = vunpack.c.l.b16 %v221
      %v272 = vunpack.c.l.b16 %v222
      %v273 = vpack.c.b16 %v269, %v268
      %v274 = vpack.c.b16 %v271, %v270
      %v275 = vpack.c.b16 %v272, %v272
      %vm278 = vcmask 293888
      %v280 = vsel %vm278, %v255, 0
      %v283 = vsel %vm278, %v256, 0
      %v286 = vsel %vm278, %v257, 0
      %v289 = vsel %vm278, %v258, 0
      %v292 = vsel %vm278, %v259, 0
      %v295 = vsel %vm278, %v260, 0
      %v298 = vsel %vm278, %v261, 0
      %v301 = vsel %vm278, %v262, 0
      %vm303 = vcmask 1041408
      %v305 = vsel %vm303, %v275, 0
      %307 = vmatprep.subr.bf16.mxu0 0
      %308 = vmatpush1.bf16.msra.mxu0 %v273
      %309 = vmatprep.subr.bf16.mxu0 0
      %310 = vmatpush1.bf16.msra.mxu0 %v274
      %311 = vmatprep.subr.bf16.mxu0 0
      %312 = vmatpush1.bf16.msra.mxu0 %v305
      %313 = vmatprep.subr.bf16.mxu0 0
      %314 = vmatpush1.bf16.msra.mxu0 0
      %315 = vmatprep.subr.bf16.mxu0 0
      %316 = vmatpush1.bf16.msra.mxu0 0
      %317 = vmatprep.subr.bf16.mxu0 0
      %318 = vmatpush1.bf16.msra.mxu0 0
      %319 = vmatprep.subr.bf16.mxu0 0
      %320 = vmatpush1.bf16.msra.mxu0 0
      %321 = vmatprep.subr.bf16.mxu0 0
      %322 = vmatpush1.bf16.msra.mxu0 0
      %323 = vmatprep.subr.bf16.mxu0 0
      %324 = vmatpush1.bf16.msra.mxu0 0
      %325 = vmatprep.subr.bf16.mxu0 0
      %326 = vmatpush1.bf16.msra.mxu0 0
      %327 = vmatprep.subr.bf16.mxu0 0
      %328 = vmatpush1.bf16.msra.mxu0 0
      %329 = vmatprep.subr.bf16.mxu0 0
      %330 = vmatpush1.bf16.msra.mxu0 0
      %331 = vmatprep.subr.bf16.mxu0 0
      %332 = vmatpush1.bf16.msra.mxu0 0
      %333 = vmatprep.subr.bf16.mxu0 0
      %334 = vmatpush1.bf16.msra.mxu0 0
      %335 = vmatprep.subr.bf16.mxu0 0
      %336 = vmatpush1.bf16.msra.mxu0 0
      %337 = vmatprep.subr.bf16.mxu0 0
      %338 = vmatpush1.bf16.msra.mxu0 0
      %339 = vmatprep.mubr.bf16.mxu0 0
      %340 = vmatmul.mubr.bf16.gmra.mrb[0].mxu0 %v280
      %v341 = vpop.f32.mrb[0].mxu0
      %v342 = vadd.f32 0.0, %v341
      %v343 = vpop.f32.mrb[0].mxu0
      %v344 = vpop.f32.mrb[0].mxu0
      %v345 = vadd.f32 0.0, %v344
      %v346 = vpop.f32.mrb[0].mxu0
      %347 = vmatprep.mubr.bf16.mxu0 0
      %348 = vmatmul.mubr.bf16.gmra.mrb[0].mxu0 %v283
      %v349 = vpop.f32.mrb[0].mxu0
      %v350 = vadd.f32 0.0, %v349
      %v351 = vpop.f32.mrb[0].mxu0
      %v352 = vpop.f32.mrb[0].mxu0
      %v353 = vadd.f32 0.0, %v352
      %v354 = vpop.f32.mrb[0].mxu0
      %355 = vmatprep.mubr.bf16.mxu0 0
      %356 = vmatmul.mubr.bf16.gmra.mrb[0].mxu0 %v286
      %v357 = vpop.f32.mrb[0].mxu0
      %v358 = vadd.f32 0.0, %v357
      %v359 = vpop.f32.mrb[0].mxu0
      %v360 = vpop.f32.mrb[0].mxu0
      %v361 = vadd.f32 0.0, %v360
      %v362 = vpop.f32.mrb[0].mxu0
      %363 = vmatprep.mubr.bf16.mxu0 0
      %364 = vmatmul.mubr.bf16.gmra.mrb[0].mxu0 %v289
      %v365 = vpop.f32.mrb[0].mxu0
      %v366 = vadd.f32 0.0, %v365
      %v367 = vpop.f32.mrb[0].mxu0
      %v368 = vpop.f32.mrb[0].mxu0
      %v369 = vadd.f32 0.0, %v368
      %v370 = vpop.f32.mrb[0].mxu0
      %371 = vmatprep.mubr.bf16.mxu0 0
      %372 = vmatmul.mubr.bf16.gmra.mrb[0].mxu0 %v292
      %v373 = vpop.f32.mrb[0].mxu0
      %v374 = vadd.f32 0.0, %v373
      %v375 = vpop.f32.mrb[0].mxu0
      %v376 = vpop.f32.mrb[0].mxu0
      %v377 = vadd.f32 0.0, %v376
      %v378 = vpop.f32.mrb[0].mxu0
      %379 = vmatprep.mubr.bf16.mxu0 0
      %380 = vmatmul.mubr.bf16.gmra.mrb[0].mxu0 %v295
      %v381 = vpop.f32.mrb[0].mxu0
      %v382 = vadd.f32 0.0, %v381
      %v383 = vpop.f32.mrb[0].mxu0
      %v384 = vpop.f32.mrb[0].mxu0
      %v385 = vadd.f32 0.0, %v384
      %v386 = vpop.f32.mrb[0].mxu0
      %387 = vmatprep.mubr.bf16.mxu0 0
      %388 = vmatmul.mubr.bf16.gmra.mrb[0].mxu0 %v298
      %v389 = vpop.f32.mrb[0].mxu0
      %v390 = vadd.f32 0.0, %v389
      %v391 = vpop.f32.mrb[0].mxu0
      %v392 = vpop.f32.mrb[0].mxu0
      %v393 = vadd.f32 0.0, %v392
      %v394 = vpop.f32.mrb[0].mxu0
      %395 = vmatprep.mubr.bf16.mxu0 0
      %396 = vmatmul.mubr.bf16.gmra.mrb[0].mxu0 %v301
      %v397 = vpop.f32.mrb[0].mxu0
      %v398 = vadd.f32 0.0, %v397
      %v399 = vpop.f32.mrb[0].mxu0
      %v400 = vpop.f32.mrb[0].mxu0
      %v401 = vadd.f32 0.0, %v400
      %v402 = vpop.f32.mrb[0].mxu0
      %403 = vdwg.mxu0
      %v404 = vld [vmem:[%s2] sm:$0x1]
      %v406 = vlaneseq
      %v407 = vshrl.u32 %v406, 7
      %v408 = vsub.s32 0, %v407
      %v409 = vrot.slane %v404, %v408
      %v411 = vmul.f32 %v342, %v409
      %v412 = vmul.f32 %v345, %v409
      %v413 = vmul.f32 %v350, %v409
      %v414 = vmul.f32 %v353, %v409
      %v415 = vmul.f32 %v358, %v409
      %v416 = vmul.f32 %v361, %v409
      %v417 = vmul.f32 %v366, %v409
      %v418 = vmul.f32 %v369, %v409
      %v419 = vmul.f32 %v374, %v409
      %v420 = vmul.f32 %v377, %v409
      %v421 = vmul.f32 %v382, %v409
      %v422 = vmul.f32 %v385, %v409
      %v423 = vmul.f32 %v390, %v409
      %v424 = vmul.f32 %v393, %v409
      %v425 = vmul.f32 %v398, %v409
      %v426 = vmul.f32 %v401, %v409
      %v427 = vld [vmem:[%s3] sm:$0x1]
      %v429 = vlaneseq
      %v430 = vshrl.u32 %v429, 7
      %v431 = vsub.s32 0, %v430
      %v432 = vrot.slane %v427, %v431
      %v434 = vadd.f32 %v411, %v432
      %v435 = vadd.f32 %v412, %v432
      %v436 = vadd.f32 %v413, %v432
      %v437 = vadd.f32 %v414, %v432
      %v438 = vadd.f32 %v415, %v432
      %v439 = vadd.f32 %v416, %v432
      %v440 = vadd.f32 %v417, %v432
      %v441 = vadd.f32 %v418, %v432
      %v442 = vadd.f32 %v419, %v432
      %v443 = vadd.f32 %v420, %v432
      %v444 = vadd.f32 %v421, %v432
      %v445 = vadd.f32 %v422, %v432
      %v446 = vadd.f32 %v423, %v432
      %v447 = vadd.f32 %v424, %v432
      %v448 = vadd.f32 %v425, %v432
      %v449 = vadd.f32 %v426, %v432
      %vm450 = vcmp.ge.f32.partialorder %v434, 0.0
      %vm451 = vcmp.ge.f32.partialorder %v435, 0.0
      %vm452 = vcmp.ge.f32.partialorder %v436, 0.0
      %vm453 = vcmp.ge.f32.partialorder %v437, 0.0
      %vm454 = vcmp.ge.f32.partialorder %v438, 0.0
      %vm455 = vcmp.ge.f32.partialorder %v439, 0.0
      %vm456 = vcmp.ge.f32.partialorder %v440, 0.0
      %vm457 = vcmp.ge.f32.partialorder %v441, 0.0
      %vm458 = vcmp.ge.f32.partialorder %v442, 0.0
      %vm459 = vcmp.ge.f32.partialorder %v443, 0.0
      %vm460 = vcmp.ge.f32.partialorder %v444, 0.0
      %vm461 = vcmp.ge.f32.partialorder %v445, 0.0
      %vm462 = vcmp.ge.f32.partialorder %v446, 0.0
      %vm463 = vcmp.ge.f32.partialorder %v447, 0.0
      %vm464 = vcmp.ge.f32.partialorder %v448, 0.0
      %vm465 = vcmp.ge.f32.partialorder %v449, 0.0
      %v466 = vmul.f32 %v434, 0.2
      %v467 = vmul.f32 %v435, 0.2
      %v468 = vmul.f32 %v436, 0.2
      %v469 = vmul.f32 %v437, 0.2
      %v470 = vmul.f32 %v438, 0.2
      %v471 = vmul.f32 %v439, 0.2
      %v472 = vmul.f32 %v440, 0.2
      %v473 = vmul.f32 %v441, 0.2
      %v474 = vmul.f32 %v442, 0.2
      %v475 = vmul.f32 %v443, 0.2
      %v476 = vmul.f32 %v444, 0.2
      %v477 = vmul.f32 %v445, 0.2
      %v478 = vmul.f32 %v446, 0.2
      %v479 = vmul.f32 %v447, 0.2
      %v480 = vmul.f32 %v448, 0.2
      %v481 = vmul.f32 %v449, 0.2
      %v482 = vsel %vm450, %v434, %v466
      %v483 = vsel %vm451, %v435, %v467
      %v484 = vsel %vm452, %v436, %v468
      %v485 = vsel %vm453, %v437, %v469
      %v486 = vsel %vm454, %v438, %v470
      %v487 = vsel %vm455, %v439, %v471
      %v488 = vsel %vm456, %v440, %v472
      %v489 = vsel %vm457, %v441, %v473
      %v490 = vsel %vm458, %v442, %v474
      %v491 = vsel %vm459, %v443, %v475
      %v492 = vsel %vm460, %v444, %v476
      %v493 = vsel %vm461, %v445, %v477
      %v494 = vsel %vm462, %v446, %v478
      %v495 = vsel %vm463, %v447, %v479
      %v496 = vsel %vm464, %v448, %v480
      %v497 = vsel %vm465, %v449, %v481
      %vm498 = vcmask 31744
      %499 = vst.msk [vmem:[%s199] sm:$0xff] %vm498, %v482
      %500 = vst.msk [vmem:[%s199 + $0x8] sm:$0xff] %vm498, %v483
      %501 = vst.msk [vmem:[%s199 + $0x10] sm:$0xff] %vm498, %v484
      %502 = vst.msk [vmem:[%s199 + $0x18] sm:$0xff] %vm498, %v485
      %503 = vst.msk [vmem:[%s199 + $0x20] sm:$0xff] %vm498, %v486
      %504 = vst.msk [vmem:[%s199 + $0x28] sm:$0xff] %vm498, %v487
      %505 = vst.msk [vmem:[%s199 + $0x30] sm:$0xff] %vm498, %v488
      %506 = vst.msk [vmem:[%s199 + $0x38] sm:$0xff] %vm498, %v489
      %507 = vst.msk [vmem:[%s199 + $0x40] sm:$0xff] %vm498, %v490
      %508 = vst.msk [vmem:[%s199 + $0x48] sm:$0xff] %vm498, %v491
      %509 = vst.msk [vmem:[%s199 + $0x50] sm:$0xff] %vm498, %v492
      %510 = vst.msk [vmem:[%s199 + $0x58] sm:$0xff] %vm498, %v493
      %511 = vst.msk [vmem:[%s199 + $0x60] sm:$0xff] %vm498, %v494
      %512 = vst.msk [vmem:[%s199 + $0x68] sm:$0xff] %vm498, %v495
      %513 = vst.msk [vmem:[%s199 + $0x70] sm:$0xff] %vm498, %v496
      %514 = vst.msk [vmem:[%s199 + $0x78] sm:$0xff] %vm498, %v497
      %s515 = smul.u32 16, %s15
      %p516 = scmp.lt.s32.totalorder %s515, 31
      %s517 = scalar_select %p516, %s515, 31
      %s518 = smul.addr %s517, 8
      %s519 = scalar_lea.vmem %s4, %s518
      // Predicated region
      $region37: #{pgmsu_forward.15} parent=35 // pred_check
        %p520 = pneg %p122
      $region38: #{pgmsu_forward.15} parent=35 // pred_check_branch
        %522 = sbr.rel (%p520) target = $region40
      $region39: #{pgmsu_forward.15} parent=35 // pred_region
        %s523 = smul.u32 16, %s15
      $region40: #{pgmsu_forward.15} parent=35 // pred_fallthru
        _
    $region36: #{pgmsu_forward.15} parent=5 // pred_fallthru
      _
    %p524 = scmp.le.s32.totalorder 2, %s10
    // Predicated region
    $region41: #{pgmsu_forward.15} parent=5 // pred_check
      %p525 = pneg %p524
    $region42: #{pgmsu_forward.15} parent=5 // pred_check_branch
      %527 = sbr.rel (%p525) target = $region44
    $region43: #{pgmsu_forward.15} parent=5 // pred_region
      %s528 = ssub.s32 %s10, 2
      // Predicated region
      $region45: #{pgmsu_forward.15} parent=43 // pred_check
        %p529 = pneg %p128
      $region46: #{pgmsu_forward.15} parent=43 // pred_check_branch
        %531 = sbr.rel (%p529) target = $region48
      $region47: #{pgmsu_forward.15} parent=43 // pred_region
        %s532 = smul.u32 16, %s16
        %p533 = scmp.lt.s32.totalorder %s532, 31
        %s534 = scalar_select %p533, %s532, 31
        %s535 = smul.addr %s534, 8
        %s536 = scalar_lea.vmem %s4, %s535
      $region48: #{pgmsu_forward.15} parent=43 // pred_fallthru
        _
    $region44: #{pgmsu_forward.15} parent=5 // pred_fallthru
      _
  $region6: #{pgmsu_forward.15} parent=0 // loop_footer
    %s14 = sadd.s32 1, %s10
  $region7: #{pgmsu_forward.15} parent=0 // loop_footer_branch
    %9 = sbr.rel target = $region3
  $region8: #{pgmsu_forward.15} parent=0 // loop_exit
    _

// kernel: pgmsu_forward.16
$region0: #{pgmsu_forward.16}
  #allocation0 [shape = 'u32[]', space=smem, size = 0x4, offset = 0x4, fixed_abs, tag = 'smem constant byte address 0x4 - core index']
  #allocation1 [shape = 'u32[144,128]{1,0:T(1,128)}', space=vmem, size = 0x12000, scoped, tag = 'internal scratch']
  %s0 = inlined_call_operand.vmem [shape: bf16[256,36], index: 0, kind: input, shape index: {}]
  %s1 = inlined_call_operand.vmem [shape: bf16[36,4], index: 1, kind: input, shape index: {}]
  %s2 = inlined_call_operand.vmem [shape: f32[1,4], index: 2, kind: input, shape index: {}]
  %s3 = inlined_call_operand.vmem [shape: f32[1,4], index: 3, kind: input, shape index: {}]
  %s4 = inlined_call_operand.vmem [shape: f32[256,4], index: 4, kind: output, shape index: {}]
  %s5 = sld [smem:[#allocation0]]
  $region49: #{pgmsu_forward.16} parent=0
    _
  %s7 = ssub.s32 1, %s5
  %s8 = scalar_select 0, %s7, %s5
  loop: start=0, step=1, limit=4
  $region2: #{pgmsu_forward.16} parent=0 // loop_pre_header
    _
  $region3: #{pgmsu_forward.16} parent=0 // loop_header
    %s10 = sphi 0, %s14
    %p11 = scmp.ge.s32.totalorder %s10, 4
    %s20 = sphi 0, %s22
    %s23 = sphi 0, %s20
    %s24 = sphi 0, %s23
    %s40 = sphi 0, %s24
    %s44 = sphi 0, %s44
    %s46 = sphi 0, %s44
    %s47 = sphi 0, %s46
    %s61 = sphi 0, %s47
    %s65 = sphi 0, %s65
    %s67 = sphi 0, %s65
    %s68 = sphi 0, %s67
    %s82 = sphi 0, %s68
    %s86 = sphi 0, %s86
    %s88 = sphi 0, %s86
    %s89 = sphi 0, %s88
    %s103 = sphi 0, %s89
    %s109 = sphi 0, %s111
    %s112 = sphi 0, %s109
    %s113 = sphi 0, %s112
    %s129 = sphi 0, %s113
  $region4: #{pgmsu_forward.16} parent=0 // loop_header_branch
    %13 = sbr.rel (%p11) target = $region8
  $region5: #{pgmsu_forward.16} parent=0 // loop_body
    %s15 = ssub.s32 %s10, 1
    %s16 = ssub.s32 %s10, 2
    %s17 = sadd.s32 %s10, 1
    %s18 = ssub.s32 %s10, %s17
    %p19 = scmp.eq.s32.totalorder %s18, 0
    %s21 = sadd.s32 %s20, 1
    %s22 = scalar_select %p19, %s20, %s21
    %p25 = pneg %p19
    %p26 = scmp.eq.s32.totalorder %s10, 1
    %p27 = por %p25, %p26
    %p28 = scmp.ne.s32.totalorder %s20, %s23
    %p29 = scmp.eq.s32.totalorder %s10, 0
    %p30 = por %p28, %p29
    %p31 = scmp.ne.s32.totalorder %s20, %s23
    %p32 = scmp.eq.s32.totalorder %s15, 1
    %p33 = por %p31, %p32
    %p34 = scmp.ne.s32.totalorder %s23, %s24
    %p35 = scmp.eq.s32.totalorder %s15, 0
    %p36 = por %p34, %p35
    %p37 = scmp.ne.s32.totalorder %s23, %s24
    %p38 = scmp.eq.s32.totalorder %s16, 1
    %p39 = por %p37, %p38
    %p41 = scmp.ne.s32.totalorder %s24, %s40
    %p42 = scmp.eq.s32.totalorder %s16, 0
    %p43 = por %p41, %p42
    %s45 = sadd.s32 %s44, 1
    %p48 = scmp.eq.s32.totalorder %s10, 1
    %p49 = scmp.ne.s32.totalorder %s44, %s46
    %p50 = scmp.eq.s32.totalorder %s10, 0
    %p51 = por %p49, %p50
    %p52 = scmp.ne.s32.totalorder %s44, %s46
    %p53 = scmp.eq.s32.totalorder %s15, 1
    %p54 = por %p52, %p53
    %p55 = scmp.ne.s32.totalorder %s46, %s47
    %p56 = scmp.eq.s32.totalorder %s15, 0
    %p57 = por %p55, %p56
    %p58 = scmp.ne.s32.totalorder %s46, %s47
    %p59 = scmp.eq.s32.totalorder %s16, 1
    %p60 = por %p58, %p59
    %p62 = scmp.ne.s32.totalorder %s47, %s61
    %p63 = scmp.eq.s32.totalorder %s16, 0
    %p64 = por %p62, %p63
    %s66 = sadd.s32 %s65, 1
    %p69 = scmp.eq.s32.totalorder %s10, 1
    %p70 = scmp.ne.s32.totalorder %s65, %s67
    %p71 = scmp.eq.s32.totalorder %s10, 0
    %p72 = por %p70, %p71
    %p73 = scmp.ne.s32.totalorder %s65, %s67
    %p74 = scmp.eq.s32.totalorder %s15, 1
    %p75 = por %p73, %p74
    %p76 = scmp.ne.s32.totalorder %s67, %s68
    %p77 = scmp.eq.s32.totalorder %s15, 0
    %p78 = por %p76, %p77
    %p79 = scmp.ne.s32.totalorder %s67, %s68
    %p80 = scmp.eq.s32.totalorder %s16, 1
    %p81 = por %p79, %p80
    %p83 = scmp.ne.s32.totalorder %s68, %s82
    %p84 = scmp.eq.s32.totalorder %s16, 0
    %p85 = por %p83, %p84
    %s87 = sadd.s32 %s86, 1
    %p90 = scmp.eq.s32.totalorder %s10, 1
    %p91 = scmp.ne.s32.totalorder %s86, %s88
    %p92 = scmp.eq.s32.totalorder %s10, 0
    %p93 = por %p91, %p92
    %p94 = scmp.ne.s32.totalorder %s86, %s88
    %p95 = scmp.eq.s32.totalorder %s15, 1
    %p96 = por %p94, %p95
    %p97 = scmp.ne.s32.totalorder %s88, %s89
    %p98 = scmp.eq.s32.totalorder %s15, 0
    %p99 = por %p97, %p98
    %p100 = scmp.ne.s32.totalorder %s88, %s89
    %p101 = scmp.eq.s32.totalorder %s16, 1
    %p102 = por %p100, %p101
    %p104 = scmp.ne.s32.totalorder %s89, %s103
    %p105 = scmp.eq.s32.totalorder %s16, 0
    %p106 = por %p104, %p105
    %s107 = ssub.s32 %s10, %s17
    %p108 = scmp.eq.s32.totalorder %s107, 0
    %s110 = sadd.s32 %s109, 1
    %s111 = scalar_select %p108, %s109, %s110
    %p114 = pneg %p108
    %p115 = scmp.eq.s32.totalorder %s10, 1
    %p116 = por %p114, %p115
    %p117 = scmp.ne.s32.totalorder %s109, %s112
    %p118 = scmp.eq.s32.totalorder %s10, 0
    %p119 = por %p117, %p118
    %p120 = scmp.ne.s32.totalorder %s109, %s112
    %p121 = scmp.eq.s32.totalorder %s15, 1
    %p122 = por %p120, %p121
    %p123 = scmp.ne.s32.totalorder %s112, %s113
    %p124 = scmp.eq.s32.totalorder %s15, 0
    %p125 = por %p123, %p124
    %p126 = scmp.ne.s32.totalorder %s112, %s113
    %p127 = scmp.eq.s32.totalorder %s16, 1
    %p128 = por %p126, %p127
    %p130 = scmp.ne.s32.totalorder %s113, %s129
    %p131 = scmp.eq.s32.totalorder %s16, 0
    %p132 = por %p130, %p131
    %p133 = scmp.le.s32.totalorder 1, %s10
    %p134 = scmp.lt.s32.totalorder %s10, 3
    %p135 = pnand %p133, %p134
    %p136 = pneg %p135
    // Predicated region
    $region9: #{pgmsu_forward.16} parent=5 // pred_check
      _
    $region10: #{pgmsu_forward.16} parent=5 // pred_check_branch
      %138 = sbr.rel (%p135) target = $region12
    $region11: #{pgmsu_forward.16} parent=5 // pred_region
      %s139 = ssub.s32 %s10, 1
      // Predicated region
      $region13: #{pgmsu_forward.16} parent=11 // pred_check
        %p140 = pneg %p57
      $region14: #{pgmsu_forward.16} parent=11 // pred_check_branch
        %142 = sbr.rel (%p140) target = $region16
      $region15: #{pgmsu_forward.16} parent=11 // pred_region
        _
      $region16: #{pgmsu_forward.16} parent=11 // pred_fallthru
        _
      // Predicated region
      $region17: #{pgmsu_forward.16} parent=11 // pred_check
        %p143 = pneg %p78
      $region18: #{pgmsu_forward.16} parent=11 // pred_check_branch
        %145 = sbr.rel (%p143) target = $region20
      $region19: #{pgmsu_forward.16} parent=11 // pred_region
        _
      $region20: #{pgmsu_forward.16} parent=11 // pred_fallthru
        _
      // Predicated region
      $region21: #{pgmsu_forward.16} parent=11 // pred_check
        %p146 = pneg %p99
      $region22: #{pgmsu_forward.16} parent=11 // pred_check_branch
        %148 = sbr.rel (%p146) target = $region24
      $region23: #{pgmsu_forward.16} parent=11 // pred_region
        _
      $region24: #{pgmsu_forward.16} parent=11 // pred_fallthru
        _
    $region12: #{pgmsu_forward.16} parent=5 // pred_fallthru
      _
    %p149 = scmp.lt.s32.totalorder %s10, 2
    // Predicated region
    $region25: #{pgmsu_forward.16} parent=5 // pred_check
      %p150 = pneg %p149
    $region26: #{pgmsu_forward.16} parent=5 // pred_check_branch
      %152 = sbr.rel (%p150) target = $region28
    $region27: #{pgmsu_forward.16} parent=5 // pred_region
      // Predicated region
      $region29: #{pgmsu_forward.16} parent=27 // pred_check
        %p153 = pneg %p30
      $region30: #{pgmsu_forward.16} parent=27 // pred_check_branch
        %155 = sbr.rel (%p153) target = $region32
      $region31: #{pgmsu_forward.16} parent=27 // pred_region
        %s156 = smul.u32 16, %s10
        %p157 = scmp.lt.s32.totalorder %s156, 31
        %s158 = scalar_select %p157, %s156, 31
        %s159 = smul.addr %s158, 4
        %s160 = scalar_lea.vmem %s0, %s159
        %s161 = smul.u32 16, %s10
      $region32: #{pgmsu_forward.16} parent=27 // pred_fallthru
        _
    $region28: #{pgmsu_forward.16} parent=5 // pred_fallthru
      _
    %p162 = scmp.le.s32.totalorder 1, %s10
    %p163 = scmp.lt.s32.totalorder %s10, 3
    %p164 = pnand %p162, %p163
    %p165 = pneg %p164
    // Predicated region
    $region33: #{pgmsu_forward.16} parent=5 // pred_check
      _
    $region34: #{pgmsu_forward.16} parent=5 // pred_check_branch
      %167 = sbr.rel (%p164) target = $region36
    $region35: #{pgmsu_forward.16} parent=5 // pred_region
      %s168 = ssub.s32 %s10, 1
      %s169 = smul.u32 16, %s15
      %p170 = scmp.lt.s32.totalorder %s169, 31
      %s171 = scalar_select %p170, %s169, 31
      %s172 = smul.addr %s171, 4
      %s173 = scalar_lea.vmem %s0, %s172
      %p174 = pneg %p36
      %p175 = pneg %p33
      %p176 = pneg %p57
      %p177 = pneg %p54
      %p178 = pneg %p78
      %p179 = pneg %p75
      %p180 = pneg %p99
      %p181 = pneg %p96
      %p182 = pneg %p125
      %p183 = pneg %p122
      %s184 = smul.u32 16, %s15
      %p185 = scmp.lt.s32.totalorder %s184, 31
      %s186 = scalar_select %p185, %s184, 31
      %s187 = smul.addr %s186, 8
      %s188 = scalar_lea.vmem %s4, %s187
      %s189 = smul.u32 16, %s15
      %p190 = scmp.lt.s32.totalorder %s189, 31
      %s191 = scalar_select %p190, %s189, 31
      %s192 = smul.addr %s191, 4
      %s193 = scalar_lea.vmem %s0, %s192
      %s194 = smul.u32 16, %s15
      %s195 = smul.u32 16, %s15
      %p196 = scmp.lt.s32.totalorder %s195, 31
      %s197 = scalar_select %p196, %s195, 31
      %s198 = smul.addr %s197, 8
      %s199 = scalar_lea.vmem %s4, %s198
      %s200 = smul.u32 16, %s15
      %v202 = vld [vmem:[%s193] sm:$0xf]
      %v203 = vld [vmem:[%s193 + $0x4] sm:$0xf]
      %v204 = vld [vmem:[%s193 + $0x8] sm:$0xf]
      %v205 = vld [vmem:[%s193 + $0xc] sm:$0xf]
      %v206 = vld [vmem:[%s193 + $0x10] sm:$0xf]
      %v207 = vld [vmem:[%s193 + $0x14] sm:$0xf]
      %v208 = vld [vmem:[%s193 + $0x18] sm:$0xf]
      %v209 = vld [vmem:[%s193 + $0x1c] sm:$0xf]
      %v210 = vld [vmem:[%s193 + $0x20] sm:$0xf]
      %v211 = vld [vmem:[%s193 + $0x24] sm:$0xf]
      %v212 = vld [vmem:[%s193 + $0x28] sm:$0xf]
      %v213 = vld [vmem:[%s193 + $0x2c] sm:$0xf]
      %v214 = vld [vmem:[%s193 + $0x30] sm:$0xf]
      %v215 = vld [vmem:[%s193 + $0x34] sm:$0xf]
      %v216 = vld [vmem:[%s193 + $0x38] sm:$0xf]
      %v217 = vld [vmem:[%s193 + $0x3c] sm:$0xf]
      %v218 = vld [vmem:[%s1] sm:$0xf]
      %v219 = vld [vmem:[%s1 + $0x4] sm:$0xf]
      %v220 = vld [vmem:[%s1 + $0x8] sm:$0xf]
      %v221 = vld [vmem:[%s1 + $0xc] sm:$0xf]
      %v222 = vld [vmem:[%s1 + $0x10] sm:$0x3]
      %v239 = vunpack.c.l.b16 %v202
      %v240 = vunpack.c.l.b16 %v203
      %v241 = vunpack.c.l.b16 %v204
      %v242 = vunpack.c.l.b16 %v205
      %v243 = vunpack.c.l.b16 %v206
      %v244 = vunpack.c.l.b16 %v207
      %v245 = vunpack.c.l.b16 %v208
      %v246 = vunpack.c.l.b16 %v209
      %v247 = vunpack.c.l.b16 %v210
      %v248 = vunpack.c.l.b16 %v211
      %v249 = vunpack.c.l.b16 %v212
      %v250 = vunpack.c.l.b16 %v213
      %v251 = vunpack.c.l.b16 %v214
      %v252 = vunpack.c.l.b16 %v215
      %v253 = vunpack.c.l.b16 %v216
      %v254 = vunpack.c.l.b16 %v217
      %v255 = vpack.c.b16 %v240, %v239
      %v256 = vpack.c.b16 %v242, %v241
      %v257 = vpack.c.b16 %v244, %v243
      %v258 = vpack.c.b16 %v246, %v245
      %v259 = vpack.c.b16 %v248, %v247
      %v260 = vpack.c.b16 %v250, %v249
      %v261 = vpack.c.b16 %v252, %v251
      %v262 = vpack.c.b16 %v254, %v253
      %v268 = vunpack.c.l.b16 %v218
      %v269 = vunpack.c.l.b16 %v219
      %v270 = vunpack.c.l.b16 %v220
      %v271 = vunpack.c.l.b16 %v221
      %v272 = vunpack.c.l.b16 %v222
      %v273 = vpack.c.b16 %v269, %v268
      %v274 = vpack.c.b16 %v271, %v270
      %v275 = vpack.c.b16 %v272, %v272
      %vm278 = vcmask 293888
      %v280 = vsel %vm278, %v255, 0
      %v283 = vsel %vm278, %v256, 0
      %v286 = vsel %vm278, %v257, 0
      %v289 = vsel %vm278, %v258, 0
      %v292 = vsel %vm278, %v259, 0
      %v295 = vsel %vm278, %v260, 0
      %v298 = vsel %vm278, %v261, 0
      %v301 = vsel %vm278, %v262, 0
      %vm303 = vcmask 1041408
      %v305 = vsel %vm303, %v275, 0
      %307 = vmatprep.subr.bf16.mxu0 0
      %308 = vmatpush1.bf16.msra.mxu0 %v273
      %309 = vmatprep.subr.bf16.mxu0 0
      %310 = vmatpush1.bf16.msra.mxu0 %v274
      %311 = vmatprep.subr.bf16.mxu0 0
      %312 = vmatpush1.bf16.msra.mxu0 %v305
      %313 = vmatprep.subr.bf16.mxu0 0
      %314 = vmatpush1.bf16.msra.mxu0 0
      %315 = vmatprep.subr.bf16.mxu0 0
      %316 = vmatpush1.bf16.msra.mxu0 0
      %317 = vmatprep.subr.bf16.mxu0 0
      %318 = vmatpush1.bf16.msra.mxu0 0
      %319 = vmatprep.subr.bf16.mxu0 0
      %320 = vmatpush1.bf16.msra.mxu0 0
      %321 = vmatprep.subr.bf16.mxu0 0
      %322 = vmatpush1.bf16.msra.mxu0 0
      %323 = vmatprep.subr.bf16.mxu0 0
      %324 = vmatpush1.bf16.msra.mxu0 0
      %325 = vmatprep.subr.bf16.mxu0 0
      %326 = vmatpush1.bf16.msra.mxu0 0
      %327 = vmatprep.subr.bf16.mxu0 0
      %328 = vmatpush1.bf16.msra.mxu0 0
      %329 = vmatprep.subr.bf16.mxu0 0
      %330 = vmatpush1.bf16.msra.mxu0 0
      %331 = vmatprep.subr.bf16.mxu0 0
      %332 = vmatpush1.bf16.msra.mxu0 0
      %333 = vmatprep.subr.bf16.mxu0 0
      %334 = vmatpush1.bf16.msra.mxu0 0
      %335 = vmatprep.subr.bf16.mxu0 0
      %336 = vmatpush1.bf16.msra.mxu0 0
      %337 = vmatprep.subr.bf16.mxu0 0
      %338 = vmatpush1.bf16.msra.mxu0 0
      %339 = vmatprep.mubr.bf16.mxu0 0
      %340 = vmatmul.mubr.bf16.gmra.mrb[0].mxu0 %v280
      %v341 = vpop.f32.mrb[0].mxu0
      %v342 = vadd.f32 0.0, %v341
      %v343 = vpop.f32.mrb[0].mxu0
      %v344 = vpop.f32.mrb[0].mxu0
      %v345 = vadd.f32 0.0, %v344
      %v346 = vpop.f32.mrb[0].mxu0
      %347 = vmatprep.mubr.bf16.mxu0 0
      %348 = vmatmul.mubr.bf16.gmra.mrb[0].mxu0 %v283
      %v349 = vpop.f32.mrb[0].mxu0
      %v350 = vadd.f32 0.0, %v349
      %v351 = vpop.f32.mrb[0].mxu0
      %v352 = vpop.f32.mrb[0].mxu0
      %v353 = vadd.f32 0.0, %v352
      %v354 = vpop.f32.mrb[0].mxu0
      %355 = vmatprep.mubr.bf16.mxu0 0
      %356 = vmatmul.mubr.bf16.gmra.mrb[0].mxu0 %v286
      %v357 = vpop.f32.mrb[0].mxu0
      %v358 = vadd.f32 0.0, %v357
      %v359 = vpop.f32.mrb[0].mxu0
      %v360 = vpop.f32.mrb[0].mxu0
      %v361 = vadd.f32 0.0, %v360
      %v362 = vpop.f32.mrb[0].mxu0
      %363 = vmatprep.mubr.bf16.mxu0 0
      %364 = vmatmul.mubr.bf16.gmra.mrb[0].mxu0 %v289
      %v365 = vpop.f32.mrb[0].mxu0
      %v366 = vadd.f32 0.0, %v365
      %v367 = vpop.f32.mrb[0].mxu0
      %v368 = vpop.f32.mrb[0].mxu0
      %v369 = vadd.f32 0.0, %v368
      %v370 = vpop.f32.mrb[0].mxu0
      %371 = vmatprep.mubr.bf16.mxu0 0
      %372 = vmatmul.mubr.bf16.gmra.mrb[0].mxu0 %v292
      %v373 = vpop.f32.mrb[0].mxu0
      %v374 = vadd.f32 0.0, %v373
      %v375 = vpop.f32.mrb[0].mxu0
      %v376 = vpop.f32.mrb[0].mxu0
      %v377 = vadd.f32 0.0, %v376
      %v378 = vpop.f32.mrb[0].mxu0
      %379 = vmatprep.mubr.bf16.mxu0 0
      %380 = vmatmul.mubr.bf16.gmra.mrb[0].mxu0 %v295
      %v381 = vpop.f32.mrb[0].mxu0
      %v382 = vadd.f32 0.0, %v381
      %v383 = vpop.f32.mrb[0].mxu0
      %v384 = vpop.f32.mrb[0].mxu0
      %v385 = vadd.f32 0.0, %v384
      %v386 = vpop.f32.mrb[0].mxu0
      %387 = vmatprep.mubr.bf16.mxu0 0
      %388 = vmatmul.mubr.bf16.gmra.mrb[0].mxu0 %v298
      %v389 = vpop.f32.mrb[0].mxu0
      %v390 = vadd.f32 0.0, %v389
      %v391 = vpop.f32.mrb[0].mxu0
      %v392 = vpop.f32.mrb[0].mxu0
      %v393 = vadd.f32 0.0, %v392
      %v394 = vpop.f32.mrb[0].mxu0
      %395 = vmatprep.mubr.bf16.mxu0 0
      %396 = vmatmul.mubr.bf16.gmra.mrb[0].mxu0 %v301
      %v397 = vpop.f32.mrb[0].mxu0
      %v398 = vadd.f32 0.0, %v397
      %v399 = vpop.f32.mrb[0].mxu0
      %v400 = vpop.f32.mrb[0].mxu0
      %v401 = vadd.f32 0.0, %v400
      %v402 = vpop.f32.mrb[0].mxu0
      %403 = vdwg.mxu0
      %v404 = vld [vmem:[%s2] sm:$0x1]
      %v406 = vlaneseq
      %v407 = vshrl.u32 %v406, 7
      %v408 = vsub.s32 0, %v407
      %v409 = vrot.slane %v404, %v408
      %v411 = vmul.f32 %v342, %v409
      %v412 = vmul.f32 %v345, %v409
      %v413 = vmul.f32 %v350, %v409
      %v414 = vmul.f32 %v353, %v409
      %v415 = vmul.f32 %v358, %v409
      %v416 = vmul.f32 %v361, %v409
      %v417 = vmul.f32 %v366, %v409
      %v418 = vmul.f32 %v369, %v409
      %v419 = vmul.f32 %v374, %v409
      %v420 = vmul.f32 %v377, %v409
      %v421 = vmul.f32 %v382, %v409
      %v422 = vmul.f32 %v385, %v409
      %v423 = vmul.f32 %v390, %v409
      %v424 = vmul.f32 %v393, %v409
      %v425 = vmul.f32 %v398, %v409
      %v426 = vmul.f32 %v401, %v409
      %v427 = vld [vmem:[%s3] sm:$0x1]
      %v429 = vlaneseq
      %v430 = vshrl.u32 %v429, 7
      %v431 = vsub.s32 0, %v430
      %v432 = vrot.slane %v427, %v431
      %v434 = vadd.f32 %v411, %v432
      %v435 = vadd.f32 %v412, %v432
      %v436 = vadd.f32 %v413, %v432
      %v437 = vadd.f32 %v414, %v432
      %v438 = vadd.f32 %v415, %v432
      %v439 = vadd.f32 %v416, %v432
      %v440 = vadd.f32 %v417, %v432
      %v441 = vadd.f32 %v418, %v432
      %v442 = vadd.f32 %v419, %v432
      %v443 = vadd.f32 %v420, %v432
      %v444 = vadd.f32 %v421, %v432
      %v445 = vadd.f32 %v422, %v432
      %v446 = vadd.f32 %v423, %v432
      %v447 = vadd.f32 %v424, %v432
      %v448 = vadd.f32 %v425, %v432
      %v449 = vadd.f32 %v426, %v432
      %vm450 = vcmask 31744
      %v451 = vsel %vm450, %v434, -inf
      %452 = vmax.xlane.f32.xlu0 %v451
      %v453 = vpop.xlane.xlu0 %452
      %v454 = vsel %vm450, %v435, -inf
      %455 = vmax.xlane.f32.xlu0 %v454
      %v456 = vpop.xlane.xlu0 %455
      %v457 = vsel %vm450, %v436, -inf
      %458 = vmax.xlane.f32.xlu0 %v457
      %v459 = vpop.xlane.xlu0 %458
      %v460 = vsel %vm450, %v437, -inf
      %461 = vmax.xlane.f32.xlu0 %v460
      %v462 = vpop.xlane.xlu0 %461
      %v463 = vsel %vm450, %v438, -inf
      %464 = vmax.xlane.f32.xlu0 %v463
      %v465 = vpop.xlane.xlu0 %464
      %v466 = vsel %vm450, %v439, -inf
      %467 = vmax.xlane.f32.xlu0 %v466
      %v468 = vpop.xlane.xlu0 %467
      %v469 = vsel %vm450, %v440, -inf
      %470 = vmax.xlane.f32.xlu0 %v469
      %v471 = vpop.xlane.xlu0 %470
      %v472 = vsel %vm450, %v441, -inf
      %473 = vmax.xlane.f32.xlu0 %v472
      %v474 = vpop.xlane.xlu0 %473
      %v475 = vsel %vm450, %v442, -inf
      %476 = vmax.xlane.f32.xlu0 %v475
      %v477 = vpop.xlane.xlu0 %476
      %v478 = vsel %vm450, %v443, -inf
      %479 = vmax.xlane.f32.xlu0 %v478
      %v480 = vpop.xlane.xlu0 %479
      %v481 = vsel %vm450, %v444, -inf
      %482 = vmax.xlane.f32.xlu0 %v481
      %v483 = vpop.xlane.xlu0 %482
      %v484 = vsel %vm450, %v445, -inf
      %485 = vmax.xlane.f32.xlu0 %v484
      %v486 = vpop.xlane.xlu0 %485
      %v487 = vsel %vm450, %v446, -inf
      %488 = vmax.xlane.f32.xlu0 %v487
      %v489 = vpop.xlane.xlu0 %488
      %v490 = vsel %vm450, %v447, -inf
      %491 = vmax.xlane.f32.xlu0 %v490
      %v492 = vpop.xlane.xlu0 %491
      %v493 = vsel %vm450, %v448, -inf
      %494 = vmax.xlane.f32.xlu0 %v493
      %v495 = vpop.xlane.xlu0 %494
      %v496 = vsel %vm450, %v449, -inf
      %497 = vmax.xlane.f32.xlu0 %v496
      %v498 = vpop.xlane.xlu0 %497
      %v499 = vsub.f32 %v434, %v453
      %v500 = vsub.f32 %v435, %v456
      %v501 = vsub.f32 %v436, %v459
      %v502 = vsub.f32 %v437, %v462
      %v503 = vsub.f32 %v438, %v465
      %v504 = vsub.f32 %v439, %v468
      %v505 = vsub.f32 %v440, %v471
      %v506 = vsub.f32 %v441, %v474
      %v507 = vsub.f32 %v442, %v477
      %v508 = vsub.f32 %v443, %v480
      %v509 = vsub.f32 %v444, %v483
      %v510 = vsub.f32 %v445, %v486
      %v511 = vsub.f32 %v446, %v489
      %v512 = vsub.f32 %v447, %v492
      %v513 = vsub.f32 %v448, %v495
      %v514 = vsub.f32 %v449, %v498
      %v515 = vmul.f32 %v499, 1.442695
      %v516 = vpow.pop %v515
      %v517 = vmul.f32 %v500, 1.442695
      %v518 = vpow.pop %v517
      %v519 = vmul.f32 %v501, 1.442695
      %v520 = vpow.pop %v519
      %v521 = vmul.f32 %v502, 1.442695
      %v522 = vpow.pop %v521
      %v523 = vmul.f32 %v503, 1.442695
      %v524 = vpow.pop %v523
      %v525 = vmul.f32 %v504, 1.442695
      %v526 = vpow.pop %v525
      %v527 = vmul.f32 %v505, 1.442695
      %v528 = vpow.pop %v527
      %v529 = vmul.f32 %v506, 1.442695
      %v530 = vpow.pop %v529
      %v531 = vmul.f32 %v507, 1.442695
      %v532 = vpow.pop %v531
      %v533 = vmul.f32 %v508, 1.442695
      %v534 = vpow.pop %v533
      %v535 = vmul.f32 %v509, 1.442695
      %v536 = vpow.pop %v535
      %v537 = vmul.f32 %v510, 1.442695
      %v538 = vpow.pop %v537
      %v539 = vmul.f32 %v511, 1.442695
      %v540 = vpow.pop %v539
      %v541 = vmul.f32 %v512, 1.442695
      %v542 = vpow.pop %v541
      %v543 = vmul.f32 %v513, 1.442695
      %v544 = vpow.pop %v543
      %v545 = vmul.f32 %v514, 1.442695
      %v546 = vpow.pop %v545
      %v547 = vsel %vm450, %v516, 0.0
      %548 = vadd.xlane.f32.xlu0 %v547
      %v549 = vpop.xlane.xlu0 %548
      %v550 = vsel %vm450, %v518, 0.0
      %551 = vadd.xlane.f32.xlu0 %v550
      %v552 = vpop.xlane.xlu0 %551
      %v553 = vsel %vm450, %v520, 0.0
      %554 = vadd.xlane.f32.xlu0 %v553
      %v555 = vpop.xlane.xlu0 %554
      %v556 = vsel %vm450, %v522, 0.0
      %557 = vadd.xlane.f32.xlu0 %v556
      %v558 = vpop.xlane.xlu0 %557
      %v559 = vsel %vm450, %v524, 0.0
      %560 = vadd.xlane.f32.xlu0 %v559
      %v561 = vpop.xlane.xlu0 %560
      %v562 = vsel %vm450, %v526, 0.0
      %563 = vadd.xlane.f32.xlu0 %v562
      %v564 = vpop.xlane.xlu0 %563
      %v565 = vsel %vm450, %v528, 0.0
      %566 = vadd.xlane.f32.xlu0 %v565
      %v567 = vpop.xlane.xlu0 %566
      %v568 = vsel %vm450, %v530, 0.0
      %569 = vadd.xlane.f32.xlu0 %v568
      %v570 = vpop.xlane.xlu0 %569
      %v571 = vsel %vm450, %v532, 0.0
      %572 = vadd.xlane.f32.xlu0 %v571
      %v573 = vpop.xlane.xlu0 %572
      %v574 = vsel %vm450, %v534, 0.0
      %575 = vadd.xlane.f32.xlu0 %v574
      %v576 = vpop.xlane.xlu0 %575
      %v577 = vsel %vm450, %v536, 0.0
      %578 = vadd.xlane.f32.xlu0 %v577
      %v579 = vpop.xlane.xlu0 %578
      %v580 = vsel %vm450, %v538, 0.0
      %581 = vadd.xlane.f32.xlu0 %v580
      %v582 = vpop.xlane.xlu0 %581
      %v583 = vsel %vm450, %v540, 0.0
      %584 = vadd.xlane.f32.xlu0 %v583
      %v585 = vpop.xlane.xlu0 %584
      %v586 = vsel %vm450, %v542, 0.0
      %587 = vadd.xlane.f32.xlu0 %v586
      %v588 = vpop.xlane.xlu0 %587
      %v589 = vsel %vm450, %v544, 0.0
      %590 = vadd.xlane.f32.xlu0 %v589
      %v591 = vpop.xlane.xlu0 %590
      %v592 = vsel %vm450, %v546, 0.0
      %593 = vadd.xlane.f32.xlu0 %v592
      %v594 = vpop.xlane.xlu0 %593
      %v595 = vrcp.pop %v549
      %v596 = vmul.f32 %v516, %v595
      %v597 = vrcp.pop %v552
      %v598 = vmul.f32 %v518, %v597
      %v599 = vrcp.pop %v555
      %v600 = vmul.f32 %v520, %v599
      %v601 = vrcp.pop %v558
      %v602 = vmul.f32 %v522, %v601
      %v603 = vrcp.pop %v561
      %v604 = vmul.f32 %v524, %v603
      %v605 = vrcp.pop %v564
      %v606 = vmul.f32 %v526, %v605
      %v607 = vrcp.pop %v567
      %v608 = vmul.f32 %v528, %v607
      %v609 = vrcp.pop %v570
      %v610 = vmul.f32 %v530, %v609
      %v611 = vrcp.pop %v573
      %v612 = vmul.f32 %v532, %v611
      %v613 = vrcp.pop %v576
      %v614 = vmul.f32 %v534, %v613
      %v615 = vrcp.pop %v579
      %v616 = vmul.f32 %v536, %v615
      %v617 = vrcp.pop %v582
      %v618 = vmul.f32 %v538, %v617
      %v619 = vrcp.pop %v585
      %v620 = vmul.f32 %v540, %v619
      %v621 = vrcp.pop %v588
      %v622 = vmul.f32 %v542, %v621
      %v623 = vrcp.pop %v591
      %v624 = vmul.f32 %v544, %v623
      %v625 = vrcp.pop %v594
      %v626 = vmul.f32 %v546, %v625
      %627 = vst.msk [vmem:[%s199] sm:$0xff] %vm450, %v596
      %628 = vst.msk [vmem:[%s199 + $0x8] sm:$0xff] %vm450, %v598
      %629 = vst.msk [vmem:[%s199 + $0x10] sm:$0xff] %vm450, %v600
      %630 = vst.msk [vmem:[%s199 + $0x18] sm:$0xff] %vm450, %v602
      %631 = vst.msk [vmem:[%s199 + $0x20] sm:$0xff] %vm450, %v604
      %632 = vst.msk [vmem:[%s199 + $0x28] sm:$0xff] %vm450, %v606
      %633 = vst.msk [vmem:[%s199 + $0x30] sm:$0xff] %vm450, %v608
      %634 = vst.msk [vmem:[%s199 + $0x38] sm:$0xff] %vm450, %v610
      %635 = vst.msk [vmem:[%s199 + $0x40] sm:$0xff] %vm450, %v612
      %636 = vst.msk [vmem:[%s199 + $0x48] sm:$0xff] %vm450, %v614
      %637 = vst.msk [vmem:[%s199 + $0x50] sm:$0xff] %vm450, %v616
      %638 = vst.msk [vmem:[%s199 + $0x58] sm:$0xff] %vm450, %v618
      %639 = vst.msk [vmem:[%s199 + $0x60] sm:$0xff] %vm450, %v620
      %640 = vst.msk [vmem:[%s199 + $0x68] sm:$0xff] %vm450, %v622
      %641 = vst.msk [vmem:[%s199 + $0x70] sm:$0xff] %vm450, %v624
      %642 = vst.msk [vmem:[%s199 + $0x78] sm:$0xff] %vm450, %v626
      %s643 = smul.u32 16, %s15
      %p644 = scmp.lt.s32.totalorder %s643, 31
      %s645 = scalar_select %p644, %s643, 31
      %s646 = smul.addr %s645, 8
      %s647 = scalar_lea.vmem %s4, %s646
      // Predicated region
      $region37: #{pgmsu_forward.16} parent=35 // pred_check
        %p648 = pneg %p122
      $region38: #{pgmsu_forward.16} parent=35 // pred_check_branch
        %650 = sbr.rel (%p648) target = $region40
      $region39: #{pgmsu_forward.16} parent=35 // pred_region
        %s651 = smul.u32 16, %s15
      $region40: #{pgmsu_forward.16} parent=35 // pred_fallthru
        _
    $region36: #{pgmsu_forward.16} parent=5 // pred_fallthru
      _
    %p652 = scmp.le.s32.totalorder 2, %s10
    // Predicated region
    $region41: #{pgmsu_forward.16} parent=5 // pred_check
      %p653 = pneg %p652
    $region42: #{pgmsu_forward.16} parent=5 // pred_check_branch
      %655 = sbr.rel (%p653) target = $region44
    $region43: #{pgmsu_forward.16} parent=5 // pred_region
      %s656 = ssub.s32 %s10, 2
      // Predicated region
      $region45: #{pgmsu_forward.16} parent=43 // pred_check
        %p657 = pneg %p128
      $region46: #{pgmsu_forward.16} parent=43 // pred_check_branch
        %659 = sbr.rel (%p657) target = $region48
      $region47: #{pgmsu_forward.16} parent=43 // pred_region
        %s660 = smul.u32 16, %s16
        %p661 = scmp.lt.s32.totalorder %s660, 31
        %s662 = scalar_select %p661, %s660, 31
        %s663 = smul.addr %s662, 8
        %s664 = scalar_lea.vmem %s4, %s663
      $region48: #{pgmsu_forward.16} parent=43 // pred_fallthru
        _
    $region44: #{pgmsu_forward.16} parent=5 // pred_fallthru
      _
  $region6: #{pgmsu_forward.16} parent=0 // loop_footer
    %s14 = sadd.s32 1, %s10
  $region7: #{pgmsu_forward.16} parent=0 // loop_footer_branch
    %9 = sbr.rel target = $region3
  $region8: #{pgmsu_forward.16} parent=0 // loop_exit
    _

// kernel: pgmsu_forward.19
$region0: #{pgmsu_forward.19}
  #allocation0 [shape = 'u32[]', space=smem, size = 0x4, offset = 0x4, fixed_abs, tag = 'smem constant byte address 0x4 - core index']
  #allocation1 [shape = 'u32[144,128]{1,0:T(1,128)}', space=vmem, size = 0x12000, scoped, tag = 'internal scratch']
  %s0 = inlined_call_operand.vmem [shape: f32[256,4], index: 0, kind: input, shape index: {}]
  %s1 = inlined_call_operand.vmem [shape: f32[256,16], index: 1, kind: input, shape index: {}]
  %s2 = inlined_call_operand.vmem [shape: f32[256,4], index: 2, kind: output, shape index: {}]
  %s3 = sld [smem:[#allocation0]]
  $region41: #{pgmsu_forward.19} parent=0
    _
  %s5 = ssub.s32 1, %s3
  %s6 = scalar_select 0, %s5, %s3
  loop: start=0, step=1, limit=4
  $region2: #{pgmsu_forward.19} parent=0 // loop_pre_header
    _
  $region3: #{pgmsu_forward.19} parent=0 // loop_header
    %s8 = sphi 0, %s12
    %p9 = scmp.ge.s32.totalorder %s8, 4
    %s18 = sphi 0, %s20
    %s21 = sphi 0, %s18
    %s22 = sphi 0, %s21
    %s38 = sphi 0, %s22
    %s44 = sphi 0, %s46
    %s47 = sphi 0, %s44
    %s48 = sphi 0, %s47
    %s64 = sphi 0, %s48
    %s70 = sphi 0, %s72
    %s73 = sphi 0, %s70
    %s74 = sphi 0, %s73
    %s90 = sphi 0, %s74
  $region4: #{pgmsu_forward.19} parent=0 // loop_header_branch
    %11 = sbr.rel (%p9) target = $region8
  $region5: #{pgmsu_forward.19} parent=0 // loop_body
    %s13 = ssub.s32 %s8, 1
    %s14 = ssub.s32 %s8, 2
    %s15 = sadd.s32 %s8, 1
    %s16 = ssub.s32 %s8, %s15
    %p17 = scmp.eq.s32.totalorder %s16, 0
    %s19 = sadd.s32 %s18, 1
    %s20 = scalar_select %p17, %s18, %s19
    %p23 = pneg %p17
    %p24 = scmp.eq.s32.totalorder %s8, 1
    %p25 = por %p23, %p24
    %p26 = scmp.ne.s32.totalorder %s18, %s21
    %p27 = scmp.eq.s32.totalorder %s8, 0
    %p28 = por %p26, %p27
    %p29 = scmp.ne.s32.totalorder %s18, %s21
    %p30 = scmp.eq.s32.totalorder %s13, 1
    %p31 = por %p29, %p30
    %p32 = scmp.ne.s32.totalorder %s21, %s22
    %p33 = scmp.eq.s32.totalorder %s13, 0
    %p34 = por %p32, %p33
    %p35 = scmp.ne.s32.totalorder %s21, %s22
    %p36 = scmp.eq.s32.totalorder %s14, 1
    %p37 = por %p35, %p36
    %p39 = scmp.ne.s32.totalorder %s22, %s38
    %p40 = scmp.eq.s32.totalorder %s14, 0
    %p41 = por %p39, %p40
    %s42 = ssub.s32 %s8, %s15
    %p43 = scmp.eq.s32.totalorder %s42, 0
    %s45 = sadd.s32 %s44, 1
    %s46 = scalar_select %p43, %s44, %s45
    %p49 = pneg %p43
    %p50 = scmp.eq.s32.totalorder %s8, 1
    %p51 = por %p49, %p50
    %p52 = scmp.ne.s32.totalorder %s44, %s47
    %p53 = scmp.eq.s32.totalorder %s8, 0
    %p54 = por %p52, %p53
    %p55 = scmp.ne.s32.totalorder %s44, %s47
    %p56 = scmp.eq.s32.totalorder %s13, 1
    %p57 = por %p55, %p56
    %p58 = scmp.ne.s32.totalorder %s47, %s48
    %p59 = scmp.eq.s32.totalorder %s13, 0
    %p60 = por %p58, %p59
    %p61 = scmp.ne.s32.totalorder %s47, %s48
    %p62 = scmp.eq.s32.totalorder %s14, 1
    %p63 = por %p61, %p62
    %p65 = scmp.ne.s32.totalorder %s48, %s64
    %p66 = scmp.eq.s32.totalorder %s14, 0
    %p67 = por %p65, %p66
    %s68 = ssub.s32 %s8, %s15
    %p69 = scmp.eq.s32.totalorder %s68, 0
    %s71 = sadd.s32 %s70, 1
    %s72 = scalar_select %p69, %s70, %s71
    %p75 = pneg %p69
    %p76 = scmp.eq.s32.totalorder %s8, 1
    %p77 = por %p75, %p76
    %p78 = scmp.ne.s32.totalorder %s70, %s73
    %p79 = scmp.eq.s32.totalorder %s8, 0
    %p80 = por %p78, %p79
    %p81 = scmp.ne.s32.totalorder %s70, %s73
    %p82 = scmp.eq.s32.totalorder %s13, 1
    %p83 = por %p81, %p82
    %p84 = scmp.ne.s32.totalorder %s73, %s74
    %p85 = scmp.eq.s32.totalorder %s13, 0
    %p86 = por %p84, %p85
    %p87 = scmp.ne.s32.totalorder %s73, %s74
    %p88 = scmp.eq.s32.totalorder %s14, 1
    %p89 = por %p87, %p88
    %p91 = scmp.ne.s32.totalorder %s74, %s90
    %p92 = scmp.eq.s32.totalorder %s14, 0
    %p93 = por %p91, %p92
    %p94 = scmp.le.s32.totalorder 1, %s8
    %p95 = scmp.lt.s32.totalorder %s8, 3
    %p96 = pnand %p94, %p95
    %p97 = pneg %p96
    // Predicated region
    $region9: #{pgmsu_forward.19} parent=5 // pred_check
      _
    $region10: #{pgmsu_forward.19} parent=5 // pred_check_branch
      %99 = sbr.rel (%p96) target = $region12
    $region11: #{pgmsu_forward.19} parent=5 // pred_region
      %s100 = ssub.s32 %s8, 1
    $region12: #{pgmsu_forward.19} parent=5 // pred_fallthru
      _
    %p101 = scmp.lt.s32.totalorder %s8, 2
    // Predicated region
    $region13: #{pgmsu_forward.19} parent=5 // pred_check
      %p102 = pneg %p101
    $region14: #{pgmsu_forward.19} parent=5 // pred_check_branch
      %104 = sbr.rel (%p102) target = $region16
    $region15: #{pgmsu_forward.19} parent=5 // pred_region
      // Predicated region
      $region17: #{pgmsu_forward.19} parent=15 // pred_check
        %p105 = pneg %p28
      $region18: #{pgmsu_forward.19} parent=15 // pred_check_branch
        %107 = sbr.rel (%p105) target = $region20
      $region19: #{pgmsu_forward.19} parent=15 // pred_region
        %s108 = smul.u32 16, %s8
        %p109 = scmp.lt.s32.totalorder %s108, 31
        %s110 = scalar_select %p109, %s108, 31
        %s111 = smul.addr %s110, 8
        %s112 = scalar_lea.vmem %s0, %s111
        %s113 = smul.u32 16, %s8
      $region20: #{pgmsu_forward.19} parent=15 // pred_fallthru
        _
      // Predicated region
      $region21: #{pgmsu_forward.19} parent=15 // pred_check
        %p114 = pneg %p54
      $region22: #{pgmsu_forward.19} parent=15 // pred_check_branch
        %116 = sbr.rel (%p114) target = $region24
      $region23: #{pgmsu_forward.19} parent=15 // pred_region
        %s117 = smul.u32 16, %s8
        %p118 = scmp.lt.s32.totalorder %s117, 31
        %s119 = scalar_select %p118, %s117, 31
        %s120 = smul.addr %s119, 8
        %s121 = scalar_lea.vmem %s1, %s120
        %s122 = smul.u32 16, %s8
      $region24: #{pgmsu_forward.19} parent=15 // pred_fallthru
        _
    $region16: #{pgmsu_forward.19} parent=5 // pred_fallthru
      _
    %p123 = scmp.le.s32.totalorder 1, %s8
    %p124 = scmp.lt.s32.totalorder %s8, 3
    %p125 = pnand %p123, %p124
    %p126 = pneg %p125
    // Predicated region
    $region25: #{pgmsu_forward.19} parent=5 // pred_check
      _
    $region26: #{pgmsu_forward.19} parent=5 // pred_check_branch
      %128 = sbr.rel (%p125) target = $region28
    $region27: #{pgmsu_forward.19} parent=5 // pred_region
      %s129 = ssub.s32 %s8, 1
      %s130 = smul.u32 16, %s13
      %p131 = scmp.lt.s32.totalorder %s130, 31
      %s132 = scalar_select %p131, %s130, 31
      %s133 = smul.addr %s132, 8
      %s134 = scalar_lea.vmem %s0, %s133
      %p135 = pneg %p34
      %p136 = pneg %p31
      %s137 = smul.u32 16, %s13
      %p138 = scmp.lt.s32.totalorder %s137, 31
      %s139 = scalar_select %p138, %s137, 31
      %s140 = smul.addr %s139, 8
      %s141 = scalar_lea.vmem %s1, %s140
      %p142 = pneg %p60
      %p143 = pneg %p57
      %p144 = pneg %p86
      %p145 = pneg %p83
      %s146 = smul.u32 16, %s13
      %p147 = scmp.lt.s32.totalorder %s146, 31
      %s148 = scalar_select %p147, %s146, 31
      %s149 = smul.addr %s148, 8
      %s150 = scalar_lea.vmem %s2, %s149
      %s151 = smul.u32 16, %s13
      %p152 = scmp.lt.s32.totalorder %s151, 31
      %s153 = scalar_select %p152, %s151, 31
      %s154 = smul.addr %s153, 8
      %s155 = scalar_lea.vmem %s0, %s154
      %s156 = smul.u32 16, %s13
      %s157 = smul.u32 16, %s13
      %p158 = scmp.lt.s32.totalorder %s157, 31
      %s159 = scalar_select %p158, %s157, 31
      %s160 = smul.addr %s159, 8
      %s161 = scalar_lea.vmem %s1, %s160
      %s162 = smul.u32 16, %s13
      %s163 = smul.u32 16, %s13
      %p164 = scmp.lt.s32.totalorder %s163, 31
      %s165 = scalar_select %p164, %s163, 31
      %s166 = smul.addr %s165, 8
      %s167 = scalar_lea.vmem %s2, %s166
      %s168 = smul.u32 16, %s13
      %v169 = vld [vmem:[%s155] sm:$0xff]
      %v170 = vld [vmem:[%s155 + $0x8] sm:$0xff]
      %v171 = vld [vmem:[%s155 + $0x10] sm:$0xff]
      %v172 = vld [vmem:[%s155 + $0x18] sm:$0xff]
      %v173 = vld [vmem:[%s155 + $0x20] sm:$0xff]
      %v174 = vld [vmem:[%s155 + $0x28] sm:$0xff]
      %v175 = vld [vmem:[%s155 + $0x30] sm:$0xff]
      %v176 = vld [vmem:[%s155 + $0x38] sm:$0xff]
      %v177 = vld [vmem:[%s155 + $0x40] sm:$0xff]
      %v178 = vld [vmem:[%s155 + $0x48] sm:$0xff]
      %v179 = vld [vmem:[%s155 + $0x50] sm:$0xff]
      %v180 = vld [vmem:[%s155 + $0x58] sm:$0xff]
      %v181 = vld [vmem:[%s155 + $0x60] sm:$0xff]
      %v182 = vld [vmem:[%s155 + $0x68] sm:$0xff]
      %v183 = vld [vmem:[%s155 + $0x70] sm:$0xff]
      %v184 = vld [vmem:[%s155 + $0x78] sm:$0xff]
      %v185 = vld [vmem:[%s161] sm:$0xff]
      %v186 = vld [vmem:[%s161 + $0x8] sm:$0xff]
      %v187 = vld [vmem:[%s161 + $0x10] sm:$0xff]
      %v188 = vld [vmem:[%s161 + $0x18] sm:$0xff]
      %v189 = vld [vmem:[%s161 + $0x20] sm:$0xff]
      %v190 = vld [vmem:[%s161 + $0x28] sm:$0xff]
      %v191 = vld [vmem:[%s161 + $0x30] sm:$0xff]
      %v192 = vld [vmem:[%s161 + $0x38] sm:$0xff]
      %v193 = vld [vmem:[%s161 + $0x40] sm:$0xff]
      %v194 = vld [vmem:[%s161 + $0x48] sm:$0xff]
      %v195 = vld [vmem:[%s161 + $0x50] sm:$0xff]
      %v196 = vld [vmem:[%s161 + $0x58] sm:$0xff]
      %v197 = vld [vmem:[%s161 + $0x60] sm:$0xff]
      %v198 = vld [vmem:[%s161 + $0x68] sm:$0xff]
      %v199 = vld [vmem:[%s161 + $0x70] sm:$0xff]
      %v200 = vld [vmem:[%s161 + $0x78] sm:$0xff]
      %202 = vset.pattern.permute.xlu0 0
      %203 = vperm.xlu0 %202, %v169
      %v204 = vpop.permute.xlu0 %203
      %207 = vset.pattern.permute.xlu0 0
      %208 = vperm.xlu0 %207, %v170
      %v209 = vpop.permute.xlu0 %208
      %212 = vset.pattern.permute.xlu0 0
      %213 = vperm.xlu0 %212, %v171
      %v214 = vpop.permute.xlu0 %213
      %217 = vset.pattern.permute.xlu0 0
      %218 = vperm.xlu0 %217, %v172
      %v219 = vpop.permute.xlu0 %218
      %222 = vset.pattern.permute.xlu0 0
      %223 = vperm.xlu0 %222, %v173
      %v224 = vpop.permute.xlu0 %223
      %227 = vset.pattern.permute.xlu0 0
      %228 = vperm.xlu0 %227, %v174
      %v229 = vpop.permute.xlu0 %228
      %232 = vset.pattern.permute.xlu0 0
      %233 = vperm.xlu0 %232, %v175
      %v234 = vpop.permute.xlu0 %233
      %237 = vset.pattern.permute.xlu0 0
      %238 = vperm.xlu0 %237, %v176
      %v239 = vpop.permute.xlu0 %238
      %242 = vset.pattern.permute.xlu0 0
      %243 = vperm.xlu0 %242, %v177
      %v244 = vpop.permute.xlu0 %243
      %247 = vset.pattern.permute.xlu0 0
      %248 = vperm.xlu0 %247, %v178
      %v249 = vpop.permute.xlu0 %248
      %252 = vset.pattern.permute.xlu0 0
      %253 = vperm.xlu0 %252, %v179
      %v254 = vpop.permute.xlu0 %253
      %257 = vset.pattern.permute.xlu0 0
      %258 = vperm.xlu0 %257, %v180
      %v259 = vpop.permute.xlu0 %258
      %262 = vset.pattern.permute.xlu0 0
      %263 = vperm.xlu0 %262, %v181
      %v264 = vpop.permute.xlu0 %263
      %267 = vset.pattern.permute.xlu0 0
      %268 = vperm.xlu0 %267, %v182
      %v269 = vpop.permute.xlu0 %268
      %272 = vset.pattern.permute.xlu0 0
      %273 = vperm.xlu0 %272, %v183
      %v274 = vpop.permute.xlu0 %273
      %277 = vset.pattern.permute.xlu0 0
      %278 = vperm.xlu0 %277, %v184
      %v279 = vpop.permute.xlu0 %278
      %v281 = vmul.f32 %v204, %v185
      %v282 = vmul.f32 %v209, %v186
      %v283 = vmul.f32 %v214, %v187
      %v284 = vmul.f32 %v219, %v188
      %v285 = vmul.f32 %v224, %v189
      %v286 = vmul.f32 %v229, %v190
      %v287 = vmul.f32 %v234, %v191
      %v288 = vmul.f32 %v239, %v192
      %v289 = vmul.f32 %v244, %v193
      %v290 = vmul.f32 %v249, %v194
      %v291 = vmul.f32 %v254, %v195
      %v292 = vmul.f32 %v259, %v196
      %v293 = vmul.f32 %v264, %v197
      %v294 = vmul.f32 %v269, %v198
      %v295 = vmul.f32 %v274, %v199
      %v296 = vmul.f32 %v279, %v200
      %297 = vset.pattern.permute.xlu0 1
      %298 = vperm.xlu0 %297, %v169
      %v299 = vpop.permute.xlu0 %298
      %301 = vset.pattern.permute.xlu0 1
      %302 = vperm.xlu0 %301, %v170
      %v303 = vpop.permute.xlu0 %302
      %305 = vset.pattern.permute.xlu0 1
      %306 = vperm.xlu0 %305, %v171
      %v307 = vpop.permute.xlu0 %306
      %309 = vset.pattern.permute.xlu0 1
      %310 = vperm.xlu0 %309, %v172
      %v311 = vpop.permute.xlu0 %310
      %313 = vset.pattern.permute.xlu0 1
      %314 = vperm.xlu0 %313, %v173
      %v315 = vpop.permute.xlu0 %314
      %317 = vset.pattern.permute.xlu0 1
      %318 = vperm.xlu0 %317, %v174
      %v319 = vpop.permute.xlu0 %318
      %321 = vset.pattern.permute.xlu0 1
      %322 = vperm.xlu0 %321, %v175
      %v323 = vpop.permute.xlu0 %322
      %325 = vset.pattern.permute.xlu0 1
      %326 = vperm.xlu0 %325, %v176
      %v327 = vpop.permute.xlu0 %326
      %329 = vset.pattern.permute.xlu0 1
      %330 = vperm.xlu0 %329, %v177
      %v331 = vpop.permute.xlu0 %330
      %333 = vset.pattern.permute.xlu0 1
      %334 = vperm.xlu0 %333, %v178
      %v335 = vpop.permute.xlu0 %334
      %337 = vset.pattern.permute.xlu0 1
      %338 = vperm.xlu0 %337, %v179
      %v339 = vpop.permute.xlu0 %338
      %341 = vset.pattern.permute.xlu0 1
      %342 = vperm.xlu0 %341, %v180
      %v343 = vpop.permute.xlu0 %342
      %345 = vset.pattern.permute.xlu0 1
      %346 = vperm.xlu0 %345, %v181
      %v347 = vpop.permute.xlu0 %346
      %349 = vset.pattern.permute.xlu0 1
      %350 = vperm.xlu0 %349, %v182
      %v351 = vpop.permute.xlu0 %350
      %353 = vset.pattern.permute.xlu0 1
      %354 = vperm.xlu0 %353, %v183
      %v355 = vpop.permute.xlu0 %354
      %357 = vset.pattern.permute.xlu0 1
      %358 = vperm.xlu0 %357, %v184
      %v359 = vpop.permute.xlu0 %358
      %v361 = vmul.f32 %v299, %v185
      %v362 = vmul.f32 %v303, %v186
      %v363 = vmul.f32 %v307, %v187
      %v364 = vmul.f32 %v311, %v188
      %v365 = vmul.f32 %v315, %v189
      %v366 = vmul.f32 %v319, %v190
      %v367 = vmul.f32 %v323, %v191
      %v368 = vmul.f32 %v327, %v192
      %v369 = vmul.f32 %v331, %v193
      %v370 = vmul.f32 %v335, %v194
      %v371 = vmul.f32 %v339, %v195
      %v372 = vmul.f32 %v343, %v196
      %v373 = vmul.f32 %v347, %v197
      %v374 = vmul.f32 %v351, %v198
      %v375 = vmul.f32 %v355, %v199
      %v376 = vmul.f32 %v359, %v200
      %393 = vrot.lane.b32.xlu0 %v361, 124
      %v394 = vpop.permute.xlu0 %393
      %395 = vrot.lane.b32.xlu0 %v362, 124
      %v396 = vpop.permute.xlu0 %395
      %397 = vrot.lane.b32.xlu0 %v363, 124
      %v398 = vpop.permute.xlu0 %397
      %399 = vrot.lane.b32.xlu0 %v364, 124
      %v400 = vpop.permute.xlu0 %399
      %401 = vrot.lane.b32.xlu0 %v365, 124
      %v402 = vpop.permute.xlu0 %401
      %403 = vrot.lane.b32.xlu0 %v366, 124
      %v404 = vpop.permute.xlu0 %403
      %405 = vrot.lane.b32.xlu0 %v367, 124
      %v406 = vpop.permute.xlu0 %405
      %407 = vrot.lane.b32.xlu0 %v368, 124
      %v408 = vpop.permute.xlu0 %407
      %409 = vrot.lane.b32.xlu0 %v369, 124
      %v410 = vpop.permute.xlu0 %409
      %411 = vrot.lane.b32.xlu0 %v370, 124
      %v412 = vpop.permute.xlu0 %411
      %413 = vrot.lane.b32.xlu0 %v371, 124
      %v414 = vpop.permute.xlu0 %413
      %415 = vrot.lane.b32.xlu0 %v372, 124
      %v416 = vpop.permute.xlu0 %415
      %417 = vrot.lane.b32.xlu0 %v373, 124
      %v418 = vpop.permute.xlu0 %417
      %419 = vrot.lane.b32.xlu0 %v374, 124
      %v420 = vpop.permute.xlu0 %419
      %421 = vrot.lane.b32.xlu0 %v375, 124
      %v422 = vpop.permute.xlu0 %421
      %423 = vrot.lane.b32.xlu0 %v376, 124
      %v424 = vpop.permute.xlu0 %423
      %v441 = vadd.f32 %v281, %v394
      %v442 = vadd.f32 %v282, %v396
      %v443 = vadd.f32 %v283, %v398
      %v444 = vadd.f32 %v284, %v400
      %v445 = vadd.f32 %v285, %v402
      %v446 = vadd.f32 %v286, %v404
      %v447 = vadd.f32 %v287, %v406
      %v448 = vadd.f32 %v288, %v408
      %v449 = vadd.f32 %v289, %v410
      %v450 = vadd.f32 %v290, %v412
      %v451 = vadd.f32 %v291, %v414
      %v452 = vadd.f32 %v292, %v416
      %v453 = vadd.f32 %v293, %v418
      %v454 = vadd.f32 %v294, %v420
      %v455 = vadd.f32 %v295, %v422
      %v456 = vadd.f32 %v296, %v424
      %457 = vset.pattern.permute.xlu0 2
      %458 = vperm.xlu0 %457, %v169
      %v459 = vpop.permute.xlu0 %458
      %461 = vset.pattern.permute.xlu0 2
      %462 = vperm.xlu0 %461, %v170
      %v463 = vpop.permute.xlu0 %462
      %465 = vset.pattern.permute.xlu0 2
      %466 = vperm.xlu0 %465, %v171
      %v467 = vpop.permute.xlu0 %466
      %469 = vset.pattern.permute.xlu0 2
      %470 = vperm.xlu0 %469, %v172
      %v471 = vpop.permute.xlu0 %470
      %473 = vset.pattern.permute.xlu0 2
      %474 = vperm.xlu0 %473, %v173
      %v475 = vpop.permute.xlu0 %474
      %477 = vset.pattern.permute.xlu0 2
      %478 = vperm.xlu0 %477, %v174
      %v479 = vpop.permute.xlu0 %478
      %481 = vset.pattern.permute.xlu0 2
      %482 = vperm.xlu0 %481, %v175
      %v483 = vpop.permute.xlu0 %482
      %485 = vset.pattern.permute.xlu0 2
      %486 = vperm.xlu0 %485, %v176
      %v487 = vpop.permute.xlu0 %486
      %489 = vset.pattern.permute.xlu0 2
      %490 = vperm.xlu0 %489, %v177
      %v491 = vpop.permute.xlu0 %490
      %493 = vset.pattern.permute.xlu0 2
      %494 = vperm.xlu0 %493, %v178
      %v495 = vpop.permute.xlu0 %494
      %497 = vset.pattern.permute.xlu0 2
      %498 = vperm.xlu0 %497, %v179
      %v499 = vpop.permute.xlu0 %498
      %501 = vset.pattern.permute.xlu0 2
      %502 = vperm.xlu0 %501, %v180
      %v503 = vpop.permute.xlu0 %502
      %505 = vset.pattern.permute.xlu0 2
      %506 = vperm.xlu0 %505, %v181
      %v507 = vpop.permute.xlu0 %506
      %509 = vset.pattern.permute.xlu0 2
      %510 = vperm.xlu0 %509, %v182
      %v511 = vpop.permute.xlu0 %510
      %513 = vset.pattern.permute.xlu0 2
      %514 = vperm.xlu0 %513, %v183
      %v515 = vpop.permute.xlu0 %514
      %517 = vset.pattern.permute.xlu0 2
      %518 = vperm.xlu0 %517, %v184
      %v519 = vpop.permute.xlu0 %518
      %v521 = vmul.f32 %v459, %v185
      %v522 = vmul.f32 %v463, %v186
      %v523 = vmul.f32 %v467, %v187
      %v524 = vmul.f32 %v471, %v188
      %v525 = vmul.f32 %v475, %v189
      %v526 = vmul.f32 %v479, %v190
      %v527 = vmul.f32 %v483, %v191
      %v528 = vmul.f32 %v487, %v192
      %v529 = vmul.f32 %v491, %v193
      %v530 = vmul.f32 %v495, %v194
      %v531 = vmul.f32 %v499, %v195
      %v532 = vmul.f32 %v503, %v196
      %v533 = vmul.f32 %v507, %v197
      %v534 = vmul.f32 %v511, %v198
      %v535 = vmul.f32 %v515, %v199
      %v536 = vmul.f32 %v519, %v200
      %553 = vrot.lane.b32.xlu0 %v521, 120
      %v554 = vpop.permute.xlu0 %553
      %555 = vrot.lane.b32.xlu0 %v522, 120
      %v556 = vpop.permute.xlu0 %555
      %557 = vrot.lane.b32.xlu0 %v523, 120
      %v558 = vpop.permute.xlu0 %557
      %559 = vrot.lane.b32.xlu0 %v524, 120
      %v560 = vpop.permute.xlu0 %559
      %561 = vrot.lane.b32.xlu0 %v525, 120
      %v562 = vpop.permute.xlu0 %561
      %563 = vrot.lane.b32.xlu0 %v526, 120
      %v564 = vpop.permute.xlu0 %563
      %565 = vrot.lane.b32.xlu0 %v527, 120
      %v566 = vpop.permute.xlu0 %565
      %567 = vrot.lane.b32.xlu0 %v528, 120
      %v568 = vpop.permute.xlu0 %567
      %569 = vrot.lane.b32.xlu0 %v529, 120
      %v570 = vpop.permute.xlu0 %569
      %571 = vrot.lane.b32.xlu0 %v530, 120
      %v572 = vpop.permute.xlu0 %571
      %573 = vrot.lane.b32.xlu0 %v531, 120
      %v574 = vpop.permute.xlu0 %573
      %575 = vrot.lane.b32.xlu0 %v532, 120
      %v576 = vpop.permute.xlu0 %575
      %577 = vrot.lane.b32.xlu0 %v533, 120
      %v578 = vpop.permute.xlu0 %577
      %579 = vrot.lane.b32.xlu0 %v534, 120
      %v580 = vpop.permute.xlu0 %579
      %581 = vrot.lane.b32.xlu0 %v535, 120
      %v582 = vpop.permute.xlu0 %581
      %583 = vrot.lane.b32.xlu0 %v536, 120
      %v584 = vpop.permute.xlu0 %583
      %v601 = vadd.f32 %v441, %v554
      %v602 = vadd.f32 %v442, %v556
      %v603 = vadd.f32 %v443, %v558
      %v604 = vadd.f32 %v444, %v560
      %v605 = vadd.f32 %v445, %v562
      %v606 = vadd.f32 %v446, %v564
      %v607 = vadd.f32 %v447, %v566
      %v608 = vadd.f32 %v448, %v568
      %v609 = vadd.f32 %v449, %v570
      %v610 = vadd.f32 %v450, %v572
      %v611 = vadd.f32 %v451, %v574
      %v612 = vadd.f32 %v452, %v576
      %v613 = vadd.f32 %v453, %v578
      %v614 = vadd.f32 %v454, %v580
      %v615 = vadd.f32 %v455, %v582
      %v616 = vadd.f32 %v456, %v584
      %617 = vset.pattern.permute.xlu0 3
      %618 = vperm.xlu0 %617, %v169
      %v619 = vpop.permute.xlu0 %618
      %621 = vset.pattern.permute.xlu0 3
      %622 = vperm.xlu0 %621, %v170
      %v623 = vpop.permute.xlu0 %622
      %625 = vset.pattern.permute.xlu0 3
      %626 = vperm.xlu0 %625, %v171
      %v627 = vpop.permute.xlu0 %626
      %629 = vset.pattern.permute.xlu0 3
      %630 = vperm.xlu0 %629, %v172
      %v631 = vpop.permute.xlu0 %630
      %633 = vset.pattern.permute.xlu0 3
      %634 = vperm.xlu0 %633, %v173
      %v635 = vpop.permute.xlu0 %634
      %637 = vset.pattern.permute.xlu0 3
      %638 = vperm.xlu0 %637, %v174
      %v639 = vpop.permute.xlu0 %638
      %641 = vset.pattern.permute.xlu0 3
      %642 = vperm.xlu0 %641, %v175
      %v643 = vpop.permute.xlu0 %642
      %645 = vset.pattern.permute.xlu0 3
      %646 = vperm.xlu0 %645, %v176
      %v647 = vpop.permute.xlu0 %646
      %649 = vset.pattern.permute.xlu0 3
      %650 = vperm.xlu0 %649, %v177
      %v651 = vpop.permute.xlu0 %650
      %653 = vset.pattern.permute.xlu0 3
      %654 = vperm.xlu0 %653, %v178
      %v655 = vpop.permute.xlu0 %654
      %657 = vset.pattern.permute.xlu0 3
      %658 = vperm.xlu0 %657, %v179
      %v659 = vpop.permute.xlu0 %658
      %661 = vset.pattern.permute.xlu0 3
      %662 = vperm.xlu0 %661, %v180
      %v663 = vpop.permute.xlu0 %662
      %665 = vset.pattern.permute.xlu0 3
      %666 = vperm.xlu0 %665, %v181
      %v667 = vpop.permute.xlu0 %666
      %669 = vset.pattern.permute.xlu0 3
      %670 = vperm.xlu0 %669, %v182
      %v671 = vpop.permute.xlu0 %670
      %673 = vset.pattern.permute.xlu0 3
      %674 = vperm.xlu0 %673, %v183
      %v675 = vpop.permute.xlu0 %674
      %677 = vset.pattern.permute.xlu0 3
      %678 = vperm.xlu0 %677, %v184
      %v679 = vpop.permute.xlu0 %678
      %v681 = vmul.f32 %v619, %v185
      %v682 = vmul.f32 %v623, %v186
      %v683 = vmul.f32 %v627, %v187
      %v684 = vmul.f32 %v631, %v188
      %v685 = vmul.f32 %v635, %v189
      %v686 = vmul.f32 %v639, %v190
      %v687 = vmul.f32 %v643, %v191
      %v688 = vmul.f32 %v647, %v192
      %v689 = vmul.f32 %v651, %v193
      %v690 = vmul.f32 %v655, %v194
      %v691 = vmul.f32 %v659, %v195
      %v692 = vmul.f32 %v663, %v196
      %v693 = vmul.f32 %v667, %v197
      %v694 = vmul.f32 %v671, %v198
      %v695 = vmul.f32 %v675, %v199
      %v696 = vmul.f32 %v679, %v200
      %713 = vrot.lane.b32.xlu0 %v681, 116
      %v714 = vpop.permute.xlu0 %713
      %715 = vrot.lane.b32.xlu0 %v682, 116
      %v716 = vpop.permute.xlu0 %715
      %717 = vrot.lane.b32.xlu0 %v683, 116
      %v718 = vpop.permute.xlu0 %717
      %719 = vrot.lane.b32.xlu0 %v684, 116
      %v720 = vpop.permute.xlu0 %719
      %721 = vrot.lane.b32.xlu0 %v685, 116
      %v722 = vpop.permute.xlu0 %721
      %723 = vrot.lane.b32.xlu0 %v686, 116
      %v724 = vpop.permute.xlu0 %723
      %725 = vrot.lane.b32.xlu0 %v687, 116
      %v726 = vpop.permute.xlu0 %725
      %727 = vrot.lane.b32.xlu0 %v688, 116
      %v728 = vpop.permute.xlu0 %727
      %729 = vrot.lane.b32.xlu0 %v689, 116
      %v730 = vpop.permute.xlu0 %729
      %731 = vrot.lane.b32.xlu0 %v690, 116
      %v732 = vpop.permute.xlu0 %731
      %733 = vrot.lane.b32.xlu0 %v691, 116
      %v734 = vpop.permute.xlu0 %733
      %735 = vrot.lane.b32.xlu0 %v692, 116
      %v736 = vpop.permute.xlu0 %735
      %737 = vrot.lane.b32.xlu0 %v693, 116
      %v738 = vpop.permute.xlu0 %737
      %739 = vrot.lane.b32.xlu0 %v694, 116
      %v740 = vpop.permute.xlu0 %739
      %741 = vrot.lane.b32.xlu0 %v695, 116
      %v742 = vpop.permute.xlu0 %741
      %743 = vrot.lane.b32.xlu0 %v696, 116
      %v744 = vpop.permute.xlu0 %743
      %v761 = vadd.f32 %v601, %v714
      %v762 = vadd.f32 %v602, %v716
      %v763 = vadd.f32 %v603, %v718
      %v764 = vadd.f32 %v604, %v720
      %v765 = vadd.f32 %v605, %v722
      %v766 = vadd.f32 %v606, %v724
      %v767 = vadd.f32 %v607, %v726
      %v768 = vadd.f32 %v608, %v728
      %v769 = vadd.f32 %v609, %v730
      %v770 = vadd.f32 %v610, %v732
      %v771 = vadd.f32 %v611, %v734
      %v772 = vadd.f32 %v612, %v736
      %v773 = vadd.f32 %v613, %v738
      %v774 = vadd.f32 %v614, %v740
      %v775 = vadd.f32 %v615, %v742
      %v776 = vadd.f32 %v616, %v744
      %vm777 = vcmask 31744
      %778 = vst.msk [vmem:[%s167] sm:$0xff] %vm777, %v761
      %779 = vst.msk [vmem:[%s167 + $0x8] sm:$0xff] %vm777, %v762
      %780 = vst.msk [vmem:[%s167 + $0x10] sm:$0xff] %vm777, %v763
      %781 = vst.msk [vmem:[%s167 + $0x18] sm:$0xff] %vm777, %v764
      %782 = vst.msk [vmem:[%s167 + $0x20] sm:$0xff] %vm777, %v765
      %783 = vst.msk [vmem:[%s167 + $0x28] sm:$0xff] %vm777, %v766
      %784 = vst.msk [vmem:[%s167 + $0x30] sm:$0xff] %vm777, %v767
      %785 = vst.msk [vmem:[%s167 + $0x38] sm:$0xff] %vm777, %v768
      %786 = vst.msk [vmem:[%s167 + $0x40] sm:$0xff] %vm777, %v769
      %787 = vst.msk [vmem:[%s167 + $0x48] sm:$0xff] %vm777, %v770
      %788 = vst.msk [vmem:[%s167 + $0x50] sm:$0xff] %vm777, %v771
      %789 = vst.msk [vmem:[%s167 + $0x58] sm:$0xff] %vm777, %v772
      %790 = vst.msk [vmem:[%s167 + $0x60] sm:$0xff] %vm777, %v773
      %791 = vst.msk [vmem:[%s167 + $0x68] sm:$0xff] %vm777, %v774
      %792 = vst.msk [vmem:[%s167 + $0x70] sm:$0xff] %vm777, %v775
      %793 = vst.msk [vmem:[%s167 + $0x78] sm:$0xff] %vm777, %v776
      %s794 = smul.u32 16, %s13
      %p795 = scmp.lt.s32.totalorder %s794, 31
      %s796 = scalar_select %p795, %s794, 31
      %s797 = smul.addr %s796, 8
      %s798 = scalar_lea.vmem %s2, %s797
      // Predicated region
      $region29: #{pgmsu_forward.19} parent=27 // pred_check
        %p799 = pneg %p83
      $region30: #{pgmsu_forward.19} parent=27 // pred_check_branch
        %801 = sbr.rel (%p799) target = $region32
      $region31: #{pgmsu_forward.19} parent=27 // pred_region
        %s802 = smul.u32 16, %s13
      $region32: #{pgmsu_forward.19} parent=27 // pred_fallthru
        _
    $region28: #{pgmsu_forward.19} parent=5 // pred_fallthru
      _
    %p803 = scmp.le.s32.totalorder 2, %s8
    // Predicated region
    $region33: #{pgmsu_forward.19} parent=5 // pred_check
      %p804 = pneg %p803
    $region34: #{pgmsu_forward.19} parent=5 // pred_check_branch
      %806 = sbr.rel (%p804) target = $region36
    $region35: #{pgmsu_forward.19} parent=5 // pred_region
      %s807 = ssub.s32 %s8, 2
      // Predicated region
      $region37: #{pgmsu_forward.19} parent=35 // pred_check
        %p808 = pneg %p89
      $region38: #{pgmsu_forward.19} parent=35 // pred_check_branch
        %810 = sbr.rel (%p808) target = $region40
      $region39: #{pgmsu_forward.19} parent=35 // pred_region
        %s811 = smul.u32 16, %s14
        %p812 = scmp.lt.s32.totalorder %s811, 31
        %s813 = scalar_select %p812, %s811, 31
        %s814 = smul.addr %s813, 8
        %s815 = scalar_lea.vmem %s2, %s814
      $region40: #{pgmsu_forward.19} parent=35 // pred_fallthru
        _
    $region36: #{pgmsu_forward.19} parent=5 // pred_fallthru
      _
  $region6: #{pgmsu_forward.19} parent=0 // loop_footer
    %s12 = sadd.s32 1, %s8
  $region7: #{pgmsu_forward.19} parent=0 // loop_footer_branch
    %7 = sbr.rel target = $region3
  $region8: #{pgmsu_forward.19} parent=0 // loop_exit
    _

</llo_original>
